<compile_context>
chip_gen: v5e
topology: v5e:2x2
jax: 0.10.0
libtpu: 0.0.40
codegen_flags: <defaults>
</compile_context>

<pallas_src>
import functools

import jax
import jax.numpy as jnp
import numpy as np
from jax.experimental import pallas as pl
from jax.experimental.pallas import tpu as pltpu


# ----------------------------- reference-side activations -----------------------------
def _sigmoid(a):
    return 1.0 / (1.0 + jnp.exp(-a))


def _silu(a):
    return a * _sigmoid(a)


# ------------------------------- kernel-side activations ------------------------------
def _sigmoid_k(a):
    # exp -> EUP; approx reciprocal -> EUP vrcp (frees VPU divide slots).
    return pl.reciprocal(1.0 + jnp.exp(-a), approx=True)


def _silu_k(a):
    return a * _sigmoid_k(a)


def residual_se_kernel(x_ref, w1_ref, w2_ref, sw1_ref, sw2_ref, o_ref,
                       pad_ref, im_ref, *, H, W, pad):
    P = H * W
    GC = o_ref.shape[-1]

    # Hoisted left/right border masks (dx = -1 / +1 taps); dy borders come for free from
    # the zero pad rows of pad_ref. Built once, reused by both convs.
    w_idx = jax.lax.broadcasted_iota(jnp.int32, (P, 1), 0) % W
    mask_l = jnp.broadcast_to(w_idx > 0, (P, GC))        # valid source when dx == -1
    mask_r = jnp.broadcast_to(w_idx < W - 1, (P, GC))    # valid source when dx == +1

    # Scratch persists across grid steps and the conv only ever rewrites the middle P
    # rows, so the pad rows only need zeroing once.
    @pl.when(pl.program_id(0) == 0)
    def _():
        zpad = jnp.zeros((pad, GC), pad_ref.dtype)
        pad_ref[pl.ds(0, pad), :] = zpad
        pad_ref[pl.ds(pad + P, pad), :] = zpad

    def conv3x3(a, wbig_ref):
        # im2col conv: write the activation into the padded scratch, store each of the 9
        # shifted/masked taps straight into its (P, GC) column slab of im_ref (bounded
        # live ranges, no concat temporary), then ONE (P,9GC)x(9GC,GC) bf16 MXU matmul
        # with f32 accumulation.
        pad_ref[pl.ds(pad, P), :] = a
        k = 0
        for dy in (-1, 0, 1):
            for dx in (-1, 0, 1):
                s = dy * W + dx
                sh = pad_ref[pl.ds(pad + s, P), :]        # static-offset f32 load
                if dx == -1:
                    sh = jnp.where(mask_l, sh, 0.0)
                elif dx == 1:
                    sh = jnp.where(mask_r, sh, 0.0)
                im_ref[:, pl.ds(k * GC, GC)] = sh.astype(jnp.bfloat16)
                k += 1
        # Conv bias intentionally dropped: it cancels exactly in the non-affine
        # InstanceNorm that always follows.
        return jnp.dot(im_ref[...], wbig_ref[...],
                       preferred_element_type=jnp.float32)   # (P, GC) f32

    def inst_norm(a):
        # PyTorch InstanceNorm2d defaults: eps=1e-5, affine=False, biased variance.
        # Fused sum / sum-of-squares statistics (single sweep).
        inv_p = 1.0 / P
        mu = jnp.sum(a, axis=0, keepdims=True) * inv_p
        ex2 = jnp.sum(a * a, axis=0, keepdims=True) * inv_p
        var = jnp.maximum(ex2 - mu * mu, 0.0)
        return (a - mu) * jax.lax.rsqrt(var + 1e-5)

    out = _silu_k(inst_norm(conv3x3(x_ref[0].astype(jnp.float32), w1_ref)))
    out = inst_norm(conv3x3(out, w2_ref))

    # Squeeze-and-Excitation (block-diagonal FCs keep the packed images independent).
    # bf16 operands on the serial M=1 dots shorten the pool->fc1->fc2->scale tail.
    y = jnp.sum(out, axis=0, keepdims=True) * (1.0 / P)      # (1, GC) global avg pool
    y = _silu_k(jnp.dot(y.astype(jnp.bfloat16), sw1_ref[...],
                        preferred_element_type=jnp.float32))
    y = _sigmoid_k(jnp.dot(y.astype(jnp.bfloat16), sw2_ref[...],
                           preferred_element_type=jnp.float32))
    out = out * y

    # Residual re-read at the point of use (don't hold an f32 copy live across the body).
    out = _silu_k(out + x_ref[0].astype(jnp.float32))
    o_ref[0] = out.astype(o_ref.dtype)


def _pick_lane_width(B, C):
    """GC=256 fills the 256-wide MXU on v6e/v7x; v5e's MXU is 128 wide. Keep >= 2 grid
    steps so v7x's two TensorCores (and the in/out pipeline) stay busy."""
    try:
        kind = jax.devices()[0].device_kind.lower()
    except Exception:
        kind = ""
    lane = 256 if ("v6" in kind or "v7" in kind) else 128
    if lane == 256 and -(-B // max(1, lane // C)) < 2:
        lane = 128
    return lane


def residual_se_block(x_nchw, params, *, lane_width=None):
    B, C, H, W = x_nchw.shape
    P = H * W
    if lane_width is None:
        lane_width = _pick_lane_width(B, C)

    # Pack G images along the lane/channel axis so every block is lane-dense.
    G = max(1, lane_width // C)
    GC = G * C
    # TODO(synk): pad channels when C does not divide the lane width (otherwise GC is not
    # a multiple of 128 and output stores become masked partial-lane vst.msk).
    Bp = -(-B // G) * G
    if Bp != B:
        # Zero-image batch padding is exact: each packed image owns its own lanes and the
        # all-zero images normalize/SE to finite zeros.
        x_nchw = jnp.concatenate(
            [x_nchw, jnp.zeros((Bp - B, C, H, W), x_nchw.dtype)], axis=0)
    n_grp = Bp // G
    pad_rows = -(-(W + 1) // 16) * 16          # >= W+1, 16-row aligned

    # NCHW -> (group, P, G*C) with lane index g*C + c.
    x = (x_nchw.reshape(n_grp, G, C, H, W)
               .transpose(0, 3, 4, 1, 2)
               .reshape(n_grp, P, GC))

    eye = jnp.eye(G, dtype=jnp.float32)

    def conv_w(w):
        # PyTorch (Cout, Cin, 3, 3) -> per-tap (9, Cin, Cout) -> block-diagonal im2col
        # weight (9*G*C, G*C), cast once to bf16 for the MXU.
        w9 = jnp.transpose(jnp.asarray(w, jnp.float32), (2, 3, 1, 0)).reshape(9, C, C)
        wbig = jnp.einsum("kio,gh->kgiho", w9, eye).reshape(9 * GC, GC)
        return wbig.astype(jnp.bfloat16)

    def se_w(w):
        # PyTorch Linear weight (out, in) -> (in, out), block-diagonal over G, bf16.
        wt = jnp.asarray(w, jnp.float32).T
        i, o = wt.shape
        return jnp.einsum("io,gh->giho", wt, eye).reshape(G * i, G * o).astype(jnp.bfloat16)

    w1 = conv_w(params["conv1_w"])
    w2 = conv_w(params["conv2_w"])
    # conv1_b / conv2_b intentionally unused: they cancel in the non-affine InstanceNorm.
    sw1 = se_w(params["se_w1"])                # (GC, G*Cr)
    sw2 = se_w(params["se_w2"])                # (G*Cr, GC)
    GCr = sw1.shape[1]

    # VMEM budget guard (matters for large H*W, especially on v7x's smaller VMEM).
    itemsize = jnp.dtype(x_nchw.dtype).itemsize
    vmem_est = (4 * P * GC * itemsize                  # x + out blocks, double-buffered
                + 2 * 2 * (9 * GC * GC) * 2            # conv im2col weights (bf16), 2-buf
                + 2 * 2 * (GC * GCr) * 2               # SE weights (bf16), 2-buf
                + (P + 2 * pad_rows) * GC * 4          # f32 padded activation scratch
                + P * 9 * GC * 2)                      # bf16 im2col slab
    cp_kwargs = dict(dimension_semantics=("parallel",))
    if vmem_est > 30 * 1024 * 1024:
        # TODO(synk): for very large H*W, tile P over a second grid axis (1-row halo) or
        # switch to dy-grouped K=3*GC accumulation instead of only raising the limit.
        cp_kwargs["vmem_limit_bytes"] = min(int(vmem_est * 1.25), 120 * 1024 * 1024)

    out = pl.pallas_call(
        functools.partial(residual_se_kernel, H=H, W=W, pad=pad_rows),
        out_shape=jax.ShapeDtypeStruct((n_grp, P, GC), x_nchw.dtype),
        grid_spec=pltpu.PrefetchScalarGridSpec(
            num_scalar_prefetch=0,
            grid=(n_grp,),
            in_specs=[
                pl.BlockSpec((1, P, GC), lambda b: (b, 0, 0)),     # packed images
                pl.BlockSpec((9 * GC, GC), lambda b: (0, 0)),      # conv1 im2col weight
                pl.BlockSpec((9 * GC, GC), lambda b: (0, 0)),      # conv2 im2col weight
                pl.BlockSpec((GC, GCr), lambda b: (0, 0)),         # SE fc1 (no bias)
                pl.BlockSpec((GCr, GC), lambda b: (0, 0)),         # SE fc2 (no bias)
            ],
            out_specs=pl.BlockSpec((1, P, GC), lambda b: (b, 0, 0)),
            scratch_shapes=[
                pltpu.VMEM((P + 2 * pad_rows, GC), jnp.float32),   # padded activation
                pltpu.VMEM((P, 9 * GC), jnp.bfloat16),             # im2col slab
            ]),
        compiler_params=pltpu.CompilerParams(**cp_kwargs),
    )(x, w1, w2, sw1, sw2)

    # (group, P, G*C) -> NCHW, drop batch padding.
    out = (out.reshape(n_grp, H, W, G, C)
              .transpose(0, 3, 4, 1, 2)
              .reshape(Bp, C, H, W))
    return out[:B]


def reference_forward(x, params):
    """Pure-JAX (f32) reference mirroring the PyTorch module (NCHW)."""
    def conv(a, w, b):
        y = jax.lax.conv_general_dilated(
            a, w, window_strides=(1, 1), padding=((1, 1), (1, 1)),
            dimension_numbers=("NCHW", "OIHW", "NCHW"))
        return y + b[None, :, None, None]

    def inst_norm(a):
        mu = jnp.mean(a, axis=(2, 3), keepdims=True)
        var = jnp.mean((a - mu) ** 2, axis=(2, 3), keepdims=True)
        return (a - mu) / jnp.sqrt(var + 1e-5)

    out = _silu(inst_norm(conv(x, params["conv1_w"], params["conv1_b"])))
    out = inst_norm(conv(out, params["conv2_w"], params["conv2_b"]))
    y = jnp.mean(out, axis=(2, 3))                         # squeeze -> (B, C)
    y = _silu(y @ params["se_w1"].T)
    y = _sigmoid(y @ params["se_w2"].T)
    out = out * y[:, :, None, None]
    return _silu(out + x)


if __name__ == "__main__":
    B, C, H, W = 8, 32, 16, 16      # features=32 -> channels // 16 == 2; B=8 -> 2 grid steps
    reduction = 16
    Cr = C // reduction

    key = jax.random.PRNGKey(0)
    ks = jax.random.split(key, 7)
    params = {
        "conv1_w": jax.random.normal(ks[0], (C, C, 3, 3), jnp.float32) * 0.1,
        "conv1_b": jax.random.normal(ks[1], (C,), jnp.float32) * 0.1,
        "conv2_w": jax.random.normal(ks[2], (C, C, 3, 3), jnp.float32) * 0.1,
        "conv2_b": jax.random.normal(ks[3], (C,), jnp.float32) * 0.1,
        "se_w1": jax.random.normal(ks[4], (Cr, C), jnp.float32) * 0.1,   # Linear(C -> C//r)
        "se_w2": jax.random.normal(ks[5], (C, Cr), jnp.float32) * 0.1,   # Linear(C//r -> C)
    }
    x = jax.random.normal(ks[6], (B, C, H, W), jnp.float32)

    out = jax.block_until_ready(residual_se_block(x, params))
    ref = reference_forward(x, params)

    # bf16 MXU operands + EUP approx-reciprocal sigmoid vs the full-f32 reference ->
    # bf16-appropriate tolerance.
    np.testing.assert_allclose(np.asarray(out), np.asarray(ref), atol=3e-2, rtol=3e-2)
    print("KERNEL_OK")
</pallas_src>

<mosaic_0001>
module attributes {stable_mosaic.version = 11 : i64} {
  func.func @residual_se_kernel(%arg0: i32, %arg1: memref<1x256x128xf32, #tpu.memory_space<vmem>>, %arg2: memref<1152x128xbf16, #tpu.memory_space<vmem>>, %arg3: memref<1152x128xbf16, #tpu.memory_space<vmem>>, %arg4: memref<128x8xbf16, #tpu.memory_space<vmem>>, %arg5: memref<8x128xbf16, #tpu.memory_space<vmem>>, %arg6: memref<1x256x128xf32, #tpu.memory_space<vmem>>, %arg7: memref<320x128xf32, #tpu.memory_space<vmem>>, %arg8: memref<256x1152xbf16, #tpu.memory_space<vmem>>) attributes {dimension_semantics = [#tpu.dimension_semantics<parallel>], iteration_bounds = array<i64: 2>, scalar_prefetch = 0 : i64, scratch_operands = 2 : i64, tpu.core_type = #tpu.core_type<tc>, window_params = [{transform_indices = @transform_0, window_bounds = array<i64: 1, 256, 128>}, {pipeline_mode = #tpu.pipeline_mode<synchronous>, transform_indices = @transform_1, window_bounds = array<i64: 1152, 128>}, {pipeline_mode = #tpu.pipeline_mode<synchronous>, transform_indices = @transform_2, window_bounds = array<i64: 1152, 128>}, {pipeline_mode = #tpu.pipeline_mode<synchronous>, transform_indices = @transform_3, window_bounds = array<i64: 128, 8>}, {pipeline_mode = #tpu.pipeline_mode<synchronous>, transform_indices = @transform_4, window_bounds = array<i64: 8, 128>}, {transform_indices = @transform_5, window_bounds = array<i64: 1, 256, 128>}]} {
    %0 = tpu.iota {dimensions = array<i32: 0>} : vector<256x1xi32>
    %c16_i32 = arith.constant 16 : i32
    %c0_i32 = arith.constant 0 : i32
    %1 = arith.cmpi eq, %c16_i32, %c0_i32 : i32
    %c1_i32 = arith.constant 1 : i32
    %2 = arith.select %1, %c1_i32, %c16_i32 : i32
    %3 = vector.broadcast %2 : i32 to vector<256x1xi32>
    %4 = arith.remsi %0, %3 : vector<256x1xi32>
    %c0_i32_0 = arith.constant 0 : i32
    %5 = vector.broadcast %c0_i32_0 : i32 to vector<256x1xi32>
    %6 = arith.cmpi ne, %4, %5 : vector<256x1xi32>
    %c0_i32_1 = arith.constant 0 : i32
    %7 = vector.broadcast %c0_i32_1 : i32 to vector<256x1xi32>
    %8 = arith.cmpi slt, %4, %7 : vector<256x1xi32>
    %c0_i32_2 = arith.constant 0 : i32
    %9 = arith.cmpi slt, %2, %c0_i32_2 : i32
    %10 = vector.broadcast %9 : i1 to vector<256x1xi1>
    %11 = vector.broadcast %10 : vector<256x1xi1> to vector<256x1xi1>
    %12 = arith.xori %8, %11 : vector<256x1xi1>
    %13 = arith.andi %12, %6 : vector<256x1xi1>
    %14 = vector.broadcast %2 : i32 to vector<256x1xi32>
    %15 = arith.addi %4, %14 : vector<256x1xi32>
    %16 = arith.select %13, %15, %4 : vector<256x1xi1>, vector<256x1xi32>
    %c0_i32_3 = arith.constant 0 : i32
    %17 = vector.broadcast %c0_i32_3 : i32 to vector<256x1xi32>
    %18 = arith.cmpi sgt, %16, %17 : vector<256x1xi32>
    %19 = vector.shape_cast %18 : vector<256x1xi1> to vector<256x1xi1>
    %20 = vector.broadcast %19 : vector<256x1xi1> to vector<256x128xi1>
    %c15_i32 = arith.constant 15 : i32
    %21 = vector.broadcast %c15_i32 : i32 to vector<256x1xi32>
    %22 = arith.cmpi slt, %16, %21 : vector<256x1xi32>
    %23 = vector.shape_cast %22 : vector<256x1xi1> to vector<256x1xi1>
    %24 = vector.broadcast %23 : vector<256x1xi1> to vector<256x128xi1>
    %c0_i32_4 = arith.constant 0 : i32
    %25 = arith.cmpi eq, %arg0, %c0_i32_4 : i32
    %26 = arith.extui %25 : i1 to i32
    %c0_i32_5 = arith.constant 0 : i32
    %27 = arith.cmpi ne, %26, %c0_i32_5 : i32
    scf.if %27 {
      %cst_122 = arith.constant 0.000000e+00 : f32
      %201 = vector.broadcast %cst_122 : f32 to vector<32x128xf32>
      %c0_123 = arith.constant 0 : index
      %c0_124 = arith.constant 0 : index
      %202 = vector.load %arg7[%c0_123, %c0_124] : memref<320x128xf32, #tpu.memory_space<vmem>>, vector<32x128xf32>
      tpu.vector_store %arg7[%c0_123, %c0_124], %201 {strides = array<i32>} : memref<320x128xf32, #tpu.memory_space<vmem>>, vector<32x128xf32>,
      %c288 = arith.constant 288 : index
      %c0_125 = arith.constant 0 : index
      %203 = vector.load %arg7[%c288, %c0_125] : memref<320x128xf32, #tpu.memory_space<vmem>>, vector<32x128xf32>
      tpu.vector_store %arg7[%c288, %c0_125], %201 {strides = array<i32>} : memref<320x128xf32, #tpu.memory_space<vmem>>, vector<32x128xf32>,
    } else {
    }
    %c0 = arith.constant 0 : index
    %c0_6 = arith.constant 0 : index
    %c0_7 = arith.constant 0 : index
    %28 = vector.load %arg1[%c0, %c0_6, %c0_7] : memref<1x256x128xf32, #tpu.memory_space<vmem>>, vector<1x256x128xf32>
    %29 = vector.shape_cast %28 : vector<1x256x128xf32> to vector<256x128xf32>
    %c32 = arith.constant 32 : index
    %c0_8 = arith.constant 0 : index
    %30 = vector.load %arg7[%c32, %c0_8] : memref<320x128xf32, #tpu.memory_space<vmem>>, vector<256x128xf32>
    tpu.vector_store %arg7[%c32, %c0_8], %29 {strides = array<i32>} : memref<320x128xf32, #tpu.memory_space<vmem>>, vector<256x128xf32>,
    %c15 = arith.constant 15 : index
    %c0_9 = arith.constant 0 : index
    %31 = vector.load %arg7[%c15, %c0_9] : memref<320x128xf32, #tpu.memory_space<vmem>>, vector<256x128xf32>
    %cst = arith.constant 0.000000e+00 : f32
    %32 = vector.broadcast %cst : f32 to vector<256x128xf32>
    %33 = arith.select %20, %31, %32 : vector<256x128xi1>, vector<256x128xf32>
    %34 = arith.truncf %33 : vector<256x128xf32> to vector<256x128xbf16>
    %c0_10 = arith.constant 0 : index
    %c0_11 = arith.constant 0 : index
    %35 = vector.load %arg8[%c0_10, %c0_11] : memref<256x1152xbf16, #tpu.memory_space<vmem>>, vector<256x128xbf16>
    tpu.vector_store %arg8[%c0_10, %c0_11], %34 {strides = array<i32>} : memref<256x1152xbf16, #tpu.memory_space<vmem>>, vector<256x128xbf16>,
    %c16 = arith.constant 16 : index
    %c0_12 = arith.constant 0 : index
    %36 = vector.load %arg7[%c16, %c0_12] : memref<320x128xf32, #tpu.memory_space<vmem>>, vector<256x128xf32>
    %37 = arith.truncf %36 : vector<256x128xf32> to vector<256x128xbf16>
    %c0_13 = arith.constant 0 : index
    %c128 = arith.constant 128 : index
    %38 = vector.load %arg8[%c0_13, %c128] : memref<256x1152xbf16, #tpu.memory_space<vmem>>, vector<256x128xbf16>
    tpu.vector_store %arg8[%c0_13, %c128], %37 {strides = array<i32>} : memref<256x1152xbf16, #tpu.memory_space<vmem>>, vector<256x128xbf16>,
    %c17 = arith.constant 17 : index
    %c0_14 = arith.constant 0 : index
    %39 = vector.load %arg7[%c17, %c0_14] : memref<320x128xf32, #tpu.memory_space<vmem>>, vector<256x128xf32>
    %cst_15 = arith.constant 0.000000e+00 : f32
    %40 = vector.broadcast %cst_15 : f32 to vector<256x128xf32>
    %41 = arith.select %24, %39, %40 : vector<256x128xi1>, vector<256x128xf32>
    %42 = arith.truncf %41 : vector<256x128xf32> to vector<256x128xbf16>
    %c0_16 = arith.constant 0 : index
    %c256 = arith.constant 256 : index
    %43 = vector.load %arg8[%c0_16, %c256] : memref<256x1152xbf16, #tpu.memory_space<vmem>>, vector<256x128xbf16>
    tpu.vector_store %arg8[%c0_16, %c256], %42 {strides = array<i32>} : memref<256x1152xbf16, #tpu.memory_space<vmem>>, vector<256x128xbf16>,
    %c31 = arith.constant 31 : index
    %c0_17 = arith.constant 0 : index
    %44 = vector.load %arg7[%c31, %c0_17] : memref<320x128xf32, #tpu.memory_space<vmem>>, vector<256x128xf32>
    %cst_18 = arith.constant 0.000000e+00 : f32
    %45 = vector.broadcast %cst_18 : f32 to vector<256x128xf32>
    %46 = arith.select %20, %44, %45 : vector<256x128xi1>, vector<256x128xf32>
    %47 = arith.truncf %46 : vector<256x128xf32> to vector<256x128xbf16>
    %c0_19 = arith.constant 0 : index
    %c384 = arith.constant 384 : index
    %48 = vector.load %arg8[%c0_19, %c384] : memref<256x1152xbf16, #tpu.memory_space<vmem>>, vector<256x128xbf16>
    tpu.vector_store %arg8[%c0_19, %c384], %47 {strides = array<i32>} : memref<256x1152xbf16, #tpu.memory_space<vmem>>, vector<256x128xbf16>,
    %c32_20 = arith.constant 32 : index
    %c0_21 = arith.constant 0 : index
    %49 = vector.load %arg7[%c32_20, %c0_21] : memref<320x128xf32, #tpu.memory_space<vmem>>, vector<256x128xf32>
    %50 = arith.truncf %49 : vector<256x128xf32> to vector<256x128xbf16>
    %c0_22 = arith.constant 0 : index
    %c512 = arith.constant 512 : index
    %51 = vector.load %arg8[%c0_22, %c512] : memref<256x1152xbf16, #tpu.memory_space<vmem>>, vector<256x128xbf16>
    tpu.vector_store %arg8[%c0_22, %c512], %50 {strides = array<i32>} : memref<256x1152xbf16, #tpu.memory_space<vmem>>, vector<256x128xbf16>,
    %c33 = arith.constant 33 : index
    %c0_23 = arith.constant 0 : index
    %52 = vector.load %arg7[%c33, %c0_23] : memref<320x128xf32, #tpu.memory_space<vmem>>, vector<256x128xf32>
    %cst_24 = arith.constant 0.000000e+00 : f32
    %53 = vector.broadcast %cst_24 : f32 to vector<256x128xf32>
    %54 = arith.select %24, %52, %53 : vector<256x128xi1>, vector<256x128xf32>
    %55 = arith.truncf %54 : vector<256x128xf32> to vector<256x128xbf16>
    %c0_25 = arith.constant 0 : index
    %c640 = arith.constant 640 : index
    %56 = vector.load %arg8[%c0_25, %c640] : memref<256x1152xbf16, #tpu.memory_space<vmem>>, vector<256x128xbf16>
    tpu.vector_store %arg8[%c0_25, %c640], %55 {strides = array<i32>} : memref<256x1152xbf16, #tpu.memory_space<vmem>>, vector<256x128xbf16>,
    %c47 = arith.constant 47 : index
    %c0_26 = arith.constant 0 : index
    %57 = vector.load %arg7[%c47, %c0_26] : memref<320x128xf32, #tpu.memory_space<vmem>>, vector<256x128xf32>
    %cst_27 = arith.constant 0.000000e+00 : f32
    %58 = vector.broadcast %cst_27 : f32 to vector<256x128xf32>
    %59 = arith.select %20, %57, %58 : vector<256x128xi1>, vector<256x128xf32>
    %60 = arith.truncf %59 : vector<256x128xf32> to vector<256x128xbf16>
    %c0_28 = arith.constant 0 : index
    %c768 = arith.constant 768 : index
    %61 = vector.load %arg8[%c0_28, %c768] : memref<256x1152xbf16, #tpu.memory_space<vmem>>, vector<256x128xbf16>
    tpu.vector_store %arg8[%c0_28, %c768], %60 {strides = array<i32>} : memref<256x1152xbf16, #tpu.memory_space<vmem>>, vector<256x128xbf16>,
    %c48 = arith.constant 48 : index
    %c0_29 = arith.constant 0 : index
    %62 = vector.load %arg7[%c48, %c0_29] : memref<320x128xf32, #tpu.memory_space<vmem>>, vector<256x128xf32>
    %63 = arith.truncf %62 : vector<256x128xf32> to vector<256x128xbf16>
    %c0_30 = arith.constant 0 : index
    %c896 = arith.constant 896 : index
    %64 = vector.load %arg8[%c0_30, %c896] : memref<256x1152xbf16, #tpu.memory_space<vmem>>, vector<256x128xbf16>
    tpu.vector_store %arg8[%c0_30, %c896], %63 {strides = array<i32>} : memref<256x1152xbf16, #tpu.memory_space<vmem>>, vector<256x128xbf16>,
    %c49 = arith.constant 49 : index
    %c0_31 = arith.constant 0 : index
    %65 = vector.load %arg7[%c49, %c0_31] : memref<320x128xf32, #tpu.memory_space<vmem>>, vector<256x128xf32>
    %cst_32 = arith.constant 0.000000e+00 : f32
    %66 = vector.broadcast %cst_32 : f32 to vector<256x128xf32>
    %67 = arith.select %24, %65, %66 : vector<256x128xi1>, vector<256x128xf32>
    %68 = arith.truncf %67 : vector<256x128xf32> to vector<256x128xbf16>
    %c0_33 = arith.constant 0 : index
    %c1024 = arith.constant 1024 : index
    %69 = vector.load %arg8[%c0_33, %c1024] : memref<256x1152xbf16, #tpu.memory_space<vmem>>, vector<256x128xbf16>
    tpu.vector_store %arg8[%c0_33, %c1024], %68 {strides = array<i32>} : memref<256x1152xbf16, #tpu.memory_space<vmem>>, vector<256x128xbf16>,
    %c0_34 = arith.constant 0 : index
    %c0_35 = arith.constant 0 : index
    %70 = vector.load %arg8[%c0_34, %c0_35] : memref<256x1152xbf16, #tpu.memory_space<vmem>>, vector<256x1152xbf16>
    %c0_36 = arith.constant 0 : index
    %c0_37 = arith.constant 0 : index
    %71 = vector.load %arg2[%c0_36, %c0_37] : memref<1152x128xbf16, #tpu.memory_space<vmem>>, vector<1152x128xbf16>
    %cst_38 = arith.constant dense<0.000000e+00> : vector<256x128xf32>
    %72 = tpu.matmul %70, %71, %cst_38 {dimension_numbers = #tpu.dot_dimension_numbers<[1], [0], [0], [1], [0, 0, 1, 1], [], []>} : vector<256x1152xbf16>, vector<1152x128xbf16>, vector<256x128xf32> -> vector<256x128xf32>
    %cst_39 = arith.constant dense<0.000000e+00> : vector<128xf32>
    %73 = vector.multi_reduction <add>, %72, %cst_39 [0] : vector<256x128xf32> to vector<128xf32>
    %74 = vector.shape_cast %73 : vector<128xf32> to vector<1x128xf32>
    %cst_40 = arith.constant 3.906250e-03 : f32
    %75 = vector.broadcast %cst_40 : f32 to vector<1x128xf32>
    %76 = arith.mulf %74, %75 : vector<1x128xf32>
    %77 = arith.mulf %72, %72 : vector<256x128xf32>
    %cst_41 = arith.constant dense<0.000000e+00> : vector<128xf32>
    %78 = vector.multi_reduction <add>, %77, %cst_41 [0] : vector<256x128xf32> to vector<128xf32>
    %79 = vector.shape_cast %78 : vector<128xf32> to vector<1x128xf32>
    %cst_42 = arith.constant 3.906250e-03 : f32
    %80 = vector.broadcast %cst_42 : f32 to vector<1x128xf32>
    %81 = arith.mulf %79, %80 : vector<1x128xf32>
    %82 = arith.mulf %76, %76 : vector<1x128xf32>
    %83 = arith.subf %81, %82 : vector<1x128xf32>
    %cst_43 = arith.constant 0.000000e+00 : f32
    %84 = vector.broadcast %cst_43 : f32 to vector<1x128xf32>
    %85 = arith.maximumf %83, %84 : vector<1x128xf32>
    %86 = vector.broadcast %76 : vector<1x128xf32> to vector<256x128xf32>
    %87 = arith.subf %72, %86 : vector<256x128xf32>
    %cst_44 = arith.constant 9.99999974E-6 : f32
    %88 = vector.broadcast %cst_44 : f32 to vector<1x128xf32>
    %89 = arith.addf %85, %88 : vector<1x128xf32>
    %90 = math.rsqrt %89 : vector<1x128xf32>
    %91 = vector.broadcast %90 : vector<1x128xf32> to vector<256x128xf32>
    %92 = arith.mulf %87, %91 : vector<256x128xf32>
    %cst_45 = arith.constant 0.000000e+00 : f32
    %93 = vector.broadcast %cst_45 : f32 to vector<256x128xf32>
    %94 = arith.subf %93, %92 : vector<256x128xf32>
    %95 = math.exp %94 : vector<256x128xf32>
    %cst_46 = arith.constant 1.000000e+00 : f32
    %96 = vector.broadcast %cst_46 : f32 to vector<256x128xf32>
    %97 = arith.addf %96, %95 : vector<256x128xf32>
    %98 = tpu.reciprocal %97 {approx = true} : vector<256x128xf32> -> vector<256x128xf32>
    %99 = arith.mulf %92, %98 : vector<256x128xf32>
    %c32_47 = arith.constant 32 : index
    %c0_48 = arith.constant 0 : index
    %100 = vector.load %arg7[%c32_47, %c0_48] : memref<320x128xf32, #tpu.memory_space<vmem>>, vector<256x128xf32>
    tpu.vector_store %arg7[%c32_47, %c0_48], %99 {strides = array<i32>} : memref<320x128xf32, #tpu.memory_space<vmem>>, vector<256x128xf32>,
    %c15_49 = arith.constant 15 : index
    %c0_50 = arith.constant 0 : index
    %101 = vector.load %arg7[%c15_49, %c0_50] : memref<320x128xf32, #tpu.memory_space<vmem>>, vector<256x128xf32>
    %cst_51 = arith.constant 0.000000e+00 : f32
    %102 = vector.broadcast %cst_51 : f32 to vector<256x128xf32>
    %103 = arith.select %20, %101, %102 : vector<256x128xi1>, vector<256x128xf32>
    %104 = arith.truncf %103 : vector<256x128xf32> to vector<256x128xbf16>
    %c0_52 = arith.constant 0 : index
    %c0_53 = arith.constant 0 : index
    %105 = vector.load %arg8[%c0_52, %c0_53] : memref<256x1152xbf16, #tpu.memory_space<vmem>>, vector<256x128xbf16>
    tpu.vector_store %arg8[%c0_52, %c0_53], %104 {strides = array<i32>} : memref<256x1152xbf16, #tpu.memory_space<vmem>>, vector<256x128xbf16>,
    %c16_54 = arith.constant 16 : index
    %c0_55 = arith.constant 0 : index
    %106 = vector.load %arg7[%c16_54, %c0_55] : memref<320x128xf32, #tpu.memory_space<vmem>>, vector<256x128xf32>
    %107 = arith.truncf %106 : vector<256x128xf32> to vector<256x128xbf16>
    %c0_56 = arith.constant 0 : index
    %c128_57 = arith.constant 128 : index
    %108 = vector.load %arg8[%c0_56, %c128_57] : memref<256x1152xbf16, #tpu.memory_space<vmem>>, vector<256x128xbf16>
    tpu.vector_store %arg8[%c0_56, %c128_57], %107 {strides = array<i32>} : memref<256x1152xbf16, #tpu.memory_space<vmem>>, vector<256x128xbf16>,
    %c17_58 = arith.constant 17 : index
    %c0_59 = arith.constant 0 : index
    %109 = vector.load %arg7[%c17_58, %c0_59] : memref<320x128xf32, #tpu.memory_space<vmem>>, vector<256x128xf32>
    %cst_60 = arith.constant 0.000000e+00 : f32
    %110 = vector.broadcast %cst_60 : f32 to vector<256x128xf32>
    %111 = arith.select %24, %109, %110 : vector<256x128xi1>, vector<256x128xf32>
    %112 = arith.truncf %111 : vector<256x128xf32> to vector<256x128xbf16>
    %c0_61 = arith.constant 0 : index
    %c256_62 = arith.constant 256 : index
    %113 = vector.load %arg8[%c0_61, %c256_62] : memref<256x1152xbf16, #tpu.memory_space<vmem>>, vector<256x128xbf16>
    tpu.vector_store %arg8[%c0_61, %c256_62], %112 {strides = array<i32>} : memref<256x1152xbf16, #tpu.memory_space<vmem>>, vector<256x128xbf16>,
    %c31_63 = arith.constant 31 : index
    %c0_64 = arith.constant 0 : index
    %114 = vector.load %arg7[%c31_63, %c0_64] : memref<320x128xf32, #tpu.memory_space<vmem>>, vector<256x128xf32>
    %cst_65 = arith.constant 0.000000e+00 : f32
    %115 = vector.broadcast %cst_65 : f32 to vector<256x128xf32>
    %116 = arith.select %20, %114, %115 : vector<256x128xi1>, vector<256x128xf32>
    %117 = arith.truncf %116 : vector<256x128xf32> to vector<256x128xbf16>
    %c0_66 = arith.constant 0 : index
    %c384_67 = arith.constant 384 : index
    %118 = vector.load %arg8[%c0_66, %c384_67] : memref<256x1152xbf16, #tpu.memory_space<vmem>>, vector<256x128xbf16>
    tpu.vector_store %arg8[%c0_66, %c384_67], %117 {strides = array<i32>} : memref<256x1152xbf16, #tpu.memory_space<vmem>>, vector<256x128xbf16>,
    %c32_68 = arith.constant 32 : index
    %c0_69 = arith.constant 0 : index
    %119 = vector.load %arg7[%c32_68, %c0_69] : memref<320x128xf32, #tpu.memory_space<vmem>>, vector<256x128xf32>
    %120 = arith.truncf %119 : vector<256x128xf32> to vector<256x128xbf16>
    %c0_70 = arith.constant 0 : index
    %c512_71 = arith.constant 512 : index
    %121 = vector.load %arg8[%c0_70, %c512_71] : memref<256x1152xbf16, #tpu.memory_space<vmem>>, vector<256x128xbf16>
    tpu.vector_store %arg8[%c0_70, %c512_71], %120 {strides = array<i32>} : memref<256x1152xbf16, #tpu.memory_space<vmem>>, vector<256x128xbf16>,
    %c33_72 = arith.constant 33 : index
    %c0_73 = arith.constant 0 : index
    %122 = vector.load %arg7[%c33_72, %c0_73] : memref<320x128xf32, #tpu.memory_space<vmem>>, vector<256x128xf32>
    %cst_74 = arith.constant 0.000000e+00 : f32
    %123 = vector.broadcast %cst_74 : f32 to vector<256x128xf32>
    %124 = arith.select %24, %122, %123 : vector<256x128xi1>, vector<256x128xf32>
    %125 = arith.truncf %124 : vector<256x128xf32> to vector<256x128xbf16>
    %c0_75 = arith.constant 0 : index
    %c640_76 = arith.constant 640 : index
    %126 = vector.load %arg8[%c0_75, %c640_76] : memref<256x1152xbf16, #tpu.memory_space<vmem>>, vector<256x128xbf16>
    tpu.vector_store %arg8[%c0_75, %c640_76], %125 {strides = array<i32>} : memref<256x1152xbf16, #tpu.memory_space<vmem>>, vector<256x128xbf16>,
    %c47_77 = arith.constant 47 : index
    %c0_78 = arith.constant 0 : index
    %127 = vector.load %arg7[%c47_77, %c0_78] : memref<320x128xf32, #tpu.memory_space<vmem>>, vector<256x128xf32>
    %cst_79 = arith.constant 0.000000e+00 : f32
    %128 = vector.broadcast %cst_79 : f32 to vector<256x128xf32>
    %129 = arith.select %20, %127, %128 : vector<256x128xi1>, vector<256x128xf32>
    %130 = arith.truncf %129 : vector<256x128xf32> to vector<256x128xbf16>
    %c0_80 = arith.constant 0 : index
    %c768_81 = arith.constant 768 : index
    %131 = vector.load %arg8[%c0_80, %c768_81] : memref<256x1152xbf16, #tpu.memory_space<vmem>>, vector<256x128xbf16>
    tpu.vector_store %arg8[%c0_80, %c768_81], %130 {strides = array<i32>} : memref<256x1152xbf16, #tpu.memory_space<vmem>>, vector<256x128xbf16>,
    %c48_82 = arith.constant 48 : index
    %c0_83 = arith.constant 0 : index
    %132 = vector.load %arg7[%c48_82, %c0_83] : memref<320x128xf32, #tpu.memory_space<vmem>>, vector<256x128xf32>
    %133 = arith.truncf %132 : vector<256x128xf32> to vector<256x128xbf16>
    %c0_84 = arith.constant 0 : index
    %c896_85 = arith.constant 896 : index
    %134 = vector.load %arg8[%c0_84, %c896_85] : memref<256x1152xbf16, #tpu.memory_space<vmem>>, vector<256x128xbf16>
    tpu.vector_store %arg8[%c0_84, %c896_85], %133 {strides = array<i32>} : memref<256x1152xbf16, #tpu.memory_space<vmem>>, vector<256x128xbf16>,
    %c49_86 = arith.constant 49 : index
    %c0_87 = arith.constant 0 : index
    %135 = vector.load %arg7[%c49_86, %c0_87] : memref<320x128xf32, #tpu.memory_space<vmem>>, vector<256x128xf32>
    %cst_88 = arith.constant 0.000000e+00 : f32
    %136 = vector.broadcast %cst_88 : f32 to vector<256x128xf32>
    %137 = arith.select %24, %135, %136 : vector<256x128xi1>, vector<256x128xf32>
    %138 = arith.truncf %137 : vector<256x128xf32> to vector<256x128xbf16>
    %c0_89 = arith.constant 0 : index
    %c1024_90 = arith.constant 1024 : index
    %139 = vector.load %arg8[%c0_89, %c1024_90] : memref<256x1152xbf16, #tpu.memory_space<vmem>>, vector<256x128xbf16>
    tpu.vector_store %arg8[%c0_89, %c1024_90], %138 {strides = array<i32>} : memref<256x1152xbf16, #tpu.memory_space<vmem>>, vector<256x128xbf16>,
    %c0_91 = arith.constant 0 : index
    %c0_92 = arith.constant 0 : index
    %140 = vector.load %arg8[%c0_91, %c0_92] : memref<256x1152xbf16, #tpu.memory_space<vmem>>, vector<256x1152xbf16>
    %c0_93 = arith.constant 0 : index
    %c0_94 = arith.constant 0 : index
    %141 = vector.load %arg3[%c0_93, %c0_94] : memref<1152x128xbf16, #tpu.memory_space<vmem>>, vector<1152x128xbf16>
    %cst_95 = arith.constant dense<0.000000e+00> : vector<256x128xf32>
    %142 = tpu.matmul %140, %141, %cst_95 {dimension_numbers = #tpu.dot_dimension_numbers<[1], [0], [0], [1], [0, 0, 1, 1], [], []>} : vector<256x1152xbf16>, vector<1152x128xbf16>, vector<256x128xf32> -> vector<256x128xf32>
    %cst_96 = arith.constant dense<0.000000e+00> : vector<128xf32>
    %143 = vector.multi_reduction <add>, %142, %cst_96 [0] : vector<256x128xf32> to vector<128xf32>
    %144 = vector.shape_cast %143 : vector<128xf32> to vector<1x128xf32>
    %cst_97 = arith.constant 3.906250e-03 : f32
    %145 = vector.broadcast %cst_97 : f32 to vector<1x128xf32>
    %146 = arith.mulf %144, %145 : vector<1x128xf32>
    %147 = arith.mulf %142, %142 : vector<256x128xf32>
    %cst_98 = arith.constant dense<0.000000e+00> : vector<128xf32>
    %148 = vector.multi_reduction <add>, %147, %cst_98 [0] : vector<256x128xf32> to vector<128xf32>
    %149 = vector.shape_cast %148 : vector<128xf32> to vector<1x128xf32>
    %cst_99 = arith.constant 3.906250e-03 : f32
    %150 = vector.broadcast %cst_99 : f32 to vector<1x128xf32>
    %151 = arith.mulf %149, %150 : vector<1x128xf32>
    %152 = arith.mulf %146, %146 : vector<1x128xf32>
    %153 = arith.subf %151, %152 : vector<1x128xf32>
    %cst_100 = arith.constant 0.000000e+00 : f32
    %154 = vector.broadcast %cst_100 : f32 to vector<1x128xf32>
    %155 = arith.maximumf %153, %154 : vector<1x128xf32>
    %156 = vector.broadcast %146 : vector<1x128xf32> to vector<256x128xf32>
    %157 = arith.subf %142, %156 : vector<256x128xf32>
    %cst_101 = arith.constant 9.99999974E-6 : f32
    %158 = vector.broadcast %cst_101 : f32 to vector<1x128xf32>
    %159 = arith.addf %155, %158 : vector<1x128xf32>
    %160 = math.rsqrt %159 : vector<1x128xf32>
    %161 = vector.broadcast %160 : vector<1x128xf32> to vector<256x128xf32>
    %162 = arith.mulf %157, %161 : vector<256x128xf32>
    %cst_102 = arith.constant dense<0.000000e+00> : vector<128xf32>
    %163 = vector.multi_reduction <add>, %162, %cst_102 [0] : vector<256x128xf32> to vector<128xf32>
    %164 = vector.shape_cast %163 : vector<128xf32> to vector<1x128xf32>
    %cst_103 = arith.constant 3.906250e-03 : f32
    %165 = vector.broadcast %cst_103 : f32 to vector<1x128xf32>
    %166 = arith.mulf %164, %165 : vector<1x128xf32>
    %167 = arith.truncf %166 : vector<1x128xf32> to vector<1x128xbf16>
    %c0_104 = arith.constant 0 : index
    %c0_105 = arith.constant 0 : index
    %168 = vector.load %arg4[%c0_104, %c0_105] : memref<128x8xbf16, #tpu.memory_space<vmem>>, vector<128x8xbf16>
    %cst_106 = arith.constant dense<0.000000e+00> : vector<1x8xf32>
    %169 = tpu.matmul %167, %168, %cst_106 {dimension_numbers = #tpu.dot_dimension_numbers<[1], [0], [0], [1], [0, 0, 1, 1], [], []>} : vector<1x128xbf16>, vector<128x8xbf16>, vector<1x8xf32> -> vector<1x8xf32>
    %cst_107 = arith.constant 0.000000e+00 : f32
    %170 = vector.broadcast %cst_107 : f32 to vector<1x8xf32>
    %171 = arith.subf %170, %169 : vector<1x8xf32>
    %172 = math.exp %171 : vector<1x8xf32>
    %cst_108 = arith.constant 1.000000e+00 : f32
    %173 = vector.broadcast %cst_108 : f32 to vector<1x8xf32>
    %174 = arith.addf %173, %172 : vector<1x8xf32>
    %175 = tpu.reciprocal %174 {approx = true} : vector<1x8xf32> -> vector<1x8xf32>
    %176 = arith.mulf %169, %175 : vector<1x8xf32>
    %177 = arith.truncf %176 : vector<1x8xf32> to vector<1x8xbf16>
    %c0_109 = arith.constant 0 : index
    %c0_110 = arith.constant 0 : index
    %178 = vector.load %arg5[%c0_109, %c0_110] : memref<8x128xbf16, #tpu.memory_space<vmem>>, vector<8x128xbf16>
    %cst_111 = arith.constant dense<0.000000e+00> : vector<1x128xf32>
    %179 = tpu.matmul %177, %178, %cst_111 {dimension_numbers = #tpu.dot_dimension_numbers<[1], [0], [0], [1], [0, 0, 1, 1], [], []>} : vector<1x8xbf16>, vector<8x128xbf16>, vector<1x128xf32> -> vector<1x128xf32>
    %cst_112 = arith.constant 0.000000e+00 : f32
    %180 = vector.broadcast %cst_112 : f32 to vector<1x128xf32>
    %181 = arith.subf %180, %179 : vector<1x128xf32>
    %182 = math.exp %181 : vector<1x128xf32>
    %cst_113 = arith.constant 1.000000e+00 : f32
    %183 = vector.broadcast %cst_113 : f32 to vector<1x128xf32>
    %184 = arith.addf %183, %182 : vector<1x128xf32>
    %185 = tpu.reciprocal %184 {approx = true} : vector<1x128xf32> -> vector<1x128xf32>
    %186 = vector.broadcast %185 : vector<1x128xf32> to vector<256x128xf32>
    %187 = arith.mulf %162, %186 : vector<256x128xf32>
    %c0_114 = arith.constant 0 : index
    %c0_115 = arith.constant 0 : index
    %c0_116 = arith.constant 0 : index
    %188 = vector.load %arg1[%c0_114, %c0_115, %c0_116] : memref<1x256x128xf32, #tpu.memory_space<vmem>>, vector<1x256x128xf32>
    %189 = vector.shape_cast %188 : vector<1x256x128xf32> to vector<256x128xf32>
    %190 = arith.addf %187, %189 : vector<256x128xf32>
    %cst_117 = arith.constant 0.000000e+00 : f32
    %191 = vector.broadcast %cst_117 : f32 to vector<256x128xf32>
    %192 = arith.subf %191, %190 : vector<256x128xf32>
    %193 = math.exp %192 : vector<256x128xf32>
    %cst_118 = arith.constant 1.000000e+00 : f32
    %194 = vector.broadcast %cst_118 : f32 to vector<256x128xf32>
    %195 = arith.addf %194, %193 : vector<256x128xf32>
    %196 = tpu.reciprocal %195 {approx = true} : vector<256x128xf32> -> vector<256x128xf32>
    %197 = arith.mulf %190, %196 : vector<256x128xf32>
    %c0_119 = arith.constant 0 : index
    %c0_120 = arith.constant 0 : index
    %c0_121 = arith.constant 0 : index
    %198 = vector.load %arg6[%c0_119, %c0_120, %c0_121] : memref<1x256x128xf32, #tpu.memory_space<vmem>>, vector<1x256x128xf32>
    %199 = vector.shape_cast %198 : vector<1x256x128xf32> to vector<256x128xf32>
    %200 = vector.shape_cast %197 : vector<256x128xf32> to vector<1x256x128xf32>
    tpu.vector_store %arg6[%c0_119, %c0_120, %c0_121], %200 {strides = array<i32>} : memref<1x256x128xf32, #tpu.memory_space<vmem>>, vector<1x256x128xf32>,
    return
  }
  func.func @transform_0(%arg0: i32) -> (i32, i32, i32) {
    %c0_i32 = arith.constant 0 : i32
    %c0_i32_0 = arith.constant 0 : i32
    %c0_i32_1 = arith.constant 0 : i32
    return %arg0, %c0_i32, %c0_i32_0 : i32, i32, i32
  }
  func.func @transform_1(%arg0: i32) -> (i32, i32) {
    %c0_i32 = arith.constant 0 : i32
    %c0_i32_0 = arith.constant 0 : i32
    %c0_i32_1 = arith.constant 0 : i32
    return %c0_i32, %c0_i32_0 : i32, i32
  }
  func.func @transform_2(%arg0: i32) -> (i32, i32) {
    %c0_i32 = arith.constant 0 : i32
    %c0_i32_0 = arith.constant 0 : i32
    %c0_i32_1 = arith.constant 0 : i32
    return %c0_i32, %c0_i32_0 : i32, i32
  }
  func.func @transform_3(%arg0: i32) -> (i32, i32) {
    %c0_i32 = arith.constant 0 : i32
    %c0_i32_0 = arith.constant 0 : i32
    %c0_i32_1 = arith.constant 0 : i32
    return %c0_i32, %c0_i32_0 : i32, i32
  }
  func.func @transform_4(%arg0: i32) -> (i32, i32) {
    %c0_i32 = arith.constant 0 : i32
    %c0_i32_0 = arith.constant 0 : i32
    %c0_i32_1 = arith.constant 0 : i32
    return %c0_i32, %c0_i32_0 : i32, i32
  }
  func.func @transform_5(%arg0: i32) -> (i32, i32, i32) {
    %c0_i32 = arith.constant 0 : i32
    %c0_i32_0 = arith.constant 0 : i32
    %c0_i32_1 = arith.constant 0 : i32
    return %arg0, %c0_i32, %c0_i32_0 : i32, i32, i32
  }
}

</mosaic_0001>

<llo_original>
// kernel: tpu_custom_call.1
$region0: #{tpu_custom_call.1}
  #allocation0 [shape = 'u32[]', space=smem, size = 0x4, offset = 0x4, fixed_abs, tag = 'smem constant byte address 0x4 - core index']
  #allocation1 [shape = 'u32[72,128]{1,0:T(1,128)}', space=vmem, size = 0x9000, scoped, tag = 'internal scratch']
  #allocation2 [shape = 'f32[320,128]{1,0:T(8,128)}', space=vmem, size = 0x28000, scoped, tag = 'scratch operand']
  #allocation3 [shape = 'bf16[256,1152]{1,0:T(8,128)(2,1)}', space=vmem, size = 0x90000, scoped, tag = 'scratch operand']
  %s0 = inlined_call_operand.hbm [shape: f32[2,256,128], index: 0, kind: input, shape index: {}]
  %s1 = inlined_call_operand.hbm [shape: bf16[1152,128], index: 1, kind: input, shape index: {}]
  %s2 = inlined_call_operand.hbm [shape: bf16[1152,128], index: 2, kind: input, shape index: {}]
  %s3 = inlined_call_operand.vmem [shape: bf16[128,8], index: 3, kind: input, shape index: {}]
  %s4 = inlined_call_operand.vmem [shape: bf16[8,128], index: 4, kind: input, shape index: {}]
  %s5 = inlined_call_operand.hbm [shape: f32[2,256,128], index: 5, kind: output, shape index: {}]
  %s6 = sld [smem:[#allocation0]]
  $region69: #{tpu_custom_call.1} parent=0
    _
  %s8 = ssub.s32 1, %s6
  %s9 = scalar_select 0, %s8, %s6
  $region1: #{tpu_custom_call.1} parent=0
    #allocation4 [shape = 'u8[262144]{0}', space=vmem, size = 0x40000, scoped, tag = 'input window, operand 0']
    #allocation5 [shape = 's32[2]{0}', space=sflag, size = 0x8, scoped, tag = 'scoped memory for tpu_custom_call.1']
    #allocation6 [shape = 's32[2]{0}', space=sflag, size = 0x8, scoped, tag = 'scoped memory for tpu_custom_call.1']
    #allocation7 [shape = 'u8[294912]{0}', space=vmem, size = 0x48000, scoped, tag = 'input window, operand 1, single buffered']
    #allocation8 [shape = 's32[1]{0}', space=sflag, size = 0x4, scoped, tag = 'scoped memory for tpu_custom_call.1']
    #allocation9 [shape = 'u8[294912]{0}', space=vmem, size = 0x48000, scoped, tag = 'input window, operand 2, single buffered']
    #allocation10 [shape = 'u8[262144]{0}', space=vmem, size = 0x40000, scoped, tag = 'output window, operand 0']
    %10 = vsyncpa [#allocation5], 0
    %s11 = scalar_lea.sflag [#allocation5], 1
    %12 = vsyncpa %s11, 0
    %13 = vsyncpa [#allocation8], 0
    %14 = vsyncpa [#allocation6], 0
    %s15 = scalar_lea.sflag [#allocation6], 1
    %16 = vsyncpa %s15, 0
    loop: start=0, step=1, limit=4
    $region2: #{tpu_custom_call.1} parent=1 // loop_pre_header
      _
    $region3: #{tpu_custom_call.1} parent=1 // loop_header
      %s18 = sphi 0, %s22
      %p19 = scmp.ge.s32.totalorder %s18, 4
      %s28 = sphi 0, %s30
      %s31 = sphi 0, %s28
      %s32 = sphi 0, %s31
      %s48 = sphi 0, %s32
      %s52 = sphi 0, %s52
      %s54 = sphi 0, %s52
      %s55 = sphi 0, %s54
      %s69 = sphi 0, %s55
      %s73 = sphi 0, %s73
      %s75 = sphi 0, %s73
      %s76 = sphi 0, %s75
      %s90 = sphi 0, %s76
      %s94 = sphi 0, %s94
      %s96 = sphi 0, %s94
      %s97 = sphi 0, %s96
      %s111 = sphi 0, %s97
      %s115 = sphi 0, %s115
      %s117 = sphi 0, %s115
      %s118 = sphi 0, %s117
      %s132 = sphi 0, %s118
      %s138 = sphi 0, %s140
      %s141 = sphi 0, %s138
      %s142 = sphi 0, %s141
      %s158 = sphi 0, %s142
    $region4: #{tpu_custom_call.1} parent=1 // loop_header_branch
      %21 = sbr.rel (%p19) target = $region8
    $region5: #{tpu_custom_call.1} parent=1 // loop_body
      %s23 = ssub.s32 %s18, 1
      %s24 = ssub.s32 %s18, 2
      %s25 = sadd.s32 %s18, 1
      %s26 = ssub.s32 %s18, %s25
      %p27 = scmp.eq.s32.totalorder %s26, 0
      %s29 = sadd.s32 %s28, 1
      %s30 = scalar_select %p27, %s28, %s29
      %p33 = pneg %p27
      %p34 = scmp.eq.s32.totalorder %s18, 1
      %p35 = por %p33, %p34
      %p36 = scmp.ne.s32.totalorder %s28, %s31
      %p37 = scmp.eq.s32.totalorder %s18, 0
      %p38 = por %p36, %p37
      %p39 = scmp.ne.s32.totalorder %s28, %s31
      %p40 = scmp.eq.s32.totalorder %s23, 1
      %p41 = por %p39, %p40
      %p42 = scmp.ne.s32.totalorder %s31, %s32
      %p43 = scmp.eq.s32.totalorder %s23, 0
      %p44 = por %p42, %p43
      %p45 = scmp.ne.s32.totalorder %s31, %s32
      %p46 = scmp.eq.s32.totalorder %s24, 1
      %p47 = por %p45, %p46
      %p49 = scmp.ne.s32.totalorder %s32, %s48
      %p50 = scmp.eq.s32.totalorder %s24, 0
      %p51 = por %p49, %p50
      %s53 = sadd.s32 %s52, 1
      %p56 = scmp.eq.s32.totalorder %s18, 1
      %p57 = scmp.ne.s32.totalorder %s52, %s54
      %p58 = scmp.eq.s32.totalorder %s18, 0
      %p59 = por %p57, %p58
      %p60 = scmp.ne.s32.totalorder %s52, %s54
      %p61 = scmp.eq.s32.totalorder %s23, 1
      %p62 = por %p60, %p61
      %p63 = scmp.ne.s32.totalorder %s54, %s55
      %p64 = scmp.eq.s32.totalorder %s23, 0
      %p65 = por %p63, %p64
      %p66 = scmp.ne.s32.totalorder %s54, %s55
      %p67 = scmp.eq.s32.totalorder %s24, 1
      %p68 = por %p66, %p67
      %p70 = scmp.ne.s32.totalorder %s55, %s69
      %p71 = scmp.eq.s32.totalorder %s24, 0
      %p72 = por %p70, %p71
      %s74 = sadd.s32 %s73, 1
      %p77 = scmp.eq.s32.totalorder %s18, 1
      %p78 = scmp.ne.s32.totalorder %s73, %s75
      %p79 = scmp.eq.s32.totalorder %s18, 0
      %p80 = por %p78, %p79
      %p81 = scmp.ne.s32.totalorder %s73, %s75
      %p82 = scmp.eq.s32.totalorder %s23, 1
      %p83 = por %p81, %p82
      %p84 = scmp.ne.s32.totalorder %s75, %s76
      %p85 = scmp.eq.s32.totalorder %s23, 0
      %p86 = por %p84, %p85
      %p87 = scmp.ne.s32.totalorder %s75, %s76
      %p88 = scmp.eq.s32.totalorder %s24, 1
      %p89 = por %p87, %p88
      %p91 = scmp.ne.s32.totalorder %s76, %s90
      %p92 = scmp.eq.s32.totalorder %s24, 0
      %p93 = por %p91, %p92
      %s95 = sadd.s32 %s94, 1
      %p98 = scmp.eq.s32.totalorder %s18, 1
      %p99 = scmp.ne.s32.totalorder %s94, %s96
      %p100 = scmp.eq.s32.totalorder %s18, 0
      %p101 = por %p99, %p100
      %p102 = scmp.ne.s32.totalorder %s94, %s96
      %p103 = scmp.eq.s32.totalorder %s23, 1
      %p104 = por %p102, %p103
      %p105 = scmp.ne.s32.totalorder %s96, %s97
      %p106 = scmp.eq.s32.totalorder %s23, 0
      %p107 = por %p105, %p106
      %p108 = scmp.ne.s32.totalorder %s96, %s97
      %p109 = scmp.eq.s32.totalorder %s24, 1
      %p110 = por %p108, %p109
      %p112 = scmp.ne.s32.totalorder %s97, %s111
      %p113 = scmp.eq.s32.totalorder %s24, 0
      %p114 = por %p112, %p113
      %s116 = sadd.s32 %s115, 1
      %p119 = scmp.eq.s32.totalorder %s18, 1
      %p120 = scmp.ne.s32.totalorder %s115, %s117
      %p121 = scmp.eq.s32.totalorder %s18, 0
      %p122 = por %p120, %p121
      %p123 = scmp.ne.s32.totalorder %s115, %s117
      %p124 = scmp.eq.s32.totalorder %s23, 1
      %p125 = por %p123, %p124
      %p126 = scmp.ne.s32.totalorder %s117, %s118
      %p127 = scmp.eq.s32.totalorder %s23, 0
      %p128 = por %p126, %p127
      %p129 = scmp.ne.s32.totalorder %s117, %s118
      %p130 = scmp.eq.s32.totalorder %s24, 1
      %p131 = por %p129, %p130
      %p133 = scmp.ne.s32.totalorder %s118, %s132
      %p134 = scmp.eq.s32.totalorder %s24, 0
      %p135 = por %p133, %p134
      %s136 = ssub.s32 %s18, %s25
      %p137 = scmp.eq.s32.totalorder %s136, 0
      %s139 = sadd.s32 %s138, 1
      %s140 = scalar_select %p137, %s138, %s139
      %p143 = pneg %p137
      %p144 = scmp.eq.s32.totalorder %s18, 1
      %p145 = por %p143, %p144
      %p146 = scmp.ne.s32.totalorder %s138, %s141
      %p147 = scmp.eq.s32.totalorder %s18, 0
      %p148 = por %p146, %p147
      %p149 = scmp.ne.s32.totalorder %s138, %s141
      %p150 = scmp.eq.s32.totalorder %s23, 1
      %p151 = por %p149, %p150
      %p152 = scmp.ne.s32.totalorder %s141, %s142
      %p153 = scmp.eq.s32.totalorder %s23, 0
      %p154 = por %p152, %p153
      %p155 = scmp.ne.s32.totalorder %s141, %s142
      %p156 = scmp.eq.s32.totalorder %s24, 1
      %p157 = por %p155, %p156
      %p159 = scmp.ne.s32.totalorder %s142, %s158
      %p160 = scmp.eq.s32.totalorder %s24, 0
      %p161 = por %p159, %p160
      %p162 = scmp.le.s32.totalorder 1, %s18
      %p163 = scmp.lt.s32.totalorder %s18, 3
      %p164 = pnand %p162, %p163
      %p165 = pneg %p164
      // Predicated region
      $region9: #{tpu_custom_call.1} parent=5 // pred_check
        _
      $region10: #{tpu_custom_call.1} parent=5 // pred_check_branch
        %167 = sbr.rel (%p164) target = $region12
      $region11: #{tpu_custom_call.1} parent=5 // pred_region
        %s168 = ssub.s32 %s18, 1
        // Predicated region
        $region13: #{tpu_custom_call.1} parent=11 // pred_check
          %p169 = pneg %p65
        $region14: #{tpu_custom_call.1} parent=11 // pred_check_branch
          %171 = sbr.rel (%p169) target = $region16
        $region15: #{tpu_custom_call.1} parent=11 // pred_region
          %173 = vsyncadd [#allocation8], 0
          %s174 = sshll.u32 %s1, 4
          %s175 = int_to_ptr.hbm [resolvable:$true] %s174
          %s176 = sshll.u32 [#allocation7], 4
          %s177 = int_to_ptr.vmem [resolvable:$true] %s176
          %182 = dma.hbm_to_vmem [thread:$0]  %s175, 9216, %s177, [#allocation8], 64, 64, 4
        $region16: #{tpu_custom_call.1} parent=11 // pred_fallthru
          _
        // Predicated region
        $region17: #{tpu_custom_call.1} parent=11 // pred_check
          %p183 = pneg %p86
        $region18: #{tpu_custom_call.1} parent=11 // pred_check_branch
          %185 = sbr.rel (%p183) target = $region20
        $region19: #{tpu_custom_call.1} parent=11 // pred_region
          %187 = vsyncadd [#allocation8], 0
          %s188 = sshll.u32 %s2, 4
          %s189 = int_to_ptr.hbm [resolvable:$true] %s188
          %s190 = sshll.u32 [#allocation9], 4
          %s191 = int_to_ptr.vmem [resolvable:$true] %s190
          %196 = dma.hbm_to_vmem [thread:$0]  %s189, 9216, %s191, [#allocation8], 64, 64, 4
        $region20: #{tpu_custom_call.1} parent=11 // pred_fallthru
          _
        // Predicated region
        $region21: #{tpu_custom_call.1} parent=11 // pred_check
          %p197 = pneg %p107
        $region22: #{tpu_custom_call.1} parent=11 // pred_check_branch
          %199 = sbr.rel (%p197) target = $region24
        $region23: #{tpu_custom_call.1} parent=11 // pred_region
          _
        $region24: #{tpu_custom_call.1} parent=11 // pred_fallthru
          _
        // Predicated region
        $region25: #{tpu_custom_call.1} parent=11 // pred_check
          %p200 = pneg %p128
        $region26: #{tpu_custom_call.1} parent=11 // pred_check_branch
          %202 = sbr.rel (%p200) target = $region28
        $region27: #{tpu_custom_call.1} parent=11 // pred_region
          _
        $region28: #{tpu_custom_call.1} parent=11 // pred_fallthru
          _
      $region12: #{tpu_custom_call.1} parent=5 // pred_fallthru
        _
      %p203 = scmp.lt.s32.totalorder %s18, 2
      // Predicated region
      $region29: #{tpu_custom_call.1} parent=5 // pred_check
        %p204 = pneg %p203
      $region30: #{tpu_custom_call.1} parent=5 // pred_check_branch
        %206 = sbr.rel (%p204) target = $region32
      $region31: #{tpu_custom_call.1} parent=5 // pred_region
        // Predicated region
        $region33: #{tpu_custom_call.1} parent=31 // pred_check
          %p207 = pneg %p38
        $region34: #{tpu_custom_call.1} parent=31 // pred_check_branch
          %209 = sbr.rel (%p207) target = $region36
        $region35: #{tpu_custom_call.1} parent=31 // pred_region
          %s210 = sand.u32 %s28, 1
          %s211 = scalar_lea.sflag [#allocation5], %s210
          %s212 = sand.u32 %s28, 1
          %s213 = smul.addr %s212, 256
          %s214 = scalar_lea.vmem [#allocation4], %s213
          %216 = vsyncadd %s211, 0
          %s217 = smul.addr %s18, 32
          %s218 = smul.addr %s217, 8
          %s219 = scalar_lea.hbm %s0, %s218
          %s220 = sshll.u32 %s219, 4
          %s221 = int_to_ptr.hbm [resolvable:$true] %s220
          %s222 = sshll.u32 %s214, 4
          %s223 = int_to_ptr.vmem [resolvable:$true] %s222
          %228 = dma.hbm_to_vmem [thread:$0]  %s221, 4096, %s223, %s211, 128, 128, 8
        $region36: #{tpu_custom_call.1} parent=31 // pred_fallthru
          _
      $region32: #{tpu_custom_call.1} parent=5 // pred_fallthru
        _
      %p229 = scmp.le.s32.totalorder 1, %s18
      %p230 = scmp.lt.s32.totalorder %s18, 3
      %p231 = pnand %p229, %p230
      %p232 = pneg %p231
      // Predicated region
      $region37: #{tpu_custom_call.1} parent=5 // pred_check
        _
      $region38: #{tpu_custom_call.1} parent=5 // pred_check_branch
        %234 = sbr.rel (%p231) target = $region40
      $region39: #{tpu_custom_call.1} parent=5 // pred_region
        %s235 = ssub.s32 %s18, 1
        %s236 = sand.u32 %s31, 1
        %s237 = scalar_lea.sflag [#allocation5], %s236
        %s238 = sand.u32 %s31, 1
        %s239 = smul.addr %s238, 256
        %s240 = scalar_lea.vmem [#allocation4], %s239
        // Predicated region
        $region41: #{tpu_custom_call.1} parent=39 // pred_check
          %p241 = pneg %p44
        $region42: #{tpu_custom_call.1} parent=39 // pred_check_branch
          %243 = sbr.rel (%p241) target = $region44
        $region43: #{tpu_custom_call.1} parent=39 // pred_region
          %245 = dma.done %s237, 4096
        $region44: #{tpu_custom_call.1} parent=39 // pred_fallthru
          _
        // Predicated region
        $region45: #{tpu_custom_call.1} parent=39 // pred_check
          %p246 = pneg %p65
        $region46: #{tpu_custom_call.1} parent=39 // pred_check_branch
          %248 = sbr.rel (%p246) target = $region48
        $region47: #{tpu_custom_call.1} parent=39 // pred_region
          %250 = dma.done [#allocation8], 9216
        $region48: #{tpu_custom_call.1} parent=39 // pred_fallthru
          _
        // Predicated region
        $region49: #{tpu_custom_call.1} parent=39 // pred_check
          %p251 = pneg %p86
        $region50: #{tpu_custom_call.1} parent=39 // pred_check_branch
          %253 = sbr.rel (%p251) target = $region52
        $region51: #{tpu_custom_call.1} parent=39 // pred_region
          %255 = dma.done [#allocation8], 9216
        $region52: #{tpu_custom_call.1} parent=39 // pred_fallthru
          _
        %s256 = sand.u32 %s31, 1
        %s257 = scalar_lea.sflag [#allocation5], %s256
        %s258 = sand.u32 %s31, 1
        %s259 = smul.addr %s258, 256
        %s260 = scalar_lea.vmem [#allocation4], %s259
        %p261 = pneg %p44
        %p262 = pneg %p41
        %p263 = pneg %p65
        %p264 = pneg %p62
        %p265 = pneg %p86
        %p266 = pneg %p83
        %p267 = pneg %p107
        %p268 = pneg %p104
        %p269 = pneg %p128
        %p270 = pneg %p125
        %p271 = pneg %p154
        %p272 = pneg %p151
        %s273 = sand.u32 %s141, 1
        %s274 = scalar_lea.sflag [#allocation6], %s273
        %s275 = sand.u32 %s141, 1
        %s276 = smul.addr %s275, 256
        %s277 = scalar_lea.vmem [#allocation10], %s276
        %v279 = vlaneseq
        %v280 = vshrl.u32 %v279, 7
        %v281 = vadd.s32 %v280, 8
        %v282 = vadd.s32 %v280, 16
        %v283 = vadd.s32 %v280, 24
        %v284 = vadd.s32 %v280, 32
        %v285 = vadd.s32 %v280, 40
        %v286 = vadd.s32 %v280, 48
        %v287 = vadd.s32 %v280, 56
        %v288 = vadd.s32 %v280, 64
        %v289 = vadd.s32 %v280, 72
        %v290 = vadd.s32 %v280, 80
        %v291 = vadd.s32 %v280, 88
        %v292 = vadd.s32 %v280, 96
        %v293 = vadd.s32 %v280, 104
        %v294 = vadd.s32 %v280, 112
        %v295 = vadd.s32 %v280, 120
        %v296 = vadd.s32 %v280, 128
        %v297 = vadd.s32 %v280, 136
        %v298 = vadd.s32 %v280, 144
        %v299 = vadd.s32 %v280, 152
        %v300 = vadd.s32 %v280, 160
        %v301 = vadd.s32 %v280, 168
        %v302 = vadd.s32 %v280, 176
        %v303 = vadd.s32 %v280, 184
        %v304 = vadd.s32 %v280, 192
        %v305 = vadd.s32 %v280, 200
        %v306 = vadd.s32 %v280, 208
        %v307 = vadd.s32 %v280, 216
        %v308 = vadd.s32 %v280, 224
        %v309 = vadd.s32 %v280, 232
        %v310 = vadd.s32 %v280, 240
        %v311 = vadd.s32 %v280, 248
        %vm312 = vcmp.lt.s32.totalorder %v280, 0
        %v313 = vsub.s32 0, %v280
        %v314 = vsel %vm312, %v313, %v280
        %v315 = vshrl.u32 %v314, 4
        %v316 = vand.u32 %v314, 15
        %v317 = vsub.s32 0, %v316
        %v318 = vsel %vm312, %v317, %v316
        %vm319 = vcmp.lt.s32.totalorder %v281, 0
        %v320 = vsub.s32 0, %v281
        %v321 = vsel %vm319, %v320, %v281
        %v322 = vshrl.u32 %v321, 4
        %v323 = vand.u32 %v321, 15
        %v324 = vsub.s32 0, %v323
        %v325 = vsel %vm319, %v324, %v323
        %vm326 = vcmp.lt.s32.totalorder %v282, 0
        %v327 = vsub.s32 0, %v282
        %v328 = vsel %vm326, %v327, %v282
        %v329 = vshrl.u32 %v328, 4
        %v330 = vand.u32 %v328, 15
        %v331 = vsub.s32 0, %v330
        %v332 = vsel %vm326, %v331, %v330
        %vm333 = vcmp.lt.s32.totalorder %v283, 0
        %v334 = vsub.s32 0, %v283
        %v335 = vsel %vm333, %v334, %v283
        %v336 = vshrl.u32 %v335, 4
        %v337 = vand.u32 %v335, 15
        %v338 = vsub.s32 0, %v337
        %v339 = vsel %vm333, %v338, %v337
        %vm340 = vcmp.lt.s32.totalorder %v284, 0
        %v341 = vsub.s32 0, %v284
        %v342 = vsel %vm340, %v341, %v284
        %v343 = vshrl.u32 %v342, 4
        %v344 = vand.u32 %v342, 15
        %v345 = vsub.s32 0, %v344
        %v346 = vsel %vm340, %v345, %v344
        %vm347 = vcmp.lt.s32.totalorder %v285, 0
        %v348 = vsub.s32 0, %v285
        %v349 = vsel %vm347, %v348, %v285
        %v350 = vshrl.u32 %v349, 4
        %v351 = vand.u32 %v349, 15
        %v352 = vsub.s32 0, %v351
        %v353 = vsel %vm347, %v352, %v351
        %vm354 = vcmp.lt.s32.totalorder %v286, 0
        %v355 = vsub.s32 0, %v286
        %v356 = vsel %vm354, %v355, %v286
        %v357 = vshrl.u32 %v356, 4
        %v358 = vand.u32 %v356, 15
        %v359 = vsub.s32 0, %v358
        %v360 = vsel %vm354, %v359, %v358
        %vm361 = vcmp.lt.s32.totalorder %v287, 0
        %v362 = vsub.s32 0, %v287
        %v363 = vsel %vm361, %v362, %v287
        %v364 = vshrl.u32 %v363, 4
        %v365 = vand.u32 %v363, 15
        %v366 = vsub.s32 0, %v365
        %v367 = vsel %vm361, %v366, %v365
        %vm368 = vcmp.lt.s32.totalorder %v288, 0
        %v369 = vsub.s32 0, %v288
        %v370 = vsel %vm368, %v369, %v288
        %v371 = vshrl.u32 %v370, 4
        %v372 = vand.u32 %v370, 15
        %v373 = vsub.s32 0, %v372
        %v374 = vsel %vm368, %v373, %v372
        %vm375 = vcmp.lt.s32.totalorder %v289, 0
        %v376 = vsub.s32 0, %v289
        %v377 = vsel %vm375, %v376, %v289
        %v378 = vshrl.u32 %v377, 4
        %v379 = vand.u32 %v377, 15
        %v380 = vsub.s32 0, %v379
        %v381 = vsel %vm375, %v380, %v379
        %vm382 = vcmp.lt.s32.totalorder %v290, 0
        %v383 = vsub.s32 0, %v290
        %v384 = vsel %vm382, %v383, %v290
        %v385 = vshrl.u32 %v384, 4
        %v386 = vand.u32 %v384, 15
        %v387 = vsub.s32 0, %v386
        %v388 = vsel %vm382, %v387, %v386
        %vm389 = vcmp.lt.s32.totalorder %v291, 0
        %v390 = vsub.s32 0, %v291
        %v391 = vsel %vm389, %v390, %v291
        %v392 = vshrl.u32 %v391, 4
        %v393 = vand.u32 %v391, 15
        %v394 = vsub.s32 0, %v393
        %v395 = vsel %vm389, %v394, %v393
        %vm396 = vcmp.lt.s32.totalorder %v292, 0
        %v397 = vsub.s32 0, %v292
        %v398 = vsel %vm396, %v397, %v292
        %v399 = vshrl.u32 %v398, 4
        %v400 = vand.u32 %v398, 15
        %v401 = vsub.s32 0, %v400
        %v402 = vsel %vm396, %v401, %v400
        %vm403 = vcmp.lt.s32.totalorder %v293, 0
        %v404 = vsub.s32 0, %v293
        %v405 = vsel %vm403, %v404, %v293
        %v406 = vshrl.u32 %v405, 4
        %v407 = vand.u32 %v405, 15
        %v408 = vsub.s32 0, %v407
        %v409 = vsel %vm403, %v408, %v407
        %vm410 = vcmp.lt.s32.totalorder %v294, 0
        %v411 = vsub.s32 0, %v294
        %v412 = vsel %vm410, %v411, %v294
        %v413 = vshrl.u32 %v412, 4
        %v414 = vand.u32 %v412, 15
        %v415 = vsub.s32 0, %v414
        %v416 = vsel %vm410, %v415, %v414
        %vm417 = vcmp.lt.s32.totalorder %v295, 0
        %v418 = vsub.s32 0, %v295
        %v419 = vsel %vm417, %v418, %v295
        %v420 = vshrl.u32 %v419, 4
        %v421 = vand.u32 %v419, 15
        %v422 = vsub.s32 0, %v421
        %v423 = vsel %vm417, %v422, %v421
        %vm424 = vcmp.lt.s32.totalorder %v296, 0
        %v425 = vsub.s32 0, %v296
        %v426 = vsel %vm424, %v425, %v296
        %v427 = vshrl.u32 %v426, 4
        %v428 = vand.u32 %v426, 15
        %v429 = vsub.s32 0, %v428
        %v430 = vsel %vm424, %v429, %v428
        %vm431 = vcmp.lt.s32.totalorder %v297, 0
        %v432 = vsub.s32 0, %v297
        %v433 = vsel %vm431, %v432, %v297
        %v434 = vshrl.u32 %v433, 4
        %v435 = vand.u32 %v433, 15
        %v436 = vsub.s32 0, %v435
        %v437 = vsel %vm431, %v436, %v435
        %vm438 = vcmp.lt.s32.totalorder %v298, 0
        %v439 = vsub.s32 0, %v298
        %v440 = vsel %vm438, %v439, %v298
        %v441 = vshrl.u32 %v440, 4
        %v442 = vand.u32 %v440, 15
        %v443 = vsub.s32 0, %v442
        %v444 = vsel %vm438, %v443, %v442
        %vm445 = vcmp.lt.s32.totalorder %v299, 0
        %v446 = vsub.s32 0, %v299
        %v447 = vsel %vm445, %v446, %v299
        %v448 = vshrl.u32 %v447, 4
        %v449 = vand.u32 %v447, 15
        %v450 = vsub.s32 0, %v449
        %v451 = vsel %vm445, %v450, %v449
        %vm452 = vcmp.lt.s32.totalorder %v300, 0
        %v453 = vsub.s32 0, %v300
        %v454 = vsel %vm452, %v453, %v300
        %v455 = vshrl.u32 %v454, 4
        %v456 = vand.u32 %v454, 15
        %v457 = vsub.s32 0, %v456
        %v458 = vsel %vm452, %v457, %v456
        %vm459 = vcmp.lt.s32.totalorder %v301, 0
        %v460 = vsub.s32 0, %v301
        %v461 = vsel %vm459, %v460, %v301
        %v462 = vshrl.u32 %v461, 4
        %v463 = vand.u32 %v461, 15
        %v464 = vsub.s32 0, %v463
        %v465 = vsel %vm459, %v464, %v463
        %vm466 = vcmp.lt.s32.totalorder %v302, 0
        %v467 = vsub.s32 0, %v302
        %v468 = vsel %vm466, %v467, %v302
        %v469 = vshrl.u32 %v468, 4
        %v470 = vand.u32 %v468, 15
        %v471 = vsub.s32 0, %v470
        %v472 = vsel %vm466, %v471, %v470
        %vm473 = vcmp.lt.s32.totalorder %v303, 0
        %v474 = vsub.s32 0, %v303
        %v475 = vsel %vm473, %v474, %v303
        %v476 = vshrl.u32 %v475, 4
        %v477 = vand.u32 %v475, 15
        %v478 = vsub.s32 0, %v477
        %v479 = vsel %vm473, %v478, %v477
        %vm480 = vcmp.lt.s32.totalorder %v304, 0
        %v481 = vsub.s32 0, %v304
        %v482 = vsel %vm480, %v481, %v304
        %v483 = vshrl.u32 %v482, 4
        %v484 = vand.u32 %v482, 15
        %v485 = vsub.s32 0, %v484
        %v486 = vsel %vm480, %v485, %v484
        %vm487 = vcmp.lt.s32.totalorder %v305, 0
        %v488 = vsub.s32 0, %v305
        %v489 = vsel %vm487, %v488, %v305
        %v490 = vshrl.u32 %v489, 4
        %v491 = vand.u32 %v489, 15
        %v492 = vsub.s32 0, %v491
        %v493 = vsel %vm487, %v492, %v491
        %vm494 = vcmp.lt.s32.totalorder %v306, 0
        %v495 = vsub.s32 0, %v306
        %v496 = vsel %vm494, %v495, %v306
        %v497 = vshrl.u32 %v496, 4
        %v498 = vand.u32 %v496, 15
        %v499 = vsub.s32 0, %v498
        %v500 = vsel %vm494, %v499, %v498
        %vm501 = vcmp.lt.s32.totalorder %v307, 0
        %v502 = vsub.s32 0, %v307
        %v503 = vsel %vm501, %v502, %v307
        %v504 = vshrl.u32 %v503, 4
        %v505 = vand.u32 %v503, 15
        %v506 = vsub.s32 0, %v505
        %v507 = vsel %vm501, %v506, %v505
        %vm508 = vcmp.lt.s32.totalorder %v308, 0
        %v509 = vsub.s32 0, %v308
        %v510 = vsel %vm508, %v509, %v308
        %v511 = vshrl.u32 %v510, 4
        %v512 = vand.u32 %v510, 15
        %v513 = vsub.s32 0, %v512
        %v514 = vsel %vm508, %v513, %v512
        %vm515 = vcmp.lt.s32.totalorder %v309, 0
        %v516 = vsub.s32 0, %v309
        %v517 = vsel %vm515, %v516, %v309
        %v518 = vshrl.u32 %v517, 4
        %v519 = vand.u32 %v517, 15
        %v520 = vsub.s32 0, %v519
        %v521 = vsel %vm515, %v520, %v519
        %vm522 = vcmp.lt.s32.totalorder %v310, 0
        %v523 = vsub.s32 0, %v310
        %v524 = vsel %vm522, %v523, %v310
        %v525 = vshrl.u32 %v524, 4
        %v526 = vand.u32 %v524, 15
        %v527 = vsub.s32 0, %v526
        %v528 = vsel %vm522, %v527, %v526
        %vm529 = vcmp.lt.s32.totalorder %v311, 0
        %v530 = vsub.s32 0, %v311
        %v531 = vsel %vm529, %v530, %v311
        %v532 = vshrl.u32 %v531, 4
        %v533 = vand.u32 %v531, 15
        %v534 = vsub.s32 0, %v533
        %v535 = vsel %vm529, %v534, %v533
        %vm536 = vcmp.ne.s32.totalorder %v318, 0
        %vm537 = vcmp.ne.s32.totalorder %v325, 0
        %vm538 = vcmp.ne.s32.totalorder %v332, 0
        %vm539 = vcmp.ne.s32.totalorder %v339, 0
        %vm540 = vcmp.ne.s32.totalorder %v346, 0
        %vm541 = vcmp.ne.s32.totalorder %v353, 0
        %vm542 = vcmp.ne.s32.totalorder %v360, 0
        %vm543 = vcmp.ne.s32.totalorder %v367, 0
        %vm544 = vcmp.ne.s32.totalorder %v374, 0
        %vm545 = vcmp.ne.s32.totalorder %v381, 0
        %vm546 = vcmp.ne.s32.totalorder %v388, 0
        %vm547 = vcmp.ne.s32.totalorder %v395, 0
        %vm548 = vcmp.ne.s32.totalorder %v402, 0
        %vm549 = vcmp.ne.s32.totalorder %v409, 0
        %vm550 = vcmp.ne.s32.totalorder %v416, 0
        %vm551 = vcmp.ne.s32.totalorder %v423, 0
        %vm552 = vcmp.ne.s32.totalorder %v430, 0
        %vm553 = vcmp.ne.s32.totalorder %v437, 0
        %vm554 = vcmp.ne.s32.totalorder %v444, 0
        %vm555 = vcmp.ne.s32.totalorder %v451, 0
        %vm556 = vcmp.ne.s32.totalorder %v458, 0
        %vm557 = vcmp.ne.s32.totalorder %v465, 0
        %vm558 = vcmp.ne.s32.totalorder %v472, 0
        %vm559 = vcmp.ne.s32.totalorder %v479, 0
        %vm560 = vcmp.ne.s32.totalorder %v486, 0
        %vm561 = vcmp.ne.s32.totalorder %v493, 0
        %vm562 = vcmp.ne.s32.totalorder %v500, 0
        %vm563 = vcmp.ne.s32.totalorder %v507, 0
        %vm564 = vcmp.ne.s32.totalorder %v514, 0
        %vm565 = vcmp.ne.s32.totalorder %v521, 0
        %vm566 = vcmp.ne.s32.totalorder %v528, 0
        %vm567 = vcmp.ne.s32.totalorder %v535, 0
        %vm568 = vcmp.lt.s32.totalorder %v318, 0
        %vm569 = vcmp.lt.s32.totalorder %v325, 0
        %vm570 = vcmp.lt.s32.totalorder %v332, 0
        %vm571 = vcmp.lt.s32.totalorder %v339, 0
        %vm572 = vcmp.lt.s32.totalorder %v346, 0
        %vm573 = vcmp.lt.s32.totalorder %v353, 0
        %vm574 = vcmp.lt.s32.totalorder %v360, 0
        %vm575 = vcmp.lt.s32.totalorder %v367, 0
        %vm576 = vcmp.lt.s32.totalorder %v374, 0
        %vm577 = vcmp.lt.s32.totalorder %v381, 0
        %vm578 = vcmp.lt.s32.totalorder %v388, 0
        %vm579 = vcmp.lt.s32.totalorder %v395, 0
        %vm580 = vcmp.lt.s32.totalorder %v402, 0
        %vm581 = vcmp.lt.s32.totalorder %v409, 0
        %vm582 = vcmp.lt.s32.totalorder %v416, 0
        %vm583 = vcmp.lt.s32.totalorder %v423, 0
        %vm584 = vcmp.lt.s32.totalorder %v430, 0
        %vm585 = vcmp.lt.s32.totalorder %v437, 0
        %vm586 = vcmp.lt.s32.totalorder %v444, 0
        %vm587 = vcmp.lt.s32.totalorder %v451, 0
        %vm588 = vcmp.lt.s32.totalorder %v458, 0
        %vm589 = vcmp.lt.s32.totalorder %v465, 0
        %vm590 = vcmp.lt.s32.totalorder %v472, 0
        %vm591 = vcmp.lt.s32.totalorder %v479, 0
        %vm592 = vcmp.lt.s32.totalorder %v486, 0
        %vm593 = vcmp.lt.s32.totalorder %v493, 0
        %vm594 = vcmp.lt.s32.totalorder %v500, 0
        %vm595 = vcmp.lt.s32.totalorder %v507, 0
        %vm596 = vcmp.lt.s32.totalorder %v514, 0
        %vm597 = vcmp.lt.s32.totalorder %v521, 0
        %vm598 = vcmp.lt.s32.totalorder %v528, 0
        %vm599 = vcmp.lt.s32.totalorder %v535, 0
        %vm600 = vmand %vm568, %vm536
        %vm601 = vmand %vm569, %vm537
        %vm602 = vmand %vm570, %vm538
        %vm603 = vmand %vm571, %vm539
        %vm604 = vmand %vm572, %vm540
        %vm605 = vmand %vm573, %vm541
        %vm606 = vmand %vm574, %vm542
        %vm607 = vmand %vm575, %vm543
        %vm608 = vmand %vm576, %vm544
        %vm609 = vmand %vm577, %vm545
        %vm610 = vmand %vm578, %vm546
        %vm611 = vmand %vm579, %vm547
        %vm612 = vmand %vm580, %vm548
        %vm613 = vmand %vm581, %vm549
        %vm614 = vmand %vm582, %vm550
        %vm615 = vmand %vm583, %vm551
        %vm616 = vmand %vm584, %vm552
        %vm617 = vmand %vm585, %vm553
        %vm618 = vmand %vm586, %vm554
        %vm619 = vmand %vm587, %vm555
        %vm620 = vmand %vm588, %vm556
        %vm621 = vmand %vm589, %vm557
        %vm622 = vmand %vm590, %vm558
        %vm623 = vmand %vm591, %vm559
        %vm624 = vmand %vm592, %vm560
        %vm625 = vmand %vm593, %vm561
        %vm626 = vmand %vm594, %vm562
        %vm627 = vmand %vm595, %vm563
        %vm628 = vmand %vm596, %vm564
        %vm629 = vmand %vm597, %vm565
        %vm630 = vmand %vm598, %vm566
        %vm631 = vmand %vm599, %vm567
        %v632 = vadd.s32 %v318, 16
        %v633 = vadd.s32 %v325, 16
        %v634 = vadd.s32 %v332, 16
        %v635 = vadd.s32 %v339, 16
        %v636 = vadd.s32 %v346, 16
        %v637 = vadd.s32 %v353, 16
        %v638 = vadd.s32 %v360, 16
        %v639 = vadd.s32 %v367, 16
        %v640 = vadd.s32 %v374, 16
        %v641 = vadd.s32 %v381, 16
        %v642 = vadd.s32 %v388, 16
        %v643 = vadd.s32 %v395, 16
        %v644 = vadd.s32 %v402, 16
        %v645 = vadd.s32 %v409, 16
        %v646 = vadd.s32 %v416, 16
        %v647 = vadd.s32 %v423, 16
        %v648 = vadd.s32 %v430, 16
        %v649 = vadd.s32 %v437, 16
        %v650 = vadd.s32 %v444, 16
        %v651 = vadd.s32 %v451, 16
        %v652 = vadd.s32 %v458, 16
        %v653 = vadd.s32 %v465, 16
        %v654 = vadd.s32 %v472, 16
        %v655 = vadd.s32 %v479, 16
        %v656 = vadd.s32 %v486, 16
        %v657 = vadd.s32 %v493, 16
        %v658 = vadd.s32 %v500, 16
        %v659 = vadd.s32 %v507, 16
        %v660 = vadd.s32 %v514, 16
        %v661 = vadd.s32 %v521, 16
        %v662 = vadd.s32 %v528, 16
        %v663 = vadd.s32 %v535, 16
        %v664 = vsel %vm600, %v632, %v318
        %v665 = vsel %vm601, %v633, %v325
        %v666 = vsel %vm602, %v634, %v332
        %v667 = vsel %vm603, %v635, %v339
        %v668 = vsel %vm604, %v636, %v346
        %v669 = vsel %vm605, %v637, %v353
        %v670 = vsel %vm606, %v638, %v360
        %v671 = vsel %vm607, %v639, %v367
        %v672 = vsel %vm608, %v640, %v374
        %v673 = vsel %vm609, %v641, %v381
        %v674 = vsel %vm610, %v642, %v388
        %v675 = vsel %vm611, %v643, %v395
        %v676 = vsel %vm612, %v644, %v402
        %v677 = vsel %vm613, %v645, %v409
        %v678 = vsel %vm614, %v646, %v416
        %v679 = vsel %vm615, %v647, %v423
        %v680 = vsel %vm616, %v648, %v430
        %v681 = vsel %vm617, %v649, %v437
        %v682 = vsel %vm618, %v650, %v444
        %v683 = vsel %vm619, %v651, %v451
        %v684 = vsel %vm620, %v652, %v458
        %v685 = vsel %vm621, %v653, %v465
        %v686 = vsel %vm622, %v654, %v472
        %v687 = vsel %vm623, %v655, %v479
        %v688 = vsel %vm624, %v656, %v486
        %v689 = vsel %vm625, %v657, %v493
        %v690 = vsel %vm626, %v658, %v500
        %v691 = vsel %vm627, %v659, %v507
        %v692 = vsel %vm628, %v660, %v514
        %v693 = vsel %vm629, %v661, %v521
        %v694 = vsel %vm630, %v662, %v528
        %v695 = vsel %vm631, %v663, %v535
        %vm696 = vcmp.gt.s32.totalorder %v664, 0
        %vm697 = vcmp.gt.s32.totalorder %v665, 0
        %vm698 = vcmp.gt.s32.totalorder %v666, 0
        %vm699 = vcmp.gt.s32.totalorder %v667, 0
        %vm700 = vcmp.gt.s32.totalorder %v668, 0
        %vm701 = vcmp.gt.s32.totalorder %v669, 0
        %vm702 = vcmp.gt.s32.totalorder %v670, 0
        %vm703 = vcmp.gt.s32.totalorder %v671, 0
        %vm704 = vcmp.gt.s32.totalorder %v672, 0
        %vm705 = vcmp.gt.s32.totalorder %v673, 0
        %vm706 = vcmp.gt.s32.totalorder %v674, 0
        %vm707 = vcmp.gt.s32.totalorder %v675, 0
        %vm708 = vcmp.gt.s32.totalorder %v676, 0
        %vm709 = vcmp.gt.s32.totalorder %v677, 0
        %vm710 = vcmp.gt.s32.totalorder %v678, 0
        %vm711 = vcmp.gt.s32.totalorder %v679, 0
        %vm712 = vcmp.gt.s32.totalorder %v680, 0
        %vm713 = vcmp.gt.s32.totalorder %v681, 0
        %vm714 = vcmp.gt.s32.totalorder %v682, 0
        %vm715 = vcmp.gt.s32.totalorder %v683, 0
        %vm716 = vcmp.gt.s32.totalorder %v684, 0
        %vm717 = vcmp.gt.s32.totalorder %v685, 0
        %vm718 = vcmp.gt.s32.totalorder %v686, 0
        %vm719 = vcmp.gt.s32.totalorder %v687, 0
        %vm720 = vcmp.gt.s32.totalorder %v688, 0
        %vm721 = vcmp.gt.s32.totalorder %v689, 0
        %vm722 = vcmp.gt.s32.totalorder %v690, 0
        %vm723 = vcmp.gt.s32.totalorder %v691, 0
        %vm724 = vcmp.gt.s32.totalorder %v692, 0
        %vm725 = vcmp.gt.s32.totalorder %v693, 0
        %vm726 = vcmp.gt.s32.totalorder %v694, 0
        %vm727 = vcmp.gt.s32.totalorder %v695, 0
        %v728 = vsel %vm696, 1, 0
        %v729 = vsel %vm697, 1, 0
        %v730 = vsel %vm698, 1, 0
        %v731 = vsel %vm699, 1, 0
        %v732 = vsel %vm700, 1, 0
        %v733 = vsel %vm701, 1, 0
        %v734 = vsel %vm702, 1, 0
        %v735 = vsel %vm703, 1, 0
        %v736 = vsel %vm704, 1, 0
        %v737 = vsel %vm705, 1, 0
        %v738 = vsel %vm706, 1, 0
        %v739 = vsel %vm707, 1, 0
        %v740 = vsel %vm708, 1, 0
        %v741 = vsel %vm709, 1, 0
        %v742 = vsel %vm710, 1, 0
        %v743 = vsel %vm711, 1, 0
        %v744 = vsel %vm712, 1, 0
        %v745 = vsel %vm713, 1, 0
        %v746 = vsel %vm714, 1, 0
        %v747 = vsel %vm715, 1, 0
        %v748 = vsel %vm716, 1, 0
        %v749 = vsel %vm717, 1, 0
        %v750 = vsel %vm718, 1, 0
        %v751 = vsel %vm719, 1, 0
        %v752 = vsel %vm720, 1, 0
        %v753 = vsel %vm721, 1, 0
        %v754 = vsel %vm722, 1, 0
        %v755 = vsel %vm723, 1, 0
        %v756 = vsel %vm724, 1, 0
        %v757 = vsel %vm725, 1, 0
        %v758 = vsel %vm726, 1, 0
        %v759 = vsel %vm727, 1, 0
        %vm760 = vcmp.eq.s32.totalorder %v728, 1
        %vm761 = vcmp.eq.s32.totalorder %v729, 1
        %vm762 = vcmp.eq.s32.totalorder %v730, 1
        %vm763 = vcmp.eq.s32.totalorder %v731, 1
        %vm764 = vcmp.eq.s32.totalorder %v732, 1
        %vm765 = vcmp.eq.s32.totalorder %v733, 1
        %vm766 = vcmp.eq.s32.totalorder %v734, 1
        %vm767 = vcmp.eq.s32.totalorder %v735, 1
        %vm768 = vcmp.eq.s32.totalorder %v736, 1
        %vm769 = vcmp.eq.s32.totalorder %v737, 1
        %vm770 = vcmp.eq.s32.totalorder %v738, 1
        %vm771 = vcmp.eq.s32.totalorder %v739, 1
        %vm772 = vcmp.eq.s32.totalorder %v740, 1
        %vm773 = vcmp.eq.s32.totalorder %v741, 1
        %vm774 = vcmp.eq.s32.totalorder %v742, 1
        %vm775 = vcmp.eq.s32.totalorder %v743, 1
        %vm776 = vcmp.eq.s32.totalorder %v744, 1
        %vm777 = vcmp.eq.s32.totalorder %v745, 1
        %vm778 = vcmp.eq.s32.totalorder %v746, 1
        %vm779 = vcmp.eq.s32.totalorder %v747, 1
        %vm780 = vcmp.eq.s32.totalorder %v748, 1
        %vm781 = vcmp.eq.s32.totalorder %v749, 1
        %vm782 = vcmp.eq.s32.totalorder %v750, 1
        %vm783 = vcmp.eq.s32.totalorder %v751, 1
        %vm784 = vcmp.eq.s32.totalorder %v752, 1
        %vm785 = vcmp.eq.s32.totalorder %v753, 1
        %vm786 = vcmp.eq.s32.totalorder %v754, 1
        %vm787 = vcmp.eq.s32.totalorder %v755, 1
        %vm788 = vcmp.eq.s32.totalorder %v756, 1
        %vm789 = vcmp.eq.s32.totalorder %v757, 1
        %vm790 = vcmp.eq.s32.totalorder %v758, 1
        %vm791 = vcmp.eq.s32.totalorder %v759, 1
        %vm792 = vcmp.lt.s32.totalorder %v664, 15
        %vm793 = vcmp.lt.s32.totalorder %v665, 15
        %vm794 = vcmp.lt.s32.totalorder %v666, 15
        %vm795 = vcmp.lt.s32.totalorder %v667, 15
        %vm796 = vcmp.lt.s32.totalorder %v668, 15
        %vm797 = vcmp.lt.s32.totalorder %v669, 15
        %vm798 = vcmp.lt.s32.totalorder %v670, 15
        %vm799 = vcmp.lt.s32.totalorder %v671, 15
        %vm800 = vcmp.lt.s32.totalorder %v672, 15
        %vm801 = vcmp.lt.s32.totalorder %v673, 15
        %vm802 = vcmp.lt.s32.totalorder %v674, 15
        %vm803 = vcmp.lt.s32.totalorder %v675, 15
        %vm804 = vcmp.lt.s32.totalorder %v676, 15
        %vm805 = vcmp.lt.s32.totalorder %v677, 15
        %vm806 = vcmp.lt.s32.totalorder %v678, 15
        %vm807 = vcmp.lt.s32.totalorder %v679, 15
        %vm808 = vcmp.lt.s32.totalorder %v680, 15
        %vm809 = vcmp.lt.s32.totalorder %v681, 15
        %vm810 = vcmp.lt.s32.totalorder %v682, 15
        %vm811 = vcmp.lt.s32.totalorder %v683, 15
        %vm812 = vcmp.lt.s32.totalorder %v684, 15
        %vm813 = vcmp.lt.s32.totalorder %v685, 15
        %vm814 = vcmp.lt.s32.totalorder %v686, 15
        %vm815 = vcmp.lt.s32.totalorder %v687, 15
        %vm816 = vcmp.lt.s32.totalorder %v688, 15
        %vm817 = vcmp.lt.s32.totalorder %v689, 15
        %vm818 = vcmp.lt.s32.totalorder %v690, 15
        %vm819 = vcmp.lt.s32.totalorder %v691, 15
        %vm820 = vcmp.lt.s32.totalorder %v692, 15
        %vm821 = vcmp.lt.s32.totalorder %v693, 15
        %vm822 = vcmp.lt.s32.totalorder %v694, 15
        %vm823 = vcmp.lt.s32.totalorder %v695, 15
        %v824 = vsel %vm792, 1, 0
        %v825 = vsel %vm793, 1, 0
        %v826 = vsel %vm794, 1, 0
        %v827 = vsel %vm795, 1, 0
        %v828 = vsel %vm796, 1, 0
        %v829 = vsel %vm797, 1, 0
        %v830 = vsel %vm798, 1, 0
        %v831 = vsel %vm799, 1, 0
        %v832 = vsel %vm800, 1, 0
        %v833 = vsel %vm801, 1, 0
        %v834 = vsel %vm802, 1, 0
        %v835 = vsel %vm803, 1, 0
        %v836 = vsel %vm804, 1, 0
        %v837 = vsel %vm805, 1, 0
        %v838 = vsel %vm806, 1, 0
        %v839 = vsel %vm807, 1, 0
        %v840 = vsel %vm808, 1, 0
        %v841 = vsel %vm809, 1, 0
        %v842 = vsel %vm810, 1, 0
        %v843 = vsel %vm811, 1, 0
        %v844 = vsel %vm812, 1, 0
        %v845 = vsel %vm813, 1, 0
        %v846 = vsel %vm814, 1, 0
        %v847 = vsel %vm815, 1, 0
        %v848 = vsel %vm816, 1, 0
        %v849 = vsel %vm817, 1, 0
        %v850 = vsel %vm818, 1, 0
        %v851 = vsel %vm819, 1, 0
        %v852 = vsel %vm820, 1, 0
        %v853 = vsel %vm821, 1, 0
        %v854 = vsel %vm822, 1, 0
        %v855 = vsel %vm823, 1, 0
        %vm856 = vcmp.eq.s32.totalorder %v824, 1
        %vm857 = vcmp.eq.s32.totalorder %v825, 1
        %vm858 = vcmp.eq.s32.totalorder %v826, 1
        %vm859 = vcmp.eq.s32.totalorder %v827, 1
        %vm860 = vcmp.eq.s32.totalorder %v828, 1
        %vm861 = vcmp.eq.s32.totalorder %v829, 1
        %vm862 = vcmp.eq.s32.totalorder %v830, 1
        %vm863 = vcmp.eq.s32.totalorder %v831, 1
        %vm864 = vcmp.eq.s32.totalorder %v832, 1
        %vm865 = vcmp.eq.s32.totalorder %v833, 1
        %vm866 = vcmp.eq.s32.totalorder %v834, 1
        %vm867 = vcmp.eq.s32.totalorder %v835, 1
        %vm868 = vcmp.eq.s32.totalorder %v836, 1
        %vm869 = vcmp.eq.s32.totalorder %v837, 1
        %vm870 = vcmp.eq.s32.totalorder %v838, 1
        %vm871 = vcmp.eq.s32.totalorder %v839, 1
        %vm872 = vcmp.eq.s32.totalorder %v840, 1
        %vm873 = vcmp.eq.s32.totalorder %v841, 1
        %vm874 = vcmp.eq.s32.totalorder %v842, 1
        %vm875 = vcmp.eq.s32.totalorder %v843, 1
        %vm876 = vcmp.eq.s32.totalorder %v844, 1
        %vm877 = vcmp.eq.s32.totalorder %v845, 1
        %vm878 = vcmp.eq.s32.totalorder %v846, 1
        %vm879 = vcmp.eq.s32.totalorder %v847, 1
        %vm880 = vcmp.eq.s32.totalorder %v848, 1
        %vm881 = vcmp.eq.s32.totalorder %v849, 1
        %vm882 = vcmp.eq.s32.totalorder %v850, 1
        %vm883 = vcmp.eq.s32.totalorder %v851, 1
        %vm884 = vcmp.eq.s32.totalorder %v852, 1
        %vm885 = vcmp.eq.s32.totalorder %v853, 1
        %vm886 = vcmp.eq.s32.totalorder %v854, 1
        %vm887 = vcmp.eq.s32.totalorder %v855, 1
        %p888 = scmp.eq.s32.totalorder %s23, 0
        // Predicated region
        $region53: #{tpu_custom_call.1} parent=39 // pred_check
          %p889 = pneg %p888
        $region54: #{tpu_custom_call.1} parent=39 // pred_check_branch
          %891 = sbr.rel (%p889) target = $region56
        $region55: #{tpu_custom_call.1} parent=39 // pred_region
          %892 = vst [vmem:[#allocation2] sm:$0xff] 0.0
          %893 = vst [vmem:[#allocation2 + $0x8] sm:$0xff] 0.0
          %894 = vst [vmem:[#allocation2 + $0x10] sm:$0xff] 0.0
          %895 = vst [vmem:[#allocation2 + $0x18] sm:$0xff] 0.0
          %896 = vst [vmem:[#allocation2 + $0x120] sm:$0xff] 0.0
          %897 = vst [vmem:[#allocation2 + $0x128] sm:$0xff] 0.0
          %898 = vst [vmem:[#allocation2 + $0x130] sm:$0xff] 0.0
          %899 = vst [vmem:[#allocation2 + $0x138] sm:$0xff] 0.0
        $region56: #{tpu_custom_call.1} parent=39 // pred_fallthru
          _
        %v900 = vld [vmem:[%s240] sm:$0xff]
        %v901 = vld [vmem:[%s240 + $0x8] sm:$0xff]
        %v902 = vld [vmem:[%s240 + $0x10] sm:$0xff]
        %v903 = vld [vmem:[%s240 + $0x18] sm:$0xff]
        %v904 = vld [vmem:[%s240 + $0x20] sm:$0xff]
        %v905 = vld [vmem:[%s240 + $0x28] sm:$0xff]
        %v906 = vld [vmem:[%s240 + $0x30] sm:$0xff]
        %v907 = vld [vmem:[%s240 + $0x38] sm:$0xff]
        %v908 = vld [vmem:[%s240 + $0x40] sm:$0xff]
        %v909 = vld [vmem:[%s240 + $0x48] sm:$0xff]
        %v910 = vld [vmem:[%s240 + $0x50] sm:$0xff]
        %v911 = vld [vmem:[%s240 + $0x58] sm:$0xff]
        %v912 = vld [vmem:[%s240 + $0x60] sm:$0xff]
        %v913 = vld [vmem:[%s240 + $0x68] sm:$0xff]
        %v914 = vld [vmem:[%s240 + $0x70] sm:$0xff]
        %v915 = vld [vmem:[%s240 + $0x78] sm:$0xff]
        %v916 = vld [vmem:[%s240 + $0x80] sm:$0xff]
        %v917 = vld [vmem:[%s240 + $0x88] sm:$0xff]
        %v918 = vld [vmem:[%s240 + $0x90] sm:$0xff]
        %v919 = vld [vmem:[%s240 + $0x98] sm:$0xff]
        %v920 = vld [vmem:[%s240 + $0xa0] sm:$0xff]
        %v921 = vld [vmem:[%s240 + $0xa8] sm:$0xff]
        %v922 = vld [vmem:[%s240 + $0xb0] sm:$0xff]
        %v923 = vld [vmem:[%s240 + $0xb8] sm:$0xff]
        %v924 = vld [vmem:[%s240 + $0xc0] sm:$0xff]
        %v925 = vld [vmem:[%s240 + $0xc8] sm:$0xff]
        %v926 = vld [vmem:[%s240 + $0xd0] sm:$0xff]
        %v927 = vld [vmem:[%s240 + $0xd8] sm:$0xff]
        %v928 = vld [vmem:[%s240 + $0xe0] sm:$0xff]
        %v929 = vld [vmem:[%s240 + $0xe8] sm:$0xff]
        %v930 = vld [vmem:[%s240 + $0xf0] sm:$0xff]
        %v931 = vld [vmem:[%s240 + $0xf8] sm:$0xff]
        %932 = vst [vmem:[#allocation2 + $0x20] sm:$0xff] %v900
        %933 = vst [vmem:[#allocation2 + $0x28] sm:$0xff] %v901
        %934 = vst [vmem:[#allocation2 + $0x30] sm:$0xff] %v902
        %935 = vst [vmem:[#allocation2 + $0x38] sm:$0xff] %v903
        %936 = vst [vmem:[#allocation2 + $0x40] sm:$0xff] %v904
        %937 = vst [vmem:[#allocation2 + $0x48] sm:$0xff] %v905
        %938 = vst [vmem:[#allocation2 + $0x50] sm:$0xff] %v906
        %939 = vst [vmem:[#allocation2 + $0x58] sm:$0xff] %v907
        %940 = vst [vmem:[#allocation2 + $0x60] sm:$0xff] %v908
        %941 = vst [vmem:[#allocation2 + $0x68] sm:$0xff] %v909
        %942 = vst [vmem:[#allocation2 + $0x70] sm:$0xff] %v910
        %943 = vst [vmem:[#allocation2 + $0x78] sm:$0xff] %v911
        %944 = vst [vmem:[#allocation2 + $0x80] sm:$0xff] %v912
        %945 = vst [vmem:[#allocation2 + $0x88] sm:$0xff] %v913
        %946 = vst [vmem:[#allocation2 + $0x90] sm:$0xff] %v914
        %947 = vst [vmem:[#allocation2 + $0x98] sm:$0xff] %v915
        %948 = vst [vmem:[#allocation2 + $0xa0] sm:$0xff] %v916
        %949 = vst [vmem:[#allocation2 + $0xa8] sm:$0xff] %v917
        %950 = vst [vmem:[#allocation2 + $0xb0] sm:$0xff] %v918
        %951 = vst [vmem:[#allocation2 + $0xb8] sm:$0xff] %v919
        %952 = vst [vmem:[#allocation2 + $0xc0] sm:$0xff] %v920
        %953 = vst [vmem:[#allocation2 + $0xc8] sm:$0xff] %v921
        %954 = vst [vmem:[#allocation2 + $0xd0] sm:$0xff] %v922
        %955 = vst [vmem:[#allocation2 + $0xd8] sm:$0xff] %v923
        %956 = vst [vmem:[#allocation2 + $0xe0] sm:$0xff] %v924
        %957 = vst [vmem:[#allocation2 + $0xe8] sm:$0xff] %v925
        %958 = vst [vmem:[#allocation2 + $0xf0] sm:$0xff] %v926
        %959 = vst [vmem:[#allocation2 + $0xf8] sm:$0xff] %v927
        %960 = vst [vmem:[#allocation2 + $0x100] sm:$0xff] %v928
        %961 = vst [vmem:[#allocation2 + $0x108] sm:$0xff] %v929
        %962 = vst [vmem:[#allocation2 + $0x110] sm:$0xff] %v930
        %963 = vst [vmem:[#allocation2 + $0x118] sm:$0xff] %v931
        %v964 = vld [vmem:[#allocation2 + $0xf] sm:$0xff]
        %v965 = vld [vmem:[#allocation2 + $0x17] sm:$0xff]
        %v966 = vld [vmem:[#allocation2 + $0x1f] sm:$0xff]
        %v967 = vld [vmem:[#allocation2 + $0x27] sm:$0xff]
        %v968 = vld [vmem:[#allocation2 + $0x2f] sm:$0xff]
        %v969 = vld [vmem:[#allocation2 + $0x37] sm:$0xff]
        %v970 = vld [vmem:[#allocation2 + $0x3f] sm:$0xff]
        %v971 = vld [vmem:[#allocation2 + $0x47] sm:$0xff]
        %v972 = vld [vmem:[#allocation2 + $0x4f] sm:$0xff]
        %v973 = vld [vmem:[#allocation2 + $0x57] sm:$0xff]
        %v974 = vld [vmem:[#allocation2 + $0x5f] sm:$0xff]
        %v975 = vld [vmem:[#allocation2 + $0x67] sm:$0xff]
        %v976 = vld [vmem:[#allocation2 + $0x6f] sm:$0xff]
        %v977 = vld [vmem:[#allocation2 + $0x77] sm:$0xff]
        %v978 = vld [vmem:[#allocation2 + $0x7f] sm:$0xff]
        %v979 = vld [vmem:[#allocation2 + $0x87] sm:$0xff]
        %v980 = vld [vmem:[#allocation2 + $0x8f] sm:$0xff]
        %v981 = vld [vmem:[#allocation2 + $0x97] sm:$0xff]
        %v982 = vld [vmem:[#allocation2 + $0x9f] sm:$0xff]
        %v983 = vld [vmem:[#allocation2 + $0xa7] sm:$0xff]
        %v984 = vld [vmem:[#allocation2 + $0xaf] sm:$0xff]
        %v985 = vld [vmem:[#allocation2 + $0xb7] sm:$0xff]
        %v986 = vld [vmem:[#allocation2 + $0xbf] sm:$0xff]
        %v987 = vld [vmem:[#allocation2 + $0xc7] sm:$0xff]
        %v988 = vld [vmem:[#allocation2 + $0xcf] sm:$0xff]
        %v989 = vld [vmem:[#allocation2 + $0xd7] sm:$0xff]
        %v990 = vld [vmem:[#allocation2 + $0xdf] sm:$0xff]
        %v991 = vld [vmem:[#allocation2 + $0xe7] sm:$0xff]
        %v992 = vld [vmem:[#allocation2 + $0xef] sm:$0xff]
        %v993 = vld [vmem:[#allocation2 + $0xf7] sm:$0xff]
        %v994 = vld [vmem:[#allocation2 + $0xff] sm:$0xff]
        %v995 = vld [vmem:[#allocation2 + $0x107] sm:$0xff]
        %v996 = vsel %vm760, %v964, 0.0
        %v997 = vsel %vm761, %v965, 0.0
        %v998 = vsel %vm762, %v966, 0.0
        %v999 = vsel %vm763, %v967, 0.0
        %v1000 = vsel %vm764, %v968, 0.0
        %v1001 = vsel %vm765, %v969, 0.0
        %v1002 = vsel %vm766, %v970, 0.0
        %v1003 = vsel %vm767, %v971, 0.0
        %v1004 = vsel %vm768, %v972, 0.0
        %v1005 = vsel %vm769, %v973, 0.0
        %v1006 = vsel %vm770, %v974, 0.0
        %v1007 = vsel %vm771, %v975, 0.0
        %v1008 = vsel %vm772, %v976, 0.0
        %v1009 = vsel %vm773, %v977, 0.0
        %v1010 = vsel %vm774, %v978, 0.0
        %v1011 = vsel %vm775, %v979, 0.0
        %v1012 = vsel %vm776, %v980, 0.0
        %v1013 = vsel %vm777, %v981, 0.0
        %v1014 = vsel %vm778, %v982, 0.0
        %v1015 = vsel %vm779, %v983, 0.0
        %v1016 = vsel %vm780, %v984, 0.0
        %v1017 = vsel %vm781, %v985, 0.0
        %v1018 = vsel %vm782, %v986, 0.0
        %v1019 = vsel %vm783, %v987, 0.0
        %v1020 = vsel %vm784, %v988, 0.0
        %v1021 = vsel %vm785, %v989, 0.0
        %v1022 = vsel %vm786, %v990, 0.0
        %v1023 = vsel %vm787, %v991, 0.0
        %v1024 = vsel %vm788, %v992, 0.0
        %v1025 = vsel %vm789, %v993, 0.0
        %v1026 = vsel %vm790, %v994, 0.0
        %v1027 = vsel %vm791, %v995, 0.0
        %v1028 = vpack.c.bf16 %v996, %v996
        %v1029 = vpack.c.bf16 %v997, %v997
        %v1030 = vpack.c.bf16 %v998, %v998
        %v1031 = vpack.c.bf16 %v999, %v999
        %v1032 = vpack.c.bf16 %v1000, %v1000
        %v1033 = vpack.c.bf16 %v1001, %v1001
        %v1034 = vpack.c.bf16 %v1002, %v1002
        %v1035 = vpack.c.bf16 %v1003, %v1003
        %v1036 = vpack.c.bf16 %v1004, %v1004
        %v1037 = vpack.c.bf16 %v1005, %v1005
        %v1038 = vpack.c.bf16 %v1006, %v1006
        %v1039 = vpack.c.bf16 %v1007, %v1007
        %v1040 = vpack.c.bf16 %v1008, %v1008
        %v1041 = vpack.c.bf16 %v1009, %v1009
        %v1042 = vpack.c.bf16 %v1010, %v1010
        %v1043 = vpack.c.bf16 %v1011, %v1011
        %v1044 = vpack.c.bf16 %v1012, %v1012
        %v1045 = vpack.c.bf16 %v1013, %v1013
        %v1046 = vpack.c.bf16 %v1014, %v1014
        %v1047 = vpack.c.bf16 %v1015, %v1015
        %v1048 = vpack.c.bf16 %v1016, %v1016
        %v1049 = vpack.c.bf16 %v1017, %v1017
        %v1050 = vpack.c.bf16 %v1018, %v1018
        %v1051 = vpack.c.bf16 %v1019, %v1019
        %v1052 = vpack.c.bf16 %v1020, %v1020
        %v1053 = vpack.c.bf16 %v1021, %v1021
        %v1054 = vpack.c.bf16 %v1022, %v1022
        %v1055 = vpack.c.bf16 %v1023, %v1023
        %v1056 = vpack.c.bf16 %v1024, %v1024
        %v1057 = vpack.c.bf16 %v1025, %v1025
        %v1058 = vpack.c.bf16 %v1026, %v1026
        %v1059 = vpack.c.bf16 %v1027, %v1027
        %1060 = vst [vmem:[#allocation3] sm:$0xf] %v1028
        %1061 = vst [vmem:[#allocation3 + $0x24] sm:$0xf] %v1029
        %1062 = vst [vmem:[#allocation3 + $0x48] sm:$0xf] %v1030
        %1063 = vst [vmem:[#allocation3 + $0x6c] sm:$0xf] %v1031
        %1064 = vst [vmem:[#allocation3 + $0x90] sm:$0xf] %v1032
        %1065 = vst [vmem:[#allocation3 + $0xb4] sm:$0xf] %v1033
        %1066 = vst [vmem:[#allocation3 + $0xd8] sm:$0xf] %v1034
        %1067 = vst [vmem:[#allocation3 + $0xfc] sm:$0xf] %v1035
        %1068 = vst [vmem:[#allocation3 + $0x120] sm:$0xf] %v1036
        %1069 = vst [vmem:[#allocation3 + $0x144] sm:$0xf] %v1037
        %1070 = vst [vmem:[#allocation3 + $0x168] sm:$0xf] %v1038
        %1071 = vst [vmem:[#allocation3 + $0x18c] sm:$0xf] %v1039
        %1072 = vst [vmem:[#allocation3 + $0x1b0] sm:$0xf] %v1040
        %1073 = vst [vmem:[#allocation3 + $0x1d4] sm:$0xf] %v1041
        %1074 = vst [vmem:[#allocation3 + $0x1f8] sm:$0xf] %v1042
        %1075 = vst [vmem:[#allocation3 + $0x21c] sm:$0xf] %v1043
        %1076 = vst [vmem:[#allocation3 + $0x240] sm:$0xf] %v1044
        %1077 = vst [vmem:[#allocation3 + $0x264] sm:$0xf] %v1045
        %1078 = vst [vmem:[#allocation3 + $0x288] sm:$0xf] %v1046
        %1079 = vst [vmem:[#allocation3 + $0x2ac] sm:$0xf] %v1047
        %1080 = vst [vmem:[#allocation3 + $0x2d0] sm:$0xf] %v1048
        %1081 = vst [vmem:[#allocation3 + $0x2f4] sm:$0xf] %v1049
        %1082 = vst [vmem:[#allocation3 + $0x318] sm:$0xf] %v1050
        %1083 = vst [vmem:[#allocation3 + $0x33c] sm:$0xf] %v1051
        %1084 = vst [vmem:[#allocation3 + $0x360] sm:$0xf] %v1052
        %1085 = vst [vmem:[#allocation3 + $0x384] sm:$0xf] %v1053
        %1086 = vst [vmem:[#allocation3 + $0x3a8] sm:$0xf] %v1054
        %1087 = vst [vmem:[#allocation3 + $0x3cc] sm:$0xf] %v1055
        %1088 = vst [vmem:[#allocation3 + $0x3f0] sm:$0xf] %v1056
        %1089 = vst [vmem:[#allocation3 + $0x414] sm:$0xf] %v1057
        %1090 = vst [vmem:[#allocation3 + $0x438] sm:$0xf] %v1058
        %1091 = vst [vmem:[#allocation3 + $0x45c] sm:$0xf] %v1059
        %v1092 = vld [vmem:[#allocation2 + $0x10] sm:$0xff]
        %v1093 = vld [vmem:[#allocation2 + $0x18] sm:$0xff]
        %v1094 = vld [vmem:[#allocation2 + $0x20] sm:$0xff]
        %v1095 = vld [vmem:[#allocation2 + $0x28] sm:$0xff]
        %v1096 = vld [vmem:[#allocation2 + $0x30] sm:$0xff]
        %v1097 = vld [vmem:[#allocation2 + $0x38] sm:$0xff]
        %v1098 = vld [vmem:[#allocation2 + $0x40] sm:$0xff]
        %v1099 = vld [vmem:[#allocation2 + $0x48] sm:$0xff]
        %v1100 = vld [vmem:[#allocation2 + $0x50] sm:$0xff]
        %v1101 = vld [vmem:[#allocation2 + $0x58] sm:$0xff]
        %v1102 = vld [vmem:[#allocation2 + $0x60] sm:$0xff]
        %v1103 = vld [vmem:[#allocation2 + $0x68] sm:$0xff]
        %v1104 = vld [vmem:[#allocation2 + $0x70] sm:$0xff]
        %v1105 = vld [vmem:[#allocation2 + $0x78] sm:$0xff]
        %v1106 = vld [vmem:[#allocation2 + $0x80] sm:$0xff]
        %v1107 = vld [vmem:[#allocation2 + $0x88] sm:$0xff]
        %v1108 = vld [vmem:[#allocation2 + $0x90] sm:$0xff]
        %v1109 = vld [vmem:[#allocation2 + $0x98] sm:$0xff]
        %v1110 = vld [vmem:[#allocation2 + $0xa0] sm:$0xff]
        %v1111 = vld [vmem:[#allocation2 + $0xa8] sm:$0xff]
        %v1112 = vld [vmem:[#allocation2 + $0xb0] sm:$0xff]
        %v1113 = vld [vmem:[#allocation2 + $0xb8] sm:$0xff]
        %v1114 = vld [vmem:[#allocation2 + $0xc0] sm:$0xff]
        %v1115 = vld [vmem:[#allocation2 + $0xc8] sm:$0xff]
        %v1116 = vld [vmem:[#allocation2 + $0xd0] sm:$0xff]
        %v1117 = vld [vmem:[#allocation2 + $0xd8] sm:$0xff]
        %v1118 = vld [vmem:[#allocation2 + $0xe0] sm:$0xff]
        %v1119 = vld [vmem:[#allocation2 + $0xe8] sm:$0xff]
        %v1120 = vld [vmem:[#allocation2 + $0xf0] sm:$0xff]
        %v1121 = vld [vmem:[#allocation2 + $0xf8] sm:$0xff]
        %v1122 = vld [vmem:[#allocation2 + $0x100] sm:$0xff]
        %v1123 = vld [vmem:[#allocation2 + $0x108] sm:$0xff]
        %v1124 = vpack.c.bf16 %v1092, %v1092
        %v1125 = vpack.c.bf16 %v1093, %v1093
        %v1126 = vpack.c.bf16 %v1094, %v1094
        %v1127 = vpack.c.bf16 %v1095, %v1095
        %v1128 = vpack.c.bf16 %v1096, %v1096
        %v1129 = vpack.c.bf16 %v1097, %v1097
        %v1130 = vpack.c.bf16 %v1098, %v1098
        %v1131 = vpack.c.bf16 %v1099, %v1099
        %v1132 = vpack.c.bf16 %v1100, %v1100
        %v1133 = vpack.c.bf16 %v1101, %v1101
        %v1134 = vpack.c.bf16 %v1102, %v1102
        %v1135 = vpack.c.bf16 %v1103, %v1103
        %v1136 = vpack.c.bf16 %v1104, %v1104
        %v1137 = vpack.c.bf16 %v1105, %v1105
        %v1138 = vpack.c.bf16 %v1106, %v1106
        %v1139 = vpack.c.bf16 %v1107, %v1107
        %v1140 = vpack.c.bf16 %v1108, %v1108
        %v1141 = vpack.c.bf16 %v1109, %v1109
        %v1142 = vpack.c.bf16 %v1110, %v1110
        %v1143 = vpack.c.bf16 %v1111, %v1111
        %v1144 = vpack.c.bf16 %v1112, %v1112
        %v1145 = vpack.c.bf16 %v1113, %v1113
        %v1146 = vpack.c.bf16 %v1114, %v1114
        %v1147 = vpack.c.bf16 %v1115, %v1115
        %v1148 = vpack.c.bf16 %v1116, %v1116
        %v1149 = vpack.c.bf16 %v1117, %v1117
        %v1150 = vpack.c.bf16 %v1118, %v1118
        %v1151 = vpack.c.bf16 %v1119, %v1119
        %v1152 = vpack.c.bf16 %v1120, %v1120
        %v1153 = vpack.c.bf16 %v1121, %v1121
        %v1154 = vpack.c.bf16 %v1122, %v1122
        %v1155 = vpack.c.bf16 %v1123, %v1123
        %1156 = vst [vmem:[#allocation3 + $0x4] sm:$0xf] %v1124
        %1157 = vst [vmem:[#allocation3 + $0x28] sm:$0xf] %v1125
        %1158 = vst [vmem:[#allocation3 + $0x4c] sm:$0xf] %v1126
        %1159 = vst [vmem:[#allocation3 + $0x70] sm:$0xf] %v1127
        %1160 = vst [vmem:[#allocation3 + $0x94] sm:$0xf] %v1128
        %1161 = vst [vmem:[#allocation3 + $0xb8] sm:$0xf] %v1129
        %1162 = vst [vmem:[#allocation3 + $0xdc] sm:$0xf] %v1130
        %1163 = vst [vmem:[#allocation3 + $0x100] sm:$0xf] %v1131
        %1164 = vst [vmem:[#allocation3 + $0x124] sm:$0xf] %v1132
        %1165 = vst [vmem:[#allocation3 + $0x148] sm:$0xf] %v1133
        %1166 = vst [vmem:[#allocation3 + $0x16c] sm:$0xf] %v1134
        %1167 = vst [vmem:[#allocation3 + $0x190] sm:$0xf] %v1135
        %1168 = vst [vmem:[#allocation3 + $0x1b4] sm:$0xf] %v1136
        %1169 = vst [vmem:[#allocation3 + $0x1d8] sm:$0xf] %v1137
        %1170 = vst [vmem:[#allocation3 + $0x1fc] sm:$0xf] %v1138
        %1171 = vst [vmem:[#allocation3 + $0x220] sm:$0xf] %v1139
        %1172 = vst [vmem:[#allocation3 + $0x244] sm:$0xf] %v1140
        %1173 = vst [vmem:[#allocation3 + $0x268] sm:$0xf] %v1141
        %1174 = vst [vmem:[#allocation3 + $0x28c] sm:$0xf] %v1142
        %1175 = vst [vmem:[#allocation3 + $0x2b0] sm:$0xf] %v1143
        %1176 = vst [vmem:[#allocation3 + $0x2d4] sm:$0xf] %v1144
        %1177 = vst [vmem:[#allocation3 + $0x2f8] sm:$0xf] %v1145
        %1178 = vst [vmem:[#allocation3 + $0x31c] sm:$0xf] %v1146
        %1179 = vst [vmem:[#allocation3 + $0x340] sm:$0xf] %v1147
        %1180 = vst [vmem:[#allocation3 + $0x364] sm:$0xf] %v1148
        %1181 = vst [vmem:[#allocation3 + $0x388] sm:$0xf] %v1149
        %1182 = vst [vmem:[#allocation3 + $0x3ac] sm:$0xf] %v1150
        %1183 = vst [vmem:[#allocation3 + $0x3d0] sm:$0xf] %v1151
        %1184 = vst [vmem:[#allocation3 + $0x3f4] sm:$0xf] %v1152
        %1185 = vst [vmem:[#allocation3 + $0x418] sm:$0xf] %v1153
        %1186 = vst [vmem:[#allocation3 + $0x43c] sm:$0xf] %v1154
        %1187 = vst [vmem:[#allocation3 + $0x460] sm:$0xf] %v1155
        %v1188 = vld [vmem:[#allocation2 + $0x11] sm:$0xff]
        %v1189 = vld [vmem:[#allocation2 + $0x19] sm:$0xff]
        %v1190 = vld [vmem:[#allocation2 + $0x21] sm:$0xff]
        %v1191 = vld [vmem:[#allocation2 + $0x29] sm:$0xff]
        %v1192 = vld [vmem:[#allocation2 + $0x31] sm:$0xff]
        %v1193 = vld [vmem:[#allocation2 + $0x39] sm:$0xff]
        %v1194 = vld [vmem:[#allocation2 + $0x41] sm:$0xff]
        %v1195 = vld [vmem:[#allocation2 + $0x49] sm:$0xff]
        %v1196 = vld [vmem:[#allocation2 + $0x51] sm:$0xff]
        %v1197 = vld [vmem:[#allocation2 + $0x59] sm:$0xff]
        %v1198 = vld [vmem:[#allocation2 + $0x61] sm:$0xff]
        %v1199 = vld [vmem:[#allocation2 + $0x69] sm:$0xff]
        %v1200 = vld [vmem:[#allocation2 + $0x71] sm:$0xff]
        %v1201 = vld [vmem:[#allocation2 + $0x79] sm:$0xff]
        %v1202 = vld [vmem:[#allocation2 + $0x81] sm:$0xff]
        %v1203 = vld [vmem:[#allocation2 + $0x89] sm:$0xff]
        %v1204 = vld [vmem:[#allocation2 + $0x91] sm:$0xff]
        %v1205 = vld [vmem:[#allocation2 + $0x99] sm:$0xff]
        %v1206 = vld [vmem:[#allocation2 + $0xa1] sm:$0xff]
        %v1207 = vld [vmem:[#allocation2 + $0xa9] sm:$0xff]
        %v1208 = vld [vmem:[#allocation2 + $0xb1] sm:$0xff]
        %v1209 = vld [vmem:[#allocation2 + $0xb9] sm:$0xff]
        %v1210 = vld [vmem:[#allocation2 + $0xc1] sm:$0xff]
        %v1211 = vld [vmem:[#allocation2 + $0xc9] sm:$0xff]
        %v1212 = vld [vmem:[#allocation2 + $0xd1] sm:$0xff]
        %v1213 = vld [vmem:[#allocation2 + $0xd9] sm:$0xff]
        %v1214 = vld [vmem:[#allocation2 + $0xe1] sm:$0xff]
        %v1215 = vld [vmem:[#allocation2 + $0xe9] sm:$0xff]
        %v1216 = vld [vmem:[#allocation2 + $0xf1] sm:$0xff]
        %v1217 = vld [vmem:[#allocation2 + $0xf9] sm:$0xff]
        %v1218 = vld [vmem:[#allocation2 + $0x101] sm:$0xff]
        %v1219 = vld [vmem:[#allocation2 + $0x109] sm:$0xff]
        %v1220 = vsel %vm856, %v1188, 0.0
        %v1221 = vsel %vm857, %v1189, 0.0
        %v1222 = vsel %vm858, %v1190, 0.0
        %v1223 = vsel %vm859, %v1191, 0.0
        %v1224 = vsel %vm860, %v1192, 0.0
        %v1225 = vsel %vm861, %v1193, 0.0
        %v1226 = vsel %vm862, %v1194, 0.0
        %v1227 = vsel %vm863, %v1195, 0.0
        %v1228 = vsel %vm864, %v1196, 0.0
        %v1229 = vsel %vm865, %v1197, 0.0
        %v1230 = vsel %vm866, %v1198, 0.0
        %v1231 = vsel %vm867, %v1199, 0.0
        %v1232 = vsel %vm868, %v1200, 0.0
        %v1233 = vsel %vm869, %v1201, 0.0
        %v1234 = vsel %vm870, %v1202, 0.0
        %v1235 = vsel %vm871, %v1203, 0.0
        %v1236 = vsel %vm872, %v1204, 0.0
        %v1237 = vsel %vm873, %v1205, 0.0
        %v1238 = vsel %vm874, %v1206, 0.0
        %v1239 = vsel %vm875, %v1207, 0.0
        %v1240 = vsel %vm876, %v1208, 0.0
        %v1241 = vsel %vm877, %v1209, 0.0
        %v1242 = vsel %vm878, %v1210, 0.0
        %v1243 = vsel %vm879, %v1211, 0.0
        %v1244 = vsel %vm880, %v1212, 0.0
        %v1245 = vsel %vm881, %v1213, 0.0
        %v1246 = vsel %vm882, %v1214, 0.0
        %v1247 = vsel %vm883, %v1215, 0.0
        %v1248 = vsel %vm884, %v1216, 0.0
        %v1249 = vsel %vm885, %v1217, 0.0
        %v1250 = vsel %vm886, %v1218, 0.0
        %v1251 = vsel %vm887, %v1219, 0.0
        %v1252 = vpack.c.bf16 %v1220, %v1220
        %v1253 = vpack.c.bf16 %v1221, %v1221
        %v1254 = vpack.c.bf16 %v1222, %v1222
        %v1255 = vpack.c.bf16 %v1223, %v1223
        %v1256 = vpack.c.bf16 %v1224, %v1224
        %v1257 = vpack.c.bf16 %v1225, %v1225
        %v1258 = vpack.c.bf16 %v1226, %v1226
        %v1259 = vpack.c.bf16 %v1227, %v1227
        %v1260 = vpack.c.bf16 %v1228, %v1228
        %v1261 = vpack.c.bf16 %v1229, %v1229
        %v1262 = vpack.c.bf16 %v1230, %v1230
        %v1263 = vpack.c.bf16 %v1231, %v1231
        %v1264 = vpack.c.bf16 %v1232, %v1232
        %v1265 = vpack.c.bf16 %v1233, %v1233
        %v1266 = vpack.c.bf16 %v1234, %v1234
        %v1267 = vpack.c.bf16 %v1235, %v1235
        %v1268 = vpack.c.bf16 %v1236, %v1236
        %v1269 = vpack.c.bf16 %v1237, %v1237
        %v1270 = vpack.c.bf16 %v1238, %v1238
        %v1271 = vpack.c.bf16 %v1239, %v1239
        %v1272 = vpack.c.bf16 %v1240, %v1240
        %v1273 = vpack.c.bf16 %v1241, %v1241
        %v1274 = vpack.c.bf16 %v1242, %v1242
        %v1275 = vpack.c.bf16 %v1243, %v1243
        %v1276 = vpack.c.bf16 %v1244, %v1244
        %v1277 = vpack.c.bf16 %v1245, %v1245
        %v1278 = vpack.c.bf16 %v1246, %v1246
        %v1279 = vpack.c.bf16 %v1247, %v1247
        %v1280 = vpack.c.bf16 %v1248, %v1248
        %v1281 = vpack.c.bf16 %v1249, %v1249
        %v1282 = vpack.c.bf16 %v1250, %v1250
        %v1283 = vpack.c.bf16 %v1251, %v1251
        %1284 = vst [vmem:[#allocation3 + $0x8] sm:$0xf] %v1252
        %1285 = vst [vmem:[#allocation3 + $0x2c] sm:$0xf] %v1253
        %1286 = vst [vmem:[#allocation3 + $0x50] sm:$0xf] %v1254
        %1287 = vst [vmem:[#allocation3 + $0x74] sm:$0xf] %v1255
        %1288 = vst [vmem:[#allocation3 + $0x98] sm:$0xf] %v1256
        %1289 = vst [vmem:[#allocation3 + $0xbc] sm:$0xf] %v1257
        %1290 = vst [vmem:[#allocation3 + $0xe0] sm:$0xf] %v1258
        %1291 = vst [vmem:[#allocation3 + $0x104] sm:$0xf] %v1259
        %1292 = vst [vmem:[#allocation3 + $0x128] sm:$0xf] %v1260
        %1293 = vst [vmem:[#allocation3 + $0x14c] sm:$0xf] %v1261
        %1294 = vst [vmem:[#allocation3 + $0x170] sm:$0xf] %v1262
        %1295 = vst [vmem:[#allocation3 + $0x194] sm:$0xf] %v1263
        %1296 = vst [vmem:[#allocation3 + $0x1b8] sm:$0xf] %v1264
        %1297 = vst [vmem:[#allocation3 + $0x1dc] sm:$0xf] %v1265
        %1298 = vst [vmem:[#allocation3 + $0x200] sm:$0xf] %v1266
        %1299 = vst [vmem:[#allocation3 + $0x224] sm:$0xf] %v1267
        %1300 = vst [vmem:[#allocation3 + $0x248] sm:$0xf] %v1268
        %1301 = vst [vmem:[#allocation3 + $0x26c] sm:$0xf] %v1269
        %1302 = vst [vmem:[#allocation3 + $0x290] sm:$0xf] %v1270
        %1303 = vst [vmem:[#allocation3 + $0x2b4] sm:$0xf] %v1271
        %1304 = vst [vmem:[#allocation3 + $0x2d8] sm:$0xf] %v1272
        %1305 = vst [vmem:[#allocation3 + $0x2fc] sm:$0xf] %v1273
        %1306 = vst [vmem:[#allocation3 + $0x320] sm:$0xf] %v1274
        %1307 = vst [vmem:[#allocation3 + $0x344] sm:$0xf] %v1275
        %1308 = vst [vmem:[#allocation3 + $0x368] sm:$0xf] %v1276
        %1309 = vst [vmem:[#allocation3 + $0x38c] sm:$0xf] %v1277
        %1310 = vst [vmem:[#allocation3 + $0x3b0] sm:$0xf] %v1278
        %1311 = vst [vmem:[#allocation3 + $0x3d4] sm:$0xf] %v1279
        %1312 = vst [vmem:[#allocation3 + $0x3f8] sm:$0xf] %v1280
        %1313 = vst [vmem:[#allocation3 + $0x41c] sm:$0xf] %v1281
        %1314 = vst [vmem:[#allocation3 + $0x440] sm:$0xf] %v1282
        %1315 = vst [vmem:[#allocation3 + $0x464] sm:$0xf] %v1283
        %v1316 = vld [vmem:[#allocation2 + $0x1f] sm:$0xff]
        %v1317 = vld [vmem:[#allocation2 + $0x27] sm:$0xff]
        %v1318 = vld [vmem:[#allocation2 + $0x2f] sm:$0xff]
        %v1319 = vld [vmem:[#allocation2 + $0x37] sm:$0xff]
        %v1320 = vld [vmem:[#allocation2 + $0x3f] sm:$0xff]
        %v1321 = vld [vmem:[#allocation2 + $0x47] sm:$0xff]
        %v1322 = vld [vmem:[#allocation2 + $0x4f] sm:$0xff]
        %v1323 = vld [vmem:[#allocation2 + $0x57] sm:$0xff]
        %v1324 = vld [vmem:[#allocation2 + $0x5f] sm:$0xff]
        %v1325 = vld [vmem:[#allocation2 + $0x67] sm:$0xff]
        %v1326 = vld [vmem:[#allocation2 + $0x6f] sm:$0xff]
        %v1327 = vld [vmem:[#allocation2 + $0x77] sm:$0xff]
        %v1328 = vld [vmem:[#allocation2 + $0x7f] sm:$0xff]
        %v1329 = vld [vmem:[#allocation2 + $0x87] sm:$0xff]
        %v1330 = vld [vmem:[#allocation2 + $0x8f] sm:$0xff]
        %v1331 = vld [vmem:[#allocation2 + $0x97] sm:$0xff]
        %v1332 = vld [vmem:[#allocation2 + $0x9f] sm:$0xff]
        %v1333 = vld [vmem:[#allocation2 + $0xa7] sm:$0xff]
        %v1334 = vld [vmem:[#allocation2 + $0xaf] sm:$0xff]
        %v1335 = vld [vmem:[#allocation2 + $0xb7] sm:$0xff]
        %v1336 = vld [vmem:[#allocation2 + $0xbf] sm:$0xff]
        %v1337 = vld [vmem:[#allocation2 + $0xc7] sm:$0xff]
        %v1338 = vld [vmem:[#allocation2 + $0xcf] sm:$0xff]
        %v1339 = vld [vmem:[#allocation2 + $0xd7] sm:$0xff]
        %v1340 = vld [vmem:[#allocation2 + $0xdf] sm:$0xff]
        %v1341 = vld [vmem:[#allocation2 + $0xe7] sm:$0xff]
        %v1342 = vld [vmem:[#allocation2 + $0xef] sm:$0xff]
        %v1343 = vld [vmem:[#allocation2 + $0xf7] sm:$0xff]
        %v1344 = vld [vmem:[#allocation2 + $0xff] sm:$0xff]
        %v1345 = vld [vmem:[#allocation2 + $0x107] sm:$0xff]
        %v1346 = vld [vmem:[#allocation2 + $0x10f] sm:$0xff]
        %v1347 = vld [vmem:[#allocation2 + $0x117] sm:$0xff]
        %v1348 = vsel %vm760, %v1316, 0.0
        %v1349 = vsel %vm761, %v1317, 0.0
        %v1350 = vsel %vm762, %v1318, 0.0
        %v1351 = vsel %vm763, %v1319, 0.0
        %v1352 = vsel %vm764, %v1320, 0.0
        %v1353 = vsel %vm765, %v1321, 0.0
        %v1354 = vsel %vm766, %v1322, 0.0
        %v1355 = vsel %vm767, %v1323, 0.0
        %v1356 = vsel %vm768, %v1324, 0.0
        %v1357 = vsel %vm769, %v1325, 0.0
        %v1358 = vsel %vm770, %v1326, 0.0
        %v1359 = vsel %vm771, %v1327, 0.0
        %v1360 = vsel %vm772, %v1328, 0.0
        %v1361 = vsel %vm773, %v1329, 0.0
        %v1362 = vsel %vm774, %v1330, 0.0
        %v1363 = vsel %vm775, %v1331, 0.0
        %v1364 = vsel %vm776, %v1332, 0.0
        %v1365 = vsel %vm777, %v1333, 0.0
        %v1366 = vsel %vm778, %v1334, 0.0
        %v1367 = vsel %vm779, %v1335, 0.0
        %v1368 = vsel %vm780, %v1336, 0.0
        %v1369 = vsel %vm781, %v1337, 0.0
        %v1370 = vsel %vm782, %v1338, 0.0
        %v1371 = vsel %vm783, %v1339, 0.0
        %v1372 = vsel %vm784, %v1340, 0.0
        %v1373 = vsel %vm785, %v1341, 0.0
        %v1374 = vsel %vm786, %v1342, 0.0
        %v1375 = vsel %vm787, %v1343, 0.0
        %v1376 = vsel %vm788, %v1344, 0.0
        %v1377 = vsel %vm789, %v1345, 0.0
        %v1378 = vsel %vm790, %v1346, 0.0
        %v1379 = vsel %vm791, %v1347, 0.0
        %v1380 = vpack.c.bf16 %v1348, %v1348
        %v1381 = vpack.c.bf16 %v1349, %v1349
        %v1382 = vpack.c.bf16 %v1350, %v1350
        %v1383 = vpack.c.bf16 %v1351, %v1351
        %v1384 = vpack.c.bf16 %v1352, %v1352
        %v1385 = vpack.c.bf16 %v1353, %v1353
        %v1386 = vpack.c.bf16 %v1354, %v1354
        %v1387 = vpack.c.bf16 %v1355, %v1355
        %v1388 = vpack.c.bf16 %v1356, %v1356
        %v1389 = vpack.c.bf16 %v1357, %v1357
        %v1390 = vpack.c.bf16 %v1358, %v1358
        %v1391 = vpack.c.bf16 %v1359, %v1359
        %v1392 = vpack.c.bf16 %v1360, %v1360
        %v1393 = vpack.c.bf16 %v1361, %v1361
        %v1394 = vpack.c.bf16 %v1362, %v1362
        %v1395 = vpack.c.bf16 %v1363, %v1363
        %v1396 = vpack.c.bf16 %v1364, %v1364
        %v1397 = vpack.c.bf16 %v1365, %v1365
        %v1398 = vpack.c.bf16 %v1366, %v1366
        %v1399 = vpack.c.bf16 %v1367, %v1367
        %v1400 = vpack.c.bf16 %v1368, %v1368
        %v1401 = vpack.c.bf16 %v1369, %v1369
        %v1402 = vpack.c.bf16 %v1370, %v1370
        %v1403 = vpack.c.bf16 %v1371, %v1371
        %v1404 = vpack.c.bf16 %v1372, %v1372
        %v1405 = vpack.c.bf16 %v1373, %v1373
        %v1406 = vpack.c.bf16 %v1374, %v1374
        %v1407 = vpack.c.bf16 %v1375, %v1375
        %v1408 = vpack.c.bf16 %v1376, %v1376
        %v1409 = vpack.c.bf16 %v1377, %v1377
        %v1410 = vpack.c.bf16 %v1378, %v1378
        %v1411 = vpack.c.bf16 %v1379, %v1379
        %1412 = vst [vmem:[#allocation3 + $0xc] sm:$0xf] %v1380
        %1413 = vst [vmem:[#allocation3 + $0x30] sm:$0xf] %v1381
        %1414 = vst [vmem:[#allocation3 + $0x54] sm:$0xf] %v1382
        %1415 = vst [vmem:[#allocation3 + $0x78] sm:$0xf] %v1383
        %1416 = vst [vmem:[#allocation3 + $0x9c] sm:$0xf] %v1384
        %1417 = vst [vmem:[#allocation3 + $0xc0] sm:$0xf] %v1385
        %1418 = vst [vmem:[#allocation3 + $0xe4] sm:$0xf] %v1386
        %1419 = vst [vmem:[#allocation3 + $0x108] sm:$0xf] %v1387
        %1420 = vst [vmem:[#allocation3 + $0x12c] sm:$0xf] %v1388
        %1421 = vst [vmem:[#allocation3 + $0x150] sm:$0xf] %v1389
        %1422 = vst [vmem:[#allocation3 + $0x174] sm:$0xf] %v1390
        %1423 = vst [vmem:[#allocation3 + $0x198] sm:$0xf] %v1391
        %1424 = vst [vmem:[#allocation3 + $0x1bc] sm:$0xf] %v1392
        %1425 = vst [vmem:[#allocation3 + $0x1e0] sm:$0xf] %v1393
        %1426 = vst [vmem:[#allocation3 + $0x204] sm:$0xf] %v1394
        %1427 = vst [vmem:[#allocation3 + $0x228] sm:$0xf] %v1395
        %1428 = vst [vmem:[#allocation3 + $0x24c] sm:$0xf] %v1396
        %1429 = vst [vmem:[#allocation3 + $0x270] sm:$0xf] %v1397
        %1430 = vst [vmem:[#allocation3 + $0x294] sm:$0xf] %v1398
        %1431 = vst [vmem:[#allocation3 + $0x2b8] sm:$0xf] %v1399
        %1432 = vst [vmem:[#allocation3 + $0x2dc] sm:$0xf] %v1400
        %1433 = vst [vmem:[#allocation3 + $0x300] sm:$0xf] %v1401
        %1434 = vst [vmem:[#allocation3 + $0x324] sm:$0xf] %v1402
        %1435 = vst [vmem:[#allocation3 + $0x348] sm:$0xf] %v1403
        %1436 = vst [vmem:[#allocation3 + $0x36c] sm:$0xf] %v1404
        %1437 = vst [vmem:[#allocation3 + $0x390] sm:$0xf] %v1405
        %1438 = vst [vmem:[#allocation3 + $0x3b4] sm:$0xf] %v1406
        %1439 = vst [vmem:[#allocation3 + $0x3d8] sm:$0xf] %v1407
        %1440 = vst [vmem:[#allocation3 + $0x3fc] sm:$0xf] %v1408
        %1441 = vst [vmem:[#allocation3 + $0x420] sm:$0xf] %v1409
        %1442 = vst [vmem:[#allocation3 + $0x444] sm:$0xf] %v1410
        %1443 = vst [vmem:[#allocation3 + $0x468] sm:$0xf] %v1411
        %v1444 = vld [vmem:[#allocation2 + $0x20] sm:$0xff]
        %v1445 = vld [vmem:[#allocation2 + $0x28] sm:$0xff]
        %v1446 = vld [vmem:[#allocation2 + $0x30] sm:$0xff]
        %v1447 = vld [vmem:[#allocation2 + $0x38] sm:$0xff]
        %v1448 = vld [vmem:[#allocation2 + $0x40] sm:$0xff]
        %v1449 = vld [vmem:[#allocation2 + $0x48] sm:$0xff]
        %v1450 = vld [vmem:[#allocation2 + $0x50] sm:$0xff]
        %v1451 = vld [vmem:[#allocation2 + $0x58] sm:$0xff]
        %v1452 = vld [vmem:[#allocation2 + $0x60] sm:$0xff]
        %v1453 = vld [vmem:[#allocation2 + $0x68] sm:$0xff]
        %v1454 = vld [vmem:[#allocation2 + $0x70] sm:$0xff]
        %v1455 = vld [vmem:[#allocation2 + $0x78] sm:$0xff]
        %v1456 = vld [vmem:[#allocation2 + $0x80] sm:$0xff]
        %v1457 = vld [vmem:[#allocation2 + $0x88] sm:$0xff]
        %v1458 = vld [vmem:[#allocation2 + $0x90] sm:$0xff]
        %v1459 = vld [vmem:[#allocation2 + $0x98] sm:$0xff]
        %v1460 = vld [vmem:[#allocation2 + $0xa0] sm:$0xff]
        %v1461 = vld [vmem:[#allocation2 + $0xa8] sm:$0xff]
        %v1462 = vld [vmem:[#allocation2 + $0xb0] sm:$0xff]
        %v1463 = vld [vmem:[#allocation2 + $0xb8] sm:$0xff]
        %v1464 = vld [vmem:[#allocation2 + $0xc0] sm:$0xff]
        %v1465 = vld [vmem:[#allocation2 + $0xc8] sm:$0xff]
        %v1466 = vld [vmem:[#allocation2 + $0xd0] sm:$0xff]
        %v1467 = vld [vmem:[#allocation2 + $0xd8] sm:$0xff]
        %v1468 = vld [vmem:[#allocation2 + $0xe0] sm:$0xff]
        %v1469 = vld [vmem:[#allocation2 + $0xe8] sm:$0xff]
        %v1470 = vld [vmem:[#allocation2 + $0xf0] sm:$0xff]
        %v1471 = vld [vmem:[#allocation2 + $0xf8] sm:$0xff]
        %v1472 = vld [vmem:[#allocation2 + $0x100] sm:$0xff]
        %v1473 = vld [vmem:[#allocation2 + $0x108] sm:$0xff]
        %v1474 = vld [vmem:[#allocation2 + $0x110] sm:$0xff]
        %v1475 = vld [vmem:[#allocation2 + $0x118] sm:$0xff]
        %v1476 = vpack.c.bf16 %v1444, %v1444
        %v1477 = vpack.c.bf16 %v1445, %v1445
        %v1478 = vpack.c.bf16 %v1446, %v1446
        %v1479 = vpack.c.bf16 %v1447, %v1447
        %v1480 = vpack.c.bf16 %v1448, %v1448
        %v1481 = vpack.c.bf16 %v1449, %v1449
        %v1482 = vpack.c.bf16 %v1450, %v1450
        %v1483 = vpack.c.bf16 %v1451, %v1451
        %v1484 = vpack.c.bf16 %v1452, %v1452
        %v1485 = vpack.c.bf16 %v1453, %v1453
        %v1486 = vpack.c.bf16 %v1454, %v1454
        %v1487 = vpack.c.bf16 %v1455, %v1455
        %v1488 = vpack.c.bf16 %v1456, %v1456
        %v1489 = vpack.c.bf16 %v1457, %v1457
        %v1490 = vpack.c.bf16 %v1458, %v1458
        %v1491 = vpack.c.bf16 %v1459, %v1459
        %v1492 = vpack.c.bf16 %v1460, %v1460
        %v1493 = vpack.c.bf16 %v1461, %v1461
        %v1494 = vpack.c.bf16 %v1462, %v1462
        %v1495 = vpack.c.bf16 %v1463, %v1463
        %v1496 = vpack.c.bf16 %v1464, %v1464
        %v1497 = vpack.c.bf16 %v1465, %v1465
        %v1498 = vpack.c.bf16 %v1466, %v1466
        %v1499 = vpack.c.bf16 %v1467, %v1467
        %v1500 = vpack.c.bf16 %v1468, %v1468
        %v1501 = vpack.c.bf16 %v1469, %v1469
        %v1502 = vpack.c.bf16 %v1470, %v1470
        %v1503 = vpack.c.bf16 %v1471, %v1471
        %v1504 = vpack.c.bf16 %v1472, %v1472
        %v1505 = vpack.c.bf16 %v1473, %v1473
        %v1506 = vpack.c.bf16 %v1474, %v1474
        %v1507 = vpack.c.bf16 %v1475, %v1475
        %1508 = vst [vmem:[#allocation3 + $0x10] sm:$0xf] %v1476
        %1509 = vst [vmem:[#allocation3 + $0x34] sm:$0xf] %v1477
        %1510 = vst [vmem:[#allocation3 + $0x58] sm:$0xf] %v1478
        %1511 = vst [vmem:[#allocation3 + $0x7c] sm:$0xf] %v1479
        %1512 = vst [vmem:[#allocation3 + $0xa0] sm:$0xf] %v1480
        %1513 = vst [vmem:[#allocation3 + $0xc4] sm:$0xf] %v1481
        %1514 = vst [vmem:[#allocation3 + $0xe8] sm:$0xf] %v1482
        %1515 = vst [vmem:[#allocation3 + $0x10c] sm:$0xf] %v1483
        %1516 = vst [vmem:[#allocation3 + $0x130] sm:$0xf] %v1484
        %1517 = vst [vmem:[#allocation3 + $0x154] sm:$0xf] %v1485
        %1518 = vst [vmem:[#allocation3 + $0x178] sm:$0xf] %v1486
        %1519 = vst [vmem:[#allocation3 + $0x19c] sm:$0xf] %v1487
        %1520 = vst [vmem:[#allocation3 + $0x1c0] sm:$0xf] %v1488
        %1521 = vst [vmem:[#allocation3 + $0x1e4] sm:$0xf] %v1489
        %1522 = vst [vmem:[#allocation3 + $0x208] sm:$0xf] %v1490
        %1523 = vst [vmem:[#allocation3 + $0x22c] sm:$0xf] %v1491
        %1524 = vst [vmem:[#allocation3 + $0x250] sm:$0xf] %v1492
        %1525 = vst [vmem:[#allocation3 + $0x274] sm:$0xf] %v1493
        %1526 = vst [vmem:[#allocation3 + $0x298] sm:$0xf] %v1494
        %1527 = vst [vmem:[#allocation3 + $0x2bc] sm:$0xf] %v1495
        %1528 = vst [vmem:[#allocation3 + $0x2e0] sm:$0xf] %v1496
        %1529 = vst [vmem:[#allocation3 + $0x304] sm:$0xf] %v1497
        %1530 = vst [vmem:[#allocation3 + $0x328] sm:$0xf] %v1498
        %1531 = vst [vmem:[#allocation3 + $0x34c] sm:$0xf] %v1499
        %1532 = vst [vmem:[#allocation3 + $0x370] sm:$0xf] %v1500
        %1533 = vst [vmem:[#allocation3 + $0x394] sm:$0xf] %v1501
        %1534 = vst [vmem:[#allocation3 + $0x3b8] sm:$0xf] %v1502
        %1535 = vst [vmem:[#allocation3 + $0x3dc] sm:$0xf] %v1503
        %1536 = vst [vmem:[#allocation3 + $0x400] sm:$0xf] %v1504
        %1537 = vst [vmem:[#allocation3 + $0x424] sm:$0xf] %v1505
        %1538 = vst [vmem:[#allocation3 + $0x448] sm:$0xf] %v1506
        %1539 = vst [vmem:[#allocation3 + $0x46c] sm:$0xf] %v1507
        %v1540 = vld [vmem:[#allocation2 + $0x21] sm:$0xff]
        %v1541 = vld [vmem:[#allocation2 + $0x29] sm:$0xff]
        %v1542 = vld [vmem:[#allocation2 + $0x31] sm:$0xff]
        %v1543 = vld [vmem:[#allocation2 + $0x39] sm:$0xff]
        %v1544 = vld [vmem:[#allocation2 + $0x41] sm:$0xff]
        %v1545 = vld [vmem:[#allocation2 + $0x49] sm:$0xff]
        %v1546 = vld [vmem:[#allocation2 + $0x51] sm:$0xff]
        %v1547 = vld [vmem:[#allocation2 + $0x59] sm:$0xff]
        %v1548 = vld [vmem:[#allocation2 + $0x61] sm:$0xff]
        %v1549 = vld [vmem:[#allocation2 + $0x69] sm:$0xff]
        %v1550 = vld [vmem:[#allocation2 + $0x71] sm:$0xff]
        %v1551 = vld [vmem:[#allocation2 + $0x79] sm:$0xff]
        %v1552 = vld [vmem:[#allocation2 + $0x81] sm:$0xff]
        %v1553 = vld [vmem:[#allocation2 + $0x89] sm:$0xff]
        %v1554 = vld [vmem:[#allocation2 + $0x91] sm:$0xff]
        %v1555 = vld [vmem:[#allocation2 + $0x99] sm:$0xff]
        %v1556 = vld [vmem:[#allocation2 + $0xa1] sm:$0xff]
        %v1557 = vld [vmem:[#allocation2 + $0xa9] sm:$0xff]
        %v1558 = vld [vmem:[#allocation2 + $0xb1] sm:$0xff]
        %v1559 = vld [vmem:[#allocation2 + $0xb9] sm:$0xff]
        %v1560 = vld [vmem:[#allocation2 + $0xc1] sm:$0xff]
        %v1561 = vld [vmem:[#allocation2 + $0xc9] sm:$0xff]
        %v1562 = vld [vmem:[#allocation2 + $0xd1] sm:$0xff]
        %v1563 = vld [vmem:[#allocation2 + $0xd9] sm:$0xff]
        %v1564 = vld [vmem:[#allocation2 + $0xe1] sm:$0xff]
        %v1565 = vld [vmem:[#allocation2 + $0xe9] sm:$0xff]
        %v1566 = vld [vmem:[#allocation2 + $0xf1] sm:$0xff]
        %v1567 = vld [vmem:[#allocation2 + $0xf9] sm:$0xff]
        %v1568 = vld [vmem:[#allocation2 + $0x101] sm:$0xff]
        %v1569 = vld [vmem:[#allocation2 + $0x109] sm:$0xff]
        %v1570 = vld [vmem:[#allocation2 + $0x111] sm:$0xff]
        %v1571 = vld [vmem:[#allocation2 + $0x119] sm:$0xff]
        %v1572 = vsel %vm856, %v1540, 0.0
        %v1573 = vsel %vm857, %v1541, 0.0
        %v1574 = vsel %vm858, %v1542, 0.0
        %v1575 = vsel %vm859, %v1543, 0.0
        %v1576 = vsel %vm860, %v1544, 0.0
        %v1577 = vsel %vm861, %v1545, 0.0
        %v1578 = vsel %vm862, %v1546, 0.0
        %v1579 = vsel %vm863, %v1547, 0.0
        %v1580 = vsel %vm864, %v1548, 0.0
        %v1581 = vsel %vm865, %v1549, 0.0
        %v1582 = vsel %vm866, %v1550, 0.0
        %v1583 = vsel %vm867, %v1551, 0.0
        %v1584 = vsel %vm868, %v1552, 0.0
        %v1585 = vsel %vm869, %v1553, 0.0
        %v1586 = vsel %vm870, %v1554, 0.0
        %v1587 = vsel %vm871, %v1555, 0.0
        %v1588 = vsel %vm872, %v1556, 0.0
        %v1589 = vsel %vm873, %v1557, 0.0
        %v1590 = vsel %vm874, %v1558, 0.0
        %v1591 = vsel %vm875, %v1559, 0.0
        %v1592 = vsel %vm876, %v1560, 0.0
        %v1593 = vsel %vm877, %v1561, 0.0
        %v1594 = vsel %vm878, %v1562, 0.0
        %v1595 = vsel %vm879, %v1563, 0.0
        %v1596 = vsel %vm880, %v1564, 0.0
        %v1597 = vsel %vm881, %v1565, 0.0
        %v1598 = vsel %vm882, %v1566, 0.0
        %v1599 = vsel %vm883, %v1567, 0.0
        %v1600 = vsel %vm884, %v1568, 0.0
        %v1601 = vsel %vm885, %v1569, 0.0
        %v1602 = vsel %vm886, %v1570, 0.0
        %v1603 = vsel %vm887, %v1571, 0.0
        %v1604 = vpack.c.bf16 %v1572, %v1572
        %v1605 = vpack.c.bf16 %v1573, %v1573
        %v1606 = vpack.c.bf16 %v1574, %v1574
        %v1607 = vpack.c.bf16 %v1575, %v1575
        %v1608 = vpack.c.bf16 %v1576, %v1576
        %v1609 = vpack.c.bf16 %v1577, %v1577
        %v1610 = vpack.c.bf16 %v1578, %v1578
        %v1611 = vpack.c.bf16 %v1579, %v1579
        %v1612 = vpack.c.bf16 %v1580, %v1580
        %v1613 = vpack.c.bf16 %v1581, %v1581
        %v1614 = vpack.c.bf16 %v1582, %v1582
        %v1615 = vpack.c.bf16 %v1583, %v1583
        %v1616 = vpack.c.bf16 %v1584, %v1584
        %v1617 = vpack.c.bf16 %v1585, %v1585
        %v1618 = vpack.c.bf16 %v1586, %v1586
        %v1619 = vpack.c.bf16 %v1587, %v1587
        %v1620 = vpack.c.bf16 %v1588, %v1588
        %v1621 = vpack.c.bf16 %v1589, %v1589
        %v1622 = vpack.c.bf16 %v1590, %v1590
        %v1623 = vpack.c.bf16 %v1591, %v1591
        %v1624 = vpack.c.bf16 %v1592, %v1592
        %v1625 = vpack.c.bf16 %v1593, %v1593
        %v1626 = vpack.c.bf16 %v1594, %v1594
        %v1627 = vpack.c.bf16 %v1595, %v1595
        %v1628 = vpack.c.bf16 %v1596, %v1596
        %v1629 = vpack.c.bf16 %v1597, %v1597
        %v1630 = vpack.c.bf16 %v1598, %v1598
        %v1631 = vpack.c.bf16 %v1599, %v1599
        %v1632 = vpack.c.bf16 %v1600, %v1600
        %v1633 = vpack.c.bf16 %v1601, %v1601
        %v1634 = vpack.c.bf16 %v1602, %v1602
        %v1635 = vpack.c.bf16 %v1603, %v1603
        %1636 = vst [vmem:[#allocation3 + $0x14] sm:$0xf] %v1604
        %1637 = vst [vmem:[#allocation3 + $0x38] sm:$0xf] %v1605
        %1638 = vst [vmem:[#allocation3 + $0x5c] sm:$0xf] %v1606
        %1639 = vst [vmem:[#allocation3 + $0x80] sm:$0xf] %v1607
        %1640 = vst [vmem:[#allocation3 + $0xa4] sm:$0xf] %v1608
        %1641 = vst [vmem:[#allocation3 + $0xc8] sm:$0xf] %v1609
        %1642 = vst [vmem:[#allocation3 + $0xec] sm:$0xf] %v1610
        %1643 = vst [vmem:[#allocation3 + $0x110] sm:$0xf] %v1611
        %1644 = vst [vmem:[#allocation3 + $0x134] sm:$0xf] %v1612
        %1645 = vst [vmem:[#allocation3 + $0x158] sm:$0xf] %v1613
        %1646 = vst [vmem:[#allocation3 + $0x17c] sm:$0xf] %v1614
        %1647 = vst [vmem:[#allocation3 + $0x1a0] sm:$0xf] %v1615
        %1648 = vst [vmem:[#allocation3 + $0x1c4] sm:$0xf] %v1616
        %1649 = vst [vmem:[#allocation3 + $0x1e8] sm:$0xf] %v1617
        %1650 = vst [vmem:[#allocation3 + $0x20c] sm:$0xf] %v1618
        %1651 = vst [vmem:[#allocation3 + $0x230] sm:$0xf] %v1619
        %1652 = vst [vmem:[#allocation3 + $0x254] sm:$0xf] %v1620
        %1653 = vst [vmem:[#allocation3 + $0x278] sm:$0xf] %v1621
        %1654 = vst [vmem:[#allocation3 + $0x29c] sm:$0xf] %v1622
        %1655 = vst [vmem:[#allocation3 + $0x2c0] sm:$0xf] %v1623
        %1656 = vst [vmem:[#allocation3 + $0x2e4] sm:$0xf] %v1624
        %1657 = vst [vmem:[#allocation3 + $0x308] sm:$0xf] %v1625
        %1658 = vst [vmem:[#allocation3 + $0x32c] sm:$0xf] %v1626
        %1659 = vst [vmem:[#allocation3 + $0x350] sm:$0xf] %v1627
        %1660 = vst [vmem:[#allocation3 + $0x374] sm:$0xf] %v1628
        %1661 = vst [vmem:[#allocation3 + $0x398] sm:$0xf] %v1629
        %1662 = vst [vmem:[#allocation3 + $0x3bc] sm:$0xf] %v1630
        %1663 = vst [vmem:[#allocation3 + $0x3e0] sm:$0xf] %v1631
        %1664 = vst [vmem:[#allocation3 + $0x404] sm:$0xf] %v1632
        %1665 = vst [vmem:[#allocation3 + $0x428] sm:$0xf] %v1633
        %1666 = vst [vmem:[#allocation3 + $0x44c] sm:$0xf] %v1634
        %1667 = vst [vmem:[#allocation3 + $0x470] sm:$0xf] %v1635
        %v1668 = vld [vmem:[#allocation2 + $0x2f] sm:$0xff]
        %v1669 = vld [vmem:[#allocation2 + $0x37] sm:$0xff]
        %v1670 = vld [vmem:[#allocation2 + $0x3f] sm:$0xff]
        %v1671 = vld [vmem:[#allocation2 + $0x47] sm:$0xff]
        %v1672 = vld [vmem:[#allocation2 + $0x4f] sm:$0xff]
        %v1673 = vld [vmem:[#allocation2 + $0x57] sm:$0xff]
        %v1674 = vld [vmem:[#allocation2 + $0x5f] sm:$0xff]
        %v1675 = vld [vmem:[#allocation2 + $0x67] sm:$0xff]
        %v1676 = vld [vmem:[#allocation2 + $0x6f] sm:$0xff]
        %v1677 = vld [vmem:[#allocation2 + $0x77] sm:$0xff]
        %v1678 = vld [vmem:[#allocation2 + $0x7f] sm:$0xff]
        %v1679 = vld [vmem:[#allocation2 + $0x87] sm:$0xff]
        %v1680 = vld [vmem:[#allocation2 + $0x8f] sm:$0xff]
        %v1681 = vld [vmem:[#allocation2 + $0x97] sm:$0xff]
        %v1682 = vld [vmem:[#allocation2 + $0x9f] sm:$0xff]
        %v1683 = vld [vmem:[#allocation2 + $0xa7] sm:$0xff]
        %v1684 = vld [vmem:[#allocation2 + $0xaf] sm:$0xff]
        %v1685 = vld [vmem:[#allocation2 + $0xb7] sm:$0xff]
        %v1686 = vld [vmem:[#allocation2 + $0xbf] sm:$0xff]
        %v1687 = vld [vmem:[#allocation2 + $0xc7] sm:$0xff]
        %v1688 = vld [vmem:[#allocation2 + $0xcf] sm:$0xff]
        %v1689 = vld [vmem:[#allocation2 + $0xd7] sm:$0xff]
        %v1690 = vld [vmem:[#allocation2 + $0xdf] sm:$0xff]
        %v1691 = vld [vmem:[#allocation2 + $0xe7] sm:$0xff]
        %v1692 = vld [vmem:[#allocation2 + $0xef] sm:$0xff]
        %v1693 = vld [vmem:[#allocation2 + $0xf7] sm:$0xff]
        %v1694 = vld [vmem:[#allocation2 + $0xff] sm:$0xff]
        %v1695 = vld [vmem:[#allocation2 + $0x107] sm:$0xff]
        %v1696 = vld [vmem:[#allocation2 + $0x10f] sm:$0xff]
        %v1697 = vld [vmem:[#allocation2 + $0x117] sm:$0xff]
        %v1698 = vld [vmem:[#allocation2 + $0x11f] sm:$0xff]
        %v1699 = vld [vmem:[#allocation2 + $0x127] sm:$0xff]
        %v1700 = vsel %vm760, %v1668, 0.0
        %v1701 = vsel %vm761, %v1669, 0.0
        %v1702 = vsel %vm762, %v1670, 0.0
        %v1703 = vsel %vm763, %v1671, 0.0
        %v1704 = vsel %vm764, %v1672, 0.0
        %v1705 = vsel %vm765, %v1673, 0.0
        %v1706 = vsel %vm766, %v1674, 0.0
        %v1707 = vsel %vm767, %v1675, 0.0
        %v1708 = vsel %vm768, %v1676, 0.0
        %v1709 = vsel %vm769, %v1677, 0.0
        %v1710 = vsel %vm770, %v1678, 0.0
        %v1711 = vsel %vm771, %v1679, 0.0
        %v1712 = vsel %vm772, %v1680, 0.0
        %v1713 = vsel %vm773, %v1681, 0.0
        %v1714 = vsel %vm774, %v1682, 0.0
        %v1715 = vsel %vm775, %v1683, 0.0
        %v1716 = vsel %vm776, %v1684, 0.0
        %v1717 = vsel %vm777, %v1685, 0.0
        %v1718 = vsel %vm778, %v1686, 0.0
        %v1719 = vsel %vm779, %v1687, 0.0
        %v1720 = vsel %vm780, %v1688, 0.0
        %v1721 = vsel %vm781, %v1689, 0.0
        %v1722 = vsel %vm782, %v1690, 0.0
        %v1723 = vsel %vm783, %v1691, 0.0
        %v1724 = vsel %vm784, %v1692, 0.0
        %v1725 = vsel %vm785, %v1693, 0.0
        %v1726 = vsel %vm786, %v1694, 0.0
        %v1727 = vsel %vm787, %v1695, 0.0
        %v1728 = vsel %vm788, %v1696, 0.0
        %v1729 = vsel %vm789, %v1697, 0.0
        %v1730 = vsel %vm790, %v1698, 0.0
        %v1731 = vsel %vm791, %v1699, 0.0
        %v1732 = vpack.c.bf16 %v1700, %v1700
        %v1733 = vpack.c.bf16 %v1701, %v1701
        %v1734 = vpack.c.bf16 %v1702, %v1702
        %v1735 = vpack.c.bf16 %v1703, %v1703
        %v1736 = vpack.c.bf16 %v1704, %v1704
        %v1737 = vpack.c.bf16 %v1705, %v1705
        %v1738 = vpack.c.bf16 %v1706, %v1706
        %v1739 = vpack.c.bf16 %v1707, %v1707
        %v1740 = vpack.c.bf16 %v1708, %v1708
        %v1741 = vpack.c.bf16 %v1709, %v1709
        %v1742 = vpack.c.bf16 %v1710, %v1710
        %v1743 = vpack.c.bf16 %v1711, %v1711
        %v1744 = vpack.c.bf16 %v1712, %v1712
        %v1745 = vpack.c.bf16 %v1713, %v1713
        %v1746 = vpack.c.bf16 %v1714, %v1714
        %v1747 = vpack.c.bf16 %v1715, %v1715
        %v1748 = vpack.c.bf16 %v1716, %v1716
        %v1749 = vpack.c.bf16 %v1717, %v1717
        %v1750 = vpack.c.bf16 %v1718, %v1718
        %v1751 = vpack.c.bf16 %v1719, %v1719
        %v1752 = vpack.c.bf16 %v1720, %v1720
        %v1753 = vpack.c.bf16 %v1721, %v1721
        %v1754 = vpack.c.bf16 %v1722, %v1722
        %v1755 = vpack.c.bf16 %v1723, %v1723
        %v1756 = vpack.c.bf16 %v1724, %v1724
        %v1757 = vpack.c.bf16 %v1725, %v1725
        %v1758 = vpack.c.bf16 %v1726, %v1726
        %v1759 = vpack.c.bf16 %v1727, %v1727
        %v1760 = vpack.c.bf16 %v1728, %v1728
        %v1761 = vpack.c.bf16 %v1729, %v1729
        %v1762 = vpack.c.bf16 %v1730, %v1730
        %v1763 = vpack.c.bf16 %v1731, %v1731
        %1764 = vst [vmem:[#allocation3 + $0x18] sm:$0xf] %v1732
        %1765 = vst [vmem:[#allocation3 + $0x3c] sm:$0xf] %v1733
        %1766 = vst [vmem:[#allocation3 + $0x60] sm:$0xf] %v1734
        %1767 = vst [vmem:[#allocation3 + $0x84] sm:$0xf] %v1735
        %1768 = vst [vmem:[#allocation3 + $0xa8] sm:$0xf] %v1736
        %1769 = vst [vmem:[#allocation3 + $0xcc] sm:$0xf] %v1737
        %1770 = vst [vmem:[#allocation3 + $0xf0] sm:$0xf] %v1738
        %1771 = vst [vmem:[#allocation3 + $0x114] sm:$0xf] %v1739
        %1772 = vst [vmem:[#allocation3 + $0x138] sm:$0xf] %v1740
        %1773 = vst [vmem:[#allocation3 + $0x15c] sm:$0xf] %v1741
        %1774 = vst [vmem:[#allocation3 + $0x180] sm:$0xf] %v1742
        %1775 = vst [vmem:[#allocation3 + $0x1a4] sm:$0xf] %v1743
        %1776 = vst [vmem:[#allocation3 + $0x1c8] sm:$0xf] %v1744
        %1777 = vst [vmem:[#allocation3 + $0x1ec] sm:$0xf] %v1745
        %1778 = vst [vmem:[#allocation3 + $0x210] sm:$0xf] %v1746
        %1779 = vst [vmem:[#allocation3 + $0x234] sm:$0xf] %v1747
        %1780 = vst [vmem:[#allocation3 + $0x258] sm:$0xf] %v1748
        %1781 = vst [vmem:[#allocation3 + $0x27c] sm:$0xf] %v1749
        %1782 = vst [vmem:[#allocation3 + $0x2a0] sm:$0xf] %v1750
        %1783 = vst [vmem:[#allocation3 + $0x2c4] sm:$0xf] %v1751
        %1784 = vst [vmem:[#allocation3 + $0x2e8] sm:$0xf] %v1752
        %1785 = vst [vmem:[#allocation3 + $0x30c] sm:$0xf] %v1753
        %1786 = vst [vmem:[#allocation3 + $0x330] sm:$0xf] %v1754
        %1787 = vst [vmem:[#allocation3 + $0x354] sm:$0xf] %v1755
        %1788 = vst [vmem:[#allocation3 + $0x378] sm:$0xf] %v1756
        %1789 = vst [vmem:[#allocation3 + $0x39c] sm:$0xf] %v1757
        %1790 = vst [vmem:[#allocation3 + $0x3c0] sm:$0xf] %v1758
        %1791 = vst [vmem:[#allocation3 + $0x3e4] sm:$0xf] %v1759
        %1792 = vst [vmem:[#allocation3 + $0x408] sm:$0xf] %v1760
        %1793 = vst [vmem:[#allocation3 + $0x42c] sm:$0xf] %v1761
        %1794 = vst [vmem:[#allocation3 + $0x450] sm:$0xf] %v1762
        %1795 = vst [vmem:[#allocation3 + $0x474] sm:$0xf] %v1763
        %v1796 = vld [vmem:[#allocation2 + $0x30] sm:$0xff]
        %v1797 = vld [vmem:[#allocation2 + $0x38] sm:$0xff]
        %v1798 = vld [vmem:[#allocation2 + $0x40] sm:$0xff]
        %v1799 = vld [vmem:[#allocation2 + $0x48] sm:$0xff]
        %v1800 = vld [vmem:[#allocation2 + $0x50] sm:$0xff]
        %v1801 = vld [vmem:[#allocation2 + $0x58] sm:$0xff]
        %v1802 = vld [vmem:[#allocation2 + $0x60] sm:$0xff]
        %v1803 = vld [vmem:[#allocation2 + $0x68] sm:$0xff]
        %v1804 = vld [vmem:[#allocation2 + $0x70] sm:$0xff]
        %v1805 = vld [vmem:[#allocation2 + $0x78] sm:$0xff]
        %v1806 = vld [vmem:[#allocation2 + $0x80] sm:$0xff]
        %v1807 = vld [vmem:[#allocation2 + $0x88] sm:$0xff]
        %v1808 = vld [vmem:[#allocation2 + $0x90] sm:$0xff]
        %v1809 = vld [vmem:[#allocation2 + $0x98] sm:$0xff]
        %v1810 = vld [vmem:[#allocation2 + $0xa0] sm:$0xff]
        %v1811 = vld [vmem:[#allocation2 + $0xa8] sm:$0xff]
        %v1812 = vld [vmem:[#allocation2 + $0xb0] sm:$0xff]
        %v1813 = vld [vmem:[#allocation2 + $0xb8] sm:$0xff]
        %v1814 = vld [vmem:[#allocation2 + $0xc0] sm:$0xff]
        %v1815 = vld [vmem:[#allocation2 + $0xc8] sm:$0xff]
        %v1816 = vld [vmem:[#allocation2 + $0xd0] sm:$0xff]
        %v1817 = vld [vmem:[#allocation2 + $0xd8] sm:$0xff]
        %v1818 = vld [vmem:[#allocation2 + $0xe0] sm:$0xff]
        %v1819 = vld [vmem:[#allocation2 + $0xe8] sm:$0xff]
        %v1820 = vld [vmem:[#allocation2 + $0xf0] sm:$0xff]
        %v1821 = vld [vmem:[#allocation2 + $0xf8] sm:$0xff]
        %v1822 = vld [vmem:[#allocation2 + $0x100] sm:$0xff]
        %v1823 = vld [vmem:[#allocation2 + $0x108] sm:$0xff]
        %v1824 = vld [vmem:[#allocation2 + $0x110] sm:$0xff]
        %v1825 = vld [vmem:[#allocation2 + $0x118] sm:$0xff]
        %v1826 = vld [vmem:[#allocation2 + $0x120] sm:$0xff]
        %v1827 = vld [vmem:[#allocation2 + $0x128] sm:$0xff]
        %v1828 = vpack.c.bf16 %v1796, %v1796
        %v1829 = vpack.c.bf16 %v1797, %v1797
        %v1830 = vpack.c.bf16 %v1798, %v1798
        %v1831 = vpack.c.bf16 %v1799, %v1799
        %v1832 = vpack.c.bf16 %v1800, %v1800
        %v1833 = vpack.c.bf16 %v1801, %v1801
        %v1834 = vpack.c.bf16 %v1802, %v1802
        %v1835 = vpack.c.bf16 %v1803, %v1803
        %v1836 = vpack.c.bf16 %v1804, %v1804
        %v1837 = vpack.c.bf16 %v1805, %v1805
        %v1838 = vpack.c.bf16 %v1806, %v1806
        %v1839 = vpack.c.bf16 %v1807, %v1807
        %v1840 = vpack.c.bf16 %v1808, %v1808
        %v1841 = vpack.c.bf16 %v1809, %v1809
        %v1842 = vpack.c.bf16 %v1810, %v1810
        %v1843 = vpack.c.bf16 %v1811, %v1811
        %v1844 = vpack.c.bf16 %v1812, %v1812
        %v1845 = vpack.c.bf16 %v1813, %v1813
        %v1846 = vpack.c.bf16 %v1814, %v1814
        %v1847 = vpack.c.bf16 %v1815, %v1815
        %v1848 = vpack.c.bf16 %v1816, %v1816
        %v1849 = vpack.c.bf16 %v1817, %v1817
        %v1850 = vpack.c.bf16 %v1818, %v1818
        %v1851 = vpack.c.bf16 %v1819, %v1819
        %v1852 = vpack.c.bf16 %v1820, %v1820
        %v1853 = vpack.c.bf16 %v1821, %v1821
        %v1854 = vpack.c.bf16 %v1822, %v1822
        %v1855 = vpack.c.bf16 %v1823, %v1823
        %v1856 = vpack.c.bf16 %v1824, %v1824
        %v1857 = vpack.c.bf16 %v1825, %v1825
        %v1858 = vpack.c.bf16 %v1826, %v1826
        %v1859 = vpack.c.bf16 %v1827, %v1827
        %1860 = vst [vmem:[#allocation3 + $0x1c] sm:$0xf] %v1828
        %1861 = vst [vmem:[#allocation3 + $0x40] sm:$0xf] %v1829
        %1862 = vst [vmem:[#allocation3 + $0x64] sm:$0xf] %v1830
        %1863 = vst [vmem:[#allocation3 + $0x88] sm:$0xf] %v1831
        %1864 = vst [vmem:[#allocation3 + $0xac] sm:$0xf] %v1832
        %1865 = vst [vmem:[#allocation3 + $0xd0] sm:$0xf] %v1833
        %1866 = vst [vmem:[#allocation3 + $0xf4] sm:$0xf] %v1834
        %1867 = vst [vmem:[#allocation3 + $0x118] sm:$0xf] %v1835
        %1868 = vst [vmem:[#allocation3 + $0x13c] sm:$0xf] %v1836
        %1869 = vst [vmem:[#allocation3 + $0x160] sm:$0xf] %v1837
        %1870 = vst [vmem:[#allocation3 + $0x184] sm:$0xf] %v1838
        %1871 = vst [vmem:[#allocation3 + $0x1a8] sm:$0xf] %v1839
        %1872 = vst [vmem:[#allocation3 + $0x1cc] sm:$0xf] %v1840
        %1873 = vst [vmem:[#allocation3 + $0x1f0] sm:$0xf] %v1841
        %1874 = vst [vmem:[#allocation3 + $0x214] sm:$0xf] %v1842
        %1875 = vst [vmem:[#allocation3 + $0x238] sm:$0xf] %v1843
        %1876 = vst [vmem:[#allocation3 + $0x25c] sm:$0xf] %v1844
        %1877 = vst [vmem:[#allocation3 + $0x280] sm:$0xf] %v1845
        %1878 = vst [vmem:[#allocation3 + $0x2a4] sm:$0xf] %v1846
        %1879 = vst [vmem:[#allocation3 + $0x2c8] sm:$0xf] %v1847
        %1880 = vst [vmem:[#allocation3 + $0x2ec] sm:$0xf] %v1848
        %1881 = vst [vmem:[#allocation3 + $0x310] sm:$0xf] %v1849
        %1882 = vst [vmem:[#allocation3 + $0x334] sm:$0xf] %v1850
        %1883 = vst [vmem:[#allocation3 + $0x358] sm:$0xf] %v1851
        %1884 = vst [vmem:[#allocation3 + $0x37c] sm:$0xf] %v1852
        %1885 = vst [vmem:[#allocation3 + $0x3a0] sm:$0xf] %v1853
        %1886 = vst [vmem:[#allocation3 + $0x3c4] sm:$0xf] %v1854
        %1887 = vst [vmem:[#allocation3 + $0x3e8] sm:$0xf] %v1855
        %1888 = vst [vmem:[#allocation3 + $0x40c] sm:$0xf] %v1856
        %1889 = vst [vmem:[#allocation3 + $0x430] sm:$0xf] %v1857
        %1890 = vst [vmem:[#allocation3 + $0x454] sm:$0xf] %v1858
        %1891 = vst [vmem:[#allocation3 + $0x478] sm:$0xf] %v1859
        %v1892 = vld [vmem:[#allocation2 + $0x31] sm:$0xff]
        %v1893 = vld [vmem:[#allocation2 + $0x39] sm:$0xff]
        %v1894 = vld [vmem:[#allocation2 + $0x41] sm:$0xff]
        %v1895 = vld [vmem:[#allocation2 + $0x49] sm:$0xff]
        %v1896 = vld [vmem:[#allocation2 + $0x51] sm:$0xff]
        %v1897 = vld [vmem:[#allocation2 + $0x59] sm:$0xff]
        %v1898 = vld [vmem:[#allocation2 + $0x61] sm:$0xff]
        %v1899 = vld [vmem:[#allocation2 + $0x69] sm:$0xff]
        %v1900 = vld [vmem:[#allocation2 + $0x71] sm:$0xff]
        %v1901 = vld [vmem:[#allocation2 + $0x79] sm:$0xff]
        %v1902 = vld [vmem:[#allocation2 + $0x81] sm:$0xff]
        %v1903 = vld [vmem:[#allocation2 + $0x89] sm:$0xff]
        %v1904 = vld [vmem:[#allocation2 + $0x91] sm:$0xff]
        %v1905 = vld [vmem:[#allocation2 + $0x99] sm:$0xff]
        %v1906 = vld [vmem:[#allocation2 + $0xa1] sm:$0xff]
        %v1907 = vld [vmem:[#allocation2 + $0xa9] sm:$0xff]
        %v1908 = vld [vmem:[#allocation2 + $0xb1] sm:$0xff]
        %v1909 = vld [vmem:[#allocation2 + $0xb9] sm:$0xff]
        %v1910 = vld [vmem:[#allocation2 + $0xc1] sm:$0xff]
        %v1911 = vld [vmem:[#allocation2 + $0xc9] sm:$0xff]
        %v1912 = vld [vmem:[#allocation2 + $0xd1] sm:$0xff]
        %v1913 = vld [vmem:[#allocation2 + $0xd9] sm:$0xff]
        %v1914 = vld [vmem:[#allocation2 + $0xe1] sm:$0xff]
        %v1915 = vld [vmem:[#allocation2 + $0xe9] sm:$0xff]
        %v1916 = vld [vmem:[#allocation2 + $0xf1] sm:$0xff]
        %v1917 = vld [vmem:[#allocation2 + $0xf9] sm:$0xff]
        %v1918 = vld [vmem:[#allocation2 + $0x101] sm:$0xff]
        %v1919 = vld [vmem:[#allocation2 + $0x109] sm:$0xff]
        %v1920 = vld [vmem:[#allocation2 + $0x111] sm:$0xff]
        %v1921 = vld [vmem:[#allocation2 + $0x119] sm:$0xff]
        %v1922 = vld [vmem:[#allocation2 + $0x121] sm:$0xff]
        %v1923 = vld [vmem:[#allocation2 + $0x129] sm:$0xff]
        %v1924 = vsel %vm856, %v1892, 0.0
        %v1925 = vsel %vm857, %v1893, 0.0
        %v1926 = vsel %vm858, %v1894, 0.0
        %v1927 = vsel %vm859, %v1895, 0.0
        %v1928 = vsel %vm860, %v1896, 0.0
        %v1929 = vsel %vm861, %v1897, 0.0
        %v1930 = vsel %vm862, %v1898, 0.0
        %v1931 = vsel %vm863, %v1899, 0.0
        %v1932 = vsel %vm864, %v1900, 0.0
        %v1933 = vsel %vm865, %v1901, 0.0
        %v1934 = vsel %vm866, %v1902, 0.0
        %v1935 = vsel %vm867, %v1903, 0.0
        %v1936 = vsel %vm868, %v1904, 0.0
        %v1937 = vsel %vm869, %v1905, 0.0
        %v1938 = vsel %vm870, %v1906, 0.0
        %v1939 = vsel %vm871, %v1907, 0.0
        %v1940 = vsel %vm872, %v1908, 0.0
        %v1941 = vsel %vm873, %v1909, 0.0
        %v1942 = vsel %vm874, %v1910, 0.0
        %v1943 = vsel %vm875, %v1911, 0.0
        %v1944 = vsel %vm876, %v1912, 0.0
        %v1945 = vsel %vm877, %v1913, 0.0
        %v1946 = vsel %vm878, %v1914, 0.0
        %v1947 = vsel %vm879, %v1915, 0.0
        %v1948 = vsel %vm880, %v1916, 0.0
        %v1949 = vsel %vm881, %v1917, 0.0
        %v1950 = vsel %vm882, %v1918, 0.0
        %v1951 = vsel %vm883, %v1919, 0.0
        %v1952 = vsel %vm884, %v1920, 0.0
        %v1953 = vsel %vm885, %v1921, 0.0
        %v1954 = vsel %vm886, %v1922, 0.0
        %v1955 = vsel %vm887, %v1923, 0.0
        %v1956 = vpack.c.bf16 %v1924, %v1924
        %v1957 = vpack.c.bf16 %v1925, %v1925
        %v1958 = vpack.c.bf16 %v1926, %v1926
        %v1959 = vpack.c.bf16 %v1927, %v1927
        %v1960 = vpack.c.bf16 %v1928, %v1928
        %v1961 = vpack.c.bf16 %v1929, %v1929
        %v1962 = vpack.c.bf16 %v1930, %v1930
        %v1963 = vpack.c.bf16 %v1931, %v1931
        %v1964 = vpack.c.bf16 %v1932, %v1932
        %v1965 = vpack.c.bf16 %v1933, %v1933
        %v1966 = vpack.c.bf16 %v1934, %v1934
        %v1967 = vpack.c.bf16 %v1935, %v1935
        %v1968 = vpack.c.bf16 %v1936, %v1936
        %v1969 = vpack.c.bf16 %v1937, %v1937
        %v1970 = vpack.c.bf16 %v1938, %v1938
        %v1971 = vpack.c.bf16 %v1939, %v1939
        %v1972 = vpack.c.bf16 %v1940, %v1940
        %v1973 = vpack.c.bf16 %v1941, %v1941
        %v1974 = vpack.c.bf16 %v1942, %v1942
        %v1975 = vpack.c.bf16 %v1943, %v1943
        %v1976 = vpack.c.bf16 %v1944, %v1944
        %v1977 = vpack.c.bf16 %v1945, %v1945
        %v1978 = vpack.c.bf16 %v1946, %v1946
        %v1979 = vpack.c.bf16 %v1947, %v1947
        %v1980 = vpack.c.bf16 %v1948, %v1948
        %v1981 = vpack.c.bf16 %v1949, %v1949
        %v1982 = vpack.c.bf16 %v1950, %v1950
        %v1983 = vpack.c.bf16 %v1951, %v1951
        %v1984 = vpack.c.bf16 %v1952, %v1952
        %v1985 = vpack.c.bf16 %v1953, %v1953
        %v1986 = vpack.c.bf16 %v1954, %v1954
        %v1987 = vpack.c.bf16 %v1955, %v1955
        %1988 = vst [vmem:[#allocation3 + $0x20] sm:$0xf] %v1956
        %1989 = vst [vmem:[#allocation3 + $0x44] sm:$0xf] %v1957
        %1990 = vst [vmem:[#allocation3 + $0x68] sm:$0xf] %v1958
        %1991 = vst [vmem:[#allocation3 + $0x8c] sm:$0xf] %v1959
        %1992 = vst [vmem:[#allocation3 + $0xb0] sm:$0xf] %v1960
        %1993 = vst [vmem:[#allocation3 + $0xd4] sm:$0xf] %v1961
        %1994 = vst [vmem:[#allocation3 + $0xf8] sm:$0xf] %v1962
        %1995 = vst [vmem:[#allocation3 + $0x11c] sm:$0xf] %v1963
        %1996 = vst [vmem:[#allocation3 + $0x140] sm:$0xf] %v1964
        %1997 = vst [vmem:[#allocation3 + $0x164] sm:$0xf] %v1965
        %1998 = vst [vmem:[#allocation3 + $0x188] sm:$0xf] %v1966
        %1999 = vst [vmem:[#allocation3 + $0x1ac] sm:$0xf] %v1967
        %2000 = vst [vmem:[#allocation3 + $0x1d0] sm:$0xf] %v1968
        %2001 = vst [vmem:[#allocation3 + $0x1f4] sm:$0xf] %v1969
        %2002 = vst [vmem:[#allocation3 + $0x218] sm:$0xf] %v1970
        %2003 = vst [vmem:[#allocation3 + $0x23c] sm:$0xf] %v1971
        %2004 = vst [vmem:[#allocation3 + $0x260] sm:$0xf] %v1972
        %2005 = vst [vmem:[#allocation3 + $0x284] sm:$0xf] %v1973
        %2006 = vst [vmem:[#allocation3 + $0x2a8] sm:$0xf] %v1974
        %2007 = vst [vmem:[#allocation3 + $0x2cc] sm:$0xf] %v1975
        %2008 = vst [vmem:[#allocation3 + $0x2f0] sm:$0xf] %v1976
        %2009 = vst [vmem:[#allocation3 + $0x314] sm:$0xf] %v1977
        %2010 = vst [vmem:[#allocation3 + $0x338] sm:$0xf] %v1978
        %2011 = vst [vmem:[#allocation3 + $0x35c] sm:$0xf] %v1979
        %2012 = vst [vmem:[#allocation3 + $0x380] sm:$0xf] %v1980
        %2013 = vst [vmem:[#allocation3 + $0x3a4] sm:$0xf] %v1981
        %2014 = vst [vmem:[#allocation3 + $0x3c8] sm:$0xf] %v1982
        %2015 = vst [vmem:[#allocation3 + $0x3ec] sm:$0xf] %v1983
        %2016 = vst [vmem:[#allocation3 + $0x410] sm:$0xf] %v1984
        %2017 = vst [vmem:[#allocation3 + $0x434] sm:$0xf] %v1985
        %2018 = vst [vmem:[#allocation3 + $0x458] sm:$0xf] %v1986
        %2019 = vst [vmem:[#allocation3 + $0x47c] sm:$0xf] %v1987
        %v2020 = vld [vmem:[#allocation3] sm:$0xff]
        %v2021 = vld [vmem:[#allocation3 + $0x8] sm:$0xff]
        %v2022 = vld [vmem:[#allocation3 + $0x10] sm:$0xff]
        %v2023 = vld [vmem:[#allocation3 + $0x18] sm:$0xff]
        %v2024 = vld [vmem:[#allocation3 + $0x20] sm:$0xf]
        %v2025 = vld [vmem:[#allocation3 + $0x24] sm:$0xff]
        %v2026 = vld [vmem:[#allocation3 + $0x2c] sm:$0xff]
        %v2027 = vld [vmem:[#allocation3 + $0x34] sm:$0xff]
        %v2028 = vld [vmem:[#allocation3 + $0x3c] sm:$0xff]
        %v2029 = vld [vmem:[#allocation3 + $0x44] sm:$0xf]
        %v2030 = vld [vmem:[#allocation3 + $0x48] sm:$0xff]
        %v2031 = vld [vmem:[#allocation3 + $0x50] sm:$0xff]
        %v2032 = vld [vmem:[#allocation3 + $0x58] sm:$0xff]
        %v2033 = vld [vmem:[#allocation3 + $0x60] sm:$0xff]
        %v2034 = vld [vmem:[#allocation3 + $0x68] sm:$0xf]
        %v2035 = vld [vmem:[#allocation3 + $0x6c] sm:$0xff]
        %v2036 = vld [vmem:[#allocation3 + $0x74] sm:$0xff]
        %v2037 = vld [vmem:[#allocation3 + $0x7c] sm:$0xff]
        %v2038 = vld [vmem:[#allocation3 + $0x84] sm:$0xff]
        %v2039 = vld [vmem:[#allocation3 + $0x8c] sm:$0xf]
        %v2040 = vld [vmem:[#allocation3 + $0x90] sm:$0xff]
        %v2041 = vld [vmem:[#allocation3 + $0x98] sm:$0xff]
        %v2042 = vld [vmem:[#allocation3 + $0xa0] sm:$0xff]
        %v2043 = vld [vmem:[#allocation3 + $0xa8] sm:$0xff]
        %v2044 = vld [vmem:[#allocation3 + $0xb0] sm:$0xf]
        %v2045 = vld [vmem:[#allocation3 + $0xb4] sm:$0xff]
        %v2046 = vld [vmem:[#allocation3 + $0xbc] sm:$0xff]
        %v2047 = vld [vmem:[#allocation3 + $0xc4] sm:$0xff]
        %v2048 = vld [vmem:[#allocation3 + $0xcc] sm:$0xff]
        %v2049 = vld [vmem:[#allocation3 + $0xd4] sm:$0xf]
        %v2050 = vld [vmem:[#allocation3 + $0xd8] sm:$0xff]
        %v2051 = vld [vmem:[#allocation3 + $0xe0] sm:$0xff]
        %v2052 = vld [vmem:[#allocation3 + $0xe8] sm:$0xff]
        %v2053 = vld [vmem:[#allocation3 + $0xf0] sm:$0xff]
        %v2054 = vld [vmem:[#allocation3 + $0xf8] sm:$0xf]
        %v2055 = vld [vmem:[#allocation3 + $0xfc] sm:$0xff]
        %v2056 = vld [vmem:[#allocation3 + $0x104] sm:$0xff]
        %v2057 = vld [vmem:[#allocation3 + $0x10c] sm:$0xff]
        %v2058 = vld [vmem:[#allocation3 + $0x114] sm:$0xff]
        %v2059 = vld [vmem:[#allocation3 + $0x11c] sm:$0xf]
        %v2060 = vld [vmem:[#allocation3 + $0x120] sm:$0xff]
        %v2061 = vld [vmem:[#allocation3 + $0x128] sm:$0xff]
        %v2062 = vld [vmem:[#allocation3 + $0x130] sm:$0xff]
        %v2063 = vld [vmem:[#allocation3 + $0x138] sm:$0xff]
        %v2064 = vld [vmem:[#allocation3 + $0x140] sm:$0xf]
        %v2065 = vld [vmem:[#allocation3 + $0x144] sm:$0xff]
        %v2066 = vld [vmem:[#allocation3 + $0x14c] sm:$0xff]
        %v2067 = vld [vmem:[#allocation3 + $0x154] sm:$0xff]
        %v2068 = vld [vmem:[#allocation3 + $0x15c] sm:$0xff]
        %v2069 = vld [vmem:[#allocation3 + $0x164] sm:$0xf]
        %v2070 = vld [vmem:[#allocation3 + $0x168] sm:$0xff]
        %v2071 = vld [vmem:[#allocation3 + $0x170] sm:$0xff]
        %v2072 = vld [vmem:[#allocation3 + $0x178] sm:$0xff]
        %v2073 = vld [vmem:[#allocation3 + $0x180] sm:$0xff]
        %v2074 = vld [vmem:[#allocation3 + $0x188] sm:$0xf]
        %v2075 = vld [vmem:[#allocation3 + $0x18c] sm:$0xff]
        %v2076 = vld [vmem:[#allocation3 + $0x194] sm:$0xff]
        %v2077 = vld [vmem:[#allocation3 + $0x19c] sm:$0xff]
        %v2078 = vld [vmem:[#allocation3 + $0x1a4] sm:$0xff]
        %v2079 = vld [vmem:[#allocation3 + $0x1ac] sm:$0xf]
        %v2080 = vld [vmem:[#allocation3 + $0x1b0] sm:$0xff]
        %v2081 = vld [vmem:[#allocation3 + $0x1b8] sm:$0xff]
        %v2082 = vld [vmem:[#allocation3 + $0x1c0] sm:$0xff]
        %v2083 = vld [vmem:[#allocation3 + $0x1c8] sm:$0xff]
        %v2084 = vld [vmem:[#allocation3 + $0x1d0] sm:$0xf]
        %v2085 = vld [vmem:[#allocation3 + $0x1d4] sm:$0xff]
        %v2086 = vld [vmem:[#allocation3 + $0x1dc] sm:$0xff]
        %v2087 = vld [vmem:[#allocation3 + $0x1e4] sm:$0xff]
        %v2088 = vld [vmem:[#allocation3 + $0x1ec] sm:$0xff]
        %v2089 = vld [vmem:[#allocation3 + $0x1f4] sm:$0xf]
        %v2090 = vld [vmem:[#allocation3 + $0x1f8] sm:$0xff]
        %v2091 = vld [vmem:[#allocation3 + $0x200] sm:$0xff]
        %v2092 = vld [vmem:[#allocation3 + $0x208] sm:$0xff]
        %v2093 = vld [vmem:[#allocation3 + $0x210] sm:$0xff]
        %v2094 = vld [vmem:[#allocation3 + $0x218] sm:$0xf]
        %v2095 = vld [vmem:[#allocation3 + $0x21c] sm:$0xff]
        %v2096 = vld [vmem:[#allocation3 + $0x224] sm:$0xff]
        %v2097 = vld [vmem:[#allocation3 + $0x22c] sm:$0xff]
        %v2098 = vld [vmem:[#allocation3 + $0x234] sm:$0xff]
        %v2099 = vld [vmem:[#allocation3 + $0x23c] sm:$0xf]
        %v2100 = vld [vmem:[#allocation3 + $0x240] sm:$0xff]
        %v2101 = vld [vmem:[#allocation3 + $0x248] sm:$0xff]
        %v2102 = vld [vmem:[#allocation3 + $0x250] sm:$0xff]
        %v2103 = vld [vmem:[#allocation3 + $0x258] sm:$0xff]
        %v2104 = vld [vmem:[#allocation3 + $0x260] sm:$0xf]
        %v2105 = vld [vmem:[#allocation3 + $0x264] sm:$0xff]
        %v2106 = vld [vmem:[#allocation3 + $0x26c] sm:$0xff]
        %v2107 = vld [vmem:[#allocation3 + $0x274] sm:$0xff]
        %v2108 = vld [vmem:[#allocation3 + $0x27c] sm:$0xff]
        %v2109 = vld [vmem:[#allocation3 + $0x284] sm:$0xf]
        %v2110 = vld [vmem:[#allocation3 + $0x288] sm:$0xff]
        %v2111 = vld [vmem:[#allocation3 + $0x290] sm:$0xff]
        %v2112 = vld [vmem:[#allocation3 + $0x298] sm:$0xff]
        %v2113 = vld [vmem:[#allocation3 + $0x2a0] sm:$0xff]
        %v2114 = vld [vmem:[#allocation3 + $0x2a8] sm:$0xf]
        %v2115 = vld [vmem:[#allocation3 + $0x2ac] sm:$0xff]
        %v2116 = vld [vmem:[#allocation3 + $0x2b4] sm:$0xff]
        %v2117 = vld [vmem:[#allocation3 + $0x2bc] sm:$0xff]
        %v2118 = vld [vmem:[#allocation3 + $0x2c4] sm:$0xff]
        %v2119 = vld [vmem:[#allocation3 + $0x2cc] sm:$0xf]
        %v2120 = vld [vmem:[#allocation3 + $0x2d0] sm:$0xff]
        %v2121 = vld [vmem:[#allocation3 + $0x2d8] sm:$0xff]
        %v2122 = vld [vmem:[#allocation3 + $0x2e0] sm:$0xff]
        %v2123 = vld [vmem:[#allocation3 + $0x2e8] sm:$0xff]
        %v2124 = vld [vmem:[#allocation3 + $0x2f0] sm:$0xf]
        %v2125 = vld [vmem:[#allocation3 + $0x2f4] sm:$0xff]
        %v2126 = vld [vmem:[#allocation3 + $0x2fc] sm:$0xff]
        %v2127 = vld [vmem:[#allocation3 + $0x304] sm:$0xff]
        %v2128 = vld [vmem:[#allocation3 + $0x30c] sm:$0xff]
        %v2129 = vld [vmem:[#allocation3 + $0x314] sm:$0xf]
        %v2130 = vld [vmem:[#allocation3 + $0x318] sm:$0xff]
        %v2131 = vld [vmem:[#allocation3 + $0x320] sm:$0xff]
        %v2132 = vld [vmem:[#allocation3 + $0x328] sm:$0xff]
        %v2133 = vld [vmem:[#allocation3 + $0x330] sm:$0xff]
        %v2134 = vld [vmem:[#allocation3 + $0x338] sm:$0xf]
        %v2135 = vld [vmem:[#allocation3 + $0x33c] sm:$0xff]
        %v2136 = vld [vmem:[#allocation3 + $0x344] sm:$0xff]
        %v2137 = vld [vmem:[#allocation3 + $0x34c] sm:$0xff]
        %v2138 = vld [vmem:[#allocation3 + $0x354] sm:$0xff]
        %v2139 = vld [vmem:[#allocation3 + $0x35c] sm:$0xf]
        %v2140 = vld [vmem:[#allocation3 + $0x360] sm:$0xff]
        %v2141 = vld [vmem:[#allocation3 + $0x368] sm:$0xff]
        %v2142 = vld [vmem:[#allocation3 + $0x370] sm:$0xff]
        %v2143 = vld [vmem:[#allocation3 + $0x378] sm:$0xff]
        %v2144 = vld [vmem:[#allocation3 + $0x380] sm:$0xf]
        %v2145 = vld [vmem:[#allocation3 + $0x384] sm:$0xff]
        %v2146 = vld [vmem:[#allocation3 + $0x38c] sm:$0xff]
        %v2147 = vld [vmem:[#allocation3 + $0x394] sm:$0xff]
        %v2148 = vld [vmem:[#allocation3 + $0x39c] sm:$0xff]
        %v2149 = vld [vmem:[#allocation3 + $0x3a4] sm:$0xf]
        %v2150 = vld [vmem:[#allocation3 + $0x3a8] sm:$0xff]
        %v2151 = vld [vmem:[#allocation3 + $0x3b0] sm:$0xff]
        %v2152 = vld [vmem:[#allocation3 + $0x3b8] sm:$0xff]
        %v2153 = vld [vmem:[#allocation3 + $0x3c0] sm:$0xff]
        %v2154 = vld [vmem:[#allocation3 + $0x3c8] sm:$0xf]
        %v2155 = vld [vmem:[#allocation3 + $0x3cc] sm:$0xff]
        %v2156 = vld [vmem:[#allocation3 + $0x3d4] sm:$0xff]
        %v2157 = vld [vmem:[#allocation3 + $0x3dc] sm:$0xff]
        %v2158 = vld [vmem:[#allocation3 + $0x3e4] sm:$0xff]
        %v2159 = vld [vmem:[#allocation3 + $0x3ec] sm:$0xf]
        %v2160 = vld [vmem:[#allocation3 + $0x3f0] sm:$0xff]
        %v2161 = vld [vmem:[#allocation3 + $0x3f8] sm:$0xff]
        %v2162 = vld [vmem:[#allocation3 + $0x400] sm:$0xff]
        %v2163 = vld [vmem:[#allocation3 + $0x408] sm:$0xff]
        %v2164 = vld [vmem:[#allocation3 + $0x410] sm:$0xf]
        %v2165 = vld [vmem:[#allocation3 + $0x414] sm:$0xff]
        %v2166 = vld [vmem:[#allocation3 + $0x41c] sm:$0xff]
        %v2167 = vld [vmem:[#allocation3 + $0x424] sm:$0xff]
        %v2168 = vld [vmem:[#allocation3 + $0x42c] sm:$0xff]
        %v2169 = vld [vmem:[#allocation3 + $0x434] sm:$0xf]
        %v2170 = vld [vmem:[#allocation3 + $0x438] sm:$0xff]
        %v2171 = vld [vmem:[#allocation3 + $0x440] sm:$0xff]
        %v2172 = vld [vmem:[#allocation3 + $0x448] sm:$0xff]
        %v2173 = vld [vmem:[#allocation3 + $0x450] sm:$0xff]
        %v2174 = vld [vmem:[#allocation3 + $0x458] sm:$0xf]
        %v2175 = vld [vmem:[#allocation3 + $0x45c] sm:$0xff]
        %v2176 = vld [vmem:[#allocation3 + $0x464] sm:$0xff]
        %v2177 = vld [vmem:[#allocation3 + $0x46c] sm:$0xff]
        %v2178 = vld [vmem:[#allocation3 + $0x474] sm:$0xff]
        %v2179 = vld [vmem:[#allocation3 + $0x47c] sm:$0xf]
        %v2180 = vld [vmem:[#allocation7] sm:$0xf]
        %v2181 = vld [vmem:[#allocation7 + $0x4] sm:$0xf]
        %v2182 = vld [vmem:[#allocation7 + $0x8] sm:$0xf]
        %v2183 = vld [vmem:[#allocation7 + $0xc] sm:$0xf]
        %v2184 = vld [vmem:[#allocation7 + $0x10] sm:$0xf]
        %v2185 = vld [vmem:[#allocation7 + $0x14] sm:$0xf]
        %v2186 = vld [vmem:[#allocation7 + $0x18] sm:$0xf]
        %v2187 = vld [vmem:[#allocation7 + $0x1c] sm:$0xf]
        %v2188 = vld [vmem:[#allocation7 + $0x20] sm:$0xf]
        %v2189 = vld [vmem:[#allocation7 + $0x24] sm:$0xf]
        %v2190 = vld [vmem:[#allocation7 + $0x28] sm:$0xf]
        %v2191 = vld [vmem:[#allocation7 + $0x2c] sm:$0xf]
        %v2192 = vld [vmem:[#allocation7 + $0x30] sm:$0xf]
        %v2193 = vld [vmem:[#allocation7 + $0x34] sm:$0xf]
        %v2194 = vld [vmem:[#allocation7 + $0x38] sm:$0xf]
        %v2195 = vld [vmem:[#allocation7 + $0x3c] sm:$0xf]
        %v2196 = vld [vmem:[#allocation7 + $0x40] sm:$0xf]
        %v2197 = vld [vmem:[#allocation7 + $0x44] sm:$0xf]
        %v2198 = vld [vmem:[#allocation7 + $0x48] sm:$0xf]
        %v2199 = vld [vmem:[#allocation7 + $0x4c] sm:$0xf]
        %v2200 = vld [vmem:[#allocation7 + $0x50] sm:$0xf]
        %v2201 = vld [vmem:[#allocation7 + $0x54] sm:$0xf]
        %v2202 = vld [vmem:[#allocation7 + $0x58] sm:$0xf]
        %v2203 = vld [vmem:[#allocation7 + $0x5c] sm:$0xf]
        %v2204 = vld [vmem:[#allocation7 + $0x60] sm:$0xf]
        %v2205 = vld [vmem:[#allocation7 + $0x64] sm:$0xf]
        %v2206 = vld [vmem:[#allocation7 + $0x68] sm:$0xf]
        %v2207 = vld [vmem:[#allocation7 + $0x6c] sm:$0xf]
        %v2208 = vld [vmem:[#allocation7 + $0x70] sm:$0xf]
        %v2209 = vld [vmem:[#allocation7 + $0x74] sm:$0xf]
        %v2210 = vld [vmem:[#allocation7 + $0x78] sm:$0xf]
        %v2211 = vld [vmem:[#allocation7 + $0x7c] sm:$0xf]
        %v2212 = vld [vmem:[#allocation7 + $0x80] sm:$0xf]
        %v2213 = vld [vmem:[#allocation7 + $0x84] sm:$0xf]
        %v2214 = vld [vmem:[#allocation7 + $0x88] sm:$0xf]
        %v2215 = vld [vmem:[#allocation7 + $0x8c] sm:$0xf]
        %v2216 = vld [vmem:[#allocation7 + $0x90] sm:$0xf]
        %v2217 = vld [vmem:[#allocation7 + $0x94] sm:$0xf]
        %v2218 = vld [vmem:[#allocation7 + $0x98] sm:$0xf]
        %v2219 = vld [vmem:[#allocation7 + $0x9c] sm:$0xf]
        %v2220 = vld [vmem:[#allocation7 + $0xa0] sm:$0xf]
        %v2221 = vld [vmem:[#allocation7 + $0xa4] sm:$0xf]
        %v2222 = vld [vmem:[#allocation7 + $0xa8] sm:$0xf]
        %v2223 = vld [vmem:[#allocation7 + $0xac] sm:$0xf]
        %v2224 = vld [vmem:[#allocation7 + $0xb0] sm:$0xf]
        %v2225 = vld [vmem:[#allocation7 + $0xb4] sm:$0xf]
        %v2226 = vld [vmem:[#allocation7 + $0xb8] sm:$0xf]
        %v2227 = vld [vmem:[#allocation7 + $0xbc] sm:$0xf]
        %v2228 = vld [vmem:[#allocation7 + $0xc0] sm:$0xf]
        %v2229 = vld [vmem:[#allocation7 + $0xc4] sm:$0xf]
        %v2230 = vld [vmem:[#allocation7 + $0xc8] sm:$0xf]
        %v2231 = vld [vmem:[#allocation7 + $0xcc] sm:$0xf]
        %v2232 = vld [vmem:[#allocation7 + $0xd0] sm:$0xf]
        %v2233 = vld [vmem:[#allocation7 + $0xd4] sm:$0xf]
        %v2234 = vld [vmem:[#allocation7 + $0xd8] sm:$0xf]
        %v2235 = vld [vmem:[#allocation7 + $0xdc] sm:$0xf]
        %v2236 = vld [vmem:[#allocation7 + $0xe0] sm:$0xf]
        %v2237 = vld [vmem:[#allocation7 + $0xe4] sm:$0xf]
        %v2238 = vld [vmem:[#allocation7 + $0xe8] sm:$0xf]
        %v2239 = vld [vmem:[#allocation7 + $0xec] sm:$0xf]
        %v2240 = vld [vmem:[#allocation7 + $0xf0] sm:$0xf]
        %v2241 = vld [vmem:[#allocation7 + $0xf4] sm:$0xf]
        %v2242 = vld [vmem:[#allocation7 + $0xf8] sm:$0xf]
        %v2243 = vld [vmem:[#allocation7 + $0xfc] sm:$0xf]
        %v2244 = vld [vmem:[#allocation7 + $0x100] sm:$0xf]
        %v2245 = vld [vmem:[#allocation7 + $0x104] sm:$0xf]
        %v2246 = vld [vmem:[#allocation7 + $0x108] sm:$0xf]
        %v2247 = vld [vmem:[#allocation7 + $0x10c] sm:$0xf]
        %v2248 = vld [vmem:[#allocation7 + $0x110] sm:$0xf]
        %v2249 = vld [vmem:[#allocation7 + $0x114] sm:$0xf]
        %v2250 = vld [vmem:[#allocation7 + $0x118] sm:$0xf]
        %v2251 = vld [vmem:[#allocation7 + $0x11c] sm:$0xf]
        %v2252 = vld [vmem:[#allocation7 + $0x120] sm:$0xf]
        %v2253 = vld [vmem:[#allocation7 + $0x124] sm:$0xf]
        %v2254 = vld [vmem:[#allocation7 + $0x128] sm:$0xf]
        %v2255 = vld [vmem:[#allocation7 + $0x12c] sm:$0xf]
        %v2256 = vld [vmem:[#allocation7 + $0x130] sm:$0xf]
        %v2257 = vld [vmem:[#allocation7 + $0x134] sm:$0xf]
        %v2258 = vld [vmem:[#allocation7 + $0x138] sm:$0xf]
        %v2259 = vld [vmem:[#allocation7 + $0x13c] sm:$0xf]
        %v2260 = vld [vmem:[#allocation7 + $0x140] sm:$0xf]
        %v2261 = vld [vmem:[#allocation7 + $0x144] sm:$0xf]
        %v2262 = vld [vmem:[#allocation7 + $0x148] sm:$0xf]
        %v2263 = vld [vmem:[#allocation7 + $0x14c] sm:$0xf]
        %v2264 = vld [vmem:[#allocation7 + $0x150] sm:$0xf]
        %v2265 = vld [vmem:[#allocation7 + $0x154] sm:$0xf]
        %v2266 = vld [vmem:[#allocation7 + $0x158] sm:$0xf]
        %v2267 = vld [vmem:[#allocation7 + $0x15c] sm:$0xf]
        %v2268 = vld [vmem:[#allocation7 + $0x160] sm:$0xf]
        %v2269 = vld [vmem:[#allocation7 + $0x164] sm:$0xf]
        %v2270 = vld [vmem:[#allocation7 + $0x168] sm:$0xf]
        %v2271 = vld [vmem:[#allocation7 + $0x16c] sm:$0xf]
        %v2272 = vld [vmem:[#allocation7 + $0x170] sm:$0xf]
        %v2273 = vld [vmem:[#allocation7 + $0x174] sm:$0xf]
        %v2274 = vld [vmem:[#allocation7 + $0x178] sm:$0xf]
        %v2275 = vld [vmem:[#allocation7 + $0x17c] sm:$0xf]
        %v2276 = vld [vmem:[#allocation7 + $0x180] sm:$0xf]
        %v2277 = vld [vmem:[#allocation7 + $0x184] sm:$0xf]
        %v2278 = vld [vmem:[#allocation7 + $0x188] sm:$0xf]
        %v2279 = vld [vmem:[#allocation7 + $0x18c] sm:$0xf]
        %v2280 = vld [vmem:[#allocation7 + $0x190] sm:$0xf]
        %v2281 = vld [vmem:[#allocation7 + $0x194] sm:$0xf]
        %v2282 = vld [vmem:[#allocation7 + $0x198] sm:$0xf]
        %v2283 = vld [vmem:[#allocation7 + $0x19c] sm:$0xf]
        %v2284 = vld [vmem:[#allocation7 + $0x1a0] sm:$0xf]
        %v2285 = vld [vmem:[#allocation7 + $0x1a4] sm:$0xf]
        %v2286 = vld [vmem:[#allocation7 + $0x1a8] sm:$0xf]
        %v2287 = vld [vmem:[#allocation7 + $0x1ac] sm:$0xf]
        %v2288 = vld [vmem:[#allocation7 + $0x1b0] sm:$0xf]
        %v2289 = vld [vmem:[#allocation7 + $0x1b4] sm:$0xf]
        %v2290 = vld [vmem:[#allocation7 + $0x1b8] sm:$0xf]
        %v2291 = vld [vmem:[#allocation7 + $0x1bc] sm:$0xf]
        %v2292 = vld [vmem:[#allocation7 + $0x1c0] sm:$0xf]
        %v2293 = vld [vmem:[#allocation7 + $0x1c4] sm:$0xf]
        %v2294 = vld [vmem:[#allocation7 + $0x1c8] sm:$0xf]
        %v2295 = vld [vmem:[#allocation7 + $0x1cc] sm:$0xf]
        %v2296 = vld [vmem:[#allocation7 + $0x1d0] sm:$0xf]
        %v2297 = vld [vmem:[#allocation7 + $0x1d4] sm:$0xf]
        %v2298 = vld [vmem:[#allocation7 + $0x1d8] sm:$0xf]
        %v2299 = vld [vmem:[#allocation7 + $0x1dc] sm:$0xf]
        %v2300 = vld [vmem:[#allocation7 + $0x1e0] sm:$0xf]
        %v2301 = vld [vmem:[#allocation7 + $0x1e4] sm:$0xf]
        %v2302 = vld [vmem:[#allocation7 + $0x1e8] sm:$0xf]
        %v2303 = vld [vmem:[#allocation7 + $0x1ec] sm:$0xf]
        %v2304 = vld [vmem:[#allocation7 + $0x1f0] sm:$0xf]
        %v2305 = vld [vmem:[#allocation7 + $0x1f4] sm:$0xf]
        %v2306 = vld [vmem:[#allocation7 + $0x1f8] sm:$0xf]
        %v2307 = vld [vmem:[#allocation7 + $0x1fc] sm:$0xf]
        %v2308 = vld [vmem:[#allocation7 + $0x200] sm:$0xf]
        %v2309 = vld [vmem:[#allocation7 + $0x204] sm:$0xf]
        %v2310 = vld [vmem:[#allocation7 + $0x208] sm:$0xf]
        %v2311 = vld [vmem:[#allocation7 + $0x20c] sm:$0xf]
        %v2312 = vld [vmem:[#allocation7 + $0x210] sm:$0xf]
        %v2313 = vld [vmem:[#allocation7 + $0x214] sm:$0xf]
        %v2314 = vld [vmem:[#allocation7 + $0x218] sm:$0xf]
        %v2315 = vld [vmem:[#allocation7 + $0x21c] sm:$0xf]
        %v2316 = vld [vmem:[#allocation7 + $0x220] sm:$0xf]
        %v2317 = vld [vmem:[#allocation7 + $0x224] sm:$0xf]
        %v2318 = vld [vmem:[#allocation7 + $0x228] sm:$0xf]
        %v2319 = vld [vmem:[#allocation7 + $0x22c] sm:$0xf]
        %v2320 = vld [vmem:[#allocation7 + $0x230] sm:$0xf]
        %v2321 = vld [vmem:[#allocation7 + $0x234] sm:$0xf]
        %v2322 = vld [vmem:[#allocation7 + $0x238] sm:$0xf]
        %v2323 = vld [vmem:[#allocation7 + $0x23c] sm:$0xf]
        %v2484 = vunpack.c.l.b16 %v2020
        %v2485 = vunpack.c.h.b16 %v2020
        %v2486 = vunpack.c.l.b16 %v2021
        %v2487 = vunpack.c.h.b16 %v2021
        %v2488 = vunpack.c.l.b16 %v2022
        %v2489 = vunpack.c.h.b16 %v2022
        %v2490 = vunpack.c.l.b16 %v2023
        %v2491 = vunpack.c.h.b16 %v2023
        %v2492 = vunpack.c.l.b16 %v2024
        %v2493 = vunpack.c.l.b16 %v2025
        %v2494 = vunpack.c.h.b16 %v2025
        %v2495 = vunpack.c.l.b16 %v2026
        %v2496 = vunpack.c.h.b16 %v2026
        %v2497 = vunpack.c.l.b16 %v2027
        %v2498 = vunpack.c.h.b16 %v2027
        %v2499 = vunpack.c.l.b16 %v2028
        %v2500 = vunpack.c.h.b16 %v2028
        %v2501 = vunpack.c.l.b16 %v2029
        %v2502 = vunpack.c.l.b16 %v2030
        %v2503 = vunpack.c.h.b16 %v2030
        %v2504 = vunpack.c.l.b16 %v2031
        %v2505 = vunpack.c.h.b16 %v2031
        %v2506 = vunpack.c.l.b16 %v2032
        %v2507 = vunpack.c.h.b16 %v2032
        %v2508 = vunpack.c.l.b16 %v2033
        %v2509 = vunpack.c.h.b16 %v2033
        %v2510 = vunpack.c.l.b16 %v2034
        %v2511 = vunpack.c.l.b16 %v2035
        %v2512 = vunpack.c.h.b16 %v2035
        %v2513 = vunpack.c.l.b16 %v2036
        %v2514 = vunpack.c.h.b16 %v2036
        %v2515 = vunpack.c.l.b16 %v2037
        %v2516 = vunpack.c.h.b16 %v2037
        %v2517 = vunpack.c.l.b16 %v2038
        %v2518 = vunpack.c.h.b16 %v2038
        %v2519 = vunpack.c.l.b16 %v2039
        %v2520 = vunpack.c.l.b16 %v2040
        %v2521 = vunpack.c.h.b16 %v2040
        %v2522 = vunpack.c.l.b16 %v2041
        %v2523 = vunpack.c.h.b16 %v2041
        %v2524 = vunpack.c.l.b16 %v2042
        %v2525 = vunpack.c.h.b16 %v2042
        %v2526 = vunpack.c.l.b16 %v2043
        %v2527 = vunpack.c.h.b16 %v2043
        %v2528 = vunpack.c.l.b16 %v2044
        %v2529 = vunpack.c.l.b16 %v2045
        %v2530 = vunpack.c.h.b16 %v2045
        %v2531 = vunpack.c.l.b16 %v2046
        %v2532 = vunpack.c.h.b16 %v2046
        %v2533 = vunpack.c.l.b16 %v2047
        %v2534 = vunpack.c.h.b16 %v2047
        %v2535 = vunpack.c.l.b16 %v2048
        %v2536 = vunpack.c.h.b16 %v2048
        %v2537 = vunpack.c.l.b16 %v2049
        %v2538 = vunpack.c.l.b16 %v2050
        %v2539 = vunpack.c.h.b16 %v2050
        %v2540 = vunpack.c.l.b16 %v2051
        %v2541 = vunpack.c.h.b16 %v2051
        %v2542 = vunpack.c.l.b16 %v2052
        %v2543 = vunpack.c.h.b16 %v2052
        %v2544 = vunpack.c.l.b16 %v2053
        %v2545 = vunpack.c.h.b16 %v2053
        %v2546 = vunpack.c.l.b16 %v2054
        %v2547 = vunpack.c.l.b16 %v2055
        %v2548 = vunpack.c.h.b16 %v2055
        %v2549 = vunpack.c.l.b16 %v2056
        %v2550 = vunpack.c.h.b16 %v2056
        %v2551 = vunpack.c.l.b16 %v2057
        %v2552 = vunpack.c.h.b16 %v2057
        %v2553 = vunpack.c.l.b16 %v2058
        %v2554 = vunpack.c.h.b16 %v2058
        %v2555 = vunpack.c.l.b16 %v2059
        %v2556 = vunpack.c.l.b16 %v2060
        %v2557 = vunpack.c.h.b16 %v2060
        %v2558 = vunpack.c.l.b16 %v2061
        %v2559 = vunpack.c.h.b16 %v2061
        %v2560 = vunpack.c.l.b16 %v2062
        %v2561 = vunpack.c.h.b16 %v2062
        %v2562 = vunpack.c.l.b16 %v2063
        %v2563 = vunpack.c.h.b16 %v2063
        %v2564 = vunpack.c.l.b16 %v2064
        %v2565 = vunpack.c.l.b16 %v2065
        %v2566 = vunpack.c.h.b16 %v2065
        %v2567 = vunpack.c.l.b16 %v2066
        %v2568 = vunpack.c.h.b16 %v2066
        %v2569 = vunpack.c.l.b16 %v2067
        %v2570 = vunpack.c.h.b16 %v2067
        %v2571 = vunpack.c.l.b16 %v2068
        %v2572 = vunpack.c.h.b16 %v2068
        %v2573 = vunpack.c.l.b16 %v2069
        %v2574 = vunpack.c.l.b16 %v2070
        %v2575 = vunpack.c.h.b16 %v2070
        %v2576 = vunpack.c.l.b16 %v2071
        %v2577 = vunpack.c.h.b16 %v2071
        %v2578 = vunpack.c.l.b16 %v2072
        %v2579 = vunpack.c.h.b16 %v2072
        %v2580 = vunpack.c.l.b16 %v2073
        %v2581 = vunpack.c.h.b16 %v2073
        %v2582 = vunpack.c.l.b16 %v2074
        %v2583 = vunpack.c.l.b16 %v2075
        %v2584 = vunpack.c.h.b16 %v2075
        %v2585 = vunpack.c.l.b16 %v2076
        %v2586 = vunpack.c.h.b16 %v2076
        %v2587 = vunpack.c.l.b16 %v2077
        %v2588 = vunpack.c.h.b16 %v2077
        %v2589 = vunpack.c.l.b16 %v2078
        %v2590 = vunpack.c.h.b16 %v2078
        %v2591 = vunpack.c.l.b16 %v2079
        %v2592 = vunpack.c.l.b16 %v2080
        %v2593 = vunpack.c.h.b16 %v2080
        %v2594 = vunpack.c.l.b16 %v2081
        %v2595 = vunpack.c.h.b16 %v2081
        %v2596 = vunpack.c.l.b16 %v2082
        %v2597 = vunpack.c.h.b16 %v2082
        %v2598 = vunpack.c.l.b16 %v2083
        %v2599 = vunpack.c.h.b16 %v2083
        %v2600 = vunpack.c.l.b16 %v2084
        %v2601 = vunpack.c.l.b16 %v2085
        %v2602 = vunpack.c.h.b16 %v2085
        %v2603 = vunpack.c.l.b16 %v2086
        %v2604 = vunpack.c.h.b16 %v2086
        %v2605 = vunpack.c.l.b16 %v2087
        %v2606 = vunpack.c.h.b16 %v2087
        %v2607 = vunpack.c.l.b16 %v2088
        %v2608 = vunpack.c.h.b16 %v2088
        %v2609 = vunpack.c.l.b16 %v2089
        %v2610 = vunpack.c.l.b16 %v2090
        %v2611 = vunpack.c.h.b16 %v2090
        %v2612 = vunpack.c.l.b16 %v2091
        %v2613 = vunpack.c.h.b16 %v2091
        %v2614 = vunpack.c.l.b16 %v2092
        %v2615 = vunpack.c.h.b16 %v2092
        %v2616 = vunpack.c.l.b16 %v2093
        %v2617 = vunpack.c.h.b16 %v2093
        %v2618 = vunpack.c.l.b16 %v2094
        %v2619 = vunpack.c.l.b16 %v2095
        %v2620 = vunpack.c.h.b16 %v2095
        %v2621 = vunpack.c.l.b16 %v2096
        %v2622 = vunpack.c.h.b16 %v2096
        %v2623 = vunpack.c.l.b16 %v2097
        %v2624 = vunpack.c.h.b16 %v2097
        %v2625 = vunpack.c.l.b16 %v2098
        %v2626 = vunpack.c.h.b16 %v2098
        %v2627 = vunpack.c.l.b16 %v2099
        %v2628 = vunpack.c.l.b16 %v2100
        %v2629 = vunpack.c.h.b16 %v2100
        %v2630 = vunpack.c.l.b16 %v2101
        %v2631 = vunpack.c.h.b16 %v2101
        %v2632 = vunpack.c.l.b16 %v2102
        %v2633 = vunpack.c.h.b16 %v2102
        %v2634 = vunpack.c.l.b16 %v2103
        %v2635 = vunpack.c.h.b16 %v2103
        %v2636 = vunpack.c.l.b16 %v2104
        %v2637 = vunpack.c.l.b16 %v2105
        %v2638 = vunpack.c.h.b16 %v2105
        %v2639 = vunpack.c.l.b16 %v2106
        %v2640 = vunpack.c.h.b16 %v2106
        %v2641 = vunpack.c.l.b16 %v2107
        %v2642 = vunpack.c.h.b16 %v2107
        %v2643 = vunpack.c.l.b16 %v2108
        %v2644 = vunpack.c.h.b16 %v2108
        %v2645 = vunpack.c.l.b16 %v2109
        %v2646 = vunpack.c.l.b16 %v2110
        %v2647 = vunpack.c.h.b16 %v2110
        %v2648 = vunpack.c.l.b16 %v2111
        %v2649 = vunpack.c.h.b16 %v2111
        %v2650 = vunpack.c.l.b16 %v2112
        %v2651 = vunpack.c.h.b16 %v2112
        %v2652 = vunpack.c.l.b16 %v2113
        %v2653 = vunpack.c.h.b16 %v2113
        %v2654 = vunpack.c.l.b16 %v2114
        %v2655 = vunpack.c.l.b16 %v2115
        %v2656 = vunpack.c.h.b16 %v2115
        %v2657 = vunpack.c.l.b16 %v2116
        %v2658 = vunpack.c.h.b16 %v2116
        %v2659 = vunpack.c.l.b16 %v2117
        %v2660 = vunpack.c.h.b16 %v2117
        %v2661 = vunpack.c.l.b16 %v2118
        %v2662 = vunpack.c.h.b16 %v2118
        %v2663 = vunpack.c.l.b16 %v2119
        %v2664 = vunpack.c.l.b16 %v2120
        %v2665 = vunpack.c.h.b16 %v2120
        %v2666 = vunpack.c.l.b16 %v2121
        %v2667 = vunpack.c.h.b16 %v2121
        %v2668 = vunpack.c.l.b16 %v2122
        %v2669 = vunpack.c.h.b16 %v2122
        %v2670 = vunpack.c.l.b16 %v2123
        %v2671 = vunpack.c.h.b16 %v2123
        %v2672 = vunpack.c.l.b16 %v2124
        %v2673 = vunpack.c.l.b16 %v2125
        %v2674 = vunpack.c.h.b16 %v2125
        %v2675 = vunpack.c.l.b16 %v2126
        %v2676 = vunpack.c.h.b16 %v2126
        %v2677 = vunpack.c.l.b16 %v2127
        %v2678 = vunpack.c.h.b16 %v2127
        %v2679 = vunpack.c.l.b16 %v2128
        %v2680 = vunpack.c.h.b16 %v2128
        %v2681 = vunpack.c.l.b16 %v2129
        %v2682 = vunpack.c.l.b16 %v2130
        %v2683 = vunpack.c.h.b16 %v2130
        %v2684 = vunpack.c.l.b16 %v2131
        %v2685 = vunpack.c.h.b16 %v2131
        %v2686 = vunpack.c.l.b16 %v2132
        %v2687 = vunpack.c.h.b16 %v2132
        %v2688 = vunpack.c.l.b16 %v2133
        %v2689 = vunpack.c.h.b16 %v2133
        %v2690 = vunpack.c.l.b16 %v2134
        %v2691 = vunpack.c.l.b16 %v2135
        %v2692 = vunpack.c.h.b16 %v2135
        %v2693 = vunpack.c.l.b16 %v2136
        %v2694 = vunpack.c.h.b16 %v2136
        %v2695 = vunpack.c.l.b16 %v2137
        %v2696 = vunpack.c.h.b16 %v2137
        %v2697 = vunpack.c.l.b16 %v2138
        %v2698 = vunpack.c.h.b16 %v2138
        %v2699 = vunpack.c.l.b16 %v2139
        %v2700 = vunpack.c.l.b16 %v2140
        %v2701 = vunpack.c.h.b16 %v2140
        %v2702 = vunpack.c.l.b16 %v2141
        %v2703 = vunpack.c.h.b16 %v2141
        %v2704 = vunpack.c.l.b16 %v2142
        %v2705 = vunpack.c.h.b16 %v2142
        %v2706 = vunpack.c.l.b16 %v2143
        %v2707 = vunpack.c.h.b16 %v2143
        %v2708 = vunpack.c.l.b16 %v2144
        %v2709 = vunpack.c.l.b16 %v2145
        %v2710 = vunpack.c.h.b16 %v2145
        %v2711 = vunpack.c.l.b16 %v2146
        %v2712 = vunpack.c.h.b16 %v2146
        %v2713 = vunpack.c.l.b16 %v2147
        %v2714 = vunpack.c.h.b16 %v2147
        %v2715 = vunpack.c.l.b16 %v2148
        %v2716 = vunpack.c.h.b16 %v2148
        %v2717 = vunpack.c.l.b16 %v2149
        %v2718 = vunpack.c.l.b16 %v2150
        %v2719 = vunpack.c.h.b16 %v2150
        %v2720 = vunpack.c.l.b16 %v2151
        %v2721 = vunpack.c.h.b16 %v2151
        %v2722 = vunpack.c.l.b16 %v2152
        %v2723 = vunpack.c.h.b16 %v2152
        %v2724 = vunpack.c.l.b16 %v2153
        %v2725 = vunpack.c.h.b16 %v2153
        %v2726 = vunpack.c.l.b16 %v2154
        %v2727 = vunpack.c.l.b16 %v2155
        %v2728 = vunpack.c.h.b16 %v2155
        %v2729 = vunpack.c.l.b16 %v2156
        %v2730 = vunpack.c.h.b16 %v2156
        %v2731 = vunpack.c.l.b16 %v2157
        %v2732 = vunpack.c.h.b16 %v2157
        %v2733 = vunpack.c.l.b16 %v2158
        %v2734 = vunpack.c.h.b16 %v2158
        %v2735 = vunpack.c.l.b16 %v2159
        %v2736 = vunpack.c.l.b16 %v2160
        %v2737 = vunpack.c.h.b16 %v2160
        %v2738 = vunpack.c.l.b16 %v2161
        %v2739 = vunpack.c.h.b16 %v2161
        %v2740 = vunpack.c.l.b16 %v2162
        %v2741 = vunpack.c.h.b16 %v2162
        %v2742 = vunpack.c.l.b16 %v2163
        %v2743 = vunpack.c.h.b16 %v2163
        %v2744 = vunpack.c.l.b16 %v2164
        %v2745 = vunpack.c.l.b16 %v2165
        %v2746 = vunpack.c.h.b16 %v2165
        %v2747 = vunpack.c.l.b16 %v2166
        %v2748 = vunpack.c.h.b16 %v2166
        %v2749 = vunpack.c.l.b16 %v2167
        %v2750 = vunpack.c.h.b16 %v2167
        %v2751 = vunpack.c.l.b16 %v2168
        %v2752 = vunpack.c.h.b16 %v2168
        %v2753 = vunpack.c.l.b16 %v2169
        %v2754 = vunpack.c.l.b16 %v2170
        %v2755 = vunpack.c.h.b16 %v2170
        %v2756 = vunpack.c.l.b16 %v2171
        %v2757 = vunpack.c.h.b16 %v2171
        %v2758 = vunpack.c.l.b16 %v2172
        %v2759 = vunpack.c.h.b16 %v2172
        %v2760 = vunpack.c.l.b16 %v2173
        %v2761 = vunpack.c.h.b16 %v2173
        %v2762 = vunpack.c.l.b16 %v2174
        %v2763 = vunpack.c.l.b16 %v2175
        %v2764 = vunpack.c.h.b16 %v2175
        %v2765 = vunpack.c.l.b16 %v2176
        %v2766 = vunpack.c.h.b16 %v2176
        %v2767 = vunpack.c.l.b16 %v2177
        %v2768 = vunpack.c.h.b16 %v2177
        %v2769 = vunpack.c.l.b16 %v2178
        %v2770 = vunpack.c.h.b16 %v2178
        %v2771 = vunpack.c.l.b16 %v2179
        %v2772 = vpack.c.b16 %v2493, %v2484
        %v2773 = vpack.c.b16 %v2494, %v2485
        %v2774 = vpack.c.b16 %v2495, %v2486
        %v2775 = vpack.c.b16 %v2496, %v2487
        %v2776 = vpack.c.b16 %v2497, %v2488
        %v2777 = vpack.c.b16 %v2498, %v2489
        %v2778 = vpack.c.b16 %v2499, %v2490
        %v2779 = vpack.c.b16 %v2500, %v2491
        %v2780 = vpack.c.b16 %v2501, %v2492
        %v2781 = vpack.c.b16 %v2511, %v2502
        %v2782 = vpack.c.b16 %v2512, %v2503
        %v2783 = vpack.c.b16 %v2513, %v2504
        %v2784 = vpack.c.b16 %v2514, %v2505
        %v2785 = vpack.c.b16 %v2515, %v2506
        %v2786 = vpack.c.b16 %v2516, %v2507
        %v2787 = vpack.c.b16 %v2517, %v2508
        %v2788 = vpack.c.b16 %v2518, %v2509
        %v2789 = vpack.c.b16 %v2519, %v2510
        %v2790 = vpack.c.b16 %v2529, %v2520
        %v2791 = vpack.c.b16 %v2530, %v2521
        %v2792 = vpack.c.b16 %v2531, %v2522
        %v2793 = vpack.c.b16 %v2532, %v2523
        %v2794 = vpack.c.b16 %v2533, %v2524
        %v2795 = vpack.c.b16 %v2534, %v2525
        %v2796 = vpack.c.b16 %v2535, %v2526
        %v2797 = vpack.c.b16 %v2536, %v2527
        %v2798 = vpack.c.b16 %v2537, %v2528
        %v2799 = vpack.c.b16 %v2547, %v2538
        %v2800 = vpack.c.b16 %v2548, %v2539
        %v2801 = vpack.c.b16 %v2549, %v2540
        %v2802 = vpack.c.b16 %v2550, %v2541
        %v2803 = vpack.c.b16 %v2551, %v2542
        %v2804 = vpack.c.b16 %v2552, %v2543
        %v2805 = vpack.c.b16 %v2553, %v2544
        %v2806 = vpack.c.b16 %v2554, %v2545
        %v2807 = vpack.c.b16 %v2555, %v2546
        %v2808 = vpack.c.b16 %v2565, %v2556
        %v2809 = vpack.c.b16 %v2566, %v2557
        %v2810 = vpack.c.b16 %v2567, %v2558
        %v2811 = vpack.c.b16 %v2568, %v2559
        %v2812 = vpack.c.b16 %v2569, %v2560
        %v2813 = vpack.c.b16 %v2570, %v2561
        %v2814 = vpack.c.b16 %v2571, %v2562
        %v2815 = vpack.c.b16 %v2572, %v2563
        %v2816 = vpack.c.b16 %v2573, %v2564
        %v2817 = vpack.c.b16 %v2583, %v2574
        %v2818 = vpack.c.b16 %v2584, %v2575
        %v2819 = vpack.c.b16 %v2585, %v2576
        %v2820 = vpack.c.b16 %v2586, %v2577
        %v2821 = vpack.c.b16 %v2587, %v2578
        %v2822 = vpack.c.b16 %v2588, %v2579
        %v2823 = vpack.c.b16 %v2589, %v2580
        %v2824 = vpack.c.b16 %v2590, %v2581
        %v2825 = vpack.c.b16 %v2591, %v2582
        %v2826 = vpack.c.b16 %v2601, %v2592
        %v2827 = vpack.c.b16 %v2602, %v2593
        %v2828 = vpack.c.b16 %v2603, %v2594
        %v2829 = vpack.c.b16 %v2604, %v2595
        %v2830 = vpack.c.b16 %v2605, %v2596
        %v2831 = vpack.c.b16 %v2606, %v2597
        %v2832 = vpack.c.b16 %v2607, %v2598
        %v2833 = vpack.c.b16 %v2608, %v2599
        %v2834 = vpack.c.b16 %v2609, %v2600
        %v2835 = vpack.c.b16 %v2619, %v2610
        %v2836 = vpack.c.b16 %v2620, %v2611
        %v2837 = vpack.c.b16 %v2621, %v2612
        %v2838 = vpack.c.b16 %v2622, %v2613
        %v2839 = vpack.c.b16 %v2623, %v2614
        %v2840 = vpack.c.b16 %v2624, %v2615
        %v2841 = vpack.c.b16 %v2625, %v2616
        %v2842 = vpack.c.b16 %v2626, %v2617
        %v2843 = vpack.c.b16 %v2627, %v2618
        %v2844 = vpack.c.b16 %v2637, %v2628
        %v2845 = vpack.c.b16 %v2638, %v2629
        %v2846 = vpack.c.b16 %v2639, %v2630
        %v2847 = vpack.c.b16 %v2640, %v2631
        %v2848 = vpack.c.b16 %v2641, %v2632
        %v2849 = vpack.c.b16 %v2642, %v2633
        %v2850 = vpack.c.b16 %v2643, %v2634
        %v2851 = vpack.c.b16 %v2644, %v2635
        %v2852 = vpack.c.b16 %v2645, %v2636
        %v2853 = vpack.c.b16 %v2655, %v2646
        %v2854 = vpack.c.b16 %v2656, %v2647
        %v2855 = vpack.c.b16 %v2657, %v2648
        %v2856 = vpack.c.b16 %v2658, %v2649
        %v2857 = vpack.c.b16 %v2659, %v2650
        %v2858 = vpack.c.b16 %v2660, %v2651
        %v2859 = vpack.c.b16 %v2661, %v2652
        %v2860 = vpack.c.b16 %v2662, %v2653
        %v2861 = vpack.c.b16 %v2663, %v2654
        %v2862 = vpack.c.b16 %v2673, %v2664
        %v2863 = vpack.c.b16 %v2674, %v2665
        %v2864 = vpack.c.b16 %v2675, %v2666
        %v2865 = vpack.c.b16 %v2676, %v2667
        %v2866 = vpack.c.b16 %v2677, %v2668
        %v2867 = vpack.c.b16 %v2678, %v2669
        %v2868 = vpack.c.b16 %v2679, %v2670
        %v2869 = vpack.c.b16 %v2680, %v2671
        %v2870 = vpack.c.b16 %v2681, %v2672
        %v2871 = vpack.c.b16 %v2691, %v2682
        %v2872 = vpack.c.b16 %v2692, %v2683
        %v2873 = vpack.c.b16 %v2693, %v2684
        %v2874 = vpack.c.b16 %v2694, %v2685
        %v2875 = vpack.c.b16 %v2695, %v2686
        %v2876 = vpack.c.b16 %v2696, %v2687
        %v2877 = vpack.c.b16 %v2697, %v2688
        %v2878 = vpack.c.b16 %v2698, %v2689
        %v2879 = vpack.c.b16 %v2699, %v2690
        %v2880 = vpack.c.b16 %v2709, %v2700
        %v2881 = vpack.c.b16 %v2710, %v2701
        %v2882 = vpack.c.b16 %v2711, %v2702
        %v2883 = vpack.c.b16 %v2712, %v2703
        %v2884 = vpack.c.b16 %v2713, %v2704
        %v2885 = vpack.c.b16 %v2714, %v2705
        %v2886 = vpack.c.b16 %v2715, %v2706
        %v2887 = vpack.c.b16 %v2716, %v2707
        %v2888 = vpack.c.b16 %v2717, %v2708
        %v2889 = vpack.c.b16 %v2727, %v2718
        %v2890 = vpack.c.b16 %v2728, %v2719
        %v2891 = vpack.c.b16 %v2729, %v2720
        %v2892 = vpack.c.b16 %v2730, %v2721
        %v2893 = vpack.c.b16 %v2731, %v2722
        %v2894 = vpack.c.b16 %v2732, %v2723
        %v2895 = vpack.c.b16 %v2733, %v2724
        %v2896 = vpack.c.b16 %v2734, %v2725
        %v2897 = vpack.c.b16 %v2735, %v2726
        %v2898 = vpack.c.b16 %v2745, %v2736
        %v2899 = vpack.c.b16 %v2746, %v2737
        %v2900 = vpack.c.b16 %v2747, %v2738
        %v2901 = vpack.c.b16 %v2748, %v2739
        %v2902 = vpack.c.b16 %v2749, %v2740
        %v2903 = vpack.c.b16 %v2750, %v2741
        %v2904 = vpack.c.b16 %v2751, %v2742
        %v2905 = vpack.c.b16 %v2752, %v2743
        %v2906 = vpack.c.b16 %v2753, %v2744
        %v2907 = vpack.c.b16 %v2763, %v2754
        %v2908 = vpack.c.b16 %v2764, %v2755
        %v2909 = vpack.c.b16 %v2765, %v2756
        %v2910 = vpack.c.b16 %v2766, %v2757
        %v2911 = vpack.c.b16 %v2767, %v2758
        %v2912 = vpack.c.b16 %v2768, %v2759
        %v2913 = vpack.c.b16 %v2769, %v2760
        %v2914 = vpack.c.b16 %v2770, %v2761
        %v2915 = vpack.c.b16 %v2771, %v2762
        %v3204 = vunpack.c.l.b16 %v2180
        %v3205 = vunpack.c.l.b16 %v2181
        %v3206 = vunpack.c.l.b16 %v2182
        %v3207 = vunpack.c.l.b16 %v2183
        %v3208 = vunpack.c.l.b16 %v2184
        %v3209 = vunpack.c.l.b16 %v2185
        %v3210 = vunpack.c.l.b16 %v2186
        %v3211 = vunpack.c.l.b16 %v2187
        %v3212 = vunpack.c.l.b16 %v2188
        %v3213 = vunpack.c.l.b16 %v2189
        %v3214 = vunpack.c.l.b16 %v2190
        %v3215 = vunpack.c.l.b16 %v2191
        %v3216 = vunpack.c.l.b16 %v2192
        %v3217 = vunpack.c.l.b16 %v2193
        %v3218 = vunpack.c.l.b16 %v2194
        %v3219 = vunpack.c.l.b16 %v2195
        %v3220 = vunpack.c.l.b16 %v2196
        %v3221 = vunpack.c.l.b16 %v2197
        %v3222 = vunpack.c.l.b16 %v2198
        %v3223 = vunpack.c.l.b16 %v2199
        %v3224 = vunpack.c.l.b16 %v2200
        %v3225 = vunpack.c.l.b16 %v2201
        %v3226 = vunpack.c.l.b16 %v2202
        %v3227 = vunpack.c.l.b16 %v2203
        %v3228 = vunpack.c.l.b16 %v2204
        %v3229 = vunpack.c.l.b16 %v2205
        %v3230 = vunpack.c.l.b16 %v2206
        %v3231 = vunpack.c.l.b16 %v2207
        %v3232 = vunpack.c.l.b16 %v2208
        %v3233 = vunpack.c.l.b16 %v2209
        %v3234 = vunpack.c.l.b16 %v2210
        %v3235 = vunpack.c.l.b16 %v2211
        %v3236 = vunpack.c.l.b16 %v2212
        %v3237 = vunpack.c.l.b16 %v2213
        %v3238 = vunpack.c.l.b16 %v2214
        %v3239 = vunpack.c.l.b16 %v2215
        %v3240 = vunpack.c.l.b16 %v2216
        %v3241 = vunpack.c.l.b16 %v2217
        %v3242 = vunpack.c.l.b16 %v2218
        %v3243 = vunpack.c.l.b16 %v2219
        %v3244 = vunpack.c.l.b16 %v2220
        %v3245 = vunpack.c.l.b16 %v2221
        %v3246 = vunpack.c.l.b16 %v2222
        %v3247 = vunpack.c.l.b16 %v2223
        %v3248 = vunpack.c.l.b16 %v2224
        %v3249 = vunpack.c.l.b16 %v2225
        %v3250 = vunpack.c.l.b16 %v2226
        %v3251 = vunpack.c.l.b16 %v2227
        %v3252 = vunpack.c.l.b16 %v2228
        %v3253 = vunpack.c.l.b16 %v2229
        %v3254 = vunpack.c.l.b16 %v2230
        %v3255 = vunpack.c.l.b16 %v2231
        %v3256 = vunpack.c.l.b16 %v2232
        %v3257 = vunpack.c.l.b16 %v2233
        %v3258 = vunpack.c.l.b16 %v2234
        %v3259 = vunpack.c.l.b16 %v2235
        %v3260 = vunpack.c.l.b16 %v2236
        %v3261 = vunpack.c.l.b16 %v2237
        %v3262 = vunpack.c.l.b16 %v2238
        %v3263 = vunpack.c.l.b16 %v2239
        %v3264 = vunpack.c.l.b16 %v2240
        %v3265 = vunpack.c.l.b16 %v2241
        %v3266 = vunpack.c.l.b16 %v2242
        %v3267 = vunpack.c.l.b16 %v2243
        %v3268 = vunpack.c.l.b16 %v2244
        %v3269 = vunpack.c.l.b16 %v2245
        %v3270 = vunpack.c.l.b16 %v2246
        %v3271 = vunpack.c.l.b16 %v2247
        %v3272 = vunpack.c.l.b16 %v2248
        %v3273 = vunpack.c.l.b16 %v2249
        %v3274 = vunpack.c.l.b16 %v2250
        %v3275 = vunpack.c.l.b16 %v2251
        %v3276 = vunpack.c.l.b16 %v2252
        %v3277 = vunpack.c.l.b16 %v2253
        %v3278 = vunpack.c.l.b16 %v2254
        %v3279 = vunpack.c.l.b16 %v2255
        %v3280 = vunpack.c.l.b16 %v2256
        %v3281 = vunpack.c.l.b16 %v2257
        %v3282 = vunpack.c.l.b16 %v2258
        %v3283 = vunpack.c.l.b16 %v2259
        %v3284 = vunpack.c.l.b16 %v2260
        %v3285 = vunpack.c.l.b16 %v2261
        %v3286 = vunpack.c.l.b16 %v2262
        %v3287 = vunpack.c.l.b16 %v2263
        %v3288 = vunpack.c.l.b16 %v2264
        %v3289 = vunpack.c.l.b16 %v2265
        %v3290 = vunpack.c.l.b16 %v2266
        %v3291 = vunpack.c.l.b16 %v2267
        %v3292 = vunpack.c.l.b16 %v2268
        %v3293 = vunpack.c.l.b16 %v2269
        %v3294 = vunpack.c.l.b16 %v2270
        %v3295 = vunpack.c.l.b16 %v2271
        %v3296 = vunpack.c.l.b16 %v2272
        %v3297 = vunpack.c.l.b16 %v2273
        %v3298 = vunpack.c.l.b16 %v2274
        %v3299 = vunpack.c.l.b16 %v2275
        %v3300 = vunpack.c.l.b16 %v2276
        %v3301 = vunpack.c.l.b16 %v2277
        %v3302 = vunpack.c.l.b16 %v2278
        %v3303 = vunpack.c.l.b16 %v2279
        %v3304 = vunpack.c.l.b16 %v2280
        %v3305 = vunpack.c.l.b16 %v2281
        %v3306 = vunpack.c.l.b16 %v2282
        %v3307 = vunpack.c.l.b16 %v2283
        %v3308 = vunpack.c.l.b16 %v2284
        %v3309 = vunpack.c.l.b16 %v2285
        %v3310 = vunpack.c.l.b16 %v2286
        %v3311 = vunpack.c.l.b16 %v2287
        %v3312 = vunpack.c.l.b16 %v2288
        %v3313 = vunpack.c.l.b16 %v2289
        %v3314 = vunpack.c.l.b16 %v2290
        %v3315 = vunpack.c.l.b16 %v2291
        %v3316 = vunpack.c.l.b16 %v2292
        %v3317 = vunpack.c.l.b16 %v2293
        %v3318 = vunpack.c.l.b16 %v2294
        %v3319 = vunpack.c.l.b16 %v2295
        %v3320 = vunpack.c.l.b16 %v2296
        %v3321 = vunpack.c.l.b16 %v2297
        %v3322 = vunpack.c.l.b16 %v2298
        %v3323 = vunpack.c.l.b16 %v2299
        %v3324 = vunpack.c.l.b16 %v2300
        %v3325 = vunpack.c.l.b16 %v2301
        %v3326 = vunpack.c.l.b16 %v2302
        %v3327 = vunpack.c.l.b16 %v2303
        %v3328 = vunpack.c.l.b16 %v2304
        %v3329 = vunpack.c.l.b16 %v2305
        %v3330 = vunpack.c.l.b16 %v2306
        %v3331 = vunpack.c.l.b16 %v2307
        %v3332 = vunpack.c.l.b16 %v2308
        %v3333 = vunpack.c.l.b16 %v2309
        %v3334 = vunpack.c.l.b16 %v2310
        %v3335 = vunpack.c.l.b16 %v2311
        %v3336 = vunpack.c.l.b16 %v2312
        %v3337 = vunpack.c.l.b16 %v2313
        %v3338 = vunpack.c.l.b16 %v2314
        %v3339 = vunpack.c.l.b16 %v2315
        %v3340 = vunpack.c.l.b16 %v2316
        %v3341 = vunpack.c.l.b16 %v2317
        %v3342 = vunpack.c.l.b16 %v2318
        %v3343 = vunpack.c.l.b16 %v2319
        %v3344 = vunpack.c.l.b16 %v2320
        %v3345 = vunpack.c.l.b16 %v2321
        %v3346 = vunpack.c.l.b16 %v2322
        %v3347 = vunpack.c.l.b16 %v2323
        %v3348 = vpack.c.b16 %v3205, %v3204
        %v3349 = vpack.c.b16 %v3207, %v3206
        %v3350 = vpack.c.b16 %v3209, %v3208
        %v3351 = vpack.c.b16 %v3211, %v3210
        %v3352 = vpack.c.b16 %v3213, %v3212
        %v3353 = vpack.c.b16 %v3215, %v3214
        %v3354 = vpack.c.b16 %v3217, %v3216
        %v3355 = vpack.c.b16 %v3219, %v3218
        %v3356 = vpack.c.b16 %v3221, %v3220
        %v3357 = vpack.c.b16 %v3223, %v3222
        %v3358 = vpack.c.b16 %v3225, %v3224
        %v3359 = vpack.c.b16 %v3227, %v3226
        %v3360 = vpack.c.b16 %v3229, %v3228
        %v3361 = vpack.c.b16 %v3231, %v3230
        %v3362 = vpack.c.b16 %v3233, %v3232
        %v3363 = vpack.c.b16 %v3235, %v3234
        %v3364 = vpack.c.b16 %v3237, %v3236
        %v3365 = vpack.c.b16 %v3239, %v3238
        %v3366 = vpack.c.b16 %v3241, %v3240
        %v3367 = vpack.c.b16 %v3243, %v3242
        %v3368 = vpack.c.b16 %v3245, %v3244
        %v3369 = vpack.c.b16 %v3247, %v3246
        %v3370 = vpack.c.b16 %v3249, %v3248
        %v3371 = vpack.c.b16 %v3251, %v3250
        %v3372 = vpack.c.b16 %v3253, %v3252
        %v3373 = vpack.c.b16 %v3255, %v3254
        %v3374 = vpack.c.b16 %v3257, %v3256
        %v3375 = vpack.c.b16 %v3259, %v3258
        %v3376 = vpack.c.b16 %v3261, %v3260
        %v3377 = vpack.c.b16 %v3263, %v3262
        %v3378 = vpack.c.b16 %v3265, %v3264
        %v3379 = vpack.c.b16 %v3267, %v3266
        %v3380 = vpack.c.b16 %v3269, %v3268
        %v3381 = vpack.c.b16 %v3271, %v3270
        %v3382 = vpack.c.b16 %v3273, %v3272
        %v3383 = vpack.c.b16 %v3275, %v3274
        %v3384 = vpack.c.b16 %v3277, %v3276
        %v3385 = vpack.c.b16 %v3279, %v3278
        %v3386 = vpack.c.b16 %v3281, %v3280
        %v3387 = vpack.c.b16 %v3283, %v3282
        %v3388 = vpack.c.b16 %v3285, %v3284
        %v3389 = vpack.c.b16 %v3287, %v3286
        %v3390 = vpack.c.b16 %v3289, %v3288
        %v3391 = vpack.c.b16 %v3291, %v3290
        %v3392 = vpack.c.b16 %v3293, %v3292
        %v3393 = vpack.c.b16 %v3295, %v3294
        %v3394 = vpack.c.b16 %v3297, %v3296
        %v3395 = vpack.c.b16 %v3299, %v3298
        %v3396 = vpack.c.b16 %v3301, %v3300
        %v3397 = vpack.c.b16 %v3303, %v3302
        %v3398 = vpack.c.b16 %v3305, %v3304
        %v3399 = vpack.c.b16 %v3307, %v3306
        %v3400 = vpack.c.b16 %v3309, %v3308
        %v3401 = vpack.c.b16 %v3311, %v3310
        %v3402 = vpack.c.b16 %v3313, %v3312
        %v3403 = vpack.c.b16 %v3315, %v3314
        %v3404 = vpack.c.b16 %v3317, %v3316
        %v3405 = vpack.c.b16 %v3319, %v3318
        %v3406 = vpack.c.b16 %v3321, %v3320
        %v3407 = vpack.c.b16 %v3323, %v3322
        %v3408 = vpack.c.b16 %v3325, %v3324
        %v3409 = vpack.c.b16 %v3327, %v3326
        %v3410 = vpack.c.b16 %v3329, %v3328
        %v3411 = vpack.c.b16 %v3331, %v3330
        %v3412 = vpack.c.b16 %v3333, %v3332
        %v3413 = vpack.c.b16 %v3335, %v3334
        %v3414 = vpack.c.b16 %v3337, %v3336
        %v3415 = vpack.c.b16 %v3339, %v3338
        %v3416 = vpack.c.b16 %v3341, %v3340
        %v3417 = vpack.c.b16 %v3343, %v3342
        %v3418 = vpack.c.b16 %v3345, %v3344
        %v3419 = vpack.c.b16 %v3347, %v3346
        %3492 = vmatpush.bf16.msra.mxu0 %v3355
        %3493 = vmatpush.bf16.msra.mxu0 %v3354
        %3494 = vmatpush.bf16.msra.mxu0 %v3353
        %3495 = vmatpush.bf16.msra.mxu0 %v3352
        %3496 = vmatpush.bf16.msra.mxu0 %v3351
        %3497 = vmatpush.bf16.msra.mxu0 %v3350
        %3498 = vmatpush.bf16.msra.mxu0 %v3349
        %3499 = vmatpush.bf16.msra.mxu0 %v3348
        %3500 = vmatmul.bf16.gmra.mxu0 %v2772
        %v3501 = vpop.f32.mrf.mxu0
        %v3502 = vadd.f32 0.0, %v3501
        %v3503 = vpop.f32.mrf.mxu0
        %v3504 = vadd.f32 0.0, %v3503
        %3505 = vmatmul.bf16.gmra.mxu0 %v2781
        %v3506 = vpop.f32.mrf.mxu0
        %v3507 = vadd.f32 0.0, %v3506
        %v3508 = vpop.f32.mrf.mxu0
        %v3509 = vadd.f32 0.0, %v3508
        %3510 = vmatmul.bf16.gmra.mxu0 %v2790
        %v3511 = vpop.f32.mrf.mxu0
        %v3512 = vadd.f32 0.0, %v3511
        %v3513 = vpop.f32.mrf.mxu0
        %v3514 = vadd.f32 0.0, %v3513
        %3515 = vmatmul.bf16.gmra.mxu0 %v2799
        %v3516 = vpop.f32.mrf.mxu0
        %v3517 = vadd.f32 0.0, %v3516
        %v3518 = vpop.f32.mrf.mxu0
        %v3519 = vadd.f32 0.0, %v3518
        %3520 = vmatmul.bf16.gmra.mxu0 %v2808
        %v3521 = vpop.f32.mrf.mxu0
        %v3522 = vadd.f32 0.0, %v3521
        %v3523 = vpop.f32.mrf.mxu0
        %v3524 = vadd.f32 0.0, %v3523
        %3525 = vmatmul.bf16.gmra.mxu0 %v2817
        %v3526 = vpop.f32.mrf.mxu0
        %v3527 = vadd.f32 0.0, %v3526
        %v3528 = vpop.f32.mrf.mxu0
        %v3529 = vadd.f32 0.0, %v3528
        %3530 = vmatmul.bf16.gmra.mxu0 %v2826
        %v3531 = vpop.f32.mrf.mxu0
        %v3532 = vadd.f32 0.0, %v3531
        %v3533 = vpop.f32.mrf.mxu0
        %v3534 = vadd.f32 0.0, %v3533
        %3535 = vmatmul.bf16.gmra.mxu0 %v2835
        %v3536 = vpop.f32.mrf.mxu0
        %v3537 = vadd.f32 0.0, %v3536
        %v3538 = vpop.f32.mrf.mxu0
        %v3539 = vadd.f32 0.0, %v3538
        %3540 = vmatmul.bf16.gmra.mxu0 %v2844
        %v3541 = vpop.f32.mrf.mxu0
        %v3542 = vadd.f32 0.0, %v3541
        %v3543 = vpop.f32.mrf.mxu0
        %v3544 = vadd.f32 0.0, %v3543
        %3545 = vmatmul.bf16.gmra.mxu0 %v2853
        %v3546 = vpop.f32.mrf.mxu0
        %v3547 = vadd.f32 0.0, %v3546
        %v3548 = vpop.f32.mrf.mxu0
        %v3549 = vadd.f32 0.0, %v3548
        %3550 = vmatmul.bf16.gmra.mxu0 %v2862
        %v3551 = vpop.f32.mrf.mxu0
        %v3552 = vadd.f32 0.0, %v3551
        %v3553 = vpop.f32.mrf.mxu0
        %v3554 = vadd.f32 0.0, %v3553
        %3555 = vmatmul.bf16.gmra.mxu0 %v2871
        %v3556 = vpop.f32.mrf.mxu0
        %v3557 = vadd.f32 0.0, %v3556
        %v3558 = vpop.f32.mrf.mxu0
        %v3559 = vadd.f32 0.0, %v3558
        %3560 = vmatmul.bf16.gmra.mxu0 %v2880
        %v3561 = vpop.f32.mrf.mxu0
        %v3562 = vadd.f32 0.0, %v3561
        %v3563 = vpop.f32.mrf.mxu0
        %v3564 = vadd.f32 0.0, %v3563
        %3565 = vmatmul.bf16.gmra.mxu0 %v2889
        %v3566 = vpop.f32.mrf.mxu0
        %v3567 = vadd.f32 0.0, %v3566
        %v3568 = vpop.f32.mrf.mxu0
        %v3569 = vadd.f32 0.0, %v3568
        %3570 = vmatmul.bf16.gmra.mxu0 %v2898
        %v3571 = vpop.f32.mrf.mxu0
        %v3572 = vadd.f32 0.0, %v3571
        %v3573 = vpop.f32.mrf.mxu0
        %v3574 = vadd.f32 0.0, %v3573
        %3575 = vmatmul.bf16.gmra.mxu0 %v2907
        %v3576 = vpop.f32.mrf.mxu0
        %v3577 = vadd.f32 0.0, %v3576
        %v3578 = vpop.f32.mrf.mxu0
        %v3579 = vadd.f32 0.0, %v3578
        %3580 = vdwg.mxu0
        %3581 = vmatpush.bf16.msra.mxu0 %v3363
        %3582 = vmatpush.bf16.msra.mxu0 %v3362
        %3583 = vmatpush.bf16.msra.mxu0 %v3361
        %3584 = vmatpush.bf16.msra.mxu0 %v3360
        %3585 = vmatpush.bf16.msra.mxu0 %v3359
        %3586 = vmatpush.bf16.msra.mxu0 %v3358
        %3587 = vmatpush.bf16.msra.mxu0 %v3357
        %3588 = vmatpush.bf16.msra.mxu0 %v3356
        %3589 = vmatmul.bf16.gmra.mxu0 %v2773
        %v3590 = vpop.f32.mrf.mxu0
        %v3591 = vadd.f32 %v3502, %v3590
        %v3592 = vpop.f32.mrf.mxu0
        %v3593 = vadd.f32 %v3504, %v3592
        %3594 = vmatmul.bf16.gmra.mxu0 %v2782
        %v3595 = vpop.f32.mrf.mxu0
        %v3596 = vadd.f32 %v3507, %v3595
        %v3597 = vpop.f32.mrf.mxu0
        %v3598 = vadd.f32 %v3509, %v3597
        %3599 = vmatmul.bf16.gmra.mxu0 %v2791
        %v3600 = vpop.f32.mrf.mxu0
        %v3601 = vadd.f32 %v3512, %v3600
        %v3602 = vpop.f32.mrf.mxu0
        %v3603 = vadd.f32 %v3514, %v3602
        %3604 = vmatmul.bf16.gmra.mxu0 %v2800
        %v3605 = vpop.f32.mrf.mxu0
        %v3606 = vadd.f32 %v3517, %v3605
        %v3607 = vpop.f32.mrf.mxu0
        %v3608 = vadd.f32 %v3519, %v3607
        %3609 = vmatmul.bf16.gmra.mxu0 %v2809
        %v3610 = vpop.f32.mrf.mxu0
        %v3611 = vadd.f32 %v3522, %v3610
        %v3612 = vpop.f32.mrf.mxu0
        %v3613 = vadd.f32 %v3524, %v3612
        %3614 = vmatmul.bf16.gmra.mxu0 %v2818
        %v3615 = vpop.f32.mrf.mxu0
        %v3616 = vadd.f32 %v3527, %v3615
        %v3617 = vpop.f32.mrf.mxu0
        %v3618 = vadd.f32 %v3529, %v3617
        %3619 = vmatmul.bf16.gmra.mxu0 %v2827
        %v3620 = vpop.f32.mrf.mxu0
        %v3621 = vadd.f32 %v3532, %v3620
        %v3622 = vpop.f32.mrf.mxu0
        %v3623 = vadd.f32 %v3534, %v3622
        %3624 = vmatmul.bf16.gmra.mxu0 %v2836
        %v3625 = vpop.f32.mrf.mxu0
        %v3626 = vadd.f32 %v3537, %v3625
        %v3627 = vpop.f32.mrf.mxu0
        %v3628 = vadd.f32 %v3539, %v3627
        %3629 = vmatmul.bf16.gmra.mxu0 %v2845
        %v3630 = vpop.f32.mrf.mxu0
        %v3631 = vadd.f32 %v3542, %v3630
        %v3632 = vpop.f32.mrf.mxu0
        %v3633 = vadd.f32 %v3544, %v3632
        %3634 = vmatmul.bf16.gmra.mxu0 %v2854
        %v3635 = vpop.f32.mrf.mxu0
        %v3636 = vadd.f32 %v3547, %v3635
        %v3637 = vpop.f32.mrf.mxu0
        %v3638 = vadd.f32 %v3549, %v3637
        %3639 = vmatmul.bf16.gmra.mxu0 %v2863
        %v3640 = vpop.f32.mrf.mxu0
        %v3641 = vadd.f32 %v3552, %v3640
        %v3642 = vpop.f32.mrf.mxu0
        %v3643 = vadd.f32 %v3554, %v3642
        %3644 = vmatmul.bf16.gmra.mxu0 %v2872
        %v3645 = vpop.f32.mrf.mxu0
        %v3646 = vadd.f32 %v3557, %v3645
        %v3647 = vpop.f32.mrf.mxu0
        %v3648 = vadd.f32 %v3559, %v3647
        %3649 = vmatmul.bf16.gmra.mxu0 %v2881
        %v3650 = vpop.f32.mrf.mxu0
        %v3651 = vadd.f32 %v3562, %v3650
        %v3652 = vpop.f32.mrf.mxu0
        %v3653 = vadd.f32 %v3564, %v3652
        %3654 = vmatmul.bf16.gmra.mxu0 %v2890
        %v3655 = vpop.f32.mrf.mxu0
        %v3656 = vadd.f32 %v3567, %v3655
        %v3657 = vpop.f32.mrf.mxu0
        %v3658 = vadd.f32 %v3569, %v3657
        %3659 = vmatmul.bf16.gmra.mxu0 %v2899
        %v3660 = vpop.f32.mrf.mxu0
        %v3661 = vadd.f32 %v3572, %v3660
        %v3662 = vpop.f32.mrf.mxu0
        %v3663 = vadd.f32 %v3574, %v3662
        %3664 = vmatmul.bf16.gmra.mxu0 %v2908
        %v3665 = vpop.f32.mrf.mxu0
        %v3666 = vadd.f32 %v3577, %v3665
        %v3667 = vpop.f32.mrf.mxu0
        %v3668 = vadd.f32 %v3579, %v3667
        %3669 = vdwg.mxu0
        %3670 = vmatpush.bf16.msra.mxu0 %v3371
        %3671 = vmatpush.bf16.msra.mxu0 %v3370
        %3672 = vmatpush.bf16.msra.mxu0 %v3369
        %3673 = vmatpush.bf16.msra.mxu0 %v3368
        %3674 = vmatpush.bf16.msra.mxu0 %v3367
        %3675 = vmatpush.bf16.msra.mxu0 %v3366
        %3676 = vmatpush.bf16.msra.mxu0 %v3365
        %3677 = vmatpush.bf16.msra.mxu0 %v3364
        %3678 = vmatmul.bf16.gmra.mxu0 %v2774
        %v3679 = vpop.f32.mrf.mxu0
        %v3680 = vadd.f32 %v3591, %v3679
        %v3681 = vpop.f32.mrf.mxu0
        %v3682 = vadd.f32 %v3593, %v3681
        %3683 = vmatmul.bf16.gmra.mxu0 %v2783
        %v3684 = vpop.f32.mrf.mxu0
        %v3685 = vadd.f32 %v3596, %v3684
        %v3686 = vpop.f32.mrf.mxu0
        %v3687 = vadd.f32 %v3598, %v3686
        %3688 = vmatmul.bf16.gmra.mxu0 %v2792
        %v3689 = vpop.f32.mrf.mxu0
        %v3690 = vadd.f32 %v3601, %v3689
        %v3691 = vpop.f32.mrf.mxu0
        %v3692 = vadd.f32 %v3603, %v3691
        %3693 = vmatmul.bf16.gmra.mxu0 %v2801
        %v3694 = vpop.f32.mrf.mxu0
        %v3695 = vadd.f32 %v3606, %v3694
        %v3696 = vpop.f32.mrf.mxu0
        %v3697 = vadd.f32 %v3608, %v3696
        %3698 = vmatmul.bf16.gmra.mxu0 %v2810
        %v3699 = vpop.f32.mrf.mxu0
        %v3700 = vadd.f32 %v3611, %v3699
        %v3701 = vpop.f32.mrf.mxu0
        %v3702 = vadd.f32 %v3613, %v3701
        %3703 = vmatmul.bf16.gmra.mxu0 %v2819
        %v3704 = vpop.f32.mrf.mxu0
        %v3705 = vadd.f32 %v3616, %v3704
        %v3706 = vpop.f32.mrf.mxu0
        %v3707 = vadd.f32 %v3618, %v3706
        %3708 = vmatmul.bf16.gmra.mxu0 %v2828
        %v3709 = vpop.f32.mrf.mxu0
        %v3710 = vadd.f32 %v3621, %v3709
        %v3711 = vpop.f32.mrf.mxu0
        %v3712 = vadd.f32 %v3623, %v3711
        %3713 = vmatmul.bf16.gmra.mxu0 %v2837
        %v3714 = vpop.f32.mrf.mxu0
        %v3715 = vadd.f32 %v3626, %v3714
        %v3716 = vpop.f32.mrf.mxu0
        %v3717 = vadd.f32 %v3628, %v3716
        %3718 = vmatmul.bf16.gmra.mxu0 %v2846
        %v3719 = vpop.f32.mrf.mxu0
        %v3720 = vadd.f32 %v3631, %v3719
        %v3721 = vpop.f32.mrf.mxu0
        %v3722 = vadd.f32 %v3633, %v3721
        %3723 = vmatmul.bf16.gmra.mxu0 %v2855
        %v3724 = vpop.f32.mrf.mxu0
        %v3725 = vadd.f32 %v3636, %v3724
        %v3726 = vpop.f32.mrf.mxu0
        %v3727 = vadd.f32 %v3638, %v3726
        %3728 = vmatmul.bf16.gmra.mxu0 %v2864
        %v3729 = vpop.f32.mrf.mxu0
        %v3730 = vadd.f32 %v3641, %v3729
        %v3731 = vpop.f32.mrf.mxu0
        %v3732 = vadd.f32 %v3643, %v3731
        %3733 = vmatmul.bf16.gmra.mxu0 %v2873
        %v3734 = vpop.f32.mrf.mxu0
        %v3735 = vadd.f32 %v3646, %v3734
        %v3736 = vpop.f32.mrf.mxu0
        %v3737 = vadd.f32 %v3648, %v3736
        %3738 = vmatmul.bf16.gmra.mxu0 %v2882
        %v3739 = vpop.f32.mrf.mxu0
        %v3740 = vadd.f32 %v3651, %v3739
        %v3741 = vpop.f32.mrf.mxu0
        %v3742 = vadd.f32 %v3653, %v3741
        %3743 = vmatmul.bf16.gmra.mxu0 %v2891
        %v3744 = vpop.f32.mrf.mxu0
        %v3745 = vadd.f32 %v3656, %v3744
        %v3746 = vpop.f32.mrf.mxu0
        %v3747 = vadd.f32 %v3658, %v3746
        %3748 = vmatmul.bf16.gmra.mxu0 %v2900
        %v3749 = vpop.f32.mrf.mxu0
        %v3750 = vadd.f32 %v3661, %v3749
        %v3751 = vpop.f32.mrf.mxu0
        %v3752 = vadd.f32 %v3663, %v3751
        %3753 = vmatmul.bf16.gmra.mxu0 %v2909
        %v3754 = vpop.f32.mrf.mxu0
        %v3755 = vadd.f32 %v3666, %v3754
        %v3756 = vpop.f32.mrf.mxu0
        %v3757 = vadd.f32 %v3668, %v3756
        %3758 = vdwg.mxu0
        %3759 = vmatpush.bf16.msra.mxu0 %v3379
        %3760 = vmatpush.bf16.msra.mxu0 %v3378
        %3761 = vmatpush.bf16.msra.mxu0 %v3377
        %3762 = vmatpush.bf16.msra.mxu0 %v3376
        %3763 = vmatpush.bf16.msra.mxu0 %v3375
        %3764 = vmatpush.bf16.msra.mxu0 %v3374
        %3765 = vmatpush.bf16.msra.mxu0 %v3373
        %3766 = vmatpush.bf16.msra.mxu0 %v3372
        %3767 = vmatmul.bf16.gmra.mxu0 %v2775
        %v3768 = vpop.f32.mrf.mxu0
        %v3769 = vadd.f32 %v3680, %v3768
        %v3770 = vpop.f32.mrf.mxu0
        %v3771 = vadd.f32 %v3682, %v3770
        %3772 = vmatmul.bf16.gmra.mxu0 %v2784
        %v3773 = vpop.f32.mrf.mxu0
        %v3774 = vadd.f32 %v3685, %v3773
        %v3775 = vpop.f32.mrf.mxu0
        %v3776 = vadd.f32 %v3687, %v3775
        %3777 = vmatmul.bf16.gmra.mxu0 %v2793
        %v3778 = vpop.f32.mrf.mxu0
        %v3779 = vadd.f32 %v3690, %v3778
        %v3780 = vpop.f32.mrf.mxu0
        %v3781 = vadd.f32 %v3692, %v3780
        %3782 = vmatmul.bf16.gmra.mxu0 %v2802
        %v3783 = vpop.f32.mrf.mxu0
        %v3784 = vadd.f32 %v3695, %v3783
        %v3785 = vpop.f32.mrf.mxu0
        %v3786 = vadd.f32 %v3697, %v3785
        %3787 = vmatmul.bf16.gmra.mxu0 %v2811
        %v3788 = vpop.f32.mrf.mxu0
        %v3789 = vadd.f32 %v3700, %v3788
        %v3790 = vpop.f32.mrf.mxu0
        %v3791 = vadd.f32 %v3702, %v3790
        %3792 = vmatmul.bf16.gmra.mxu0 %v2820
        %v3793 = vpop.f32.mrf.mxu0
        %v3794 = vadd.f32 %v3705, %v3793
        %v3795 = vpop.f32.mrf.mxu0
        %v3796 = vadd.f32 %v3707, %v3795
        %3797 = vmatmul.bf16.gmra.mxu0 %v2829
        %v3798 = vpop.f32.mrf.mxu0
        %v3799 = vadd.f32 %v3710, %v3798
        %v3800 = vpop.f32.mrf.mxu0
        %v3801 = vadd.f32 %v3712, %v3800
        %3802 = vmatmul.bf16.gmra.mxu0 %v2838
        %v3803 = vpop.f32.mrf.mxu0
        %v3804 = vadd.f32 %v3715, %v3803
        %v3805 = vpop.f32.mrf.mxu0
        %v3806 = vadd.f32 %v3717, %v3805
        %3807 = vmatmul.bf16.gmra.mxu0 %v2847
        %v3808 = vpop.f32.mrf.mxu0
        %v3809 = vadd.f32 %v3720, %v3808
        %v3810 = vpop.f32.mrf.mxu0
        %v3811 = vadd.f32 %v3722, %v3810
        %3812 = vmatmul.bf16.gmra.mxu0 %v2856
        %v3813 = vpop.f32.mrf.mxu0
        %v3814 = vadd.f32 %v3725, %v3813
        %v3815 = vpop.f32.mrf.mxu0
        %v3816 = vadd.f32 %v3727, %v3815
        %3817 = vmatmul.bf16.gmra.mxu0 %v2865
        %v3818 = vpop.f32.mrf.mxu0
        %v3819 = vadd.f32 %v3730, %v3818
        %v3820 = vpop.f32.mrf.mxu0
        %v3821 = vadd.f32 %v3732, %v3820
        %3822 = vmatmul.bf16.gmra.mxu0 %v2874
        %v3823 = vpop.f32.mrf.mxu0
        %v3824 = vadd.f32 %v3735, %v3823
        %v3825 = vpop.f32.mrf.mxu0
        %v3826 = vadd.f32 %v3737, %v3825
        %3827 = vmatmul.bf16.gmra.mxu0 %v2883
        %v3828 = vpop.f32.mrf.mxu0
        %v3829 = vadd.f32 %v3740, %v3828
        %v3830 = vpop.f32.mrf.mxu0
        %v3831 = vadd.f32 %v3742, %v3830
        %3832 = vmatmul.bf16.gmra.mxu0 %v2892
        %v3833 = vpop.f32.mrf.mxu0
        %v3834 = vadd.f32 %v3745, %v3833
        %v3835 = vpop.f32.mrf.mxu0
        %v3836 = vadd.f32 %v3747, %v3835
        %3837 = vmatmul.bf16.gmra.mxu0 %v2901
        %v3838 = vpop.f32.mrf.mxu0
        %v3839 = vadd.f32 %v3750, %v3838
        %v3840 = vpop.f32.mrf.mxu0
        %v3841 = vadd.f32 %v3752, %v3840
        %3842 = vmatmul.bf16.gmra.mxu0 %v2910
        %v3843 = vpop.f32.mrf.mxu0
        %v3844 = vadd.f32 %v3755, %v3843
        %v3845 = vpop.f32.mrf.mxu0
        %v3846 = vadd.f32 %v3757, %v3845
        %3847 = vdwg.mxu0
        %3848 = vmatpush.bf16.msra.mxu0 %v3387
        %3849 = vmatpush.bf16.msra.mxu0 %v3386
        %3850 = vmatpush.bf16.msra.mxu0 %v3385
        %3851 = vmatpush.bf16.msra.mxu0 %v3384
        %3852 = vmatpush.bf16.msra.mxu0 %v3383
        %3853 = vmatpush.bf16.msra.mxu0 %v3382
        %3854 = vmatpush.bf16.msra.mxu0 %v3381
        %3855 = vmatpush.bf16.msra.mxu0 %v3380
        %3856 = vmatmul.bf16.gmra.mxu0 %v2776
        %v3857 = vpop.f32.mrf.mxu0
        %v3858 = vadd.f32 %v3769, %v3857
        %v3859 = vpop.f32.mrf.mxu0
        %v3860 = vadd.f32 %v3771, %v3859
        %3861 = vmatmul.bf16.gmra.mxu0 %v2785
        %v3862 = vpop.f32.mrf.mxu0
        %v3863 = vadd.f32 %v3774, %v3862
        %v3864 = vpop.f32.mrf.mxu0
        %v3865 = vadd.f32 %v3776, %v3864
        %3866 = vmatmul.bf16.gmra.mxu0 %v2794
        %v3867 = vpop.f32.mrf.mxu0
        %v3868 = vadd.f32 %v3779, %v3867
        %v3869 = vpop.f32.mrf.mxu0
        %v3870 = vadd.f32 %v3781, %v3869
        %3871 = vmatmul.bf16.gmra.mxu0 %v2803
        %v3872 = vpop.f32.mrf.mxu0
        %v3873 = vadd.f32 %v3784, %v3872
        %v3874 = vpop.f32.mrf.mxu0
        %v3875 = vadd.f32 %v3786, %v3874
        %3876 = vmatmul.bf16.gmra.mxu0 %v2812
        %v3877 = vpop.f32.mrf.mxu0
        %v3878 = vadd.f32 %v3789, %v3877
        %v3879 = vpop.f32.mrf.mxu0
        %v3880 = vadd.f32 %v3791, %v3879
        %3881 = vmatmul.bf16.gmra.mxu0 %v2821
        %v3882 = vpop.f32.mrf.mxu0
        %v3883 = vadd.f32 %v3794, %v3882
        %v3884 = vpop.f32.mrf.mxu0
        %v3885 = vadd.f32 %v3796, %v3884
        %3886 = vmatmul.bf16.gmra.mxu0 %v2830
        %v3887 = vpop.f32.mrf.mxu0
        %v3888 = vadd.f32 %v3799, %v3887
        %v3889 = vpop.f32.mrf.mxu0
        %v3890 = vadd.f32 %v3801, %v3889
        %3891 = vmatmul.bf16.gmra.mxu0 %v2839
        %v3892 = vpop.f32.mrf.mxu0
        %v3893 = vadd.f32 %v3804, %v3892
        %v3894 = vpop.f32.mrf.mxu0
        %v3895 = vadd.f32 %v3806, %v3894
        %3896 = vmatmul.bf16.gmra.mxu0 %v2848
        %v3897 = vpop.f32.mrf.mxu0
        %v3898 = vadd.f32 %v3809, %v3897
        %v3899 = vpop.f32.mrf.mxu0
        %v3900 = vadd.f32 %v3811, %v3899
        %3901 = vmatmul.bf16.gmra.mxu0 %v2857
        %v3902 = vpop.f32.mrf.mxu0
        %v3903 = vadd.f32 %v3814, %v3902
        %v3904 = vpop.f32.mrf.mxu0
        %v3905 = vadd.f32 %v3816, %v3904
        %3906 = vmatmul.bf16.gmra.mxu0 %v2866
        %v3907 = vpop.f32.mrf.mxu0
        %v3908 = vadd.f32 %v3819, %v3907
        %v3909 = vpop.f32.mrf.mxu0
        %v3910 = vadd.f32 %v3821, %v3909
        %3911 = vmatmul.bf16.gmra.mxu0 %v2875
        %v3912 = vpop.f32.mrf.mxu0
        %v3913 = vadd.f32 %v3824, %v3912
        %v3914 = vpop.f32.mrf.mxu0
        %v3915 = vadd.f32 %v3826, %v3914
        %3916 = vmatmul.bf16.gmra.mxu0 %v2884
        %v3917 = vpop.f32.mrf.mxu0
        %v3918 = vadd.f32 %v3829, %v3917
        %v3919 = vpop.f32.mrf.mxu0
        %v3920 = vadd.f32 %v3831, %v3919
        %3921 = vmatmul.bf16.gmra.mxu0 %v2893
        %v3922 = vpop.f32.mrf.mxu0
        %v3923 = vadd.f32 %v3834, %v3922
        %v3924 = vpop.f32.mrf.mxu0
        %v3925 = vadd.f32 %v3836, %v3924
        %3926 = vmatmul.bf16.gmra.mxu0 %v2902
        %v3927 = vpop.f32.mrf.mxu0
        %v3928 = vadd.f32 %v3839, %v3927
        %v3929 = vpop.f32.mrf.mxu0
        %v3930 = vadd.f32 %v3841, %v3929
        %3931 = vmatmul.bf16.gmra.mxu0 %v2911
        %v3932 = vpop.f32.mrf.mxu0
        %v3933 = vadd.f32 %v3844, %v3932
        %v3934 = vpop.f32.mrf.mxu0
        %v3935 = vadd.f32 %v3846, %v3934
        %3936 = vdwg.mxu0
        %3937 = vmatpush.bf16.msra.mxu0 %v3395
        %3938 = vmatpush.bf16.msra.mxu0 %v3394
        %3939 = vmatpush.bf16.msra.mxu0 %v3393
        %3940 = vmatpush.bf16.msra.mxu0 %v3392
        %3941 = vmatpush.bf16.msra.mxu0 %v3391
        %3942 = vmatpush.bf16.msra.mxu0 %v3390
        %3943 = vmatpush.bf16.msra.mxu0 %v3389
        %3944 = vmatpush.bf16.msra.mxu0 %v3388
        %3945 = vmatmul.bf16.gmra.mxu0 %v2777
        %v3946 = vpop.f32.mrf.mxu0
        %v3947 = vadd.f32 %v3858, %v3946
        %v3948 = vpop.f32.mrf.mxu0
        %v3949 = vadd.f32 %v3860, %v3948
        %3950 = vmatmul.bf16.gmra.mxu0 %v2786
        %v3951 = vpop.f32.mrf.mxu0
        %v3952 = vadd.f32 %v3863, %v3951
        %v3953 = vpop.f32.mrf.mxu0
        %v3954 = vadd.f32 %v3865, %v3953
        %3955 = vmatmul.bf16.gmra.mxu0 %v2795
        %v3956 = vpop.f32.mrf.mxu0
        %v3957 = vadd.f32 %v3868, %v3956
        %v3958 = vpop.f32.mrf.mxu0
        %v3959 = vadd.f32 %v3870, %v3958
        %3960 = vmatmul.bf16.gmra.mxu0 %v2804
        %v3961 = vpop.f32.mrf.mxu0
        %v3962 = vadd.f32 %v3873, %v3961
        %v3963 = vpop.f32.mrf.mxu0
        %v3964 = vadd.f32 %v3875, %v3963
        %3965 = vmatmul.bf16.gmra.mxu0 %v2813
        %v3966 = vpop.f32.mrf.mxu0
        %v3967 = vadd.f32 %v3878, %v3966
        %v3968 = vpop.f32.mrf.mxu0
        %v3969 = vadd.f32 %v3880, %v3968
        %3970 = vmatmul.bf16.gmra.mxu0 %v2822
        %v3971 = vpop.f32.mrf.mxu0
        %v3972 = vadd.f32 %v3883, %v3971
        %v3973 = vpop.f32.mrf.mxu0
        %v3974 = vadd.f32 %v3885, %v3973
        %3975 = vmatmul.bf16.gmra.mxu0 %v2831
        %v3976 = vpop.f32.mrf.mxu0
        %v3977 = vadd.f32 %v3888, %v3976
        %v3978 = vpop.f32.mrf.mxu0
        %v3979 = vadd.f32 %v3890, %v3978
        %3980 = vmatmul.bf16.gmra.mxu0 %v2840
        %v3981 = vpop.f32.mrf.mxu0
        %v3982 = vadd.f32 %v3893, %v3981
        %v3983 = vpop.f32.mrf.mxu0
        %v3984 = vadd.f32 %v3895, %v3983
        %3985 = vmatmul.bf16.gmra.mxu0 %v2849
        %v3986 = vpop.f32.mrf.mxu0
        %v3987 = vadd.f32 %v3898, %v3986
        %v3988 = vpop.f32.mrf.mxu0
        %v3989 = vadd.f32 %v3900, %v3988
        %3990 = vmatmul.bf16.gmra.mxu0 %v2858
        %v3991 = vpop.f32.mrf.mxu0
        %v3992 = vadd.f32 %v3903, %v3991
        %v3993 = vpop.f32.mrf.mxu0
        %v3994 = vadd.f32 %v3905, %v3993
        %3995 = vmatmul.bf16.gmra.mxu0 %v2867
        %v3996 = vpop.f32.mrf.mxu0
        %v3997 = vadd.f32 %v3908, %v3996
        %v3998 = vpop.f32.mrf.mxu0
        %v3999 = vadd.f32 %v3910, %v3998
        %4000 = vmatmul.bf16.gmra.mxu0 %v2876
        %v4001 = vpop.f32.mrf.mxu0
        %v4002 = vadd.f32 %v3913, %v4001
        %v4003 = vpop.f32.mrf.mxu0
        %v4004 = vadd.f32 %v3915, %v4003
        %4005 = vmatmul.bf16.gmra.mxu0 %v2885
        %v4006 = vpop.f32.mrf.mxu0
        %v4007 = vadd.f32 %v3918, %v4006
        %v4008 = vpop.f32.mrf.mxu0
        %v4009 = vadd.f32 %v3920, %v4008
        %4010 = vmatmul.bf16.gmra.mxu0 %v2894
        %v4011 = vpop.f32.mrf.mxu0
        %v4012 = vadd.f32 %v3923, %v4011
        %v4013 = vpop.f32.mrf.mxu0
        %v4014 = vadd.f32 %v3925, %v4013
        %4015 = vmatmul.bf16.gmra.mxu0 %v2903
        %v4016 = vpop.f32.mrf.mxu0
        %v4017 = vadd.f32 %v3928, %v4016
        %v4018 = vpop.f32.mrf.mxu0
        %v4019 = vadd.f32 %v3930, %v4018
        %4020 = vmatmul.bf16.gmra.mxu0 %v2912
        %v4021 = vpop.f32.mrf.mxu0
        %v4022 = vadd.f32 %v3933, %v4021
        %v4023 = vpop.f32.mrf.mxu0
        %v4024 = vadd.f32 %v3935, %v4023
        %4025 = vdwg.mxu0
        %4026 = vmatpush.bf16.msra.mxu0 %v3403
        %4027 = vmatpush.bf16.msra.mxu0 %v3402
        %4028 = vmatpush.bf16.msra.mxu0 %v3401
        %4029 = vmatpush.bf16.msra.mxu0 %v3400
        %4030 = vmatpush.bf16.msra.mxu0 %v3399
        %4031 = vmatpush.bf16.msra.mxu0 %v3398
        %4032 = vmatpush.bf16.msra.mxu0 %v3397
        %4033 = vmatpush.bf16.msra.mxu0 %v3396
        %4034 = vmatmul.bf16.gmra.mxu0 %v2778
        %v4035 = vpop.f32.mrf.mxu0
        %v4036 = vadd.f32 %v3947, %v4035
        %v4037 = vpop.f32.mrf.mxu0
        %v4038 = vadd.f32 %v3949, %v4037
        %4039 = vmatmul.bf16.gmra.mxu0 %v2787
        %v4040 = vpop.f32.mrf.mxu0
        %v4041 = vadd.f32 %v3952, %v4040
        %v4042 = vpop.f32.mrf.mxu0
        %v4043 = vadd.f32 %v3954, %v4042
        %4044 = vmatmul.bf16.gmra.mxu0 %v2796
        %v4045 = vpop.f32.mrf.mxu0
        %v4046 = vadd.f32 %v3957, %v4045
        %v4047 = vpop.f32.mrf.mxu0
        %v4048 = vadd.f32 %v3959, %v4047
        %4049 = vmatmul.bf16.gmra.mxu0 %v2805
        %v4050 = vpop.f32.mrf.mxu0
        %v4051 = vadd.f32 %v3962, %v4050
        %v4052 = vpop.f32.mrf.mxu0
        %v4053 = vadd.f32 %v3964, %v4052
        %4054 = vmatmul.bf16.gmra.mxu0 %v2814
        %v4055 = vpop.f32.mrf.mxu0
        %v4056 = vadd.f32 %v3967, %v4055
        %v4057 = vpop.f32.mrf.mxu0
        %v4058 = vadd.f32 %v3969, %v4057
        %4059 = vmatmul.bf16.gmra.mxu0 %v2823
        %v4060 = vpop.f32.mrf.mxu0
        %v4061 = vadd.f32 %v3972, %v4060
        %v4062 = vpop.f32.mrf.mxu0
        %v4063 = vadd.f32 %v3974, %v4062
        %4064 = vmatmul.bf16.gmra.mxu0 %v2832
        %v4065 = vpop.f32.mrf.mxu0
        %v4066 = vadd.f32 %v3977, %v4065
        %v4067 = vpop.f32.mrf.mxu0
        %v4068 = vadd.f32 %v3979, %v4067
        %4069 = vmatmul.bf16.gmra.mxu0 %v2841
        %v4070 = vpop.f32.mrf.mxu0
        %v4071 = vadd.f32 %v3982, %v4070
        %v4072 = vpop.f32.mrf.mxu0
        %v4073 = vadd.f32 %v3984, %v4072
        %4074 = vmatmul.bf16.gmra.mxu0 %v2850
        %v4075 = vpop.f32.mrf.mxu0
        %v4076 = vadd.f32 %v3987, %v4075
        %v4077 = vpop.f32.mrf.mxu0
        %v4078 = vadd.f32 %v3989, %v4077
        %4079 = vmatmul.bf16.gmra.mxu0 %v2859
        %v4080 = vpop.f32.mrf.mxu0
        %v4081 = vadd.f32 %v3992, %v4080
        %v4082 = vpop.f32.mrf.mxu0
        %v4083 = vadd.f32 %v3994, %v4082
        %4084 = vmatmul.bf16.gmra.mxu0 %v2868
        %v4085 = vpop.f32.mrf.mxu0
        %v4086 = vadd.f32 %v3997, %v4085
        %v4087 = vpop.f32.mrf.mxu0
        %v4088 = vadd.f32 %v3999, %v4087
        %4089 = vmatmul.bf16.gmra.mxu0 %v2877
        %v4090 = vpop.f32.mrf.mxu0
        %v4091 = vadd.f32 %v4002, %v4090
        %v4092 = vpop.f32.mrf.mxu0
        %v4093 = vadd.f32 %v4004, %v4092
        %4094 = vmatmul.bf16.gmra.mxu0 %v2886
        %v4095 = vpop.f32.mrf.mxu0
        %v4096 = vadd.f32 %v4007, %v4095
        %v4097 = vpop.f32.mrf.mxu0
        %v4098 = vadd.f32 %v4009, %v4097
        %4099 = vmatmul.bf16.gmra.mxu0 %v2895
        %v4100 = vpop.f32.mrf.mxu0
        %v4101 = vadd.f32 %v4012, %v4100
        %v4102 = vpop.f32.mrf.mxu0
        %v4103 = vadd.f32 %v4014, %v4102
        %4104 = vmatmul.bf16.gmra.mxu0 %v2904
        %v4105 = vpop.f32.mrf.mxu0
        %v4106 = vadd.f32 %v4017, %v4105
        %v4107 = vpop.f32.mrf.mxu0
        %v4108 = vadd.f32 %v4019, %v4107
        %4109 = vmatmul.bf16.gmra.mxu0 %v2913
        %v4110 = vpop.f32.mrf.mxu0
        %v4111 = vadd.f32 %v4022, %v4110
        %v4112 = vpop.f32.mrf.mxu0
        %v4113 = vadd.f32 %v4024, %v4112
        %4114 = vdwg.mxu0
        %4115 = vmatpush.bf16.msra.mxu0 %v3411
        %4116 = vmatpush.bf16.msra.mxu0 %v3410
        %4117 = vmatpush.bf16.msra.mxu0 %v3409
        %4118 = vmatpush.bf16.msra.mxu0 %v3408
        %4119 = vmatpush.bf16.msra.mxu0 %v3407
        %4120 = vmatpush.bf16.msra.mxu0 %v3406
        %4121 = vmatpush.bf16.msra.mxu0 %v3405
        %4122 = vmatpush.bf16.msra.mxu0 %v3404
        %4123 = vmatmul.bf16.gmra.mxu0 %v2779
        %v4124 = vpop.f32.mrf.mxu0
        %v4125 = vadd.f32 %v4036, %v4124
        %v4126 = vpop.f32.mrf.mxu0
        %v4127 = vadd.f32 %v4038, %v4126
        %4128 = vmatmul.bf16.gmra.mxu0 %v2788
        %v4129 = vpop.f32.mrf.mxu0
        %v4130 = vadd.f32 %v4041, %v4129
        %v4131 = vpop.f32.mrf.mxu0
        %v4132 = vadd.f32 %v4043, %v4131
        %4133 = vmatmul.bf16.gmra.mxu0 %v2797
        %v4134 = vpop.f32.mrf.mxu0
        %v4135 = vadd.f32 %v4046, %v4134
        %v4136 = vpop.f32.mrf.mxu0
        %v4137 = vadd.f32 %v4048, %v4136
        %4138 = vmatmul.bf16.gmra.mxu0 %v2806
        %v4139 = vpop.f32.mrf.mxu0
        %v4140 = vadd.f32 %v4051, %v4139
        %v4141 = vpop.f32.mrf.mxu0
        %v4142 = vadd.f32 %v4053, %v4141
        %4143 = vmatmul.bf16.gmra.mxu0 %v2815
        %v4144 = vpop.f32.mrf.mxu0
        %v4145 = vadd.f32 %v4056, %v4144
        %v4146 = vpop.f32.mrf.mxu0
        %v4147 = vadd.f32 %v4058, %v4146
        %4148 = vmatmul.bf16.gmra.mxu0 %v2824
        %v4149 = vpop.f32.mrf.mxu0
        %v4150 = vadd.f32 %v4061, %v4149
        %v4151 = vpop.f32.mrf.mxu0
        %v4152 = vadd.f32 %v4063, %v4151
        %4153 = vmatmul.bf16.gmra.mxu0 %v2833
        %v4154 = vpop.f32.mrf.mxu0
        %v4155 = vadd.f32 %v4066, %v4154
        %v4156 = vpop.f32.mrf.mxu0
        %v4157 = vadd.f32 %v4068, %v4156
        %4158 = vmatmul.bf16.gmra.mxu0 %v2842
        %v4159 = vpop.f32.mrf.mxu0
        %v4160 = vadd.f32 %v4071, %v4159
        %v4161 = vpop.f32.mrf.mxu0
        %v4162 = vadd.f32 %v4073, %v4161
        %4163 = vmatmul.bf16.gmra.mxu0 %v2851
        %v4164 = vpop.f32.mrf.mxu0
        %v4165 = vadd.f32 %v4076, %v4164
        %v4166 = vpop.f32.mrf.mxu0
        %v4167 = vadd.f32 %v4078, %v4166
        %4168 = vmatmul.bf16.gmra.mxu0 %v2860
        %v4169 = vpop.f32.mrf.mxu0
        %v4170 = vadd.f32 %v4081, %v4169
        %v4171 = vpop.f32.mrf.mxu0
        %v4172 = vadd.f32 %v4083, %v4171
        %4173 = vmatmul.bf16.gmra.mxu0 %v2869
        %v4174 = vpop.f32.mrf.mxu0
        %v4175 = vadd.f32 %v4086, %v4174
        %v4176 = vpop.f32.mrf.mxu0
        %v4177 = vadd.f32 %v4088, %v4176
        %4178 = vmatmul.bf16.gmra.mxu0 %v2878
        %v4179 = vpop.f32.mrf.mxu0
        %v4180 = vadd.f32 %v4091, %v4179
        %v4181 = vpop.f32.mrf.mxu0
        %v4182 = vadd.f32 %v4093, %v4181
        %4183 = vmatmul.bf16.gmra.mxu0 %v2887
        %v4184 = vpop.f32.mrf.mxu0
        %v4185 = vadd.f32 %v4096, %v4184
        %v4186 = vpop.f32.mrf.mxu0
        %v4187 = vadd.f32 %v4098, %v4186
        %4188 = vmatmul.bf16.gmra.mxu0 %v2896
        %v4189 = vpop.f32.mrf.mxu0
        %v4190 = vadd.f32 %v4101, %v4189
        %v4191 = vpop.f32.mrf.mxu0
        %v4192 = vadd.f32 %v4103, %v4191
        %4193 = vmatmul.bf16.gmra.mxu0 %v2905
        %v4194 = vpop.f32.mrf.mxu0
        %v4195 = vadd.f32 %v4106, %v4194
        %v4196 = vpop.f32.mrf.mxu0
        %v4197 = vadd.f32 %v4108, %v4196
        %4198 = vmatmul.bf16.gmra.mxu0 %v2914
        %v4199 = vpop.f32.mrf.mxu0
        %v4200 = vadd.f32 %v4111, %v4199
        %v4201 = vpop.f32.mrf.mxu0
        %v4202 = vadd.f32 %v4113, %v4201
        %4203 = vdwg.mxu0
        %4204 = vmatpush.bf16.msra.mxu0 %v3419
        %4205 = vmatpush.bf16.msra.mxu0 %v3418
        %4206 = vmatpush.bf16.msra.mxu0 %v3417
        %4207 = vmatpush.bf16.msra.mxu0 %v3416
        %4208 = vmatpush.bf16.msra.mxu0 %v3415
        %4209 = vmatpush.bf16.msra.mxu0 %v3414
        %4210 = vmatpush.bf16.msra.mxu0 %v3413
        %4211 = vmatpush.bf16.msra.mxu0 %v3412
        %4212 = vmatmul.bf16.gmra.mxu0 %v2780
        %v4213 = vpop.f32.mrf.mxu0
        %v4214 = vadd.f32 %v4125, %v4213
        %v4215 = vpop.f32.mrf.mxu0
        %v4216 = vadd.f32 %v4127, %v4215
        %4217 = vmatmul.bf16.gmra.mxu0 %v2789
        %v4218 = vpop.f32.mrf.mxu0
        %v4219 = vadd.f32 %v4130, %v4218
        %v4220 = vpop.f32.mrf.mxu0
        %v4221 = vadd.f32 %v4132, %v4220
        %4222 = vmatmul.bf16.gmra.mxu0 %v2798
        %v4223 = vpop.f32.mrf.mxu0
        %v4224 = vadd.f32 %v4135, %v4223
        %v4225 = vpop.f32.mrf.mxu0
        %v4226 = vadd.f32 %v4137, %v4225
        %4227 = vmatmul.bf16.gmra.mxu0 %v2807
        %v4228 = vpop.f32.mrf.mxu0
        %v4229 = vadd.f32 %v4140, %v4228
        %v4230 = vpop.f32.mrf.mxu0
        %v4231 = vadd.f32 %v4142, %v4230
        %4232 = vmatmul.bf16.gmra.mxu0 %v2816
        %v4233 = vpop.f32.mrf.mxu0
        %v4234 = vadd.f32 %v4145, %v4233
        %v4235 = vpop.f32.mrf.mxu0
        %v4236 = vadd.f32 %v4147, %v4235
        %4237 = vmatmul.bf16.gmra.mxu0 %v2825
        %v4238 = vpop.f32.mrf.mxu0
        %v4239 = vadd.f32 %v4150, %v4238
        %v4240 = vpop.f32.mrf.mxu0
        %v4241 = vadd.f32 %v4152, %v4240
        %4242 = vmatmul.bf16.gmra.mxu0 %v2834
        %v4243 = vpop.f32.mrf.mxu0
        %v4244 = vadd.f32 %v4155, %v4243
        %v4245 = vpop.f32.mrf.mxu0
        %v4246 = vadd.f32 %v4157, %v4245
        %4247 = vmatmul.bf16.gmra.mxu0 %v2843
        %v4248 = vpop.f32.mrf.mxu0
        %v4249 = vadd.f32 %v4160, %v4248
        %v4250 = vpop.f32.mrf.mxu0
        %v4251 = vadd.f32 %v4162, %v4250
        %4252 = vmatmul.bf16.gmra.mxu0 %v2852
        %v4253 = vpop.f32.mrf.mxu0
        %v4254 = vadd.f32 %v4165, %v4253
        %v4255 = vpop.f32.mrf.mxu0
        %v4256 = vadd.f32 %v4167, %v4255
        %4257 = vmatmul.bf16.gmra.mxu0 %v2861
        %v4258 = vpop.f32.mrf.mxu0
        %v4259 = vadd.f32 %v4170, %v4258
        %v4260 = vpop.f32.mrf.mxu0
        %v4261 = vadd.f32 %v4172, %v4260
        %4262 = vmatmul.bf16.gmra.mxu0 %v2870
        %v4263 = vpop.f32.mrf.mxu0
        %v4264 = vadd.f32 %v4175, %v4263
        %v4265 = vpop.f32.mrf.mxu0
        %v4266 = vadd.f32 %v4177, %v4265
        %4267 = vmatmul.bf16.gmra.mxu0 %v2879
        %v4268 = vpop.f32.mrf.mxu0
        %v4269 = vadd.f32 %v4180, %v4268
        %v4270 = vpop.f32.mrf.mxu0
        %v4271 = vadd.f32 %v4182, %v4270
        %4272 = vmatmul.bf16.gmra.mxu0 %v2888
        %v4273 = vpop.f32.mrf.mxu0
        %v4274 = vadd.f32 %v4185, %v4273
        %v4275 = vpop.f32.mrf.mxu0
        %v4276 = vadd.f32 %v4187, %v4275
        %4277 = vmatmul.bf16.gmra.mxu0 %v2897
        %v4278 = vpop.f32.mrf.mxu0
        %v4279 = vadd.f32 %v4190, %v4278
        %v4280 = vpop.f32.mrf.mxu0
        %v4281 = vadd.f32 %v4192, %v4280
        %4282 = vmatmul.bf16.gmra.mxu0 %v2906
        %v4283 = vpop.f32.mrf.mxu0
        %v4284 = vadd.f32 %v4195, %v4283
        %v4285 = vpop.f32.mrf.mxu0
        %v4286 = vadd.f32 %v4197, %v4285
        %4287 = vmatmul.bf16.gmra.mxu0 %v2915
        %v4288 = vpop.f32.mrf.mxu0
        %v4289 = vadd.f32 %v4200, %v4288
        %v4290 = vpop.f32.mrf.mxu0
        %v4291 = vadd.f32 %v4202, %v4290
        %4292 = vdwg.mxu0
        %v4293 = vadd.f32 %v4214, %v4216
        %v4294 = vadd.f32 %v4293, %v4219
        %v4295 = vadd.f32 %v4294, %v4221
        %v4296 = vadd.f32 %v4295, %v4224
        %v4297 = vadd.f32 %v4296, %v4226
        %v4298 = vadd.f32 %v4297, %v4229
        %v4299 = vadd.f32 %v4298, %v4231
        %v4300 = vadd.f32 %v4299, %v4234
        %v4301 = vadd.f32 %v4300, %v4236
        %v4302 = vadd.f32 %v4301, %v4239
        %v4303 = vadd.f32 %v4302, %v4241
        %v4304 = vadd.f32 %v4303, %v4244
        %v4305 = vadd.f32 %v4304, %v4246
        %v4306 = vadd.f32 %v4305, %v4249
        %v4307 = vadd.f32 %v4306, %v4251
        %v4308 = vadd.f32 %v4307, %v4254
        %v4309 = vadd.f32 %v4308, %v4256
        %v4310 = vadd.f32 %v4309, %v4259
        %v4311 = vadd.f32 %v4310, %v4261
        %v4312 = vadd.f32 %v4311, %v4264
        %v4313 = vadd.f32 %v4312, %v4266
        %v4314 = vadd.f32 %v4313, %v4269
        %v4315 = vadd.f32 %v4314, %v4271
        %v4316 = vadd.f32 %v4315, %v4274
        %v4317 = vadd.f32 %v4316, %v4276
        %v4318 = vadd.f32 %v4317, %v4279
        %v4319 = vadd.f32 %v4318, %v4281
        %v4320 = vadd.f32 %v4319, %v4284
        %v4321 = vadd.f32 %v4320, %v4286
        %v4322 = vadd.f32 %v4321, %v4289
        %v4323 = vadd.f32 %v4322, %v4291
        %v4324 = vrot.slane %v4323, 4
        %v4325 = vadd.f32 %v4323, %v4324
        %v4326 = vrot.slane %v4325, 2
        %v4327 = vadd.f32 %v4325, %v4326
        %v4328 = vrot.slane %v4327, 1
        %v4329 = vadd.f32 %v4327, %v4328
        %v4330 = vmul.f32 %v4329, 0.00390625
        %v4331 = vmul.f32 %v4214, %v4214
        %v4332 = vmul.f32 %v4216, %v4216
        %v4333 = vmul.f32 %v4219, %v4219
        %v4334 = vmul.f32 %v4221, %v4221
        %v4335 = vmul.f32 %v4224, %v4224
        %v4336 = vmul.f32 %v4226, %v4226
        %v4337 = vmul.f32 %v4229, %v4229
        %v4338 = vmul.f32 %v4231, %v4231
        %v4339 = vmul.f32 %v4234, %v4234
        %v4340 = vmul.f32 %v4236, %v4236
        %v4341 = vmul.f32 %v4239, %v4239
        %v4342 = vmul.f32 %v4241, %v4241
        %v4343 = vmul.f32 %v4244, %v4244
        %v4344 = vmul.f32 %v4246, %v4246
        %v4345 = vmul.f32 %v4249, %v4249
        %v4346 = vmul.f32 %v4251, %v4251
        %v4347 = vmul.f32 %v4254, %v4254
        %v4348 = vmul.f32 %v4256, %v4256
        %v4349 = vmul.f32 %v4259, %v4259
        %v4350 = vmul.f32 %v4261, %v4261
        %v4351 = vmul.f32 %v4264, %v4264
        %v4352 = vmul.f32 %v4266, %v4266
        %v4353 = vmul.f32 %v4269, %v4269
        %v4354 = vmul.f32 %v4271, %v4271
        %v4355 = vmul.f32 %v4274, %v4274
        %v4356 = vmul.f32 %v4276, %v4276
        %v4357 = vmul.f32 %v4279, %v4279
        %v4358 = vmul.f32 %v4281, %v4281
        %v4359 = vmul.f32 %v4284, %v4284
        %v4360 = vmul.f32 %v4286, %v4286
        %v4361 = vmul.f32 %v4289, %v4289
        %v4362 = vmul.f32 %v4291, %v4291
        %v4363 = vadd.f32 %v4331, %v4332
        %v4364 = vadd.f32 %v4363, %v4333
        %v4365 = vadd.f32 %v4364, %v4334
        %v4366 = vadd.f32 %v4365, %v4335
        %v4367 = vadd.f32 %v4366, %v4336
        %v4368 = vadd.f32 %v4367, %v4337
        %v4369 = vadd.f32 %v4368, %v4338
        %v4370 = vadd.f32 %v4369, %v4339
        %v4371 = vadd.f32 %v4370, %v4340
        %v4372 = vadd.f32 %v4371, %v4341
        %v4373 = vadd.f32 %v4372, %v4342
        %v4374 = vadd.f32 %v4373, %v4343
        %v4375 = vadd.f32 %v4374, %v4344
        %v4376 = vadd.f32 %v4375, %v4345
        %v4377 = vadd.f32 %v4376, %v4346
        %v4378 = vadd.f32 %v4377, %v4347
        %v4379 = vadd.f32 %v4378, %v4348
        %v4380 = vadd.f32 %v4379, %v4349
        %v4381 = vadd.f32 %v4380, %v4350
        %v4382 = vadd.f32 %v4381, %v4351
        %v4383 = vadd.f32 %v4382, %v4352
        %v4384 = vadd.f32 %v4383, %v4353
        %v4385 = vadd.f32 %v4384, %v4354
        %v4386 = vadd.f32 %v4385, %v4355
        %v4387 = vadd.f32 %v4386, %v4356
        %v4388 = vadd.f32 %v4387, %v4357
        %v4389 = vadd.f32 %v4388, %v4358
        %v4390 = vadd.f32 %v4389, %v4359
        %v4391 = vadd.f32 %v4390, %v4360
        %v4392 = vadd.f32 %v4391, %v4361
        %v4393 = vadd.f32 %v4392, %v4362
        %v4394 = vrot.slane %v4393, 4
        %v4395 = vadd.f32 %v4393, %v4394
        %v4396 = vrot.slane %v4395, 2
        %v4397 = vadd.f32 %v4395, %v4396
        %v4398 = vrot.slane %v4397, 1
        %v4399 = vadd.f32 %v4397, %v4398
        %v4400 = vmul.f32 %v4399, 0.00390625
        %v4401 = vmul.f32 %v4330, %v4330
        %v4402 = vsub.f32 %v4400, %v4401
        %v4403 = vmax.f32 %v4402, 0.0
        %v4404 = vsub.f32 %v4214, %v4330
        %v4405 = vsub.f32 %v4216, %v4330
        %v4406 = vsub.f32 %v4219, %v4330
        %v4407 = vsub.f32 %v4221, %v4330
        %v4408 = vsub.f32 %v4224, %v4330
        %v4409 = vsub.f32 %v4226, %v4330
        %v4410 = vsub.f32 %v4229, %v4330
        %v4411 = vsub.f32 %v4231, %v4330
        %v4412 = vsub.f32 %v4234, %v4330
        %v4413 = vsub.f32 %v4236, %v4330
        %v4414 = vsub.f32 %v4239, %v4330
        %v4415 = vsub.f32 %v4241, %v4330
        %v4416 = vsub.f32 %v4244, %v4330
        %v4417 = vsub.f32 %v4246, %v4330
        %v4418 = vsub.f32 %v4249, %v4330
        %v4419 = vsub.f32 %v4251, %v4330
        %v4420 = vsub.f32 %v4254, %v4330
        %v4421 = vsub.f32 %v4256, %v4330
        %v4422 = vsub.f32 %v4259, %v4330
        %v4423 = vsub.f32 %v4261, %v4330
        %v4424 = vsub.f32 %v4264, %v4330
        %v4425 = vsub.f32 %v4266, %v4330
        %v4426 = vsub.f32 %v4269, %v4330
        %v4427 = vsub.f32 %v4271, %v4330
        %v4428 = vsub.f32 %v4274, %v4330
        %v4429 = vsub.f32 %v4276, %v4330
        %v4430 = vsub.f32 %v4279, %v4330
        %v4431 = vsub.f32 %v4281, %v4330
        %v4432 = vsub.f32 %v4284, %v4330
        %v4433 = vsub.f32 %v4286, %v4330
        %v4434 = vsub.f32 %v4289, %v4330
        %v4435 = vsub.f32 %v4291, %v4330
        %v4436 = vadd.f32 %v4403, 1e-05
        %v4437 = vrsqrt.pop %v4436
        %v4438 = vmul.f32 %v4437, %v4436
        %v4439 = vmul.f32 %v4438, %v4437
        %v4440 = vmul.f32 0.5, %v4439
        %v4441 = vsub.f32 1.5, %v4440
        %v4442 = vmul.f32 %v4437, %v4441
        %vm4443 = vweird.f32 %v4436
        %vm4444 = vweird.f32 %v4437
        %vm4445 = vmor %vm4443, %vm4444
        %v4446 = vsel %vm4445, %v4437, %v4442
        %v4447 = vmul.f32 %v4404, %v4446
        %v4448 = vmul.f32 %v4405, %v4446
        %v4449 = vmul.f32 %v4406, %v4446
        %v4450 = vmul.f32 %v4407, %v4446
        %v4451 = vmul.f32 %v4408, %v4446
        %v4452 = vmul.f32 %v4409, %v4446
        %v4453 = vmul.f32 %v4410, %v4446
        %v4454 = vmul.f32 %v4411, %v4446
        %v4455 = vmul.f32 %v4412, %v4446
        %v4456 = vmul.f32 %v4413, %v4446
        %v4457 = vmul.f32 %v4414, %v4446
        %v4458 = vmul.f32 %v4415, %v4446
        %v4459 = vmul.f32 %v4416, %v4446
        %v4460 = vmul.f32 %v4417, %v4446
        %v4461 = vmul.f32 %v4418, %v4446
        %v4462 = vmul.f32 %v4419, %v4446
        %v4463 = vmul.f32 %v4420, %v4446
        %v4464 = vmul.f32 %v4421, %v4446
        %v4465 = vmul.f32 %v4422, %v4446
        %v4466 = vmul.f32 %v4423, %v4446
        %v4467 = vmul.f32 %v4424, %v4446
        %v4468 = vmul.f32 %v4425, %v4446
        %v4469 = vmul.f32 %v4426, %v4446
        %v4470 = vmul.f32 %v4427, %v4446
        %v4471 = vmul.f32 %v4428, %v4446
        %v4472 = vmul.f32 %v4429, %v4446
        %v4473 = vmul.f32 %v4430, %v4446
        %v4474 = vmul.f32 %v4431, %v4446
        %v4475 = vmul.f32 %v4432, %v4446
        %v4476 = vmul.f32 %v4433, %v4446
        %v4477 = vmul.f32 %v4434, %v4446
        %v4478 = vmul.f32 %v4435, %v4446
        %v4479 = vsub.f32 0.0, %v4447
        %v4480 = vsub.f32 0.0, %v4448
        %v4481 = vsub.f32 0.0, %v4449
        %v4482 = vsub.f32 0.0, %v4450
        %v4483 = vsub.f32 0.0, %v4451
        %v4484 = vsub.f32 0.0, %v4452
        %v4485 = vsub.f32 0.0, %v4453
        %v4486 = vsub.f32 0.0, %v4454
        %v4487 = vsub.f32 0.0, %v4455
        %v4488 = vsub.f32 0.0, %v4456
        %v4489 = vsub.f32 0.0, %v4457
        %v4490 = vsub.f32 0.0, %v4458
        %v4491 = vsub.f32 0.0, %v4459
        %v4492 = vsub.f32 0.0, %v4460
        %v4493 = vsub.f32 0.0, %v4461
        %v4494 = vsub.f32 0.0, %v4462
        %v4495 = vsub.f32 0.0, %v4463
        %v4496 = vsub.f32 0.0, %v4464
        %v4497 = vsub.f32 0.0, %v4465
        %v4498 = vsub.f32 0.0, %v4466
        %v4499 = vsub.f32 0.0, %v4467
        %v4500 = vsub.f32 0.0, %v4468
        %v4501 = vsub.f32 0.0, %v4469
        %v4502 = vsub.f32 0.0, %v4470
        %v4503 = vsub.f32 0.0, %v4471
        %v4504 = vsub.f32 0.0, %v4472
        %v4505 = vsub.f32 0.0, %v4473
        %v4506 = vsub.f32 0.0, %v4474
        %v4507 = vsub.f32 0.0, %v4475
        %v4508 = vsub.f32 0.0, %v4476
        %v4509 = vsub.f32 0.0, %v4477
        %v4510 = vsub.f32 0.0, %v4478
        %v4511 = vmul.f32 %v4479, 1.442695
        %v4512 = vpow.pop %v4511
        %v4513 = vmul.f32 %v4480, 1.442695
        %v4514 = vpow.pop %v4513
        %v4515 = vmul.f32 %v4481, 1.442695
        %v4516 = vpow.pop %v4515
        %v4517 = vmul.f32 %v4482, 1.442695
        %v4518 = vpow.pop %v4517
        %v4519 = vmul.f32 %v4483, 1.442695
        %v4520 = vpow.pop %v4519
        %v4521 = vmul.f32 %v4484, 1.442695
        %v4522 = vpow.pop %v4521
        %v4523 = vmul.f32 %v4485, 1.442695
        %v4524 = vpow.pop %v4523
        %v4525 = vmul.f32 %v4486, 1.442695
        %v4526 = vpow.pop %v4525
        %v4527 = vmul.f32 %v4487, 1.442695
        %v4528 = vpow.pop %v4527
        %v4529 = vmul.f32 %v4488, 1.442695
        %v4530 = vpow.pop %v4529
        %v4531 = vmul.f32 %v4489, 1.442695
        %v4532 = vpow.pop %v4531
        %v4533 = vmul.f32 %v4490, 1.442695
        %v4534 = vpow.pop %v4533
        %v4535 = vmul.f32 %v4491, 1.442695
        %v4536 = vpow.pop %v4535
        %v4537 = vmul.f32 %v4492, 1.442695
        %v4538 = vpow.pop %v4537
        %v4539 = vmul.f32 %v4493, 1.442695
        %v4540 = vpow.pop %v4539
        %v4541 = vmul.f32 %v4494, 1.442695
        %v4542 = vpow.pop %v4541
        %v4543 = vmul.f32 %v4495, 1.442695
        %v4544 = vpow.pop %v4543
        %v4545 = vmul.f32 %v4496, 1.442695
        %v4546 = vpow.pop %v4545
        %v4547 = vmul.f32 %v4497, 1.442695
        %v4548 = vpow.pop %v4547
        %v4549 = vmul.f32 %v4498, 1.442695
        %v4550 = vpow.pop %v4549
        %v4551 = vmul.f32 %v4499, 1.442695
        %v4552 = vpow.pop %v4551
        %v4553 = vmul.f32 %v4500, 1.442695
        %v4554 = vpow.pop %v4553
        %v4555 = vmul.f32 %v4501, 1.442695
        %v4556 = vpow.pop %v4555
        %v4557 = vmul.f32 %v4502, 1.442695
        %v4558 = vpow.pop %v4557
        %v4559 = vmul.f32 %v4503, 1.442695
        %v4560 = vpow.pop %v4559
        %v4561 = vmul.f32 %v4504, 1.442695
        %v4562 = vpow.pop %v4561
        %v4563 = vmul.f32 %v4505, 1.442695
        %v4564 = vpow.pop %v4563
        %v4565 = vmul.f32 %v4506, 1.442695
        %v4566 = vpow.pop %v4565
        %v4567 = vmul.f32 %v4507, 1.442695
        %v4568 = vpow.pop %v4567
        %v4569 = vmul.f32 %v4508, 1.442695
        %v4570 = vpow.pop %v4569
        %v4571 = vmul.f32 %v4509, 1.442695
        %v4572 = vpow.pop %v4571
        %v4573 = vmul.f32 %v4510, 1.442695
        %v4574 = vpow.pop %v4573
        %v4575 = vadd.f32 %v4512, 1.0
        %v4576 = vadd.f32 %v4514, 1.0
        %v4577 = vadd.f32 %v4516, 1.0
        %v4578 = vadd.f32 %v4518, 1.0
        %v4579 = vadd.f32 %v4520, 1.0
        %v4580 = vadd.f32 %v4522, 1.0
        %v4581 = vadd.f32 %v4524, 1.0
        %v4582 = vadd.f32 %v4526, 1.0
        %v4583 = vadd.f32 %v4528, 1.0
        %v4584 = vadd.f32 %v4530, 1.0
        %v4585 = vadd.f32 %v4532, 1.0
        %v4586 = vadd.f32 %v4534, 1.0
        %v4587 = vadd.f32 %v4536, 1.0
        %v4588 = vadd.f32 %v4538, 1.0
        %v4589 = vadd.f32 %v4540, 1.0
        %v4590 = vadd.f32 %v4542, 1.0
        %v4591 = vadd.f32 %v4544, 1.0
        %v4592 = vadd.f32 %v4546, 1.0
        %v4593 = vadd.f32 %v4548, 1.0
        %v4594 = vadd.f32 %v4550, 1.0
        %v4595 = vadd.f32 %v4552, 1.0
        %v4596 = vadd.f32 %v4554, 1.0
        %v4597 = vadd.f32 %v4556, 1.0
        %v4598 = vadd.f32 %v4558, 1.0
        %v4599 = vadd.f32 %v4560, 1.0
        %v4600 = vadd.f32 %v4562, 1.0
        %v4601 = vadd.f32 %v4564, 1.0
        %v4602 = vadd.f32 %v4566, 1.0
        %v4603 = vadd.f32 %v4568, 1.0
        %v4604 = vadd.f32 %v4570, 1.0
        %v4605 = vadd.f32 %v4572, 1.0
        %v4606 = vadd.f32 %v4574, 1.0
        %v4607 = vrcp.pop %v4575
        %v4608 = vrcp.pop %v4576
        %v4609 = vrcp.pop %v4577
        %v4610 = vrcp.pop %v4578
        %v4611 = vrcp.pop %v4579
        %v4612 = vrcp.pop %v4580
        %v4613 = vrcp.pop %v4581
        %v4614 = vrcp.pop %v4582
        %v4615 = vrcp.pop %v4583
        %v4616 = vrcp.pop %v4584
        %v4617 = vrcp.pop %v4585
        %v4618 = vrcp.pop %v4586
        %v4619 = vrcp.pop %v4587
        %v4620 = vrcp.pop %v4588
        %v4621 = vrcp.pop %v4589
        %v4622 = vrcp.pop %v4590
        %v4623 = vrcp.pop %v4591
        %v4624 = vrcp.pop %v4592
        %v4625 = vrcp.pop %v4593
        %v4626 = vrcp.pop %v4594
        %v4627 = vrcp.pop %v4595
        %v4628 = vrcp.pop %v4596
        %v4629 = vrcp.pop %v4597
        %v4630 = vrcp.pop %v4598
        %v4631 = vrcp.pop %v4599
        %v4632 = vrcp.pop %v4600
        %v4633 = vrcp.pop %v4601
        %v4634 = vrcp.pop %v4602
        %v4635 = vrcp.pop %v4603
        %v4636 = vrcp.pop %v4604
        %v4637 = vrcp.pop %v4605
        %v4638 = vrcp.pop %v4606
        %v4639 = vmul.f32 %v4447, %v4607
        %v4640 = vmul.f32 %v4448, %v4608
        %v4641 = vmul.f32 %v4449, %v4609
        %v4642 = vmul.f32 %v4450, %v4610
        %v4643 = vmul.f32 %v4451, %v4611
        %v4644 = vmul.f32 %v4452, %v4612
        %v4645 = vmul.f32 %v4453, %v4613
        %v4646 = vmul.f32 %v4454, %v4614
        %v4647 = vmul.f32 %v4455, %v4615
        %v4648 = vmul.f32 %v4456, %v4616
        %v4649 = vmul.f32 %v4457, %v4617
        %v4650 = vmul.f32 %v4458, %v4618
        %v4651 = vmul.f32 %v4459, %v4619
        %v4652 = vmul.f32 %v4460, %v4620
        %v4653 = vmul.f32 %v4461, %v4621
        %v4654 = vmul.f32 %v4462, %v4622
        %v4655 = vmul.f32 %v4463, %v4623
        %v4656 = vmul.f32 %v4464, %v4624
        %v4657 = vmul.f32 %v4465, %v4625
        %v4658 = vmul.f32 %v4466, %v4626
        %v4659 = vmul.f32 %v4467, %v4627
        %v4660 = vmul.f32 %v4468, %v4628
        %v4661 = vmul.f32 %v4469, %v4629
        %v4662 = vmul.f32 %v4470, %v4630
        %v4663 = vmul.f32 %v4471, %v4631
        %v4664 = vmul.f32 %v4472, %v4632
        %v4665 = vmul.f32 %v4473, %v4633
        %v4666 = vmul.f32 %v4474, %v4634
        %v4667 = vmul.f32 %v4475, %v4635
        %v4668 = vmul.f32 %v4476, %v4636
        %v4669 = vmul.f32 %v4477, %v4637
        %v4670 = vmul.f32 %v4478, %v4638
        %4671 = vst [vmem:[#allocation2 + $0x20] sm:$0xff] %v4639
        %4672 = vst [vmem:[#allocation2 + $0x28] sm:$0xff] %v4640
        %4673 = vst [vmem:[#allocation2 + $0x30] sm:$0xff] %v4641
        %4674 = vst [vmem:[#allocation2 + $0x38] sm:$0xff] %v4642
        %4675 = vst [vmem:[#allocation2 + $0x40] sm:$0xff] %v4643
        %4676 = vst [vmem:[#allocation2 + $0x48] sm:$0xff] %v4644
        %4677 = vst [vmem:[#allocation2 + $0x50] sm:$0xff] %v4645
        %4678 = vst [vmem:[#allocation2 + $0x58] sm:$0xff] %v4646
        %4679 = vst [vmem:[#allocation2 + $0x60] sm:$0xff] %v4647
        %4680 = vst [vmem:[#allocation2 + $0x68] sm:$0xff] %v4648
        %4681 = vst [vmem:[#allocation2 + $0x70] sm:$0xff] %v4649
        %4682 = vst [vmem:[#allocation2 + $0x78] sm:$0xff] %v4650
        %4683 = vst [vmem:[#allocation2 + $0x80] sm:$0xff] %v4651
        %4684 = vst [vmem:[#allocation2 + $0x88] sm:$0xff] %v4652
        %4685 = vst [vmem:[#allocation2 + $0x90] sm:$0xff] %v4653
        %4686 = vst [vmem:[#allocation2 + $0x98] sm:$0xff] %v4654
        %4687 = vst [vmem:[#allocation2 + $0xa0] sm:$0xff] %v4655
        %4688 = vst [vmem:[#allocation2 + $0xa8] sm:$0xff] %v4656
        %4689 = vst [vmem:[#allocation2 + $0xb0] sm:$0xff] %v4657
        %4690 = vst [vmem:[#allocation2 + $0xb8] sm:$0xff] %v4658
        %4691 = vst [vmem:[#allocation2 + $0xc0] sm:$0xff] %v4659
        %4692 = vst [vmem:[#allocation2 + $0xc8] sm:$0xff] %v4660
        %4693 = vst [vmem:[#allocation2 + $0xd0] sm:$0xff] %v4661
        %4694 = vst [vmem:[#allocation2 + $0xd8] sm:$0xff] %v4662
        %4695 = vst [vmem:[#allocation2 + $0xe0] sm:$0xff] %v4663
        %4696 = vst [vmem:[#allocation2 + $0xe8] sm:$0xff] %v4664
        %4697 = vst [vmem:[#allocation2 + $0xf0] sm:$0xff] %v4665
        %4698 = vst [vmem:[#allocation2 + $0xf8] sm:$0xff] %v4666
        %4699 = vst [vmem:[#allocation2 + $0x100] sm:$0xff] %v4667
        %4700 = vst [vmem:[#allocation2 + $0x108] sm:$0xff] %v4668
        %4701 = vst [vmem:[#allocation2 + $0x110] sm:$0xff] %v4669
        %4702 = vst [vmem:[#allocation2 + $0x118] sm:$0xff] %v4670
        %v4703 = vld [vmem:[#allocation2 + $0xf] sm:$0xff]
        %v4704 = vld [vmem:[#allocation2 + $0x17] sm:$0xff]
        %v4705 = vld [vmem:[#allocation2 + $0x1f] sm:$0xff]
        %v4706 = vld [vmem:[#allocation2 + $0x27] sm:$0xff]
        %v4707 = vld [vmem:[#allocation2 + $0x2f] sm:$0xff]
        %v4708 = vld [vmem:[#allocation2 + $0x37] sm:$0xff]
        %v4709 = vld [vmem:[#allocation2 + $0x3f] sm:$0xff]
        %v4710 = vld [vmem:[#allocation2 + $0x47] sm:$0xff]
        %v4711 = vld [vmem:[#allocation2 + $0x4f] sm:$0xff]
        %v4712 = vld [vmem:[#allocation2 + $0x57] sm:$0xff]
        %v4713 = vld [vmem:[#allocation2 + $0x5f] sm:$0xff]
        %v4714 = vld [vmem:[#allocation2 + $0x67] sm:$0xff]
        %v4715 = vld [vmem:[#allocation2 + $0x6f] sm:$0xff]
        %v4716 = vld [vmem:[#allocation2 + $0x77] sm:$0xff]
        %v4717 = vld [vmem:[#allocation2 + $0x7f] sm:$0xff]
        %v4718 = vld [vmem:[#allocation2 + $0x87] sm:$0xff]
        %v4719 = vld [vmem:[#allocation2 + $0x8f] sm:$0xff]
        %v4720 = vld [vmem:[#allocation2 + $0x97] sm:$0xff]
        %v4721 = vld [vmem:[#allocation2 + $0x9f] sm:$0xff]
        %v4722 = vld [vmem:[#allocation2 + $0xa7] sm:$0xff]
        %v4723 = vld [vmem:[#allocation2 + $0xaf] sm:$0xff]
        %v4724 = vld [vmem:[#allocation2 + $0xb7] sm:$0xff]
        %v4725 = vld [vmem:[#allocation2 + $0xbf] sm:$0xff]
        %v4726 = vld [vmem:[#allocation2 + $0xc7] sm:$0xff]
        %v4727 = vld [vmem:[#allocation2 + $0xcf] sm:$0xff]
        %v4728 = vld [vmem:[#allocation2 + $0xd7] sm:$0xff]
        %v4729 = vld [vmem:[#allocation2 + $0xdf] sm:$0xff]
        %v4730 = vld [vmem:[#allocation2 + $0xe7] sm:$0xff]
        %v4731 = vld [vmem:[#allocation2 + $0xef] sm:$0xff]
        %v4732 = vld [vmem:[#allocation2 + $0xf7] sm:$0xff]
        %v4733 = vld [vmem:[#allocation2 + $0xff] sm:$0xff]
        %v4734 = vld [vmem:[#allocation2 + $0x107] sm:$0xff]
        %v4735 = vsel %vm760, %v4703, 0.0
        %v4736 = vsel %vm761, %v4704, 0.0
        %v4737 = vsel %vm762, %v4705, 0.0
        %v4738 = vsel %vm763, %v4706, 0.0
        %v4739 = vsel %vm764, %v4707, 0.0
        %v4740 = vsel %vm765, %v4708, 0.0
        %v4741 = vsel %vm766, %v4709, 0.0
        %v4742 = vsel %vm767, %v4710, 0.0
        %v4743 = vsel %vm768, %v4711, 0.0
        %v4744 = vsel %vm769, %v4712, 0.0
        %v4745 = vsel %vm770, %v4713, 0.0
        %v4746 = vsel %vm771, %v4714, 0.0
        %v4747 = vsel %vm772, %v4715, 0.0
        %v4748 = vsel %vm773, %v4716, 0.0
        %v4749 = vsel %vm774, %v4717, 0.0
        %v4750 = vsel %vm775, %v4718, 0.0
        %v4751 = vsel %vm776, %v4719, 0.0
        %v4752 = vsel %vm777, %v4720, 0.0
        %v4753 = vsel %vm778, %v4721, 0.0
        %v4754 = vsel %vm779, %v4722, 0.0
        %v4755 = vsel %vm780, %v4723, 0.0
        %v4756 = vsel %vm781, %v4724, 0.0
        %v4757 = vsel %vm782, %v4725, 0.0
        %v4758 = vsel %vm783, %v4726, 0.0
        %v4759 = vsel %vm784, %v4727, 0.0
        %v4760 = vsel %vm785, %v4728, 0.0
        %v4761 = vsel %vm786, %v4729, 0.0
        %v4762 = vsel %vm787, %v4730, 0.0
        %v4763 = vsel %vm788, %v4731, 0.0
        %v4764 = vsel %vm789, %v4732, 0.0
        %v4765 = vsel %vm790, %v4733, 0.0
        %v4766 = vsel %vm791, %v4734, 0.0
        %v4767 = vpack.c.bf16 %v4735, %v4735
        %v4768 = vpack.c.bf16 %v4736, %v4736
        %v4769 = vpack.c.bf16 %v4737, %v4737
        %v4770 = vpack.c.bf16 %v4738, %v4738
        %v4771 = vpack.c.bf16 %v4739, %v4739
        %v4772 = vpack.c.bf16 %v4740, %v4740
        %v4773 = vpack.c.bf16 %v4741, %v4741
        %v4774 = vpack.c.bf16 %v4742, %v4742
        %v4775 = vpack.c.bf16 %v4743, %v4743
        %v4776 = vpack.c.bf16 %v4744, %v4744
        %v4777 = vpack.c.bf16 %v4745, %v4745
        %v4778 = vpack.c.bf16 %v4746, %v4746
        %v4779 = vpack.c.bf16 %v4747, %v4747
        %v4780 = vpack.c.bf16 %v4748, %v4748
        %v4781 = vpack.c.bf16 %v4749, %v4749
        %v4782 = vpack.c.bf16 %v4750, %v4750
        %v4783 = vpack.c.bf16 %v4751, %v4751
        %v4784 = vpack.c.bf16 %v4752, %v4752
        %v4785 = vpack.c.bf16 %v4753, %v4753
        %v4786 = vpack.c.bf16 %v4754, %v4754
        %v4787 = vpack.c.bf16 %v4755, %v4755
        %v4788 = vpack.c.bf16 %v4756, %v4756
        %v4789 = vpack.c.bf16 %v4757, %v4757
        %v4790 = vpack.c.bf16 %v4758, %v4758
        %v4791 = vpack.c.bf16 %v4759, %v4759
        %v4792 = vpack.c.bf16 %v4760, %v4760
        %v4793 = vpack.c.bf16 %v4761, %v4761
        %v4794 = vpack.c.bf16 %v4762, %v4762
        %v4795 = vpack.c.bf16 %v4763, %v4763
        %v4796 = vpack.c.bf16 %v4764, %v4764
        %v4797 = vpack.c.bf16 %v4765, %v4765
        %v4798 = vpack.c.bf16 %v4766, %v4766
        %4799 = vst [vmem:[#allocation3] sm:$0xf] %v4767
        %4800 = vst [vmem:[#allocation3 + $0x24] sm:$0xf] %v4768
        %4801 = vst [vmem:[#allocation3 + $0x48] sm:$0xf] %v4769
        %4802 = vst [vmem:[#allocation3 + $0x6c] sm:$0xf] %v4770
        %4803 = vst [vmem:[#allocation3 + $0x90] sm:$0xf] %v4771
        %4804 = vst [vmem:[#allocation3 + $0xb4] sm:$0xf] %v4772
        %4805 = vst [vmem:[#allocation3 + $0xd8] sm:$0xf] %v4773
        %4806 = vst [vmem:[#allocation3 + $0xfc] sm:$0xf] %v4774
        %4807 = vst [vmem:[#allocation3 + $0x120] sm:$0xf] %v4775
        %4808 = vst [vmem:[#allocation3 + $0x144] sm:$0xf] %v4776
        %4809 = vst [vmem:[#allocation3 + $0x168] sm:$0xf] %v4777
        %4810 = vst [vmem:[#allocation3 + $0x18c] sm:$0xf] %v4778
        %4811 = vst [vmem:[#allocation3 + $0x1b0] sm:$0xf] %v4779
        %4812 = vst [vmem:[#allocation3 + $0x1d4] sm:$0xf] %v4780
        %4813 = vst [vmem:[#allocation3 + $0x1f8] sm:$0xf] %v4781
        %4814 = vst [vmem:[#allocation3 + $0x21c] sm:$0xf] %v4782
        %4815 = vst [vmem:[#allocation3 + $0x240] sm:$0xf] %v4783
        %4816 = vst [vmem:[#allocation3 + $0x264] sm:$0xf] %v4784
        %4817 = vst [vmem:[#allocation3 + $0x288] sm:$0xf] %v4785
        %4818 = vst [vmem:[#allocation3 + $0x2ac] sm:$0xf] %v4786
        %4819 = vst [vmem:[#allocation3 + $0x2d0] sm:$0xf] %v4787
        %4820 = vst [vmem:[#allocation3 + $0x2f4] sm:$0xf] %v4788
        %4821 = vst [vmem:[#allocation3 + $0x318] sm:$0xf] %v4789
        %4822 = vst [vmem:[#allocation3 + $0x33c] sm:$0xf] %v4790
        %4823 = vst [vmem:[#allocation3 + $0x360] sm:$0xf] %v4791
        %4824 = vst [vmem:[#allocation3 + $0x384] sm:$0xf] %v4792
        %4825 = vst [vmem:[#allocation3 + $0x3a8] sm:$0xf] %v4793
        %4826 = vst [vmem:[#allocation3 + $0x3cc] sm:$0xf] %v4794
        %4827 = vst [vmem:[#allocation3 + $0x3f0] sm:$0xf] %v4795
        %4828 = vst [vmem:[#allocation3 + $0x414] sm:$0xf] %v4796
        %4829 = vst [vmem:[#allocation3 + $0x438] sm:$0xf] %v4797
        %4830 = vst [vmem:[#allocation3 + $0x45c] sm:$0xf] %v4798
        %v4831 = vld [vmem:[#allocation2 + $0x10] sm:$0xff]
        %v4832 = vld [vmem:[#allocation2 + $0x18] sm:$0xff]
        %v4833 = vld [vmem:[#allocation2 + $0x20] sm:$0xff]
        %v4834 = vld [vmem:[#allocation2 + $0x28] sm:$0xff]
        %v4835 = vld [vmem:[#allocation2 + $0x30] sm:$0xff]
        %v4836 = vld [vmem:[#allocation2 + $0x38] sm:$0xff]
        %v4837 = vld [vmem:[#allocation2 + $0x40] sm:$0xff]
        %v4838 = vld [vmem:[#allocation2 + $0x48] sm:$0xff]
        %v4839 = vld [vmem:[#allocation2 + $0x50] sm:$0xff]
        %v4840 = vld [vmem:[#allocation2 + $0x58] sm:$0xff]
        %v4841 = vld [vmem:[#allocation2 + $0x60] sm:$0xff]
        %v4842 = vld [vmem:[#allocation2 + $0x68] sm:$0xff]
        %v4843 = vld [vmem:[#allocation2 + $0x70] sm:$0xff]
        %v4844 = vld [vmem:[#allocation2 + $0x78] sm:$0xff]
        %v4845 = vld [vmem:[#allocation2 + $0x80] sm:$0xff]
        %v4846 = vld [vmem:[#allocation2 + $0x88] sm:$0xff]
        %v4847 = vld [vmem:[#allocation2 + $0x90] sm:$0xff]
        %v4848 = vld [vmem:[#allocation2 + $0x98] sm:$0xff]
        %v4849 = vld [vmem:[#allocation2 + $0xa0] sm:$0xff]
        %v4850 = vld [vmem:[#allocation2 + $0xa8] sm:$0xff]
        %v4851 = vld [vmem:[#allocation2 + $0xb0] sm:$0xff]
        %v4852 = vld [vmem:[#allocation2 + $0xb8] sm:$0xff]
        %v4853 = vld [vmem:[#allocation2 + $0xc0] sm:$0xff]
        %v4854 = vld [vmem:[#allocation2 + $0xc8] sm:$0xff]
        %v4855 = vld [vmem:[#allocation2 + $0xd0] sm:$0xff]
        %v4856 = vld [vmem:[#allocation2 + $0xd8] sm:$0xff]
        %v4857 = vld [vmem:[#allocation2 + $0xe0] sm:$0xff]
        %v4858 = vld [vmem:[#allocation2 + $0xe8] sm:$0xff]
        %v4859 = vld [vmem:[#allocation2 + $0xf0] sm:$0xff]
        %v4860 = vld [vmem:[#allocation2 + $0xf8] sm:$0xff]
        %v4861 = vld [vmem:[#allocation2 + $0x100] sm:$0xff]
        %v4862 = vld [vmem:[#allocation2 + $0x108] sm:$0xff]
        %v4863 = vpack.c.bf16 %v4831, %v4831
        %v4864 = vpack.c.bf16 %v4832, %v4832
        %v4865 = vpack.c.bf16 %v4833, %v4833
        %v4866 = vpack.c.bf16 %v4834, %v4834
        %v4867 = vpack.c.bf16 %v4835, %v4835
        %v4868 = vpack.c.bf16 %v4836, %v4836
        %v4869 = vpack.c.bf16 %v4837, %v4837
        %v4870 = vpack.c.bf16 %v4838, %v4838
        %v4871 = vpack.c.bf16 %v4839, %v4839
        %v4872 = vpack.c.bf16 %v4840, %v4840
        %v4873 = vpack.c.bf16 %v4841, %v4841
        %v4874 = vpack.c.bf16 %v4842, %v4842
        %v4875 = vpack.c.bf16 %v4843, %v4843
        %v4876 = vpack.c.bf16 %v4844, %v4844
        %v4877 = vpack.c.bf16 %v4845, %v4845
        %v4878 = vpack.c.bf16 %v4846, %v4846
        %v4879 = vpack.c.bf16 %v4847, %v4847
        %v4880 = vpack.c.bf16 %v4848, %v4848
        %v4881 = vpack.c.bf16 %v4849, %v4849
        %v4882 = vpack.c.bf16 %v4850, %v4850
        %v4883 = vpack.c.bf16 %v4851, %v4851
        %v4884 = vpack.c.bf16 %v4852, %v4852
        %v4885 = vpack.c.bf16 %v4853, %v4853
        %v4886 = vpack.c.bf16 %v4854, %v4854
        %v4887 = vpack.c.bf16 %v4855, %v4855
        %v4888 = vpack.c.bf16 %v4856, %v4856
        %v4889 = vpack.c.bf16 %v4857, %v4857
        %v4890 = vpack.c.bf16 %v4858, %v4858
        %v4891 = vpack.c.bf16 %v4859, %v4859
        %v4892 = vpack.c.bf16 %v4860, %v4860
        %v4893 = vpack.c.bf16 %v4861, %v4861
        %v4894 = vpack.c.bf16 %v4862, %v4862
        %4895 = vst [vmem:[#allocation3 + $0x4] sm:$0xf] %v4863
        %4896 = vst [vmem:[#allocation3 + $0x28] sm:$0xf] %v4864
        %4897 = vst [vmem:[#allocation3 + $0x4c] sm:$0xf] %v4865
        %4898 = vst [vmem:[#allocation3 + $0x70] sm:$0xf] %v4866
        %4899 = vst [vmem:[#allocation3 + $0x94] sm:$0xf] %v4867
        %4900 = vst [vmem:[#allocation3 + $0xb8] sm:$0xf] %v4868
        %4901 = vst [vmem:[#allocation3 + $0xdc] sm:$0xf] %v4869
        %4902 = vst [vmem:[#allocation3 + $0x100] sm:$0xf] %v4870
        %4903 = vst [vmem:[#allocation3 + $0x124] sm:$0xf] %v4871
        %4904 = vst [vmem:[#allocation3 + $0x148] sm:$0xf] %v4872
        %4905 = vst [vmem:[#allocation3 + $0x16c] sm:$0xf] %v4873
        %4906 = vst [vmem:[#allocation3 + $0x190] sm:$0xf] %v4874
        %4907 = vst [vmem:[#allocation3 + $0x1b4] sm:$0xf] %v4875
        %4908 = vst [vmem:[#allocation3 + $0x1d8] sm:$0xf] %v4876
        %4909 = vst [vmem:[#allocation3 + $0x1fc] sm:$0xf] %v4877
        %4910 = vst [vmem:[#allocation3 + $0x220] sm:$0xf] %v4878
        %4911 = vst [vmem:[#allocation3 + $0x244] sm:$0xf] %v4879
        %4912 = vst [vmem:[#allocation3 + $0x268] sm:$0xf] %v4880
        %4913 = vst [vmem:[#allocation3 + $0x28c] sm:$0xf] %v4881
        %4914 = vst [vmem:[#allocation3 + $0x2b0] sm:$0xf] %v4882
        %4915 = vst [vmem:[#allocation3 + $0x2d4] sm:$0xf] %v4883
        %4916 = vst [vmem:[#allocation3 + $0x2f8] sm:$0xf] %v4884
        %4917 = vst [vmem:[#allocation3 + $0x31c] sm:$0xf] %v4885
        %4918 = vst [vmem:[#allocation3 + $0x340] sm:$0xf] %v4886
        %4919 = vst [vmem:[#allocation3 + $0x364] sm:$0xf] %v4887
        %4920 = vst [vmem:[#allocation3 + $0x388] sm:$0xf] %v4888
        %4921 = vst [vmem:[#allocation3 + $0x3ac] sm:$0xf] %v4889
        %4922 = vst [vmem:[#allocation3 + $0x3d0] sm:$0xf] %v4890
        %4923 = vst [vmem:[#allocation3 + $0x3f4] sm:$0xf] %v4891
        %4924 = vst [vmem:[#allocation3 + $0x418] sm:$0xf] %v4892
        %4925 = vst [vmem:[#allocation3 + $0x43c] sm:$0xf] %v4893
        %4926 = vst [vmem:[#allocation3 + $0x460] sm:$0xf] %v4894
        %v4927 = vld [vmem:[#allocation2 + $0x11] sm:$0xff]
        %v4928 = vld [vmem:[#allocation2 + $0x19] sm:$0xff]
        %v4929 = vld [vmem:[#allocation2 + $0x21] sm:$0xff]
        %v4930 = vld [vmem:[#allocation2 + $0x29] sm:$0xff]
        %v4931 = vld [vmem:[#allocation2 + $0x31] sm:$0xff]
        %v4932 = vld [vmem:[#allocation2 + $0x39] sm:$0xff]
        %v4933 = vld [vmem:[#allocation2 + $0x41] sm:$0xff]
        %v4934 = vld [vmem:[#allocation2 + $0x49] sm:$0xff]
        %v4935 = vld [vmem:[#allocation2 + $0x51] sm:$0xff]
        %v4936 = vld [vmem:[#allocation2 + $0x59] sm:$0xff]
        %v4937 = vld [vmem:[#allocation2 + $0x61] sm:$0xff]
        %v4938 = vld [vmem:[#allocation2 + $0x69] sm:$0xff]
        %v4939 = vld [vmem:[#allocation2 + $0x71] sm:$0xff]
        %v4940 = vld [vmem:[#allocation2 + $0x79] sm:$0xff]
        %v4941 = vld [vmem:[#allocation2 + $0x81] sm:$0xff]
        %v4942 = vld [vmem:[#allocation2 + $0x89] sm:$0xff]
        %v4943 = vld [vmem:[#allocation2 + $0x91] sm:$0xff]
        %v4944 = vld [vmem:[#allocation2 + $0x99] sm:$0xff]
        %v4945 = vld [vmem:[#allocation2 + $0xa1] sm:$0xff]
        %v4946 = vld [vmem:[#allocation2 + $0xa9] sm:$0xff]
        %v4947 = vld [vmem:[#allocation2 + $0xb1] sm:$0xff]
        %v4948 = vld [vmem:[#allocation2 + $0xb9] sm:$0xff]
        %v4949 = vld [vmem:[#allocation2 + $0xc1] sm:$0xff]
        %v4950 = vld [vmem:[#allocation2 + $0xc9] sm:$0xff]
        %v4951 = vld [vmem:[#allocation2 + $0xd1] sm:$0xff]
        %v4952 = vld [vmem:[#allocation2 + $0xd9] sm:$0xff]
        %v4953 = vld [vmem:[#allocation2 + $0xe1] sm:$0xff]
        %v4954 = vld [vmem:[#allocation2 + $0xe9] sm:$0xff]
        %v4955 = vld [vmem:[#allocation2 + $0xf1] sm:$0xff]
        %v4956 = vld [vmem:[#allocation2 + $0xf9] sm:$0xff]
        %v4957 = vld [vmem:[#allocation2 + $0x101] sm:$0xff]
        %v4958 = vld [vmem:[#allocation2 + $0x109] sm:$0xff]
        %v4959 = vsel %vm856, %v4927, 0.0
        %v4960 = vsel %vm857, %v4928, 0.0
        %v4961 = vsel %vm858, %v4929, 0.0
        %v4962 = vsel %vm859, %v4930, 0.0
        %v4963 = vsel %vm860, %v4931, 0.0
        %v4964 = vsel %vm861, %v4932, 0.0
        %v4965 = vsel %vm862, %v4933, 0.0
        %v4966 = vsel %vm863, %v4934, 0.0
        %v4967 = vsel %vm864, %v4935, 0.0
        %v4968 = vsel %vm865, %v4936, 0.0
        %v4969 = vsel %vm866, %v4937, 0.0
        %v4970 = vsel %vm867, %v4938, 0.0
        %v4971 = vsel %vm868, %v4939, 0.0
        %v4972 = vsel %vm869, %v4940, 0.0
        %v4973 = vsel %vm870, %v4941, 0.0
        %v4974 = vsel %vm871, %v4942, 0.0
        %v4975 = vsel %vm872, %v4943, 0.0
        %v4976 = vsel %vm873, %v4944, 0.0
        %v4977 = vsel %vm874, %v4945, 0.0
        %v4978 = vsel %vm875, %v4946, 0.0
        %v4979 = vsel %vm876, %v4947, 0.0
        %v4980 = vsel %vm877, %v4948, 0.0
        %v4981 = vsel %vm878, %v4949, 0.0
        %v4982 = vsel %vm879, %v4950, 0.0
        %v4983 = vsel %vm880, %v4951, 0.0
        %v4984 = vsel %vm881, %v4952, 0.0
        %v4985 = vsel %vm882, %v4953, 0.0
        %v4986 = vsel %vm883, %v4954, 0.0
        %v4987 = vsel %vm884, %v4955, 0.0
        %v4988 = vsel %vm885, %v4956, 0.0
        %v4989 = vsel %vm886, %v4957, 0.0
        %v4990 = vsel %vm887, %v4958, 0.0
        %v4991 = vpack.c.bf16 %v4959, %v4959
        %v4992 = vpack.c.bf16 %v4960, %v4960
        %v4993 = vpack.c.bf16 %v4961, %v4961
        %v4994 = vpack.c.bf16 %v4962, %v4962
        %v4995 = vpack.c.bf16 %v4963, %v4963
        %v4996 = vpack.c.bf16 %v4964, %v4964
        %v4997 = vpack.c.bf16 %v4965, %v4965
        %v4998 = vpack.c.bf16 %v4966, %v4966
        %v4999 = vpack.c.bf16 %v4967, %v4967
        %v5000 = vpack.c.bf16 %v4968, %v4968
        %v5001 = vpack.c.bf16 %v4969, %v4969
        %v5002 = vpack.c.bf16 %v4970, %v4970
        %v5003 = vpack.c.bf16 %v4971, %v4971
        %v5004 = vpack.c.bf16 %v4972, %v4972
        %v5005 = vpack.c.bf16 %v4973, %v4973
        %v5006 = vpack.c.bf16 %v4974, %v4974
        %v5007 = vpack.c.bf16 %v4975, %v4975
        %v5008 = vpack.c.bf16 %v4976, %v4976
        %v5009 = vpack.c.bf16 %v4977, %v4977
        %v5010 = vpack.c.bf16 %v4978, %v4978
        %v5011 = vpack.c.bf16 %v4979, %v4979
        %v5012 = vpack.c.bf16 %v4980, %v4980
        %v5013 = vpack.c.bf16 %v4981, %v4981
        %v5014 = vpack.c.bf16 %v4982, %v4982
        %v5015 = vpack.c.bf16 %v4983, %v4983
        %v5016 = vpack.c.bf16 %v4984, %v4984
        %v5017 = vpack.c.bf16 %v4985, %v4985
        %v5018 = vpack.c.bf16 %v4986, %v4986
        %v5019 = vpack.c.bf16 %v4987, %v4987
        %v5020 = vpack.c.bf16 %v4988, %v4988
        %v5021 = vpack.c.bf16 %v4989, %v4989
        %v5022 = vpack.c.bf16 %v4990, %v4990
        %5023 = vst [vmem:[#allocation3 + $0x8] sm:$0xf] %v4991
        %5024 = vst [vmem:[#allocation3 + $0x2c] sm:$0xf] %v4992
        %5025 = vst [vmem:[#allocation3 + $0x50] sm:$0xf] %v4993
        %5026 = vst [vmem:[#allocation3 + $0x74] sm:$0xf] %v4994
        %5027 = vst [vmem:[#allocation3 + $0x98] sm:$0xf] %v4995
        %5028 = vst [vmem:[#allocation3 + $0xbc] sm:$0xf] %v4996
        %5029 = vst [vmem:[#allocation3 + $0xe0] sm:$0xf] %v4997
        %5030 = vst [vmem:[#allocation3 + $0x104] sm:$0xf] %v4998
        %5031 = vst [vmem:[#allocation3 + $0x128] sm:$0xf] %v4999
        %5032 = vst [vmem:[#allocation3 + $0x14c] sm:$0xf] %v5000
        %5033 = vst [vmem:[#allocation3 + $0x170] sm:$0xf] %v5001
        %5034 = vst [vmem:[#allocation3 + $0x194] sm:$0xf] %v5002
        %5035 = vst [vmem:[#allocation3 + $0x1b8] sm:$0xf] %v5003
        %5036 = vst [vmem:[#allocation3 + $0x1dc] sm:$0xf] %v5004
        %5037 = vst [vmem:[#allocation3 + $0x200] sm:$0xf] %v5005
        %5038 = vst [vmem:[#allocation3 + $0x224] sm:$0xf] %v5006
        %5039 = vst [vmem:[#allocation3 + $0x248] sm:$0xf] %v5007
        %5040 = vst [vmem:[#allocation3 + $0x26c] sm:$0xf] %v5008
        %5041 = vst [vmem:[#allocation3 + $0x290] sm:$0xf] %v5009
        %5042 = vst [vmem:[#allocation3 + $0x2b4] sm:$0xf] %v5010
        %5043 = vst [vmem:[#allocation3 + $0x2d8] sm:$0xf] %v5011
        %5044 = vst [vmem:[#allocation3 + $0x2fc] sm:$0xf] %v5012
        %5045 = vst [vmem:[#allocation3 + $0x320] sm:$0xf] %v5013
        %5046 = vst [vmem:[#allocation3 + $0x344] sm:$0xf] %v5014
        %5047 = vst [vmem:[#allocation3 + $0x368] sm:$0xf] %v5015
        %5048 = vst [vmem:[#allocation3 + $0x38c] sm:$0xf] %v5016
        %5049 = vst [vmem:[#allocation3 + $0x3b0] sm:$0xf] %v5017
        %5050 = vst [vmem:[#allocation3 + $0x3d4] sm:$0xf] %v5018
        %5051 = vst [vmem:[#allocation3 + $0x3f8] sm:$0xf] %v5019
        %5052 = vst [vmem:[#allocation3 + $0x41c] sm:$0xf] %v5020
        %5053 = vst [vmem:[#allocation3 + $0x440] sm:$0xf] %v5021
        %5054 = vst [vmem:[#allocation3 + $0x464] sm:$0xf] %v5022
        %v5055 = vld [vmem:[#allocation2 + $0x1f] sm:$0xff]
        %v5056 = vld [vmem:[#allocation2 + $0x27] sm:$0xff]
        %v5057 = vld [vmem:[#allocation2 + $0x2f] sm:$0xff]
        %v5058 = vld [vmem:[#allocation2 + $0x37] sm:$0xff]
        %v5059 = vld [vmem:[#allocation2 + $0x3f] sm:$0xff]
        %v5060 = vld [vmem:[#allocation2 + $0x47] sm:$0xff]
        %v5061 = vld [vmem:[#allocation2 + $0x4f] sm:$0xff]
        %v5062 = vld [vmem:[#allocation2 + $0x57] sm:$0xff]
        %v5063 = vld [vmem:[#allocation2 + $0x5f] sm:$0xff]
        %v5064 = vld [vmem:[#allocation2 + $0x67] sm:$0xff]
        %v5065 = vld [vmem:[#allocation2 + $0x6f] sm:$0xff]
        %v5066 = vld [vmem:[#allocation2 + $0x77] sm:$0xff]
        %v5067 = vld [vmem:[#allocation2 + $0x7f] sm:$0xff]
        %v5068 = vld [vmem:[#allocation2 + $0x87] sm:$0xff]
        %v5069 = vld [vmem:[#allocation2 + $0x8f] sm:$0xff]
        %v5070 = vld [vmem:[#allocation2 + $0x97] sm:$0xff]
        %v5071 = vld [vmem:[#allocation2 + $0x9f] sm:$0xff]
        %v5072 = vld [vmem:[#allocation2 + $0xa7] sm:$0xff]
        %v5073 = vld [vmem:[#allocation2 + $0xaf] sm:$0xff]
        %v5074 = vld [vmem:[#allocation2 + $0xb7] sm:$0xff]
        %v5075 = vld [vmem:[#allocation2 + $0xbf] sm:$0xff]
        %v5076 = vld [vmem:[#allocation2 + $0xc7] sm:$0xff]
        %v5077 = vld [vmem:[#allocation2 + $0xcf] sm:$0xff]
        %v5078 = vld [vmem:[#allocation2 + $0xd7] sm:$0xff]
        %v5079 = vld [vmem:[#allocation2 + $0xdf] sm:$0xff]
        %v5080 = vld [vmem:[#allocation2 + $0xe7] sm:$0xff]
        %v5081 = vld [vmem:[#allocation2 + $0xef] sm:$0xff]
        %v5082 = vld [vmem:[#allocation2 + $0xf7] sm:$0xff]
        %v5083 = vld [vmem:[#allocation2 + $0xff] sm:$0xff]
        %v5084 = vld [vmem:[#allocation2 + $0x107] sm:$0xff]
        %v5085 = vld [vmem:[#allocation2 + $0x10f] sm:$0xff]
        %v5086 = vld [vmem:[#allocation2 + $0x117] sm:$0xff]
        %v5087 = vsel %vm760, %v5055, 0.0
        %v5088 = vsel %vm761, %v5056, 0.0
        %v5089 = vsel %vm762, %v5057, 0.0
        %v5090 = vsel %vm763, %v5058, 0.0
        %v5091 = vsel %vm764, %v5059, 0.0
        %v5092 = vsel %vm765, %v5060, 0.0
        %v5093 = vsel %vm766, %v5061, 0.0
        %v5094 = vsel %vm767, %v5062, 0.0
        %v5095 = vsel %vm768, %v5063, 0.0
        %v5096 = vsel %vm769, %v5064, 0.0
        %v5097 = vsel %vm770, %v5065, 0.0
        %v5098 = vsel %vm771, %v5066, 0.0
        %v5099 = vsel %vm772, %v5067, 0.0
        %v5100 = vsel %vm773, %v5068, 0.0
        %v5101 = vsel %vm774, %v5069, 0.0
        %v5102 = vsel %vm775, %v5070, 0.0
        %v5103 = vsel %vm776, %v5071, 0.0
        %v5104 = vsel %vm777, %v5072, 0.0
        %v5105 = vsel %vm778, %v5073, 0.0
        %v5106 = vsel %vm779, %v5074, 0.0
        %v5107 = vsel %vm780, %v5075, 0.0
        %v5108 = vsel %vm781, %v5076, 0.0
        %v5109 = vsel %vm782, %v5077, 0.0
        %v5110 = vsel %vm783, %v5078, 0.0
        %v5111 = vsel %vm784, %v5079, 0.0
        %v5112 = vsel %vm785, %v5080, 0.0
        %v5113 = vsel %vm786, %v5081, 0.0
        %v5114 = vsel %vm787, %v5082, 0.0
        %v5115 = vsel %vm788, %v5083, 0.0
        %v5116 = vsel %vm789, %v5084, 0.0
        %v5117 = vsel %vm790, %v5085, 0.0
        %v5118 = vsel %vm791, %v5086, 0.0
        %v5119 = vpack.c.bf16 %v5087, %v5087
        %v5120 = vpack.c.bf16 %v5088, %v5088
        %v5121 = vpack.c.bf16 %v5089, %v5089
        %v5122 = vpack.c.bf16 %v5090, %v5090
        %v5123 = vpack.c.bf16 %v5091, %v5091
        %v5124 = vpack.c.bf16 %v5092, %v5092
        %v5125 = vpack.c.bf16 %v5093, %v5093
        %v5126 = vpack.c.bf16 %v5094, %v5094
        %v5127 = vpack.c.bf16 %v5095, %v5095
        %v5128 = vpack.c.bf16 %v5096, %v5096
        %v5129 = vpack.c.bf16 %v5097, %v5097
        %v5130 = vpack.c.bf16 %v5098, %v5098
        %v5131 = vpack.c.bf16 %v5099, %v5099
        %v5132 = vpack.c.bf16 %v5100, %v5100
        %v5133 = vpack.c.bf16 %v5101, %v5101
        %v5134 = vpack.c.bf16 %v5102, %v5102
        %v5135 = vpack.c.bf16 %v5103, %v5103
        %v5136 = vpack.c.bf16 %v5104, %v5104
        %v5137 = vpack.c.bf16 %v5105, %v5105
        %v5138 = vpack.c.bf16 %v5106, %v5106
        %v5139 = vpack.c.bf16 %v5107, %v5107
        %v5140 = vpack.c.bf16 %v5108, %v5108
        %v5141 = vpack.c.bf16 %v5109, %v5109
        %v5142 = vpack.c.bf16 %v5110, %v5110
        %v5143 = vpack.c.bf16 %v5111, %v5111
        %v5144 = vpack.c.bf16 %v5112, %v5112
        %v5145 = vpack.c.bf16 %v5113, %v5113
        %v5146 = vpack.c.bf16 %v5114, %v5114
        %v5147 = vpack.c.bf16 %v5115, %v5115
        %v5148 = vpack.c.bf16 %v5116, %v5116
        %v5149 = vpack.c.bf16 %v5117, %v5117
        %v5150 = vpack.c.bf16 %v5118, %v5118
        %5151 = vst [vmem:[#allocation3 + $0xc] sm:$0xf] %v5119
        %5152 = vst [vmem:[#allocation3 + $0x30] sm:$0xf] %v5120
        %5153 = vst [vmem:[#allocation3 + $0x54] sm:$0xf] %v5121
        %5154 = vst [vmem:[#allocation3 + $0x78] sm:$0xf] %v5122
        %5155 = vst [vmem:[#allocation3 + $0x9c] sm:$0xf] %v5123
        %5156 = vst [vmem:[#allocation3 + $0xc0] sm:$0xf] %v5124
        %5157 = vst [vmem:[#allocation3 + $0xe4] sm:$0xf] %v5125
        %5158 = vst [vmem:[#allocation3 + $0x108] sm:$0xf] %v5126
        %5159 = vst [vmem:[#allocation3 + $0x12c] sm:$0xf] %v5127
        %5160 = vst [vmem:[#allocation3 + $0x150] sm:$0xf] %v5128
        %5161 = vst [vmem:[#allocation3 + $0x174] sm:$0xf] %v5129
        %5162 = vst [vmem:[#allocation3 + $0x198] sm:$0xf] %v5130
        %5163 = vst [vmem:[#allocation3 + $0x1bc] sm:$0xf] %v5131
        %5164 = vst [vmem:[#allocation3 + $0x1e0] sm:$0xf] %v5132
        %5165 = vst [vmem:[#allocation3 + $0x204] sm:$0xf] %v5133
        %5166 = vst [vmem:[#allocation3 + $0x228] sm:$0xf] %v5134
        %5167 = vst [vmem:[#allocation3 + $0x24c] sm:$0xf] %v5135
        %5168 = vst [vmem:[#allocation3 + $0x270] sm:$0xf] %v5136
        %5169 = vst [vmem:[#allocation3 + $0x294] sm:$0xf] %v5137
        %5170 = vst [vmem:[#allocation3 + $0x2b8] sm:$0xf] %v5138
        %5171 = vst [vmem:[#allocation3 + $0x2dc] sm:$0xf] %v5139
        %5172 = vst [vmem:[#allocation3 + $0x300] sm:$0xf] %v5140
        %5173 = vst [vmem:[#allocation3 + $0x324] sm:$0xf] %v5141
        %5174 = vst [vmem:[#allocation3 + $0x348] sm:$0xf] %v5142
        %5175 = vst [vmem:[#allocation3 + $0x36c] sm:$0xf] %v5143
        %5176 = vst [vmem:[#allocation3 + $0x390] sm:$0xf] %v5144
        %5177 = vst [vmem:[#allocation3 + $0x3b4] sm:$0xf] %v5145
        %5178 = vst [vmem:[#allocation3 + $0x3d8] sm:$0xf] %v5146
        %5179 = vst [vmem:[#allocation3 + $0x3fc] sm:$0xf] %v5147
        %5180 = vst [vmem:[#allocation3 + $0x420] sm:$0xf] %v5148
        %5181 = vst [vmem:[#allocation3 + $0x444] sm:$0xf] %v5149
        %5182 = vst [vmem:[#allocation3 + $0x468] sm:$0xf] %v5150
        %v5183 = vld [vmem:[#allocation2 + $0x20] sm:$0xff]
        %v5184 = vld [vmem:[#allocation2 + $0x28] sm:$0xff]
        %v5185 = vld [vmem:[#allocation2 + $0x30] sm:$0xff]
        %v5186 = vld [vmem:[#allocation2 + $0x38] sm:$0xff]
        %v5187 = vld [vmem:[#allocation2 + $0x40] sm:$0xff]
        %v5188 = vld [vmem:[#allocation2 + $0x48] sm:$0xff]
        %v5189 = vld [vmem:[#allocation2 + $0x50] sm:$0xff]
        %v5190 = vld [vmem:[#allocation2 + $0x58] sm:$0xff]
        %v5191 = vld [vmem:[#allocation2 + $0x60] sm:$0xff]
        %v5192 = vld [vmem:[#allocation2 + $0x68] sm:$0xff]
        %v5193 = vld [vmem:[#allocation2 + $0x70] sm:$0xff]
        %v5194 = vld [vmem:[#allocation2 + $0x78] sm:$0xff]
        %v5195 = vld [vmem:[#allocation2 + $0x80] sm:$0xff]
        %v5196 = vld [vmem:[#allocation2 + $0x88] sm:$0xff]
        %v5197 = vld [vmem:[#allocation2 + $0x90] sm:$0xff]
        %v5198 = vld [vmem:[#allocation2 + $0x98] sm:$0xff]
        %v5199 = vld [vmem:[#allocation2 + $0xa0] sm:$0xff]
        %v5200 = vld [vmem:[#allocation2 + $0xa8] sm:$0xff]
        %v5201 = vld [vmem:[#allocation2 + $0xb0] sm:$0xff]
        %v5202 = vld [vmem:[#allocation2 + $0xb8] sm:$0xff]
        %v5203 = vld [vmem:[#allocation2 + $0xc0] sm:$0xff]
        %v5204 = vld [vmem:[#allocation2 + $0xc8] sm:$0xff]
        %v5205 = vld [vmem:[#allocation2 + $0xd0] sm:$0xff]
        %v5206 = vld [vmem:[#allocation2 + $0xd8] sm:$0xff]
        %v5207 = vld [vmem:[#allocation2 + $0xe0] sm:$0xff]
        %v5208 = vld [vmem:[#allocation2 + $0xe8] sm:$0xff]
        %v5209 = vld [vmem:[#allocation2 + $0xf0] sm:$0xff]
        %v5210 = vld [vmem:[#allocation2 + $0xf8] sm:$0xff]
        %v5211 = vld [vmem:[#allocation2 + $0x100] sm:$0xff]
        %v5212 = vld [vmem:[#allocation2 + $0x108] sm:$0xff]
        %v5213 = vld [vmem:[#allocation2 + $0x110] sm:$0xff]
        %v5214 = vld [vmem:[#allocation2 + $0x118] sm:$0xff]
        %v5215 = vpack.c.bf16 %v5183, %v5183
        %v5216 = vpack.c.bf16 %v5184, %v5184
        %v5217 = vpack.c.bf16 %v5185, %v5185
        %v5218 = vpack.c.bf16 %v5186, %v5186
        %v5219 = vpack.c.bf16 %v5187, %v5187
        %v5220 = vpack.c.bf16 %v5188, %v5188
        %v5221 = vpack.c.bf16 %v5189, %v5189
        %v5222 = vpack.c.bf16 %v5190, %v5190
        %v5223 = vpack.c.bf16 %v5191, %v5191
        %v5224 = vpack.c.bf16 %v5192, %v5192
        %v5225 = vpack.c.bf16 %v5193, %v5193
        %v5226 = vpack.c.bf16 %v5194, %v5194
        %v5227 = vpack.c.bf16 %v5195, %v5195
        %v5228 = vpack.c.bf16 %v5196, %v5196
        %v5229 = vpack.c.bf16 %v5197, %v5197
        %v5230 = vpack.c.bf16 %v5198, %v5198
        %v5231 = vpack.c.bf16 %v5199, %v5199
        %v5232 = vpack.c.bf16 %v5200, %v5200
        %v5233 = vpack.c.bf16 %v5201, %v5201
        %v5234 = vpack.c.bf16 %v5202, %v5202
        %v5235 = vpack.c.bf16 %v5203, %v5203
        %v5236 = vpack.c.bf16 %v5204, %v5204
        %v5237 = vpack.c.bf16 %v5205, %v5205
        %v5238 = vpack.c.bf16 %v5206, %v5206
        %v5239 = vpack.c.bf16 %v5207, %v5207
        %v5240 = vpack.c.bf16 %v5208, %v5208
        %v5241 = vpack.c.bf16 %v5209, %v5209
        %v5242 = vpack.c.bf16 %v5210, %v5210
        %v5243 = vpack.c.bf16 %v5211, %v5211
        %v5244 = vpack.c.bf16 %v5212, %v5212
        %v5245 = vpack.c.bf16 %v5213, %v5213
        %v5246 = vpack.c.bf16 %v5214, %v5214
        %5247 = vst [vmem:[#allocation3 + $0x10] sm:$0xf] %v5215
        %5248 = vst [vmem:[#allocation3 + $0x34] sm:$0xf] %v5216
        %5249 = vst [vmem:[#allocation3 + $0x58] sm:$0xf] %v5217
        %5250 = vst [vmem:[#allocation3 + $0x7c] sm:$0xf] %v5218
        %5251 = vst [vmem:[#allocation3 + $0xa0] sm:$0xf] %v5219
        %5252 = vst [vmem:[#allocation3 + $0xc4] sm:$0xf] %v5220
        %5253 = vst [vmem:[#allocation3 + $0xe8] sm:$0xf] %v5221
        %5254 = vst [vmem:[#allocation3 + $0x10c] sm:$0xf] %v5222
        %5255 = vst [vmem:[#allocation3 + $0x130] sm:$0xf] %v5223
        %5256 = vst [vmem:[#allocation3 + $0x154] sm:$0xf] %v5224
        %5257 = vst [vmem:[#allocation3 + $0x178] sm:$0xf] %v5225
        %5258 = vst [vmem:[#allocation3 + $0x19c] sm:$0xf] %v5226
        %5259 = vst [vmem:[#allocation3 + $0x1c0] sm:$0xf] %v5227
        %5260 = vst [vmem:[#allocation3 + $0x1e4] sm:$0xf] %v5228
        %5261 = vst [vmem:[#allocation3 + $0x208] sm:$0xf] %v5229
        %5262 = vst [vmem:[#allocation3 + $0x22c] sm:$0xf] %v5230
        %5263 = vst [vmem:[#allocation3 + $0x250] sm:$0xf] %v5231
        %5264 = vst [vmem:[#allocation3 + $0x274] sm:$0xf] %v5232
        %5265 = vst [vmem:[#allocation3 + $0x298] sm:$0xf] %v5233
        %5266 = vst [vmem:[#allocation3 + $0x2bc] sm:$0xf] %v5234
        %5267 = vst [vmem:[#allocation3 + $0x2e0] sm:$0xf] %v5235
        %5268 = vst [vmem:[#allocation3 + $0x304] sm:$0xf] %v5236
        %5269 = vst [vmem:[#allocation3 + $0x328] sm:$0xf] %v5237
        %5270 = vst [vmem:[#allocation3 + $0x34c] sm:$0xf] %v5238
        %5271 = vst [vmem:[#allocation3 + $0x370] sm:$0xf] %v5239
        %5272 = vst [vmem:[#allocation3 + $0x394] sm:$0xf] %v5240
        %5273 = vst [vmem:[#allocation3 + $0x3b8] sm:$0xf] %v5241
        %5274 = vst [vmem:[#allocation3 + $0x3dc] sm:$0xf] %v5242
        %5275 = vst [vmem:[#allocation3 + $0x400] sm:$0xf] %v5243
        %5276 = vst [vmem:[#allocation3 + $0x424] sm:$0xf] %v5244
        %5277 = vst [vmem:[#allocation3 + $0x448] sm:$0xf] %v5245
        %5278 = vst [vmem:[#allocation3 + $0x46c] sm:$0xf] %v5246
        %v5279 = vld [vmem:[#allocation2 + $0x21] sm:$0xff]
        %v5280 = vld [vmem:[#allocation2 + $0x29] sm:$0xff]
        %v5281 = vld [vmem:[#allocation2 + $0x31] sm:$0xff]
        %v5282 = vld [vmem:[#allocation2 + $0x39] sm:$0xff]
        %v5283 = vld [vmem:[#allocation2 + $0x41] sm:$0xff]
        %v5284 = vld [vmem:[#allocation2 + $0x49] sm:$0xff]
        %v5285 = vld [vmem:[#allocation2 + $0x51] sm:$0xff]
        %v5286 = vld [vmem:[#allocation2 + $0x59] sm:$0xff]
        %v5287 = vld [vmem:[#allocation2 + $0x61] sm:$0xff]
        %v5288 = vld [vmem:[#allocation2 + $0x69] sm:$0xff]
        %v5289 = vld [vmem:[#allocation2 + $0x71] sm:$0xff]
        %v5290 = vld [vmem:[#allocation2 + $0x79] sm:$0xff]
        %v5291 = vld [vmem:[#allocation2 + $0x81] sm:$0xff]
        %v5292 = vld [vmem:[#allocation2 + $0x89] sm:$0xff]
        %v5293 = vld [vmem:[#allocation2 + $0x91] sm:$0xff]
        %v5294 = vld [vmem:[#allocation2 + $0x99] sm:$0xff]
        %v5295 = vld [vmem:[#allocation2 + $0xa1] sm:$0xff]
        %v5296 = vld [vmem:[#allocation2 + $0xa9] sm:$0xff]
        %v5297 = vld [vmem:[#allocation2 + $0xb1] sm:$0xff]
        %v5298 = vld [vmem:[#allocation2 + $0xb9] sm:$0xff]
        %v5299 = vld [vmem:[#allocation2 + $0xc1] sm:$0xff]
        %v5300 = vld [vmem:[#allocation2 + $0xc9] sm:$0xff]
        %v5301 = vld [vmem:[#allocation2 + $0xd1] sm:$0xff]
        %v5302 = vld [vmem:[#allocation2 + $0xd9] sm:$0xff]
        %v5303 = vld [vmem:[#allocation2 + $0xe1] sm:$0xff]
        %v5304 = vld [vmem:[#allocation2 + $0xe9] sm:$0xff]
        %v5305 = vld [vmem:[#allocation2 + $0xf1] sm:$0xff]
        %v5306 = vld [vmem:[#allocation2 + $0xf9] sm:$0xff]
        %v5307 = vld [vmem:[#allocation2 + $0x101] sm:$0xff]
        %v5308 = vld [vmem:[#allocation2 + $0x109] sm:$0xff]
        %v5309 = vld [vmem:[#allocation2 + $0x111] sm:$0xff]
        %v5310 = vld [vmem:[#allocation2 + $0x119] sm:$0xff]
        %v5311 = vsel %vm856, %v5279, 0.0
        %v5312 = vsel %vm857, %v5280, 0.0
        %v5313 = vsel %vm858, %v5281, 0.0
        %v5314 = vsel %vm859, %v5282, 0.0
        %v5315 = vsel %vm860, %v5283, 0.0
        %v5316 = vsel %vm861, %v5284, 0.0
        %v5317 = vsel %vm862, %v5285, 0.0
        %v5318 = vsel %vm863, %v5286, 0.0
        %v5319 = vsel %vm864, %v5287, 0.0
        %v5320 = vsel %vm865, %v5288, 0.0
        %v5321 = vsel %vm866, %v5289, 0.0
        %v5322 = vsel %vm867, %v5290, 0.0
        %v5323 = vsel %vm868, %v5291, 0.0
        %v5324 = vsel %vm869, %v5292, 0.0
        %v5325 = vsel %vm870, %v5293, 0.0
        %v5326 = vsel %vm871, %v5294, 0.0
        %v5327 = vsel %vm872, %v5295, 0.0
        %v5328 = vsel %vm873, %v5296, 0.0
        %v5329 = vsel %vm874, %v5297, 0.0
        %v5330 = vsel %vm875, %v5298, 0.0
        %v5331 = vsel %vm876, %v5299, 0.0
        %v5332 = vsel %vm877, %v5300, 0.0
        %v5333 = vsel %vm878, %v5301, 0.0
        %v5334 = vsel %vm879, %v5302, 0.0
        %v5335 = vsel %vm880, %v5303, 0.0
        %v5336 = vsel %vm881, %v5304, 0.0
        %v5337 = vsel %vm882, %v5305, 0.0
        %v5338 = vsel %vm883, %v5306, 0.0
        %v5339 = vsel %vm884, %v5307, 0.0
        %v5340 = vsel %vm885, %v5308, 0.0
        %v5341 = vsel %vm886, %v5309, 0.0
        %v5342 = vsel %vm887, %v5310, 0.0
        %v5343 = vpack.c.bf16 %v5311, %v5311
        %v5344 = vpack.c.bf16 %v5312, %v5312
        %v5345 = vpack.c.bf16 %v5313, %v5313
        %v5346 = vpack.c.bf16 %v5314, %v5314
        %v5347 = vpack.c.bf16 %v5315, %v5315
        %v5348 = vpack.c.bf16 %v5316, %v5316
        %v5349 = vpack.c.bf16 %v5317, %v5317
        %v5350 = vpack.c.bf16 %v5318, %v5318
        %v5351 = vpack.c.bf16 %v5319, %v5319
        %v5352 = vpack.c.bf16 %v5320, %v5320
        %v5353 = vpack.c.bf16 %v5321, %v5321
        %v5354 = vpack.c.bf16 %v5322, %v5322
        %v5355 = vpack.c.bf16 %v5323, %v5323
        %v5356 = vpack.c.bf16 %v5324, %v5324
        %v5357 = vpack.c.bf16 %v5325, %v5325
        %v5358 = vpack.c.bf16 %v5326, %v5326
        %v5359 = vpack.c.bf16 %v5327, %v5327
        %v5360 = vpack.c.bf16 %v5328, %v5328
        %v5361 = vpack.c.bf16 %v5329, %v5329
        %v5362 = vpack.c.bf16 %v5330, %v5330
        %v5363 = vpack.c.bf16 %v5331, %v5331
        %v5364 = vpack.c.bf16 %v5332, %v5332
        %v5365 = vpack.c.bf16 %v5333, %v5333
        %v5366 = vpack.c.bf16 %v5334, %v5334
        %v5367 = vpack.c.bf16 %v5335, %v5335
        %v5368 = vpack.c.bf16 %v5336, %v5336
        %v5369 = vpack.c.bf16 %v5337, %v5337
        %v5370 = vpack.c.bf16 %v5338, %v5338
        %v5371 = vpack.c.bf16 %v5339, %v5339
        %v5372 = vpack.c.bf16 %v5340, %v5340
        %v5373 = vpack.c.bf16 %v5341, %v5341
        %v5374 = vpack.c.bf16 %v5342, %v5342
        %5375 = vst [vmem:[#allocation3 + $0x14] sm:$0xf] %v5343
        %5376 = vst [vmem:[#allocation3 + $0x38] sm:$0xf] %v5344
        %5377 = vst [vmem:[#allocation3 + $0x5c] sm:$0xf] %v5345
        %5378 = vst [vmem:[#allocation3 + $0x80] sm:$0xf] %v5346
        %5379 = vst [vmem:[#allocation3 + $0xa4] sm:$0xf] %v5347
        %5380 = vst [vmem:[#allocation3 + $0xc8] sm:$0xf] %v5348
        %5381 = vst [vmem:[#allocation3 + $0xec] sm:$0xf] %v5349
        %5382 = vst [vmem:[#allocation3 + $0x110] sm:$0xf] %v5350
        %5383 = vst [vmem:[#allocation3 + $0x134] sm:$0xf] %v5351
        %5384 = vst [vmem:[#allocation3 + $0x158] sm:$0xf] %v5352
        %5385 = vst [vmem:[#allocation3 + $0x17c] sm:$0xf] %v5353
        %5386 = vst [vmem:[#allocation3 + $0x1a0] sm:$0xf] %v5354
        %5387 = vst [vmem:[#allocation3 + $0x1c4] sm:$0xf] %v5355
        %5388 = vst [vmem:[#allocation3 + $0x1e8] sm:$0xf] %v5356
        %5389 = vst [vmem:[#allocation3 + $0x20c] sm:$0xf] %v5357
        %5390 = vst [vmem:[#allocation3 + $0x230] sm:$0xf] %v5358
        %5391 = vst [vmem:[#allocation3 + $0x254] sm:$0xf] %v5359
        %5392 = vst [vmem:[#allocation3 + $0x278] sm:$0xf] %v5360
        %5393 = vst [vmem:[#allocation3 + $0x29c] sm:$0xf] %v5361
        %5394 = vst [vmem:[#allocation3 + $0x2c0] sm:$0xf] %v5362
        %5395 = vst [vmem:[#allocation3 + $0x2e4] sm:$0xf] %v5363
        %5396 = vst [vmem:[#allocation3 + $0x308] sm:$0xf] %v5364
        %5397 = vst [vmem:[#allocation3 + $0x32c] sm:$0xf] %v5365
        %5398 = vst [vmem:[#allocation3 + $0x350] sm:$0xf] %v5366
        %5399 = vst [vmem:[#allocation3 + $0x374] sm:$0xf] %v5367
        %5400 = vst [vmem:[#allocation3 + $0x398] sm:$0xf] %v5368
        %5401 = vst [vmem:[#allocation3 + $0x3bc] sm:$0xf] %v5369
        %5402 = vst [vmem:[#allocation3 + $0x3e0] sm:$0xf] %v5370
        %5403 = vst [vmem:[#allocation3 + $0x404] sm:$0xf] %v5371
        %5404 = vst [vmem:[#allocation3 + $0x428] sm:$0xf] %v5372
        %5405 = vst [vmem:[#allocation3 + $0x44c] sm:$0xf] %v5373
        %5406 = vst [vmem:[#allocation3 + $0x470] sm:$0xf] %v5374
        %v5407 = vld [vmem:[#allocation2 + $0x2f] sm:$0xff]
        %v5408 = vld [vmem:[#allocation2 + $0x37] sm:$0xff]
        %v5409 = vld [vmem:[#allocation2 + $0x3f] sm:$0xff]
        %v5410 = vld [vmem:[#allocation2 + $0x47] sm:$0xff]
        %v5411 = vld [vmem:[#allocation2 + $0x4f] sm:$0xff]
        %v5412 = vld [vmem:[#allocation2 + $0x57] sm:$0xff]
        %v5413 = vld [vmem:[#allocation2 + $0x5f] sm:$0xff]
        %v5414 = vld [vmem:[#allocation2 + $0x67] sm:$0xff]
        %v5415 = vld [vmem:[#allocation2 + $0x6f] sm:$0xff]
        %v5416 = vld [vmem:[#allocation2 + $0x77] sm:$0xff]
        %v5417 = vld [vmem:[#allocation2 + $0x7f] sm:$0xff]
        %v5418 = vld [vmem:[#allocation2 + $0x87] sm:$0xff]
        %v5419 = vld [vmem:[#allocation2 + $0x8f] sm:$0xff]
        %v5420 = vld [vmem:[#allocation2 + $0x97] sm:$0xff]
        %v5421 = vld [vmem:[#allocation2 + $0x9f] sm:$0xff]
        %v5422 = vld [vmem:[#allocation2 + $0xa7] sm:$0xff]
        %v5423 = vld [vmem:[#allocation2 + $0xaf] sm:$0xff]
        %v5424 = vld [vmem:[#allocation2 + $0xb7] sm:$0xff]
        %v5425 = vld [vmem:[#allocation2 + $0xbf] sm:$0xff]
        %v5426 = vld [vmem:[#allocation2 + $0xc7] sm:$0xff]
        %v5427 = vld [vmem:[#allocation2 + $0xcf] sm:$0xff]
        %v5428 = vld [vmem:[#allocation2 + $0xd7] sm:$0xff]
        %v5429 = vld [vmem:[#allocation2 + $0xdf] sm:$0xff]
        %v5430 = vld [vmem:[#allocation2 + $0xe7] sm:$0xff]
        %v5431 = vld [vmem:[#allocation2 + $0xef] sm:$0xff]
        %v5432 = vld [vmem:[#allocation2 + $0xf7] sm:$0xff]
        %v5433 = vld [vmem:[#allocation2 + $0xff] sm:$0xff]
        %v5434 = vld [vmem:[#allocation2 + $0x107] sm:$0xff]
        %v5435 = vld [vmem:[#allocation2 + $0x10f] sm:$0xff]
        %v5436 = vld [vmem:[#allocation2 + $0x117] sm:$0xff]
        %v5437 = vld [vmem:[#allocation2 + $0x11f] sm:$0xff]
        %v5438 = vld [vmem:[#allocation2 + $0x127] sm:$0xff]
        %v5439 = vsel %vm760, %v5407, 0.0
        %v5440 = vsel %vm761, %v5408, 0.0
        %v5441 = vsel %vm762, %v5409, 0.0
        %v5442 = vsel %vm763, %v5410, 0.0
        %v5443 = vsel %vm764, %v5411, 0.0
        %v5444 = vsel %vm765, %v5412, 0.0
        %v5445 = vsel %vm766, %v5413, 0.0
        %v5446 = vsel %vm767, %v5414, 0.0
        %v5447 = vsel %vm768, %v5415, 0.0
        %v5448 = vsel %vm769, %v5416, 0.0
        %v5449 = vsel %vm770, %v5417, 0.0
        %v5450 = vsel %vm771, %v5418, 0.0
        %v5451 = vsel %vm772, %v5419, 0.0
        %v5452 = vsel %vm773, %v5420, 0.0
        %v5453 = vsel %vm774, %v5421, 0.0
        %v5454 = vsel %vm775, %v5422, 0.0
        %v5455 = vsel %vm776, %v5423, 0.0
        %v5456 = vsel %vm777, %v5424, 0.0
        %v5457 = vsel %vm778, %v5425, 0.0
        %v5458 = vsel %vm779, %v5426, 0.0
        %v5459 = vsel %vm780, %v5427, 0.0
        %v5460 = vsel %vm781, %v5428, 0.0
        %v5461 = vsel %vm782, %v5429, 0.0
        %v5462 = vsel %vm783, %v5430, 0.0
        %v5463 = vsel %vm784, %v5431, 0.0
        %v5464 = vsel %vm785, %v5432, 0.0
        %v5465 = vsel %vm786, %v5433, 0.0
        %v5466 = vsel %vm787, %v5434, 0.0
        %v5467 = vsel %vm788, %v5435, 0.0
        %v5468 = vsel %vm789, %v5436, 0.0
        %v5469 = vsel %vm790, %v5437, 0.0
        %v5470 = vsel %vm791, %v5438, 0.0
        %v5471 = vpack.c.bf16 %v5439, %v5439
        %v5472 = vpack.c.bf16 %v5440, %v5440
        %v5473 = vpack.c.bf16 %v5441, %v5441
        %v5474 = vpack.c.bf16 %v5442, %v5442
        %v5475 = vpack.c.bf16 %v5443, %v5443
        %v5476 = vpack.c.bf16 %v5444, %v5444
        %v5477 = vpack.c.bf16 %v5445, %v5445
        %v5478 = vpack.c.bf16 %v5446, %v5446
        %v5479 = vpack.c.bf16 %v5447, %v5447
        %v5480 = vpack.c.bf16 %v5448, %v5448
        %v5481 = vpack.c.bf16 %v5449, %v5449
        %v5482 = vpack.c.bf16 %v5450, %v5450
        %v5483 = vpack.c.bf16 %v5451, %v5451
        %v5484 = vpack.c.bf16 %v5452, %v5452
        %v5485 = vpack.c.bf16 %v5453, %v5453
        %v5486 = vpack.c.bf16 %v5454, %v5454
        %v5487 = vpack.c.bf16 %v5455, %v5455
        %v5488 = vpack.c.bf16 %v5456, %v5456
        %v5489 = vpack.c.bf16 %v5457, %v5457
        %v5490 = vpack.c.bf16 %v5458, %v5458
        %v5491 = vpack.c.bf16 %v5459, %v5459
        %v5492 = vpack.c.bf16 %v5460, %v5460
        %v5493 = vpack.c.bf16 %v5461, %v5461
        %v5494 = vpack.c.bf16 %v5462, %v5462
        %v5495 = vpack.c.bf16 %v5463, %v5463
        %v5496 = vpack.c.bf16 %v5464, %v5464
        %v5497 = vpack.c.bf16 %v5465, %v5465
        %v5498 = vpack.c.bf16 %v5466, %v5466
        %v5499 = vpack.c.bf16 %v5467, %v5467
        %v5500 = vpack.c.bf16 %v5468, %v5468
        %v5501 = vpack.c.bf16 %v5469, %v5469
        %v5502 = vpack.c.bf16 %v5470, %v5470
        %5503 = vst [vmem:[#allocation3 + $0x18] sm:$0xf] %v5471
        %5504 = vst [vmem:[#allocation3 + $0x3c] sm:$0xf] %v5472
        %5505 = vst [vmem:[#allocation3 + $0x60] sm:$0xf] %v5473
        %5506 = vst [vmem:[#allocation3 + $0x84] sm:$0xf] %v5474
        %5507 = vst [vmem:[#allocation3 + $0xa8] sm:$0xf] %v5475
        %5508 = vst [vmem:[#allocation3 + $0xcc] sm:$0xf] %v5476
        %5509 = vst [vmem:[#allocation3 + $0xf0] sm:$0xf] %v5477
        %5510 = vst [vmem:[#allocation3 + $0x114] sm:$0xf] %v5478
        %5511 = vst [vmem:[#allocation3 + $0x138] sm:$0xf] %v5479
        %5512 = vst [vmem:[#allocation3 + $0x15c] sm:$0xf] %v5480
        %5513 = vst [vmem:[#allocation3 + $0x180] sm:$0xf] %v5481
        %5514 = vst [vmem:[#allocation3 + $0x1a4] sm:$0xf] %v5482
        %5515 = vst [vmem:[#allocation3 + $0x1c8] sm:$0xf] %v5483
        %5516 = vst [vmem:[#allocation3 + $0x1ec] sm:$0xf] %v5484
        %5517 = vst [vmem:[#allocation3 + $0x210] sm:$0xf] %v5485
        %5518 = vst [vmem:[#allocation3 + $0x234] sm:$0xf] %v5486
        %5519 = vst [vmem:[#allocation3 + $0x258] sm:$0xf] %v5487
        %5520 = vst [vmem:[#allocation3 + $0x27c] sm:$0xf] %v5488
        %5521 = vst [vmem:[#allocation3 + $0x2a0] sm:$0xf] %v5489
        %5522 = vst [vmem:[#allocation3 + $0x2c4] sm:$0xf] %v5490
        %5523 = vst [vmem:[#allocation3 + $0x2e8] sm:$0xf] %v5491
        %5524 = vst [vmem:[#allocation3 + $0x30c] sm:$0xf] %v5492
        %5525 = vst [vmem:[#allocation3 + $0x330] sm:$0xf] %v5493
        %5526 = vst [vmem:[#allocation3 + $0x354] sm:$0xf] %v5494
        %5527 = vst [vmem:[#allocation3 + $0x378] sm:$0xf] %v5495
        %5528 = vst [vmem:[#allocation3 + $0x39c] sm:$0xf] %v5496
        %5529 = vst [vmem:[#allocation3 + $0x3c0] sm:$0xf] %v5497
        %5530 = vst [vmem:[#allocation3 + $0x3e4] sm:$0xf] %v5498
        %5531 = vst [vmem:[#allocation3 + $0x408] sm:$0xf] %v5499
        %5532 = vst [vmem:[#allocation3 + $0x42c] sm:$0xf] %v5500
        %5533 = vst [vmem:[#allocation3 + $0x450] sm:$0xf] %v5501
        %5534 = vst [vmem:[#allocation3 + $0x474] sm:$0xf] %v5502
        %v5535 = vld [vmem:[#allocation2 + $0x30] sm:$0xff]
        %v5536 = vld [vmem:[#allocation2 + $0x38] sm:$0xff]
        %v5537 = vld [vmem:[#allocation2 + $0x40] sm:$0xff]
        %v5538 = vld [vmem:[#allocation2 + $0x48] sm:$0xff]
        %v5539 = vld [vmem:[#allocation2 + $0x50] sm:$0xff]
        %v5540 = vld [vmem:[#allocation2 + $0x58] sm:$0xff]
        %v5541 = vld [vmem:[#allocation2 + $0x60] sm:$0xff]
        %v5542 = vld [vmem:[#allocation2 + $0x68] sm:$0xff]
        %v5543 = vld [vmem:[#allocation2 + $0x70] sm:$0xff]
        %v5544 = vld [vmem:[#allocation2 + $0x78] sm:$0xff]
        %v5545 = vld [vmem:[#allocation2 + $0x80] sm:$0xff]
        %v5546 = vld [vmem:[#allocation2 + $0x88] sm:$0xff]
        %v5547 = vld [vmem:[#allocation2 + $0x90] sm:$0xff]
        %v5548 = vld [vmem:[#allocation2 + $0x98] sm:$0xff]
        %v5549 = vld [vmem:[#allocation2 + $0xa0] sm:$0xff]
        %v5550 = vld [vmem:[#allocation2 + $0xa8] sm:$0xff]
        %v5551 = vld [vmem:[#allocation2 + $0xb0] sm:$0xff]
        %v5552 = vld [vmem:[#allocation2 + $0xb8] sm:$0xff]
        %v5553 = vld [vmem:[#allocation2 + $0xc0] sm:$0xff]
        %v5554 = vld [vmem:[#allocation2 + $0xc8] sm:$0xff]
        %v5555 = vld [vmem:[#allocation2 + $0xd0] sm:$0xff]
        %v5556 = vld [vmem:[#allocation2 + $0xd8] sm:$0xff]
        %v5557 = vld [vmem:[#allocation2 + $0xe0] sm:$0xff]
        %v5558 = vld [vmem:[#allocation2 + $0xe8] sm:$0xff]
        %v5559 = vld [vmem:[#allocation2 + $0xf0] sm:$0xff]
        %v5560 = vld [vmem:[#allocation2 + $0xf8] sm:$0xff]
        %v5561 = vld [vmem:[#allocation2 + $0x100] sm:$0xff]
        %v5562 = vld [vmem:[#allocation2 + $0x108] sm:$0xff]
        %v5563 = vld [vmem:[#allocation2 + $0x110] sm:$0xff]
        %v5564 = vld [vmem:[#allocation2 + $0x118] sm:$0xff]
        %v5565 = vld [vmem:[#allocation2 + $0x120] sm:$0xff]
        %v5566 = vld [vmem:[#allocation2 + $0x128] sm:$0xff]
        %v5567 = vpack.c.bf16 %v5535, %v5535
        %v5568 = vpack.c.bf16 %v5536, %v5536
        %v5569 = vpack.c.bf16 %v5537, %v5537
        %v5570 = vpack.c.bf16 %v5538, %v5538
        %v5571 = vpack.c.bf16 %v5539, %v5539
        %v5572 = vpack.c.bf16 %v5540, %v5540
        %v5573 = vpack.c.bf16 %v5541, %v5541
        %v5574 = vpack.c.bf16 %v5542, %v5542
        %v5575 = vpack.c.bf16 %v5543, %v5543
        %v5576 = vpack.c.bf16 %v5544, %v5544
        %v5577 = vpack.c.bf16 %v5545, %v5545
        %v5578 = vpack.c.bf16 %v5546, %v5546
        %v5579 = vpack.c.bf16 %v5547, %v5547
        %v5580 = vpack.c.bf16 %v5548, %v5548
        %v5581 = vpack.c.bf16 %v5549, %v5549
        %v5582 = vpack.c.bf16 %v5550, %v5550
        %v5583 = vpack.c.bf16 %v5551, %v5551
        %v5584 = vpack.c.bf16 %v5552, %v5552
        %v5585 = vpack.c.bf16 %v5553, %v5553
        %v5586 = vpack.c.bf16 %v5554, %v5554
        %v5587 = vpack.c.bf16 %v5555, %v5555
        %v5588 = vpack.c.bf16 %v5556, %v5556
        %v5589 = vpack.c.bf16 %v5557, %v5557
        %v5590 = vpack.c.bf16 %v5558, %v5558
        %v5591 = vpack.c.bf16 %v5559, %v5559
        %v5592 = vpack.c.bf16 %v5560, %v5560
        %v5593 = vpack.c.bf16 %v5561, %v5561
        %v5594 = vpack.c.bf16 %v5562, %v5562
        %v5595 = vpack.c.bf16 %v5563, %v5563
        %v5596 = vpack.c.bf16 %v5564, %v5564
        %v5597 = vpack.c.bf16 %v5565, %v5565
        %v5598 = vpack.c.bf16 %v5566, %v5566
        %5599 = vst [vmem:[#allocation3 + $0x1c] sm:$0xf] %v5567
        %5600 = vst [vmem:[#allocation3 + $0x40] sm:$0xf] %v5568
        %5601 = vst [vmem:[#allocation3 + $0x64] sm:$0xf] %v5569
        %5602 = vst [vmem:[#allocation3 + $0x88] sm:$0xf] %v5570
        %5603 = vst [vmem:[#allocation3 + $0xac] sm:$0xf] %v5571
        %5604 = vst [vmem:[#allocation3 + $0xd0] sm:$0xf] %v5572
        %5605 = vst [vmem:[#allocation3 + $0xf4] sm:$0xf] %v5573
        %5606 = vst [vmem:[#allocation3 + $0x118] sm:$0xf] %v5574
        %5607 = vst [vmem:[#allocation3 + $0x13c] sm:$0xf] %v5575
        %5608 = vst [vmem:[#allocation3 + $0x160] sm:$0xf] %v5576
        %5609 = vst [vmem:[#allocation3 + $0x184] sm:$0xf] %v5577
        %5610 = vst [vmem:[#allocation3 + $0x1a8] sm:$0xf] %v5578
        %5611 = vst [vmem:[#allocation3 + $0x1cc] sm:$0xf] %v5579
        %5612 = vst [vmem:[#allocation3 + $0x1f0] sm:$0xf] %v5580
        %5613 = vst [vmem:[#allocation3 + $0x214] sm:$0xf] %v5581
        %5614 = vst [vmem:[#allocation3 + $0x238] sm:$0xf] %v5582
        %5615 = vst [vmem:[#allocation3 + $0x25c] sm:$0xf] %v5583
        %5616 = vst [vmem:[#allocation3 + $0x280] sm:$0xf] %v5584
        %5617 = vst [vmem:[#allocation3 + $0x2a4] sm:$0xf] %v5585
        %5618 = vst [vmem:[#allocation3 + $0x2c8] sm:$0xf] %v5586
        %5619 = vst [vmem:[#allocation3 + $0x2ec] sm:$0xf] %v5587
        %5620 = vst [vmem:[#allocation3 + $0x310] sm:$0xf] %v5588
        %5621 = vst [vmem:[#allocation3 + $0x334] sm:$0xf] %v5589
        %5622 = vst [vmem:[#allocation3 + $0x358] sm:$0xf] %v5590
        %5623 = vst [vmem:[#allocation3 + $0x37c] sm:$0xf] %v5591
        %5624 = vst [vmem:[#allocation3 + $0x3a0] sm:$0xf] %v5592
        %5625 = vst [vmem:[#allocation3 + $0x3c4] sm:$0xf] %v5593
        %5626 = vst [vmem:[#allocation3 + $0x3e8] sm:$0xf] %v5594
        %5627 = vst [vmem:[#allocation3 + $0x40c] sm:$0xf] %v5595
        %5628 = vst [vmem:[#allocation3 + $0x430] sm:$0xf] %v5596
        %5629 = vst [vmem:[#allocation3 + $0x454] sm:$0xf] %v5597
        %5630 = vst [vmem:[#allocation3 + $0x478] sm:$0xf] %v5598
        %v5631 = vld [vmem:[#allocation2 + $0x31] sm:$0xff]
        %v5632 = vld [vmem:[#allocation2 + $0x39] sm:$0xff]
        %v5633 = vld [vmem:[#allocation2 + $0x41] sm:$0xff]
        %v5634 = vld [vmem:[#allocation2 + $0x49] sm:$0xff]
        %v5635 = vld [vmem:[#allocation2 + $0x51] sm:$0xff]
        %v5636 = vld [vmem:[#allocation2 + $0x59] sm:$0xff]
        %v5637 = vld [vmem:[#allocation2 + $0x61] sm:$0xff]
        %v5638 = vld [vmem:[#allocation2 + $0x69] sm:$0xff]
        %v5639 = vld [vmem:[#allocation2 + $0x71] sm:$0xff]
        %v5640 = vld [vmem:[#allocation2 + $0x79] sm:$0xff]
        %v5641 = vld [vmem:[#allocation2 + $0x81] sm:$0xff]
        %v5642 = vld [vmem:[#allocation2 + $0x89] sm:$0xff]
        %v5643 = vld [vmem:[#allocation2 + $0x91] sm:$0xff]
        %v5644 = vld [vmem:[#allocation2 + $0x99] sm:$0xff]
        %v5645 = vld [vmem:[#allocation2 + $0xa1] sm:$0xff]
        %v5646 = vld [vmem:[#allocation2 + $0xa9] sm:$0xff]
        %v5647 = vld [vmem:[#allocation2 + $0xb1] sm:$0xff]
        %v5648 = vld [vmem:[#allocation2 + $0xb9] sm:$0xff]
        %v5649 = vld [vmem:[#allocation2 + $0xc1] sm:$0xff]
        %v5650 = vld [vmem:[#allocation2 + $0xc9] sm:$0xff]
        %v5651 = vld [vmem:[#allocation2 + $0xd1] sm:$0xff]
        %v5652 = vld [vmem:[#allocation2 + $0xd9] sm:$0xff]
        %v5653 = vld [vmem:[#allocation2 + $0xe1] sm:$0xff]
        %v5654 = vld [vmem:[#allocation2 + $0xe9] sm:$0xff]
        %v5655 = vld [vmem:[#allocation2 + $0xf1] sm:$0xff]
        %v5656 = vld [vmem:[#allocation2 + $0xf9] sm:$0xff]
        %v5657 = vld [vmem:[#allocation2 + $0x101] sm:$0xff]
        %v5658 = vld [vmem:[#allocation2 + $0x109] sm:$0xff]
        %v5659 = vld [vmem:[#allocation2 + $0x111] sm:$0xff]
        %v5660 = vld [vmem:[#allocation2 + $0x119] sm:$0xff]
        %v5661 = vld [vmem:[#allocation2 + $0x121] sm:$0xff]
        %v5662 = vld [vmem:[#allocation2 + $0x129] sm:$0xff]
        %v5663 = vsel %vm856, %v5631, 0.0
        %v5664 = vsel %vm857, %v5632, 0.0
        %v5665 = vsel %vm858, %v5633, 0.0
        %v5666 = vsel %vm859, %v5634, 0.0
        %v5667 = vsel %vm860, %v5635, 0.0
        %v5668 = vsel %vm861, %v5636, 0.0
        %v5669 = vsel %vm862, %v5637, 0.0
        %v5670 = vsel %vm863, %v5638, 0.0
        %v5671 = vsel %vm864, %v5639, 0.0
        %v5672 = vsel %vm865, %v5640, 0.0
        %v5673 = vsel %vm866, %v5641, 0.0
        %v5674 = vsel %vm867, %v5642, 0.0
        %v5675 = vsel %vm868, %v5643, 0.0
        %v5676 = vsel %vm869, %v5644, 0.0
        %v5677 = vsel %vm870, %v5645, 0.0
        %v5678 = vsel %vm871, %v5646, 0.0
        %v5679 = vsel %vm872, %v5647, 0.0
        %v5680 = vsel %vm873, %v5648, 0.0
        %v5681 = vsel %vm874, %v5649, 0.0
        %v5682 = vsel %vm875, %v5650, 0.0
        %v5683 = vsel %vm876, %v5651, 0.0
        %v5684 = vsel %vm877, %v5652, 0.0
        %v5685 = vsel %vm878, %v5653, 0.0
        %v5686 = vsel %vm879, %v5654, 0.0
        %v5687 = vsel %vm880, %v5655, 0.0
        %v5688 = vsel %vm881, %v5656, 0.0
        %v5689 = vsel %vm882, %v5657, 0.0
        %v5690 = vsel %vm883, %v5658, 0.0
        %v5691 = vsel %vm884, %v5659, 0.0
        %v5692 = vsel %vm885, %v5660, 0.0
        %v5693 = vsel %vm886, %v5661, 0.0
        %v5694 = vsel %vm887, %v5662, 0.0
        %v5695 = vpack.c.bf16 %v5663, %v5663
        %v5696 = vpack.c.bf16 %v5664, %v5664
        %v5697 = vpack.c.bf16 %v5665, %v5665
        %v5698 = vpack.c.bf16 %v5666, %v5666
        %v5699 = vpack.c.bf16 %v5667, %v5667
        %v5700 = vpack.c.bf16 %v5668, %v5668
        %v5701 = vpack.c.bf16 %v5669, %v5669
        %v5702 = vpack.c.bf16 %v5670, %v5670
        %v5703 = vpack.c.bf16 %v5671, %v5671
        %v5704 = vpack.c.bf16 %v5672, %v5672
        %v5705 = vpack.c.bf16 %v5673, %v5673
        %v5706 = vpack.c.bf16 %v5674, %v5674
        %v5707 = vpack.c.bf16 %v5675, %v5675
        %v5708 = vpack.c.bf16 %v5676, %v5676
        %v5709 = vpack.c.bf16 %v5677, %v5677
        %v5710 = vpack.c.bf16 %v5678, %v5678
        %v5711 = vpack.c.bf16 %v5679, %v5679
        %v5712 = vpack.c.bf16 %v5680, %v5680
        %v5713 = vpack.c.bf16 %v5681, %v5681
        %v5714 = vpack.c.bf16 %v5682, %v5682
        %v5715 = vpack.c.bf16 %v5683, %v5683
        %v5716 = vpack.c.bf16 %v5684, %v5684
        %v5717 = vpack.c.bf16 %v5685, %v5685
        %v5718 = vpack.c.bf16 %v5686, %v5686
        %v5719 = vpack.c.bf16 %v5687, %v5687
        %v5720 = vpack.c.bf16 %v5688, %v5688
        %v5721 = vpack.c.bf16 %v5689, %v5689
        %v5722 = vpack.c.bf16 %v5690, %v5690
        %v5723 = vpack.c.bf16 %v5691, %v5691
        %v5724 = vpack.c.bf16 %v5692, %v5692
        %v5725 = vpack.c.bf16 %v5693, %v5693
        %v5726 = vpack.c.bf16 %v5694, %v5694
        %5727 = vst [vmem:[#allocation3 + $0x20] sm:$0xf] %v5695
        %5728 = vst [vmem:[#allocation3 + $0x44] sm:$0xf] %v5696
        %5729 = vst [vmem:[#allocation3 + $0x68] sm:$0xf] %v5697
        %5730 = vst [vmem:[#allocation3 + $0x8c] sm:$0xf] %v5698
        %5731 = vst [vmem:[#allocation3 + $0xb0] sm:$0xf] %v5699
        %5732 = vst [vmem:[#allocation3 + $0xd4] sm:$0xf] %v5700
        %5733 = vst [vmem:[#allocation3 + $0xf8] sm:$0xf] %v5701
        %5734 = vst [vmem:[#allocation3 + $0x11c] sm:$0xf] %v5702
        %5735 = vst [vmem:[#allocation3 + $0x140] sm:$0xf] %v5703
        %5736 = vst [vmem:[#allocation3 + $0x164] sm:$0xf] %v5704
        %5737 = vst [vmem:[#allocation3 + $0x188] sm:$0xf] %v5705
        %5738 = vst [vmem:[#allocation3 + $0x1ac] sm:$0xf] %v5706
        %5739 = vst [vmem:[#allocation3 + $0x1d0] sm:$0xf] %v5707
        %5740 = vst [vmem:[#allocation3 + $0x1f4] sm:$0xf] %v5708
        %5741 = vst [vmem:[#allocation3 + $0x218] sm:$0xf] %v5709
        %5742 = vst [vmem:[#allocation3 + $0x23c] sm:$0xf] %v5710
        %5743 = vst [vmem:[#allocation3 + $0x260] sm:$0xf] %v5711
        %5744 = vst [vmem:[#allocation3 + $0x284] sm:$0xf] %v5712
        %5745 = vst [vmem:[#allocation3 + $0x2a8] sm:$0xf] %v5713
        %5746 = vst [vmem:[#allocation3 + $0x2cc] sm:$0xf] %v5714
        %5747 = vst [vmem:[#allocation3 + $0x2f0] sm:$0xf] %v5715
        %5748 = vst [vmem:[#allocation3 + $0x314] sm:$0xf] %v5716
        %5749 = vst [vmem:[#allocation3 + $0x338] sm:$0xf] %v5717
        %5750 = vst [vmem:[#allocation3 + $0x35c] sm:$0xf] %v5718
        %5751 = vst [vmem:[#allocation3 + $0x380] sm:$0xf] %v5719
        %5752 = vst [vmem:[#allocation3 + $0x3a4] sm:$0xf] %v5720
        %5753 = vst [vmem:[#allocation3 + $0x3c8] sm:$0xf] %v5721
        %5754 = vst [vmem:[#allocation3 + $0x3ec] sm:$0xf] %v5722
        %5755 = vst [vmem:[#allocation3 + $0x410] sm:$0xf] %v5723
        %5756 = vst [vmem:[#allocation3 + $0x434] sm:$0xf] %v5724
        %5757 = vst [vmem:[#allocation3 + $0x458] sm:$0xf] %v5725
        %5758 = vst [vmem:[#allocation3 + $0x47c] sm:$0xf] %v5726
        %v5759 = vld [vmem:[#allocation3] sm:$0xff]
        %v5760 = vld [vmem:[#allocation3 + $0x8] sm:$0xff]
        %v5761 = vld [vmem:[#allocation3 + $0x10] sm:$0xff]
        %v5762 = vld [vmem:[#allocation3 + $0x18] sm:$0xff]
        %v5763 = vld [vmem:[#allocation3 + $0x20] sm:$0xf]
        %v5764 = vld [vmem:[#allocation3 + $0x24] sm:$0xff]
        %v5765 = vld [vmem:[#allocation3 + $0x2c] sm:$0xff]
        %v5766 = vld [vmem:[#allocation3 + $0x34] sm:$0xff]
        %v5767 = vld [vmem:[#allocation3 + $0x3c] sm:$0xff]
        %v5768 = vld [vmem:[#allocation3 + $0x44] sm:$0xf]
        %v5769 = vld [vmem:[#allocation3 + $0x48] sm:$0xff]
        %v5770 = vld [vmem:[#allocation3 + $0x50] sm:$0xff]
        %v5771 = vld [vmem:[#allocation3 + $0x58] sm:$0xff]
        %v5772 = vld [vmem:[#allocation3 + $0x60] sm:$0xff]
        %v5773 = vld [vmem:[#allocation3 + $0x68] sm:$0xf]
        %v5774 = vld [vmem:[#allocation3 + $0x6c] sm:$0xff]
        %v5775 = vld [vmem:[#allocation3 + $0x74] sm:$0xff]
        %v5776 = vld [vmem:[#allocation3 + $0x7c] sm:$0xff]
        %v5777 = vld [vmem:[#allocation3 + $0x84] sm:$0xff]
        %v5778 = vld [vmem:[#allocation3 + $0x8c] sm:$0xf]
        %v5779 = vld [vmem:[#allocation3 + $0x90] sm:$0xff]
        %v5780 = vld [vmem:[#allocation3 + $0x98] sm:$0xff]
        %v5781 = vld [vmem:[#allocation3 + $0xa0] sm:$0xff]
        %v5782 = vld [vmem:[#allocation3 + $0xa8] sm:$0xff]
        %v5783 = vld [vmem:[#allocation3 + $0xb0] sm:$0xf]
        %v5784 = vld [vmem:[#allocation3 + $0xb4] sm:$0xff]
        %v5785 = vld [vmem:[#allocation3 + $0xbc] sm:$0xff]
        %v5786 = vld [vmem:[#allocation3 + $0xc4] sm:$0xff]
        %v5787 = vld [vmem:[#allocation3 + $0xcc] sm:$0xff]
        %v5788 = vld [vmem:[#allocation3 + $0xd4] sm:$0xf]
        %v5789 = vld [vmem:[#allocation3 + $0xd8] sm:$0xff]
        %v5790 = vld [vmem:[#allocation3 + $0xe0] sm:$0xff]
        %v5791 = vld [vmem:[#allocation3 + $0xe8] sm:$0xff]
        %v5792 = vld [vmem:[#allocation3 + $0xf0] sm:$0xff]
        %v5793 = vld [vmem:[#allocation3 + $0xf8] sm:$0xf]
        %v5794 = vld [vmem:[#allocation3 + $0xfc] sm:$0xff]
        %v5795 = vld [vmem:[#allocation3 + $0x104] sm:$0xff]
        %v5796 = vld [vmem:[#allocation3 + $0x10c] sm:$0xff]
        %v5797 = vld [vmem:[#allocation3 + $0x114] sm:$0xff]
        %v5798 = vld [vmem:[#allocation3 + $0x11c] sm:$0xf]
        %v5799 = vld [vmem:[#allocation3 + $0x120] sm:$0xff]
        %v5800 = vld [vmem:[#allocation3 + $0x128] sm:$0xff]
        %v5801 = vld [vmem:[#allocation3 + $0x130] sm:$0xff]
        %v5802 = vld [vmem:[#allocation3 + $0x138] sm:$0xff]
        %v5803 = vld [vmem:[#allocation3 + $0x140] sm:$0xf]
        %v5804 = vld [vmem:[#allocation3 + $0x144] sm:$0xff]
        %v5805 = vld [vmem:[#allocation3 + $0x14c] sm:$0xff]
        %v5806 = vld [vmem:[#allocation3 + $0x154] sm:$0xff]
        %v5807 = vld [vmem:[#allocation3 + $0x15c] sm:$0xff]
        %v5808 = vld [vmem:[#allocation3 + $0x164] sm:$0xf]
        %v5809 = vld [vmem:[#allocation3 + $0x168] sm:$0xff]
        %v5810 = vld [vmem:[#allocation3 + $0x170] sm:$0xff]
        %v5811 = vld [vmem:[#allocation3 + $0x178] sm:$0xff]
        %v5812 = vld [vmem:[#allocation3 + $0x180] sm:$0xff]
        %v5813 = vld [vmem:[#allocation3 + $0x188] sm:$0xf]
        %v5814 = vld [vmem:[#allocation3 + $0x18c] sm:$0xff]
        %v5815 = vld [vmem:[#allocation3 + $0x194] sm:$0xff]
        %v5816 = vld [vmem:[#allocation3 + $0x19c] sm:$0xff]
        %v5817 = vld [vmem:[#allocation3 + $0x1a4] sm:$0xff]
        %v5818 = vld [vmem:[#allocation3 + $0x1ac] sm:$0xf]
        %v5819 = vld [vmem:[#allocation3 + $0x1b0] sm:$0xff]
        %v5820 = vld [vmem:[#allocation3 + $0x1b8] sm:$0xff]
        %v5821 = vld [vmem:[#allocation3 + $0x1c0] sm:$0xff]
        %v5822 = vld [vmem:[#allocation3 + $0x1c8] sm:$0xff]
        %v5823 = vld [vmem:[#allocation3 + $0x1d0] sm:$0xf]
        %v5824 = vld [vmem:[#allocation3 + $0x1d4] sm:$0xff]
        %v5825 = vld [vmem:[#allocation3 + $0x1dc] sm:$0xff]
        %v5826 = vld [vmem:[#allocation3 + $0x1e4] sm:$0xff]
        %v5827 = vld [vmem:[#allocation3 + $0x1ec] sm:$0xff]
        %v5828 = vld [vmem:[#allocation3 + $0x1f4] sm:$0xf]
        %v5829 = vld [vmem:[#allocation3 + $0x1f8] sm:$0xff]
        %v5830 = vld [vmem:[#allocation3 + $0x200] sm:$0xff]
        %v5831 = vld [vmem:[#allocation3 + $0x208] sm:$0xff]
        %v5832 = vld [vmem:[#allocation3 + $0x210] sm:$0xff]
        %v5833 = vld [vmem:[#allocation3 + $0x218] sm:$0xf]
        %v5834 = vld [vmem:[#allocation3 + $0x21c] sm:$0xff]
        %v5835 = vld [vmem:[#allocation3 + $0x224] sm:$0xff]
        %v5836 = vld [vmem:[#allocation3 + $0x22c] sm:$0xff]
        %v5837 = vld [vmem:[#allocation3 + $0x234] sm:$0xff]
        %v5838 = vld [vmem:[#allocation3 + $0x23c] sm:$0xf]
        %v5839 = vld [vmem:[#allocation3 + $0x240] sm:$0xff]
        %v5840 = vld [vmem:[#allocation3 + $0x248] sm:$0xff]
        %v5841 = vld [vmem:[#allocation3 + $0x250] sm:$0xff]
        %v5842 = vld [vmem:[#allocation3 + $0x258] sm:$0xff]
        %v5843 = vld [vmem:[#allocation3 + $0x260] sm:$0xf]
        %v5844 = vld [vmem:[#allocation3 + $0x264] sm:$0xff]
        %v5845 = vld [vmem:[#allocation3 + $0x26c] sm:$0xff]
        %v5846 = vld [vmem:[#allocation3 + $0x274] sm:$0xff]
        %v5847 = vld [vmem:[#allocation3 + $0x27c] sm:$0xff]
        %v5848 = vld [vmem:[#allocation3 + $0x284] sm:$0xf]
        %v5849 = vld [vmem:[#allocation3 + $0x288] sm:$0xff]
        %v5850 = vld [vmem:[#allocation3 + $0x290] sm:$0xff]
        %v5851 = vld [vmem:[#allocation3 + $0x298] sm:$0xff]
        %v5852 = vld [vmem:[#allocation3 + $0x2a0] sm:$0xff]
        %v5853 = vld [vmem:[#allocation3 + $0x2a8] sm:$0xf]
        %v5854 = vld [vmem:[#allocation3 + $0x2ac] sm:$0xff]
        %v5855 = vld [vmem:[#allocation3 + $0x2b4] sm:$0xff]
        %v5856 = vld [vmem:[#allocation3 + $0x2bc] sm:$0xff]
        %v5857 = vld [vmem:[#allocation3 + $0x2c4] sm:$0xff]
        %v5858 = vld [vmem:[#allocation3 + $0x2cc] sm:$0xf]
        %v5859 = vld [vmem:[#allocation3 + $0x2d0] sm:$0xff]
        %v5860 = vld [vmem:[#allocation3 + $0x2d8] sm:$0xff]
        %v5861 = vld [vmem:[#allocation3 + $0x2e0] sm:$0xff]
        %v5862 = vld [vmem:[#allocation3 + $0x2e8] sm:$0xff]
        %v5863 = vld [vmem:[#allocation3 + $0x2f0] sm:$0xf]
        %v5864 = vld [vmem:[#allocation3 + $0x2f4] sm:$0xff]
        %v5865 = vld [vmem:[#allocation3 + $0x2fc] sm:$0xff]
        %v5866 = vld [vmem:[#allocation3 + $0x304] sm:$0xff]
        %v5867 = vld [vmem:[#allocation3 + $0x30c] sm:$0xff]
        %v5868 = vld [vmem:[#allocation3 + $0x314] sm:$0xf]
        %v5869 = vld [vmem:[#allocation3 + $0x318] sm:$0xff]
        %v5870 = vld [vmem:[#allocation3 + $0x320] sm:$0xff]
        %v5871 = vld [vmem:[#allocation3 + $0x328] sm:$0xff]
        %v5872 = vld [vmem:[#allocation3 + $0x330] sm:$0xff]
        %v5873 = vld [vmem:[#allocation3 + $0x338] sm:$0xf]
        %v5874 = vld [vmem:[#allocation3 + $0x33c] sm:$0xff]
        %v5875 = vld [vmem:[#allocation3 + $0x344] sm:$0xff]
        %v5876 = vld [vmem:[#allocation3 + $0x34c] sm:$0xff]
        %v5877 = vld [vmem:[#allocation3 + $0x354] sm:$0xff]
        %v5878 = vld [vmem:[#allocation3 + $0x35c] sm:$0xf]
        %v5879 = vld [vmem:[#allocation3 + $0x360] sm:$0xff]
        %v5880 = vld [vmem:[#allocation3 + $0x368] sm:$0xff]
        %v5881 = vld [vmem:[#allocation3 + $0x370] sm:$0xff]
        %v5882 = vld [vmem:[#allocation3 + $0x378] sm:$0xff]
        %v5883 = vld [vmem:[#allocation3 + $0x380] sm:$0xf]
        %v5884 = vld [vmem:[#allocation3 + $0x384] sm:$0xff]
        %v5885 = vld [vmem:[#allocation3 + $0x38c] sm:$0xff]
        %v5886 = vld [vmem:[#allocation3 + $0x394] sm:$0xff]
        %v5887 = vld [vmem:[#allocation3 + $0x39c] sm:$0xff]
        %v5888 = vld [vmem:[#allocation3 + $0x3a4] sm:$0xf]
        %v5889 = vld [vmem:[#allocation3 + $0x3a8] sm:$0xff]
        %v5890 = vld [vmem:[#allocation3 + $0x3b0] sm:$0xff]
        %v5891 = vld [vmem:[#allocation3 + $0x3b8] sm:$0xff]
        %v5892 = vld [vmem:[#allocation3 + $0x3c0] sm:$0xff]
        %v5893 = vld [vmem:[#allocation3 + $0x3c8] sm:$0xf]
        %v5894 = vld [vmem:[#allocation3 + $0x3cc] sm:$0xff]
        %v5895 = vld [vmem:[#allocation3 + $0x3d4] sm:$0xff]
        %v5896 = vld [vmem:[#allocation3 + $0x3dc] sm:$0xff]
        %v5897 = vld [vmem:[#allocation3 + $0x3e4] sm:$0xff]
        %v5898 = vld [vmem:[#allocation3 + $0x3ec] sm:$0xf]
        %v5899 = vld [vmem:[#allocation3 + $0x3f0] sm:$0xff]
        %v5900 = vld [vmem:[#allocation3 + $0x3f8] sm:$0xff]
        %v5901 = vld [vmem:[#allocation3 + $0x400] sm:$0xff]
        %v5902 = vld [vmem:[#allocation3 + $0x408] sm:$0xff]
        %v5903 = vld [vmem:[#allocation3 + $0x410] sm:$0xf]
        %v5904 = vld [vmem:[#allocation3 + $0x414] sm:$0xff]
        %v5905 = vld [vmem:[#allocation3 + $0x41c] sm:$0xff]
        %v5906 = vld [vmem:[#allocation3 + $0x424] sm:$0xff]
        %v5907 = vld [vmem:[#allocation3 + $0x42c] sm:$0xff]
        %v5908 = vld [vmem:[#allocation3 + $0x434] sm:$0xf]
        %v5909 = vld [vmem:[#allocation3 + $0x438] sm:$0xff]
        %v5910 = vld [vmem:[#allocation3 + $0x440] sm:$0xff]
        %v5911 = vld [vmem:[#allocation3 + $0x448] sm:$0xff]
        %v5912 = vld [vmem:[#allocation3 + $0x450] sm:$0xff]
        %v5913 = vld [vmem:[#allocation3 + $0x458] sm:$0xf]
        %v5914 = vld [vmem:[#allocation3 + $0x45c] sm:$0xff]
        %v5915 = vld [vmem:[#allocation3 + $0x464] sm:$0xff]
        %v5916 = vld [vmem:[#allocation3 + $0x46c] sm:$0xff]
        %v5917 = vld [vmem:[#allocation3 + $0x474] sm:$0xff]
        %v5918 = vld [vmem:[#allocation3 + $0x47c] sm:$0xf]
        %v5919 = vld [vmem:[#allocation9] sm:$0xf]
        %v5920 = vld [vmem:[#allocation9 + $0x4] sm:$0xf]
        %v5921 = vld [vmem:[#allocation9 + $0x8] sm:$0xf]
        %v5922 = vld [vmem:[#allocation9 + $0xc] sm:$0xf]
        %v5923 = vld [vmem:[#allocation9 + $0x10] sm:$0xf]
        %v5924 = vld [vmem:[#allocation9 + $0x14] sm:$0xf]
        %v5925 = vld [vmem:[#allocation9 + $0x18] sm:$0xf]
        %v5926 = vld [vmem:[#allocation9 + $0x1c] sm:$0xf]
        %v5927 = vld [vmem:[#allocation9 + $0x20] sm:$0xf]
        %v5928 = vld [vmem:[#allocation9 + $0x24] sm:$0xf]
        %v5929 = vld [vmem:[#allocation9 + $0x28] sm:$0xf]
        %v5930 = vld [vmem:[#allocation9 + $0x2c] sm:$0xf]
        %v5931 = vld [vmem:[#allocation9 + $0x30] sm:$0xf]
        %v5932 = vld [vmem:[#allocation9 + $0x34] sm:$0xf]
        %v5933 = vld [vmem:[#allocation9 + $0x38] sm:$0xf]
        %v5934 = vld [vmem:[#allocation9 + $0x3c] sm:$0xf]
        %v5935 = vld [vmem:[#allocation9 + $0x40] sm:$0xf]
        %v5936 = vld [vmem:[#allocation9 + $0x44] sm:$0xf]
        %v5937 = vld [vmem:[#allocation9 + $0x48] sm:$0xf]
        %v5938 = vld [vmem:[#allocation9 + $0x4c] sm:$0xf]
        %v5939 = vld [vmem:[#allocation9 + $0x50] sm:$0xf]
        %v5940 = vld [vmem:[#allocation9 + $0x54] sm:$0xf]
        %v5941 = vld [vmem:[#allocation9 + $0x58] sm:$0xf]
        %v5942 = vld [vmem:[#allocation9 + $0x5c] sm:$0xf]
        %v5943 = vld [vmem:[#allocation9 + $0x60] sm:$0xf]
        %v5944 = vld [vmem:[#allocation9 + $0x64] sm:$0xf]
        %v5945 = vld [vmem:[#allocation9 + $0x68] sm:$0xf]
        %v5946 = vld [vmem:[#allocation9 + $0x6c] sm:$0xf]
        %v5947 = vld [vmem:[#allocation9 + $0x70] sm:$0xf]
        %v5948 = vld [vmem:[#allocation9 + $0x74] sm:$0xf]
        %v5949 = vld [vmem:[#allocation9 + $0x78] sm:$0xf]
        %v5950 = vld [vmem:[#allocation9 + $0x7c] sm:$0xf]
        %v5951 = vld [vmem:[#allocation9 + $0x80] sm:$0xf]
        %v5952 = vld [vmem:[#allocation9 + $0x84] sm:$0xf]
        %v5953 = vld [vmem:[#allocation9 + $0x88] sm:$0xf]
        %v5954 = vld [vmem:[#allocation9 + $0x8c] sm:$0xf]
        %v5955 = vld [vmem:[#allocation9 + $0x90] sm:$0xf]
        %v5956 = vld [vmem:[#allocation9 + $0x94] sm:$0xf]
        %v5957 = vld [vmem:[#allocation9 + $0x98] sm:$0xf]
        %v5958 = vld [vmem:[#allocation9 + $0x9c] sm:$0xf]
        %v5959 = vld [vmem:[#allocation9 + $0xa0] sm:$0xf]
        %v5960 = vld [vmem:[#allocation9 + $0xa4] sm:$0xf]
        %v5961 = vld [vmem:[#allocation9 + $0xa8] sm:$0xf]
        %v5962 = vld [vmem:[#allocation9 + $0xac] sm:$0xf]
        %v5963 = vld [vmem:[#allocation9 + $0xb0] sm:$0xf]
        %v5964 = vld [vmem:[#allocation9 + $0xb4] sm:$0xf]
        %v5965 = vld [vmem:[#allocation9 + $0xb8] sm:$0xf]
        %v5966 = vld [vmem:[#allocation9 + $0xbc] sm:$0xf]
        %v5967 = vld [vmem:[#allocation9 + $0xc0] sm:$0xf]
        %v5968 = vld [vmem:[#allocation9 + $0xc4] sm:$0xf]
        %v5969 = vld [vmem:[#allocation9 + $0xc8] sm:$0xf]
        %v5970 = vld [vmem:[#allocation9 + $0xcc] sm:$0xf]
        %v5971 = vld [vmem:[#allocation9 + $0xd0] sm:$0xf]
        %v5972 = vld [vmem:[#allocation9 + $0xd4] sm:$0xf]
        %v5973 = vld [vmem:[#allocation9 + $0xd8] sm:$0xf]
        %v5974 = vld [vmem:[#allocation9 + $0xdc] sm:$0xf]
        %v5975 = vld [vmem:[#allocation9 + $0xe0] sm:$0xf]
        %v5976 = vld [vmem:[#allocation9 + $0xe4] sm:$0xf]
        %v5977 = vld [vmem:[#allocation9 + $0xe8] sm:$0xf]
        %v5978 = vld [vmem:[#allocation9 + $0xec] sm:$0xf]
        %v5979 = vld [vmem:[#allocation9 + $0xf0] sm:$0xf]
        %v5980 = vld [vmem:[#allocation9 + $0xf4] sm:$0xf]
        %v5981 = vld [vmem:[#allocation9 + $0xf8] sm:$0xf]
        %v5982 = vld [vmem:[#allocation9 + $0xfc] sm:$0xf]
        %v5983 = vld [vmem:[#allocation9 + $0x100] sm:$0xf]
        %v5984 = vld [vmem:[#allocation9 + $0x104] sm:$0xf]
        %v5985 = vld [vmem:[#allocation9 + $0x108] sm:$0xf]
        %v5986 = vld [vmem:[#allocation9 + $0x10c] sm:$0xf]
        %v5987 = vld [vmem:[#allocation9 + $0x110] sm:$0xf]
        %v5988 = vld [vmem:[#allocation9 + $0x114] sm:$0xf]
        %v5989 = vld [vmem:[#allocation9 + $0x118] sm:$0xf]
        %v5990 = vld [vmem:[#allocation9 + $0x11c] sm:$0xf]
        %v5991 = vld [vmem:[#allocation9 + $0x120] sm:$0xf]
        %v5992 = vld [vmem:[#allocation9 + $0x124] sm:$0xf]
        %v5993 = vld [vmem:[#allocation9 + $0x128] sm:$0xf]
        %v5994 = vld [vmem:[#allocation9 + $0x12c] sm:$0xf]
        %v5995 = vld [vmem:[#allocation9 + $0x130] sm:$0xf]
        %v5996 = vld [vmem:[#allocation9 + $0x134] sm:$0xf]
        %v5997 = vld [vmem:[#allocation9 + $0x138] sm:$0xf]
        %v5998 = vld [vmem:[#allocation9 + $0x13c] sm:$0xf]
        %v5999 = vld [vmem:[#allocation9 + $0x140] sm:$0xf]
        %v6000 = vld [vmem:[#allocation9 + $0x144] sm:$0xf]
        %v6001 = vld [vmem:[#allocation9 + $0x148] sm:$0xf]
        %v6002 = vld [vmem:[#allocation9 + $0x14c] sm:$0xf]
        %v6003 = vld [vmem:[#allocation9 + $0x150] sm:$0xf]
        %v6004 = vld [vmem:[#allocation9 + $0x154] sm:$0xf]
        %v6005 = vld [vmem:[#allocation9 + $0x158] sm:$0xf]
        %v6006 = vld [vmem:[#allocation9 + $0x15c] sm:$0xf]
        %v6007 = vld [vmem:[#allocation9 + $0x160] sm:$0xf]
        %v6008 = vld [vmem:[#allocation9 + $0x164] sm:$0xf]
        %v6009 = vld [vmem:[#allocation9 + $0x168] sm:$0xf]
        %v6010 = vld [vmem:[#allocation9 + $0x16c] sm:$0xf]
        %v6011 = vld [vmem:[#allocation9 + $0x170] sm:$0xf]
        %v6012 = vld [vmem:[#allocation9 + $0x174] sm:$0xf]
        %v6013 = vld [vmem:[#allocation9 + $0x178] sm:$0xf]
        %v6014 = vld [vmem:[#allocation9 + $0x17c] sm:$0xf]
        %v6015 = vld [vmem:[#allocation9 + $0x180] sm:$0xf]
        %v6016 = vld [vmem:[#allocation9 + $0x184] sm:$0xf]
        %v6017 = vld [vmem:[#allocation9 + $0x188] sm:$0xf]
        %v6018 = vld [vmem:[#allocation9 + $0x18c] sm:$0xf]
        %v6019 = vld [vmem:[#allocation9 + $0x190] sm:$0xf]
        %v6020 = vld [vmem:[#allocation9 + $0x194] sm:$0xf]
        %v6021 = vld [vmem:[#allocation9 + $0x198] sm:$0xf]
        %v6022 = vld [vmem:[#allocation9 + $0x19c] sm:$0xf]
        %v6023 = vld [vmem:[#allocation9 + $0x1a0] sm:$0xf]
        %v6024 = vld [vmem:[#allocation9 + $0x1a4] sm:$0xf]
        %v6025 = vld [vmem:[#allocation9 + $0x1a8] sm:$0xf]
        %v6026 = vld [vmem:[#allocation9 + $0x1ac] sm:$0xf]
        %v6027 = vld [vmem:[#allocation9 + $0x1b0] sm:$0xf]
        %v6028 = vld [vmem:[#allocation9 + $0x1b4] sm:$0xf]
        %v6029 = vld [vmem:[#allocation9 + $0x1b8] sm:$0xf]
        %v6030 = vld [vmem:[#allocation9 + $0x1bc] sm:$0xf]
        %v6031 = vld [vmem:[#allocation9 + $0x1c0] sm:$0xf]
        %v6032 = vld [vmem:[#allocation9 + $0x1c4] sm:$0xf]
        %v6033 = vld [vmem:[#allocation9 + $0x1c8] sm:$0xf]
        %v6034 = vld [vmem:[#allocation9 + $0x1cc] sm:$0xf]
        %v6035 = vld [vmem:[#allocation9 + $0x1d0] sm:$0xf]
        %v6036 = vld [vmem:[#allocation9 + $0x1d4] sm:$0xf]
        %v6037 = vld [vmem:[#allocation9 + $0x1d8] sm:$0xf]
        %v6038 = vld [vmem:[#allocation9 + $0x1dc] sm:$0xf]
        %v6039 = vld [vmem:[#allocation9 + $0x1e0] sm:$0xf]
        %v6040 = vld [vmem:[#allocation9 + $0x1e4] sm:$0xf]
        %v6041 = vld [vmem:[#allocation9 + $0x1e8] sm:$0xf]
        %v6042 = vld [vmem:[#allocation9 + $0x1ec] sm:$0xf]
        %v6043 = vld [vmem:[#allocation9 + $0x1f0] sm:$0xf]
        %v6044 = vld [vmem:[#allocation9 + $0x1f4] sm:$0xf]
        %v6045 = vld [vmem:[#allocation9 + $0x1f8] sm:$0xf]
        %v6046 = vld [vmem:[#allocation9 + $0x1fc] sm:$0xf]
        %v6047 = vld [vmem:[#allocation9 + $0x200] sm:$0xf]
        %v6048 = vld [vmem:[#allocation9 + $0x204] sm:$0xf]
        %v6049 = vld [vmem:[#allocation9 + $0x208] sm:$0xf]
        %v6050 = vld [vmem:[#allocation9 + $0x20c] sm:$0xf]
        %v6051 = vld [vmem:[#allocation9 + $0x210] sm:$0xf]
        %v6052 = vld [vmem:[#allocation9 + $0x214] sm:$0xf]
        %v6053 = vld [vmem:[#allocation9 + $0x218] sm:$0xf]
        %v6054 = vld [vmem:[#allocation9 + $0x21c] sm:$0xf]
        %v6055 = vld [vmem:[#allocation9 + $0x220] sm:$0xf]
        %v6056 = vld [vmem:[#allocation9 + $0x224] sm:$0xf]
        %v6057 = vld [vmem:[#allocation9 + $0x228] sm:$0xf]
        %v6058 = vld [vmem:[#allocation9 + $0x22c] sm:$0xf]
        %v6059 = vld [vmem:[#allocation9 + $0x230] sm:$0xf]
        %v6060 = vld [vmem:[#allocation9 + $0x234] sm:$0xf]
        %v6061 = vld [vmem:[#allocation9 + $0x238] sm:$0xf]
        %v6062 = vld [vmem:[#allocation9 + $0x23c] sm:$0xf]
        %v6223 = vunpack.c.l.b16 %v5759
        %v6224 = vunpack.c.h.b16 %v5759
        %v6225 = vunpack.c.l.b16 %v5760
        %v6226 = vunpack.c.h.b16 %v5760
        %v6227 = vunpack.c.l.b16 %v5761
        %v6228 = vunpack.c.h.b16 %v5761
        %v6229 = vunpack.c.l.b16 %v5762
        %v6230 = vunpack.c.h.b16 %v5762
        %v6231 = vunpack.c.l.b16 %v5763
        %v6232 = vunpack.c.l.b16 %v5764
        %v6233 = vunpack.c.h.b16 %v5764
        %v6234 = vunpack.c.l.b16 %v5765
        %v6235 = vunpack.c.h.b16 %v5765
        %v6236 = vunpack.c.l.b16 %v5766
        %v6237 = vunpack.c.h.b16 %v5766
        %v6238 = vunpack.c.l.b16 %v5767
        %v6239 = vunpack.c.h.b16 %v5767
        %v6240 = vunpack.c.l.b16 %v5768
        %v6241 = vunpack.c.l.b16 %v5769
        %v6242 = vunpack.c.h.b16 %v5769
        %v6243 = vunpack.c.l.b16 %v5770
        %v6244 = vunpack.c.h.b16 %v5770
        %v6245 = vunpack.c.l.b16 %v5771
        %v6246 = vunpack.c.h.b16 %v5771
        %v6247 = vunpack.c.l.b16 %v5772
        %v6248 = vunpack.c.h.b16 %v5772
        %v6249 = vunpack.c.l.b16 %v5773
        %v6250 = vunpack.c.l.b16 %v5774
        %v6251 = vunpack.c.h.b16 %v5774
        %v6252 = vunpack.c.l.b16 %v5775
        %v6253 = vunpack.c.h.b16 %v5775
        %v6254 = vunpack.c.l.b16 %v5776
        %v6255 = vunpack.c.h.b16 %v5776
        %v6256 = vunpack.c.l.b16 %v5777
        %v6257 = vunpack.c.h.b16 %v5777
        %v6258 = vunpack.c.l.b16 %v5778
        %v6259 = vunpack.c.l.b16 %v5779
        %v6260 = vunpack.c.h.b16 %v5779
        %v6261 = vunpack.c.l.b16 %v5780
        %v6262 = vunpack.c.h.b16 %v5780
        %v6263 = vunpack.c.l.b16 %v5781
        %v6264 = vunpack.c.h.b16 %v5781
        %v6265 = vunpack.c.l.b16 %v5782
        %v6266 = vunpack.c.h.b16 %v5782
        %v6267 = vunpack.c.l.b16 %v5783
        %v6268 = vunpack.c.l.b16 %v5784
        %v6269 = vunpack.c.h.b16 %v5784
        %v6270 = vunpack.c.l.b16 %v5785
        %v6271 = vunpack.c.h.b16 %v5785
        %v6272 = vunpack.c.l.b16 %v5786
        %v6273 = vunpack.c.h.b16 %v5786
        %v6274 = vunpack.c.l.b16 %v5787
        %v6275 = vunpack.c.h.b16 %v5787
        %v6276 = vunpack.c.l.b16 %v5788
        %v6277 = vunpack.c.l.b16 %v5789
        %v6278 = vunpack.c.h.b16 %v5789
        %v6279 = vunpack.c.l.b16 %v5790
        %v6280 = vunpack.c.h.b16 %v5790
        %v6281 = vunpack.c.l.b16 %v5791
        %v6282 = vunpack.c.h.b16 %v5791
        %v6283 = vunpack.c.l.b16 %v5792
        %v6284 = vunpack.c.h.b16 %v5792
        %v6285 = vunpack.c.l.b16 %v5793
        %v6286 = vunpack.c.l.b16 %v5794
        %v6287 = vunpack.c.h.b16 %v5794
        %v6288 = vunpack.c.l.b16 %v5795
        %v6289 = vunpack.c.h.b16 %v5795
        %v6290 = vunpack.c.l.b16 %v5796
        %v6291 = vunpack.c.h.b16 %v5796
        %v6292 = vunpack.c.l.b16 %v5797
        %v6293 = vunpack.c.h.b16 %v5797
        %v6294 = vunpack.c.l.b16 %v5798
        %v6295 = vunpack.c.l.b16 %v5799
        %v6296 = vunpack.c.h.b16 %v5799
        %v6297 = vunpack.c.l.b16 %v5800
        %v6298 = vunpack.c.h.b16 %v5800
        %v6299 = vunpack.c.l.b16 %v5801
        %v6300 = vunpack.c.h.b16 %v5801
        %v6301 = vunpack.c.l.b16 %v5802
        %v6302 = vunpack.c.h.b16 %v5802
        %v6303 = vunpack.c.l.b16 %v5803
        %v6304 = vunpack.c.l.b16 %v5804
        %v6305 = vunpack.c.h.b16 %v5804
        %v6306 = vunpack.c.l.b16 %v5805
        %v6307 = vunpack.c.h.b16 %v5805
        %v6308 = vunpack.c.l.b16 %v5806
        %v6309 = vunpack.c.h.b16 %v5806
        %v6310 = vunpack.c.l.b16 %v5807
        %v6311 = vunpack.c.h.b16 %v5807
        %v6312 = vunpack.c.l.b16 %v5808
        %v6313 = vunpack.c.l.b16 %v5809
        %v6314 = vunpack.c.h.b16 %v5809
        %v6315 = vunpack.c.l.b16 %v5810
        %v6316 = vunpack.c.h.b16 %v5810
        %v6317 = vunpack.c.l.b16 %v5811
        %v6318 = vunpack.c.h.b16 %v5811
        %v6319 = vunpack.c.l.b16 %v5812
        %v6320 = vunpack.c.h.b16 %v5812
        %v6321 = vunpack.c.l.b16 %v5813
        %v6322 = vunpack.c.l.b16 %v5814
        %v6323 = vunpack.c.h.b16 %v5814
        %v6324 = vunpack.c.l.b16 %v5815
        %v6325 = vunpack.c.h.b16 %v5815
        %v6326 = vunpack.c.l.b16 %v5816
        %v6327 = vunpack.c.h.b16 %v5816
        %v6328 = vunpack.c.l.b16 %v5817
        %v6329 = vunpack.c.h.b16 %v5817
        %v6330 = vunpack.c.l.b16 %v5818
        %v6331 = vunpack.c.l.b16 %v5819
        %v6332 = vunpack.c.h.b16 %v5819
        %v6333 = vunpack.c.l.b16 %v5820
        %v6334 = vunpack.c.h.b16 %v5820
        %v6335 = vunpack.c.l.b16 %v5821
        %v6336 = vunpack.c.h.b16 %v5821
        %v6337 = vunpack.c.l.b16 %v5822
        %v6338 = vunpack.c.h.b16 %v5822
        %v6339 = vunpack.c.l.b16 %v5823
        %v6340 = vunpack.c.l.b16 %v5824
        %v6341 = vunpack.c.h.b16 %v5824
        %v6342 = vunpack.c.l.b16 %v5825
        %v6343 = vunpack.c.h.b16 %v5825
        %v6344 = vunpack.c.l.b16 %v5826
        %v6345 = vunpack.c.h.b16 %v5826
        %v6346 = vunpack.c.l.b16 %v5827
        %v6347 = vunpack.c.h.b16 %v5827
        %v6348 = vunpack.c.l.b16 %v5828
        %v6349 = vunpack.c.l.b16 %v5829
        %v6350 = vunpack.c.h.b16 %v5829
        %v6351 = vunpack.c.l.b16 %v5830
        %v6352 = vunpack.c.h.b16 %v5830
        %v6353 = vunpack.c.l.b16 %v5831
        %v6354 = vunpack.c.h.b16 %v5831
        %v6355 = vunpack.c.l.b16 %v5832
        %v6356 = vunpack.c.h.b16 %v5832
        %v6357 = vunpack.c.l.b16 %v5833
        %v6358 = vunpack.c.l.b16 %v5834
        %v6359 = vunpack.c.h.b16 %v5834
        %v6360 = vunpack.c.l.b16 %v5835
        %v6361 = vunpack.c.h.b16 %v5835
        %v6362 = vunpack.c.l.b16 %v5836
        %v6363 = vunpack.c.h.b16 %v5836
        %v6364 = vunpack.c.l.b16 %v5837
        %v6365 = vunpack.c.h.b16 %v5837
        %v6366 = vunpack.c.l.b16 %v5838
        %v6367 = vunpack.c.l.b16 %v5839
        %v6368 = vunpack.c.h.b16 %v5839
        %v6369 = vunpack.c.l.b16 %v5840
        %v6370 = vunpack.c.h.b16 %v5840
        %v6371 = vunpack.c.l.b16 %v5841
        %v6372 = vunpack.c.h.b16 %v5841
        %v6373 = vunpack.c.l.b16 %v5842
        %v6374 = vunpack.c.h.b16 %v5842
        %v6375 = vunpack.c.l.b16 %v5843
        %v6376 = vunpack.c.l.b16 %v5844
        %v6377 = vunpack.c.h.b16 %v5844
        %v6378 = vunpack.c.l.b16 %v5845
        %v6379 = vunpack.c.h.b16 %v5845
        %v6380 = vunpack.c.l.b16 %v5846
        %v6381 = vunpack.c.h.b16 %v5846
        %v6382 = vunpack.c.l.b16 %v5847
        %v6383 = vunpack.c.h.b16 %v5847
        %v6384 = vunpack.c.l.b16 %v5848
        %v6385 = vunpack.c.l.b16 %v5849
        %v6386 = vunpack.c.h.b16 %v5849
        %v6387 = vunpack.c.l.b16 %v5850
        %v6388 = vunpack.c.h.b16 %v5850
        %v6389 = vunpack.c.l.b16 %v5851
        %v6390 = vunpack.c.h.b16 %v5851
        %v6391 = vunpack.c.l.b16 %v5852
        %v6392 = vunpack.c.h.b16 %v5852
        %v6393 = vunpack.c.l.b16 %v5853
        %v6394 = vunpack.c.l.b16 %v5854
        %v6395 = vunpack.c.h.b16 %v5854
        %v6396 = vunpack.c.l.b16 %v5855
        %v6397 = vunpack.c.h.b16 %v5855
        %v6398 = vunpack.c.l.b16 %v5856
        %v6399 = vunpack.c.h.b16 %v5856
        %v6400 = vunpack.c.l.b16 %v5857
        %v6401 = vunpack.c.h.b16 %v5857
        %v6402 = vunpack.c.l.b16 %v5858
        %v6403 = vunpack.c.l.b16 %v5859
        %v6404 = vunpack.c.h.b16 %v5859
        %v6405 = vunpack.c.l.b16 %v5860
        %v6406 = vunpack.c.h.b16 %v5860
        %v6407 = vunpack.c.l.b16 %v5861
        %v6408 = vunpack.c.h.b16 %v5861
        %v6409 = vunpack.c.l.b16 %v5862
        %v6410 = vunpack.c.h.b16 %v5862
        %v6411 = vunpack.c.l.b16 %v5863
        %v6412 = vunpack.c.l.b16 %v5864
        %v6413 = vunpack.c.h.b16 %v5864
        %v6414 = vunpack.c.l.b16 %v5865
        %v6415 = vunpack.c.h.b16 %v5865
        %v6416 = vunpack.c.l.b16 %v5866
        %v6417 = vunpack.c.h.b16 %v5866
        %v6418 = vunpack.c.l.b16 %v5867
        %v6419 = vunpack.c.h.b16 %v5867
        %v6420 = vunpack.c.l.b16 %v5868
        %v6421 = vunpack.c.l.b16 %v5869
        %v6422 = vunpack.c.h.b16 %v5869
        %v6423 = vunpack.c.l.b16 %v5870
        %v6424 = vunpack.c.h.b16 %v5870
        %v6425 = vunpack.c.l.b16 %v5871
        %v6426 = vunpack.c.h.b16 %v5871
        %v6427 = vunpack.c.l.b16 %v5872
        %v6428 = vunpack.c.h.b16 %v5872
        %v6429 = vunpack.c.l.b16 %v5873
        %v6430 = vunpack.c.l.b16 %v5874
        %v6431 = vunpack.c.h.b16 %v5874
        %v6432 = vunpack.c.l.b16 %v5875
        %v6433 = vunpack.c.h.b16 %v5875
        %v6434 = vunpack.c.l.b16 %v5876
        %v6435 = vunpack.c.h.b16 %v5876
        %v6436 = vunpack.c.l.b16 %v5877
        %v6437 = vunpack.c.h.b16 %v5877
        %v6438 = vunpack.c.l.b16 %v5878
        %v6439 = vunpack.c.l.b16 %v5879
        %v6440 = vunpack.c.h.b16 %v5879
        %v6441 = vunpack.c.l.b16 %v5880
        %v6442 = vunpack.c.h.b16 %v5880
        %v6443 = vunpack.c.l.b16 %v5881
        %v6444 = vunpack.c.h.b16 %v5881
        %v6445 = vunpack.c.l.b16 %v5882
        %v6446 = vunpack.c.h.b16 %v5882
        %v6447 = vunpack.c.l.b16 %v5883
        %v6448 = vunpack.c.l.b16 %v5884
        %v6449 = vunpack.c.h.b16 %v5884
        %v6450 = vunpack.c.l.b16 %v5885
        %v6451 = vunpack.c.h.b16 %v5885
        %v6452 = vunpack.c.l.b16 %v5886
        %v6453 = vunpack.c.h.b16 %v5886
        %v6454 = vunpack.c.l.b16 %v5887
        %v6455 = vunpack.c.h.b16 %v5887
        %v6456 = vunpack.c.l.b16 %v5888
        %v6457 = vunpack.c.l.b16 %v5889
        %v6458 = vunpack.c.h.b16 %v5889
        %v6459 = vunpack.c.l.b16 %v5890
        %v6460 = vunpack.c.h.b16 %v5890
        %v6461 = vunpack.c.l.b16 %v5891
        %v6462 = vunpack.c.h.b16 %v5891
        %v6463 = vunpack.c.l.b16 %v5892
        %v6464 = vunpack.c.h.b16 %v5892
        %v6465 = vunpack.c.l.b16 %v5893
        %v6466 = vunpack.c.l.b16 %v5894
        %v6467 = vunpack.c.h.b16 %v5894
        %v6468 = vunpack.c.l.b16 %v5895
        %v6469 = vunpack.c.h.b16 %v5895
        %v6470 = vunpack.c.l.b16 %v5896
        %v6471 = vunpack.c.h.b16 %v5896
        %v6472 = vunpack.c.l.b16 %v5897
        %v6473 = vunpack.c.h.b16 %v5897
        %v6474 = vunpack.c.l.b16 %v5898
        %v6475 = vunpack.c.l.b16 %v5899
        %v6476 = vunpack.c.h.b16 %v5899
        %v6477 = vunpack.c.l.b16 %v5900
        %v6478 = vunpack.c.h.b16 %v5900
        %v6479 = vunpack.c.l.b16 %v5901
        %v6480 = vunpack.c.h.b16 %v5901
        %v6481 = vunpack.c.l.b16 %v5902
        %v6482 = vunpack.c.h.b16 %v5902
        %v6483 = vunpack.c.l.b16 %v5903
        %v6484 = vunpack.c.l.b16 %v5904
        %v6485 = vunpack.c.h.b16 %v5904
        %v6486 = vunpack.c.l.b16 %v5905
        %v6487 = vunpack.c.h.b16 %v5905
        %v6488 = vunpack.c.l.b16 %v5906
        %v6489 = vunpack.c.h.b16 %v5906
        %v6490 = vunpack.c.l.b16 %v5907
        %v6491 = vunpack.c.h.b16 %v5907
        %v6492 = vunpack.c.l.b16 %v5908
        %v6493 = vunpack.c.l.b16 %v5909
        %v6494 = vunpack.c.h.b16 %v5909
        %v6495 = vunpack.c.l.b16 %v5910
        %v6496 = vunpack.c.h.b16 %v5910
        %v6497 = vunpack.c.l.b16 %v5911
        %v6498 = vunpack.c.h.b16 %v5911
        %v6499 = vunpack.c.l.b16 %v5912
        %v6500 = vunpack.c.h.b16 %v5912
        %v6501 = vunpack.c.l.b16 %v5913
        %v6502 = vunpack.c.l.b16 %v5914
        %v6503 = vunpack.c.h.b16 %v5914
        %v6504 = vunpack.c.l.b16 %v5915
        %v6505 = vunpack.c.h.b16 %v5915
        %v6506 = vunpack.c.l.b16 %v5916
        %v6507 = vunpack.c.h.b16 %v5916
        %v6508 = vunpack.c.l.b16 %v5917
        %v6509 = vunpack.c.h.b16 %v5917
        %v6510 = vunpack.c.l.b16 %v5918
        %v6511 = vpack.c.b16 %v6232, %v6223
        %v6512 = vpack.c.b16 %v6233, %v6224
        %v6513 = vpack.c.b16 %v6234, %v6225
        %v6514 = vpack.c.b16 %v6235, %v6226
        %v6515 = vpack.c.b16 %v6236, %v6227
        %v6516 = vpack.c.b16 %v6237, %v6228
        %v6517 = vpack.c.b16 %v6238, %v6229
        %v6518 = vpack.c.b16 %v6239, %v6230
        %v6519 = vpack.c.b16 %v6240, %v6231
        %v6520 = vpack.c.b16 %v6250, %v6241
        %v6521 = vpack.c.b16 %v6251, %v6242
        %v6522 = vpack.c.b16 %v6252, %v6243
        %v6523 = vpack.c.b16 %v6253, %v6244
        %v6524 = vpack.c.b16 %v6254, %v6245
        %v6525 = vpack.c.b16 %v6255, %v6246
        %v6526 = vpack.c.b16 %v6256, %v6247
        %v6527 = vpack.c.b16 %v6257, %v6248
        %v6528 = vpack.c.b16 %v6258, %v6249
        %v6529 = vpack.c.b16 %v6268, %v6259
        %v6530 = vpack.c.b16 %v6269, %v6260
        %v6531 = vpack.c.b16 %v6270, %v6261
        %v6532 = vpack.c.b16 %v6271, %v6262
        %v6533 = vpack.c.b16 %v6272, %v6263
        %v6534 = vpack.c.b16 %v6273, %v6264
        %v6535 = vpack.c.b16 %v6274, %v6265
        %v6536 = vpack.c.b16 %v6275, %v6266
        %v6537 = vpack.c.b16 %v6276, %v6267
        %v6538 = vpack.c.b16 %v6286, %v6277
        %v6539 = vpack.c.b16 %v6287, %v6278
        %v6540 = vpack.c.b16 %v6288, %v6279
        %v6541 = vpack.c.b16 %v6289, %v6280
        %v6542 = vpack.c.b16 %v6290, %v6281
        %v6543 = vpack.c.b16 %v6291, %v6282
        %v6544 = vpack.c.b16 %v6292, %v6283
        %v6545 = vpack.c.b16 %v6293, %v6284
        %v6546 = vpack.c.b16 %v6294, %v6285
        %v6547 = vpack.c.b16 %v6304, %v6295
        %v6548 = vpack.c.b16 %v6305, %v6296
        %v6549 = vpack.c.b16 %v6306, %v6297
        %v6550 = vpack.c.b16 %v6307, %v6298
        %v6551 = vpack.c.b16 %v6308, %v6299
        %v6552 = vpack.c.b16 %v6309, %v6300
        %v6553 = vpack.c.b16 %v6310, %v6301
        %v6554 = vpack.c.b16 %v6311, %v6302
        %v6555 = vpack.c.b16 %v6312, %v6303
        %v6556 = vpack.c.b16 %v6322, %v6313
        %v6557 = vpack.c.b16 %v6323, %v6314
        %v6558 = vpack.c.b16 %v6324, %v6315
        %v6559 = vpack.c.b16 %v6325, %v6316
        %v6560 = vpack.c.b16 %v6326, %v6317
        %v6561 = vpack.c.b16 %v6327, %v6318
        %v6562 = vpack.c.b16 %v6328, %v6319
        %v6563 = vpack.c.b16 %v6329, %v6320
        %v6564 = vpack.c.b16 %v6330, %v6321
        %v6565 = vpack.c.b16 %v6340, %v6331
        %v6566 = vpack.c.b16 %v6341, %v6332
        %v6567 = vpack.c.b16 %v6342, %v6333
        %v6568 = vpack.c.b16 %v6343, %v6334
        %v6569 = vpack.c.b16 %v6344, %v6335
        %v6570 = vpack.c.b16 %v6345, %v6336
        %v6571 = vpack.c.b16 %v6346, %v6337
        %v6572 = vpack.c.b16 %v6347, %v6338
        %v6573 = vpack.c.b16 %v6348, %v6339
        %v6574 = vpack.c.b16 %v6358, %v6349
        %v6575 = vpack.c.b16 %v6359, %v6350
        %v6576 = vpack.c.b16 %v6360, %v6351
        %v6577 = vpack.c.b16 %v6361, %v6352
        %v6578 = vpack.c.b16 %v6362, %v6353
        %v6579 = vpack.c.b16 %v6363, %v6354
        %v6580 = vpack.c.b16 %v6364, %v6355
        %v6581 = vpack.c.b16 %v6365, %v6356
        %v6582 = vpack.c.b16 %v6366, %v6357
        %v6583 = vpack.c.b16 %v6376, %v6367
        %v6584 = vpack.c.b16 %v6377, %v6368
        %v6585 = vpack.c.b16 %v6378, %v6369
        %v6586 = vpack.c.b16 %v6379, %v6370
        %v6587 = vpack.c.b16 %v6380, %v6371
        %v6588 = vpack.c.b16 %v6381, %v6372
        %v6589 = vpack.c.b16 %v6382, %v6373
        %v6590 = vpack.c.b16 %v6383, %v6374
        %v6591 = vpack.c.b16 %v6384, %v6375
        %v6592 = vpack.c.b16 %v6394, %v6385
        %v6593 = vpack.c.b16 %v6395, %v6386
        %v6594 = vpack.c.b16 %v6396, %v6387
        %v6595 = vpack.c.b16 %v6397, %v6388
        %v6596 = vpack.c.b16 %v6398, %v6389
        %v6597 = vpack.c.b16 %v6399, %v6390
        %v6598 = vpack.c.b16 %v6400, %v6391
        %v6599 = vpack.c.b16 %v6401, %v6392
        %v6600 = vpack.c.b16 %v6402, %v6393
        %v6601 = vpack.c.b16 %v6412, %v6403
        %v6602 = vpack.c.b16 %v6413, %v6404
        %v6603 = vpack.c.b16 %v6414, %v6405
        %v6604 = vpack.c.b16 %v6415, %v6406
        %v6605 = vpack.c.b16 %v6416, %v6407
        %v6606 = vpack.c.b16 %v6417, %v6408
        %v6607 = vpack.c.b16 %v6418, %v6409
        %v6608 = vpack.c.b16 %v6419, %v6410
        %v6609 = vpack.c.b16 %v6420, %v6411
        %v6610 = vpack.c.b16 %v6430, %v6421
        %v6611 = vpack.c.b16 %v6431, %v6422
        %v6612 = vpack.c.b16 %v6432, %v6423
        %v6613 = vpack.c.b16 %v6433, %v6424
        %v6614 = vpack.c.b16 %v6434, %v6425
        %v6615 = vpack.c.b16 %v6435, %v6426
        %v6616 = vpack.c.b16 %v6436, %v6427
        %v6617 = vpack.c.b16 %v6437, %v6428
        %v6618 = vpack.c.b16 %v6438, %v6429
        %v6619 = vpack.c.b16 %v6448, %v6439
        %v6620 = vpack.c.b16 %v6449, %v6440
        %v6621 = vpack.c.b16 %v6450, %v6441
        %v6622 = vpack.c.b16 %v6451, %v6442
        %v6623 = vpack.c.b16 %v6452, %v6443
        %v6624 = vpack.c.b16 %v6453, %v6444
        %v6625 = vpack.c.b16 %v6454, %v6445
        %v6626 = vpack.c.b16 %v6455, %v6446
        %v6627 = vpack.c.b16 %v6456, %v6447
        %v6628 = vpack.c.b16 %v6466, %v6457
        %v6629 = vpack.c.b16 %v6467, %v6458
        %v6630 = vpack.c.b16 %v6468, %v6459
        %v6631 = vpack.c.b16 %v6469, %v6460
        %v6632 = vpack.c.b16 %v6470, %v6461
        %v6633 = vpack.c.b16 %v6471, %v6462
        %v6634 = vpack.c.b16 %v6472, %v6463
        %v6635 = vpack.c.b16 %v6473, %v6464
        %v6636 = vpack.c.b16 %v6474, %v6465
        %v6637 = vpack.c.b16 %v6484, %v6475
        %v6638 = vpack.c.b16 %v6485, %v6476
        %v6639 = vpack.c.b16 %v6486, %v6477
        %v6640 = vpack.c.b16 %v6487, %v6478
        %v6641 = vpack.c.b16 %v6488, %v6479
        %v6642 = vpack.c.b16 %v6489, %v6480
        %v6643 = vpack.c.b16 %v6490, %v6481
        %v6644 = vpack.c.b16 %v6491, %v6482
        %v6645 = vpack.c.b16 %v6492, %v6483
        %v6646 = vpack.c.b16 %v6502, %v6493
        %v6647 = vpack.c.b16 %v6503, %v6494
        %v6648 = vpack.c.b16 %v6504, %v6495
        %v6649 = vpack.c.b16 %v6505, %v6496
        %v6650 = vpack.c.b16 %v6506, %v6497
        %v6651 = vpack.c.b16 %v6507, %v6498
        %v6652 = vpack.c.b16 %v6508, %v6499
        %v6653 = vpack.c.b16 %v6509, %v6500
        %v6654 = vpack.c.b16 %v6510, %v6501
        %v6943 = vunpack.c.l.b16 %v5919
        %v6944 = vunpack.c.l.b16 %v5920
        %v6945 = vunpack.c.l.b16 %v5921
        %v6946 = vunpack.c.l.b16 %v5922
        %v6947 = vunpack.c.l.b16 %v5923
        %v6948 = vunpack.c.l.b16 %v5924
        %v6949 = vunpack.c.l.b16 %v5925
        %v6950 = vunpack.c.l.b16 %v5926
        %v6951 = vunpack.c.l.b16 %v5927
        %v6952 = vunpack.c.l.b16 %v5928
        %v6953 = vunpack.c.l.b16 %v5929
        %v6954 = vunpack.c.l.b16 %v5930
        %v6955 = vunpack.c.l.b16 %v5931
        %v6956 = vunpack.c.l.b16 %v5932
        %v6957 = vunpack.c.l.b16 %v5933
        %v6958 = vunpack.c.l.b16 %v5934
        %v6959 = vunpack.c.l.b16 %v5935
        %v6960 = vunpack.c.l.b16 %v5936
        %v6961 = vunpack.c.l.b16 %v5937
        %v6962 = vunpack.c.l.b16 %v5938
        %v6963 = vunpack.c.l.b16 %v5939
        %v6964 = vunpack.c.l.b16 %v5940
        %v6965 = vunpack.c.l.b16 %v5941
        %v6966 = vunpack.c.l.b16 %v5942
        %v6967 = vunpack.c.l.b16 %v5943
        %v6968 = vunpack.c.l.b16 %v5944
        %v6969 = vunpack.c.l.b16 %v5945
        %v6970 = vunpack.c.l.b16 %v5946
        %v6971 = vunpack.c.l.b16 %v5947
        %v6972 = vunpack.c.l.b16 %v5948
        %v6973 = vunpack.c.l.b16 %v5949
        %v6974 = vunpack.c.l.b16 %v5950
        %v6975 = vunpack.c.l.b16 %v5951
        %v6976 = vunpack.c.l.b16 %v5952
        %v6977 = vunpack.c.l.b16 %v5953
        %v6978 = vunpack.c.l.b16 %v5954
        %v6979 = vunpack.c.l.b16 %v5955
        %v6980 = vunpack.c.l.b16 %v5956
        %v6981 = vunpack.c.l.b16 %v5957
        %v6982 = vunpack.c.l.b16 %v5958
        %v6983 = vunpack.c.l.b16 %v5959
        %v6984 = vunpack.c.l.b16 %v5960
        %v6985 = vunpack.c.l.b16 %v5961
        %v6986 = vunpack.c.l.b16 %v5962
        %v6987 = vunpack.c.l.b16 %v5963
        %v6988 = vunpack.c.l.b16 %v5964
        %v6989 = vunpack.c.l.b16 %v5965
        %v6990 = vunpack.c.l.b16 %v5966
        %v6991 = vunpack.c.l.b16 %v5967
        %v6992 = vunpack.c.l.b16 %v5968
        %v6993 = vunpack.c.l.b16 %v5969
        %v6994 = vunpack.c.l.b16 %v5970
        %v6995 = vunpack.c.l.b16 %v5971
        %v6996 = vunpack.c.l.b16 %v5972
        %v6997 = vunpack.c.l.b16 %v5973
        %v6998 = vunpack.c.l.b16 %v5974
        %v6999 = vunpack.c.l.b16 %v5975
        %v7000 = vunpack.c.l.b16 %v5976
        %v7001 = vunpack.c.l.b16 %v5977
        %v7002 = vunpack.c.l.b16 %v5978
        %v7003 = vunpack.c.l.b16 %v5979
        %v7004 = vunpack.c.l.b16 %v5980
        %v7005 = vunpack.c.l.b16 %v5981
        %v7006 = vunpack.c.l.b16 %v5982
        %v7007 = vunpack.c.l.b16 %v5983
        %v7008 = vunpack.c.l.b16 %v5984
        %v7009 = vunpack.c.l.b16 %v5985
        %v7010 = vunpack.c.l.b16 %v5986
        %v7011 = vunpack.c.l.b16 %v5987
        %v7012 = vunpack.c.l.b16 %v5988
        %v7013 = vunpack.c.l.b16 %v5989
        %v7014 = vunpack.c.l.b16 %v5990
        %v7015 = vunpack.c.l.b16 %v5991
        %v7016 = vunpack.c.l.b16 %v5992
        %v7017 = vunpack.c.l.b16 %v5993
        %v7018 = vunpack.c.l.b16 %v5994
        %v7019 = vunpack.c.l.b16 %v5995
        %v7020 = vunpack.c.l.b16 %v5996
        %v7021 = vunpack.c.l.b16 %v5997
        %v7022 = vunpack.c.l.b16 %v5998
        %v7023 = vunpack.c.l.b16 %v5999
        %v7024 = vunpack.c.l.b16 %v6000
        %v7025 = vunpack.c.l.b16 %v6001
        %v7026 = vunpack.c.l.b16 %v6002
        %v7027 = vunpack.c.l.b16 %v6003
        %v7028 = vunpack.c.l.b16 %v6004
        %v7029 = vunpack.c.l.b16 %v6005
        %v7030 = vunpack.c.l.b16 %v6006
        %v7031 = vunpack.c.l.b16 %v6007
        %v7032 = vunpack.c.l.b16 %v6008
        %v7033 = vunpack.c.l.b16 %v6009
        %v7034 = vunpack.c.l.b16 %v6010
        %v7035 = vunpack.c.l.b16 %v6011
        %v7036 = vunpack.c.l.b16 %v6012
        %v7037 = vunpack.c.l.b16 %v6013
        %v7038 = vunpack.c.l.b16 %v6014
        %v7039 = vunpack.c.l.b16 %v6015
        %v7040 = vunpack.c.l.b16 %v6016
        %v7041 = vunpack.c.l.b16 %v6017
        %v7042 = vunpack.c.l.b16 %v6018
        %v7043 = vunpack.c.l.b16 %v6019
        %v7044 = vunpack.c.l.b16 %v6020
        %v7045 = vunpack.c.l.b16 %v6021
        %v7046 = vunpack.c.l.b16 %v6022
        %v7047 = vunpack.c.l.b16 %v6023
        %v7048 = vunpack.c.l.b16 %v6024
        %v7049 = vunpack.c.l.b16 %v6025
        %v7050 = vunpack.c.l.b16 %v6026
        %v7051 = vunpack.c.l.b16 %v6027
        %v7052 = vunpack.c.l.b16 %v6028
        %v7053 = vunpack.c.l.b16 %v6029
        %v7054 = vunpack.c.l.b16 %v6030
        %v7055 = vunpack.c.l.b16 %v6031
        %v7056 = vunpack.c.l.b16 %v6032
        %v7057 = vunpack.c.l.b16 %v6033
        %v7058 = vunpack.c.l.b16 %v6034
        %v7059 = vunpack.c.l.b16 %v6035
        %v7060 = vunpack.c.l.b16 %v6036
        %v7061 = vunpack.c.l.b16 %v6037
        %v7062 = vunpack.c.l.b16 %v6038
        %v7063 = vunpack.c.l.b16 %v6039
        %v7064 = vunpack.c.l.b16 %v6040
        %v7065 = vunpack.c.l.b16 %v6041
        %v7066 = vunpack.c.l.b16 %v6042
        %v7067 = vunpack.c.l.b16 %v6043
        %v7068 = vunpack.c.l.b16 %v6044
        %v7069 = vunpack.c.l.b16 %v6045
        %v7070 = vunpack.c.l.b16 %v6046
        %v7071 = vunpack.c.l.b16 %v6047
        %v7072 = vunpack.c.l.b16 %v6048
        %v7073 = vunpack.c.l.b16 %v6049
        %v7074 = vunpack.c.l.b16 %v6050
        %v7075 = vunpack.c.l.b16 %v6051
        %v7076 = vunpack.c.l.b16 %v6052
        %v7077 = vunpack.c.l.b16 %v6053
        %v7078 = vunpack.c.l.b16 %v6054
        %v7079 = vunpack.c.l.b16 %v6055
        %v7080 = vunpack.c.l.b16 %v6056
        %v7081 = vunpack.c.l.b16 %v6057
        %v7082 = vunpack.c.l.b16 %v6058
        %v7083 = vunpack.c.l.b16 %v6059
        %v7084 = vunpack.c.l.b16 %v6060
        %v7085 = vunpack.c.l.b16 %v6061
        %v7086 = vunpack.c.l.b16 %v6062
        %v7087 = vpack.c.b16 %v6944, %v6943
        %v7088 = vpack.c.b16 %v6946, %v6945
        %v7089 = vpack.c.b16 %v6948, %v6947
        %v7090 = vpack.c.b16 %v6950, %v6949
        %v7091 = vpack.c.b16 %v6952, %v6951
        %v7092 = vpack.c.b16 %v6954, %v6953
        %v7093 = vpack.c.b16 %v6956, %v6955
        %v7094 = vpack.c.b16 %v6958, %v6957
        %v7095 = vpack.c.b16 %v6960, %v6959
        %v7096 = vpack.c.b16 %v6962, %v6961
        %v7097 = vpack.c.b16 %v6964, %v6963
        %v7098 = vpack.c.b16 %v6966, %v6965
        %v7099 = vpack.c.b16 %v6968, %v6967
        %v7100 = vpack.c.b16 %v6970, %v6969
        %v7101 = vpack.c.b16 %v6972, %v6971
        %v7102 = vpack.c.b16 %v6974, %v6973
        %v7103 = vpack.c.b16 %v6976, %v6975
        %v7104 = vpack.c.b16 %v6978, %v6977
        %v7105 = vpack.c.b16 %v6980, %v6979
        %v7106 = vpack.c.b16 %v6982, %v6981
        %v7107 = vpack.c.b16 %v6984, %v6983
        %v7108 = vpack.c.b16 %v6986, %v6985
        %v7109 = vpack.c.b16 %v6988, %v6987
        %v7110 = vpack.c.b16 %v6990, %v6989
        %v7111 = vpack.c.b16 %v6992, %v6991
        %v7112 = vpack.c.b16 %v6994, %v6993
        %v7113 = vpack.c.b16 %v6996, %v6995
        %v7114 = vpack.c.b16 %v6998, %v6997
        %v7115 = vpack.c.b16 %v7000, %v6999
        %v7116 = vpack.c.b16 %v7002, %v7001
        %v7117 = vpack.c.b16 %v7004, %v7003
        %v7118 = vpack.c.b16 %v7006, %v7005
        %v7119 = vpack.c.b16 %v7008, %v7007
        %v7120 = vpack.c.b16 %v7010, %v7009
        %v7121 = vpack.c.b16 %v7012, %v7011
        %v7122 = vpack.c.b16 %v7014, %v7013
        %v7123 = vpack.c.b16 %v7016, %v7015
        %v7124 = vpack.c.b16 %v7018, %v7017
        %v7125 = vpack.c.b16 %v7020, %v7019
        %v7126 = vpack.c.b16 %v7022, %v7021
        %v7127 = vpack.c.b16 %v7024, %v7023
        %v7128 = vpack.c.b16 %v7026, %v7025
        %v7129 = vpack.c.b16 %v7028, %v7027
        %v7130 = vpack.c.b16 %v7030, %v7029
        %v7131 = vpack.c.b16 %v7032, %v7031
        %v7132 = vpack.c.b16 %v7034, %v7033
        %v7133 = vpack.c.b16 %v7036, %v7035
        %v7134 = vpack.c.b16 %v7038, %v7037
        %v7135 = vpack.c.b16 %v7040, %v7039
        %v7136 = vpack.c.b16 %v7042, %v7041
        %v7137 = vpack.c.b16 %v7044, %v7043
        %v7138 = vpack.c.b16 %v7046, %v7045
        %v7139 = vpack.c.b16 %v7048, %v7047
        %v7140 = vpack.c.b16 %v7050, %v7049
        %v7141 = vpack.c.b16 %v7052, %v7051
        %v7142 = vpack.c.b16 %v7054, %v7053
        %v7143 = vpack.c.b16 %v7056, %v7055
        %v7144 = vpack.c.b16 %v7058, %v7057
        %v7145 = vpack.c.b16 %v7060, %v7059
        %v7146 = vpack.c.b16 %v7062, %v7061
        %v7147 = vpack.c.b16 %v7064, %v7063
        %v7148 = vpack.c.b16 %v7066, %v7065
        %v7149 = vpack.c.b16 %v7068, %v7067
        %v7150 = vpack.c.b16 %v7070, %v7069
        %v7151 = vpack.c.b16 %v7072, %v7071
        %v7152 = vpack.c.b16 %v7074, %v7073
        %v7153 = vpack.c.b16 %v7076, %v7075
        %v7154 = vpack.c.b16 %v7078, %v7077
        %v7155 = vpack.c.b16 %v7080, %v7079
        %v7156 = vpack.c.b16 %v7082, %v7081
        %v7157 = vpack.c.b16 %v7084, %v7083
        %v7158 = vpack.c.b16 %v7086, %v7085
        %7231 = vmatpush.bf16.msra.mxu0 %v7094
        %7232 = vmatpush.bf16.msra.mxu0 %v7093
        %7233 = vmatpush.bf16.msra.mxu0 %v7092
        %7234 = vmatpush.bf16.msra.mxu0 %v7091
        %7235 = vmatpush.bf16.msra.mxu0 %v7090
        %7236 = vmatpush.bf16.msra.mxu0 %v7089
        %7237 = vmatpush.bf16.msra.mxu0 %v7088
        %7238 = vmatpush.bf16.msra.mxu0 %v7087
        %7239 = vmatmul.bf16.gmra.mxu0 %v6511
        %v7240 = vpop.f32.mrf.mxu0
        %v7241 = vadd.f32 0.0, %v7240
        %v7242 = vpop.f32.mrf.mxu0
        %v7243 = vadd.f32 0.0, %v7242
        %7244 = vmatmul.bf16.gmra.mxu0 %v6520
        %v7245 = vpop.f32.mrf.mxu0
        %v7246 = vadd.f32 0.0, %v7245
        %v7247 = vpop.f32.mrf.mxu0
        %v7248 = vadd.f32 0.0, %v7247
        %7249 = vmatmul.bf16.gmra.mxu0 %v6529
        %v7250 = vpop.f32.mrf.mxu0
        %v7251 = vadd.f32 0.0, %v7250
        %v7252 = vpop.f32.mrf.mxu0
        %v7253 = vadd.f32 0.0, %v7252
        %7254 = vmatmul.bf16.gmra.mxu0 %v6538
        %v7255 = vpop.f32.mrf.mxu0
        %v7256 = vadd.f32 0.0, %v7255
        %v7257 = vpop.f32.mrf.mxu0
        %v7258 = vadd.f32 0.0, %v7257
        %7259 = vmatmul.bf16.gmra.mxu0 %v6547
        %v7260 = vpop.f32.mrf.mxu0
        %v7261 = vadd.f32 0.0, %v7260
        %v7262 = vpop.f32.mrf.mxu0
        %v7263 = vadd.f32 0.0, %v7262
        %7264 = vmatmul.bf16.gmra.mxu0 %v6556
        %v7265 = vpop.f32.mrf.mxu0
        %v7266 = vadd.f32 0.0, %v7265
        %v7267 = vpop.f32.mrf.mxu0
        %v7268 = vadd.f32 0.0, %v7267
        %7269 = vmatmul.bf16.gmra.mxu0 %v6565
        %v7270 = vpop.f32.mrf.mxu0
        %v7271 = vadd.f32 0.0, %v7270
        %v7272 = vpop.f32.mrf.mxu0
        %v7273 = vadd.f32 0.0, %v7272
        %7274 = vmatmul.bf16.gmra.mxu0 %v6574
        %v7275 = vpop.f32.mrf.mxu0
        %v7276 = vadd.f32 0.0, %v7275
        %v7277 = vpop.f32.mrf.mxu0
        %v7278 = vadd.f32 0.0, %v7277
        %7279 = vmatmul.bf16.gmra.mxu0 %v6583
        %v7280 = vpop.f32.mrf.mxu0
        %v7281 = vadd.f32 0.0, %v7280
        %v7282 = vpop.f32.mrf.mxu0
        %v7283 = vadd.f32 0.0, %v7282
        %7284 = vmatmul.bf16.gmra.mxu0 %v6592
        %v7285 = vpop.f32.mrf.mxu0
        %v7286 = vadd.f32 0.0, %v7285
        %v7287 = vpop.f32.mrf.mxu0
        %v7288 = vadd.f32 0.0, %v7287
        %7289 = vmatmul.bf16.gmra.mxu0 %v6601
        %v7290 = vpop.f32.mrf.mxu0
        %v7291 = vadd.f32 0.0, %v7290
        %v7292 = vpop.f32.mrf.mxu0
        %v7293 = vadd.f32 0.0, %v7292
        %7294 = vmatmul.bf16.gmra.mxu0 %v6610
        %v7295 = vpop.f32.mrf.mxu0
        %v7296 = vadd.f32 0.0, %v7295
        %v7297 = vpop.f32.mrf.mxu0
        %v7298 = vadd.f32 0.0, %v7297
        %7299 = vmatmul.bf16.gmra.mxu0 %v6619
        %v7300 = vpop.f32.mrf.mxu0
        %v7301 = vadd.f32 0.0, %v7300
        %v7302 = vpop.f32.mrf.mxu0
        %v7303 = vadd.f32 0.0, %v7302
        %7304 = vmatmul.bf16.gmra.mxu0 %v6628
        %v7305 = vpop.f32.mrf.mxu0
        %v7306 = vadd.f32 0.0, %v7305
        %v7307 = vpop.f32.mrf.mxu0
        %v7308 = vadd.f32 0.0, %v7307
        %7309 = vmatmul.bf16.gmra.mxu0 %v6637
        %v7310 = vpop.f32.mrf.mxu0
        %v7311 = vadd.f32 0.0, %v7310
        %v7312 = vpop.f32.mrf.mxu0
        %v7313 = vadd.f32 0.0, %v7312
        %7314 = vmatmul.bf16.gmra.mxu0 %v6646
        %v7315 = vpop.f32.mrf.mxu0
        %v7316 = vadd.f32 0.0, %v7315
        %v7317 = vpop.f32.mrf.mxu0
        %v7318 = vadd.f32 0.0, %v7317
        %7319 = vdwg.mxu0
        %7320 = vmatpush.bf16.msra.mxu0 %v7102
        %7321 = vmatpush.bf16.msra.mxu0 %v7101
        %7322 = vmatpush.bf16.msra.mxu0 %v7100
        %7323 = vmatpush.bf16.msra.mxu0 %v7099
        %7324 = vmatpush.bf16.msra.mxu0 %v7098
        %7325 = vmatpush.bf16.msra.mxu0 %v7097
        %7326 = vmatpush.bf16.msra.mxu0 %v7096
        %7327 = vmatpush.bf16.msra.mxu0 %v7095
        %7328 = vmatmul.bf16.gmra.mxu0 %v6512
        %v7329 = vpop.f32.mrf.mxu0
        %v7330 = vadd.f32 %v7241, %v7329
        %v7331 = vpop.f32.mrf.mxu0
        %v7332 = vadd.f32 %v7243, %v7331
        %7333 = vmatmul.bf16.gmra.mxu0 %v6521
        %v7334 = vpop.f32.mrf.mxu0
        %v7335 = vadd.f32 %v7246, %v7334
        %v7336 = vpop.f32.mrf.mxu0
        %v7337 = vadd.f32 %v7248, %v7336
        %7338 = vmatmul.bf16.gmra.mxu0 %v6530
        %v7339 = vpop.f32.mrf.mxu0
        %v7340 = vadd.f32 %v7251, %v7339
        %v7341 = vpop.f32.mrf.mxu0
        %v7342 = vadd.f32 %v7253, %v7341
        %7343 = vmatmul.bf16.gmra.mxu0 %v6539
        %v7344 = vpop.f32.mrf.mxu0
        %v7345 = vadd.f32 %v7256, %v7344
        %v7346 = vpop.f32.mrf.mxu0
        %v7347 = vadd.f32 %v7258, %v7346
        %7348 = vmatmul.bf16.gmra.mxu0 %v6548
        %v7349 = vpop.f32.mrf.mxu0
        %v7350 = vadd.f32 %v7261, %v7349
        %v7351 = vpop.f32.mrf.mxu0
        %v7352 = vadd.f32 %v7263, %v7351
        %7353 = vmatmul.bf16.gmra.mxu0 %v6557
        %v7354 = vpop.f32.mrf.mxu0
        %v7355 = vadd.f32 %v7266, %v7354
        %v7356 = vpop.f32.mrf.mxu0
        %v7357 = vadd.f32 %v7268, %v7356
        %7358 = vmatmul.bf16.gmra.mxu0 %v6566
        %v7359 = vpop.f32.mrf.mxu0
        %v7360 = vadd.f32 %v7271, %v7359
        %v7361 = vpop.f32.mrf.mxu0
        %v7362 = vadd.f32 %v7273, %v7361
        %7363 = vmatmul.bf16.gmra.mxu0 %v6575
        %v7364 = vpop.f32.mrf.mxu0
        %v7365 = vadd.f32 %v7276, %v7364
        %v7366 = vpop.f32.mrf.mxu0
        %v7367 = vadd.f32 %v7278, %v7366
        %7368 = vmatmul.bf16.gmra.mxu0 %v6584
        %v7369 = vpop.f32.mrf.mxu0
        %v7370 = vadd.f32 %v7281, %v7369
        %v7371 = vpop.f32.mrf.mxu0
        %v7372 = vadd.f32 %v7283, %v7371
        %7373 = vmatmul.bf16.gmra.mxu0 %v6593
        %v7374 = vpop.f32.mrf.mxu0
        %v7375 = vadd.f32 %v7286, %v7374
        %v7376 = vpop.f32.mrf.mxu0
        %v7377 = vadd.f32 %v7288, %v7376
        %7378 = vmatmul.bf16.gmra.mxu0 %v6602
        %v7379 = vpop.f32.mrf.mxu0
        %v7380 = vadd.f32 %v7291, %v7379
        %v7381 = vpop.f32.mrf.mxu0
        %v7382 = vadd.f32 %v7293, %v7381
        %7383 = vmatmul.bf16.gmra.mxu0 %v6611
        %v7384 = vpop.f32.mrf.mxu0
        %v7385 = vadd.f32 %v7296, %v7384
        %v7386 = vpop.f32.mrf.mxu0
        %v7387 = vadd.f32 %v7298, %v7386
        %7388 = vmatmul.bf16.gmra.mxu0 %v6620
        %v7389 = vpop.f32.mrf.mxu0
        %v7390 = vadd.f32 %v7301, %v7389
        %v7391 = vpop.f32.mrf.mxu0
        %v7392 = vadd.f32 %v7303, %v7391
        %7393 = vmatmul.bf16.gmra.mxu0 %v6629
        %v7394 = vpop.f32.mrf.mxu0
        %v7395 = vadd.f32 %v7306, %v7394
        %v7396 = vpop.f32.mrf.mxu0
        %v7397 = vadd.f32 %v7308, %v7396
        %7398 = vmatmul.bf16.gmra.mxu0 %v6638
        %v7399 = vpop.f32.mrf.mxu0
        %v7400 = vadd.f32 %v7311, %v7399
        %v7401 = vpop.f32.mrf.mxu0
        %v7402 = vadd.f32 %v7313, %v7401
        %7403 = vmatmul.bf16.gmra.mxu0 %v6647
        %v7404 = vpop.f32.mrf.mxu0
        %v7405 = vadd.f32 %v7316, %v7404
        %v7406 = vpop.f32.mrf.mxu0
        %v7407 = vadd.f32 %v7318, %v7406
        %7408 = vdwg.mxu0
        %7409 = vmatpush.bf16.msra.mxu0 %v7110
        %7410 = vmatpush.bf16.msra.mxu0 %v7109
        %7411 = vmatpush.bf16.msra.mxu0 %v7108
        %7412 = vmatpush.bf16.msra.mxu0 %v7107
        %7413 = vmatpush.bf16.msra.mxu0 %v7106
        %7414 = vmatpush.bf16.msra.mxu0 %v7105
        %7415 = vmatpush.bf16.msra.mxu0 %v7104
        %7416 = vmatpush.bf16.msra.mxu0 %v7103
        %7417 = vmatmul.bf16.gmra.mxu0 %v6513
        %v7418 = vpop.f32.mrf.mxu0
        %v7419 = vadd.f32 %v7330, %v7418
        %v7420 = vpop.f32.mrf.mxu0
        %v7421 = vadd.f32 %v7332, %v7420
        %7422 = vmatmul.bf16.gmra.mxu0 %v6522
        %v7423 = vpop.f32.mrf.mxu0
        %v7424 = vadd.f32 %v7335, %v7423
        %v7425 = vpop.f32.mrf.mxu0
        %v7426 = vadd.f32 %v7337, %v7425
        %7427 = vmatmul.bf16.gmra.mxu0 %v6531
        %v7428 = vpop.f32.mrf.mxu0
        %v7429 = vadd.f32 %v7340, %v7428
        %v7430 = vpop.f32.mrf.mxu0
        %v7431 = vadd.f32 %v7342, %v7430
        %7432 = vmatmul.bf16.gmra.mxu0 %v6540
        %v7433 = vpop.f32.mrf.mxu0
        %v7434 = vadd.f32 %v7345, %v7433
        %v7435 = vpop.f32.mrf.mxu0
        %v7436 = vadd.f32 %v7347, %v7435
        %7437 = vmatmul.bf16.gmra.mxu0 %v6549
        %v7438 = vpop.f32.mrf.mxu0
        %v7439 = vadd.f32 %v7350, %v7438
        %v7440 = vpop.f32.mrf.mxu0
        %v7441 = vadd.f32 %v7352, %v7440
        %7442 = vmatmul.bf16.gmra.mxu0 %v6558
        %v7443 = vpop.f32.mrf.mxu0
        %v7444 = vadd.f32 %v7355, %v7443
        %v7445 = vpop.f32.mrf.mxu0
        %v7446 = vadd.f32 %v7357, %v7445
        %7447 = vmatmul.bf16.gmra.mxu0 %v6567
        %v7448 = vpop.f32.mrf.mxu0
        %v7449 = vadd.f32 %v7360, %v7448
        %v7450 = vpop.f32.mrf.mxu0
        %v7451 = vadd.f32 %v7362, %v7450
        %7452 = vmatmul.bf16.gmra.mxu0 %v6576
        %v7453 = vpop.f32.mrf.mxu0
        %v7454 = vadd.f32 %v7365, %v7453
        %v7455 = vpop.f32.mrf.mxu0
        %v7456 = vadd.f32 %v7367, %v7455
        %7457 = vmatmul.bf16.gmra.mxu0 %v6585
        %v7458 = vpop.f32.mrf.mxu0
        %v7459 = vadd.f32 %v7370, %v7458
        %v7460 = vpop.f32.mrf.mxu0
        %v7461 = vadd.f32 %v7372, %v7460
        %7462 = vmatmul.bf16.gmra.mxu0 %v6594
        %v7463 = vpop.f32.mrf.mxu0
        %v7464 = vadd.f32 %v7375, %v7463
        %v7465 = vpop.f32.mrf.mxu0
        %v7466 = vadd.f32 %v7377, %v7465
        %7467 = vmatmul.bf16.gmra.mxu0 %v6603
        %v7468 = vpop.f32.mrf.mxu0
        %v7469 = vadd.f32 %v7380, %v7468
        %v7470 = vpop.f32.mrf.mxu0
        %v7471 = vadd.f32 %v7382, %v7470
        %7472 = vmatmul.bf16.gmra.mxu0 %v6612
        %v7473 = vpop.f32.mrf.mxu0
        %v7474 = vadd.f32 %v7385, %v7473
        %v7475 = vpop.f32.mrf.mxu0
        %v7476 = vadd.f32 %v7387, %v7475
        %7477 = vmatmul.bf16.gmra.mxu0 %v6621
        %v7478 = vpop.f32.mrf.mxu0
        %v7479 = vadd.f32 %v7390, %v7478
        %v7480 = vpop.f32.mrf.mxu0
        %v7481 = vadd.f32 %v7392, %v7480
        %7482 = vmatmul.bf16.gmra.mxu0 %v6630
        %v7483 = vpop.f32.mrf.mxu0
        %v7484 = vadd.f32 %v7395, %v7483
        %v7485 = vpop.f32.mrf.mxu0
        %v7486 = vadd.f32 %v7397, %v7485
        %7487 = vmatmul.bf16.gmra.mxu0 %v6639
        %v7488 = vpop.f32.mrf.mxu0
        %v7489 = vadd.f32 %v7400, %v7488
        %v7490 = vpop.f32.mrf.mxu0
        %v7491 = vadd.f32 %v7402, %v7490
        %7492 = vmatmul.bf16.gmra.mxu0 %v6648
        %v7493 = vpop.f32.mrf.mxu0
        %v7494 = vadd.f32 %v7405, %v7493
        %v7495 = vpop.f32.mrf.mxu0
        %v7496 = vadd.f32 %v7407, %v7495
        %7497 = vdwg.mxu0
        %7498 = vmatpush.bf16.msra.mxu0 %v7118
        %7499 = vmatpush.bf16.msra.mxu0 %v7117
        %7500 = vmatpush.bf16.msra.mxu0 %v7116
        %7501 = vmatpush.bf16.msra.mxu0 %v7115
        %7502 = vmatpush.bf16.msra.mxu0 %v7114
        %7503 = vmatpush.bf16.msra.mxu0 %v7113
        %7504 = vmatpush.bf16.msra.mxu0 %v7112
        %7505 = vmatpush.bf16.msra.mxu0 %v7111
        %7506 = vmatmul.bf16.gmra.mxu0 %v6514
        %v7507 = vpop.f32.mrf.mxu0
        %v7508 = vadd.f32 %v7419, %v7507
        %v7509 = vpop.f32.mrf.mxu0
        %v7510 = vadd.f32 %v7421, %v7509
        %7511 = vmatmul.bf16.gmra.mxu0 %v6523
        %v7512 = vpop.f32.mrf.mxu0
        %v7513 = vadd.f32 %v7424, %v7512
        %v7514 = vpop.f32.mrf.mxu0
        %v7515 = vadd.f32 %v7426, %v7514
        %7516 = vmatmul.bf16.gmra.mxu0 %v6532
        %v7517 = vpop.f32.mrf.mxu0
        %v7518 = vadd.f32 %v7429, %v7517
        %v7519 = vpop.f32.mrf.mxu0
        %v7520 = vadd.f32 %v7431, %v7519
        %7521 = vmatmul.bf16.gmra.mxu0 %v6541
        %v7522 = vpop.f32.mrf.mxu0
        %v7523 = vadd.f32 %v7434, %v7522
        %v7524 = vpop.f32.mrf.mxu0
        %v7525 = vadd.f32 %v7436, %v7524
        %7526 = vmatmul.bf16.gmra.mxu0 %v6550
        %v7527 = vpop.f32.mrf.mxu0
        %v7528 = vadd.f32 %v7439, %v7527
        %v7529 = vpop.f32.mrf.mxu0
        %v7530 = vadd.f32 %v7441, %v7529
        %7531 = vmatmul.bf16.gmra.mxu0 %v6559
        %v7532 = vpop.f32.mrf.mxu0
        %v7533 = vadd.f32 %v7444, %v7532
        %v7534 = vpop.f32.mrf.mxu0
        %v7535 = vadd.f32 %v7446, %v7534
        %7536 = vmatmul.bf16.gmra.mxu0 %v6568
        %v7537 = vpop.f32.mrf.mxu0
        %v7538 = vadd.f32 %v7449, %v7537
        %v7539 = vpop.f32.mrf.mxu0
        %v7540 = vadd.f32 %v7451, %v7539
        %7541 = vmatmul.bf16.gmra.mxu0 %v6577
        %v7542 = vpop.f32.mrf.mxu0
        %v7543 = vadd.f32 %v7454, %v7542
        %v7544 = vpop.f32.mrf.mxu0
        %v7545 = vadd.f32 %v7456, %v7544
        %7546 = vmatmul.bf16.gmra.mxu0 %v6586
        %v7547 = vpop.f32.mrf.mxu0
        %v7548 = vadd.f32 %v7459, %v7547
        %v7549 = vpop.f32.mrf.mxu0
        %v7550 = vadd.f32 %v7461, %v7549
        %7551 = vmatmul.bf16.gmra.mxu0 %v6595
        %v7552 = vpop.f32.mrf.mxu0
        %v7553 = vadd.f32 %v7464, %v7552
        %v7554 = vpop.f32.mrf.mxu0
        %v7555 = vadd.f32 %v7466, %v7554
        %7556 = vmatmul.bf16.gmra.mxu0 %v6604
        %v7557 = vpop.f32.mrf.mxu0
        %v7558 = vadd.f32 %v7469, %v7557
        %v7559 = vpop.f32.mrf.mxu0
        %v7560 = vadd.f32 %v7471, %v7559
        %7561 = vmatmul.bf16.gmra.mxu0 %v6613
        %v7562 = vpop.f32.mrf.mxu0
        %v7563 = vadd.f32 %v7474, %v7562
        %v7564 = vpop.f32.mrf.mxu0
        %v7565 = vadd.f32 %v7476, %v7564
        %7566 = vmatmul.bf16.gmra.mxu0 %v6622
        %v7567 = vpop.f32.mrf.mxu0
        %v7568 = vadd.f32 %v7479, %v7567
        %v7569 = vpop.f32.mrf.mxu0
        %v7570 = vadd.f32 %v7481, %v7569
        %7571 = vmatmul.bf16.gmra.mxu0 %v6631
        %v7572 = vpop.f32.mrf.mxu0
        %v7573 = vadd.f32 %v7484, %v7572
        %v7574 = vpop.f32.mrf.mxu0
        %v7575 = vadd.f32 %v7486, %v7574
        %7576 = vmatmul.bf16.gmra.mxu0 %v6640
        %v7577 = vpop.f32.mrf.mxu0
        %v7578 = vadd.f32 %v7489, %v7577
        %v7579 = vpop.f32.mrf.mxu0
        %v7580 = vadd.f32 %v7491, %v7579
        %7581 = vmatmul.bf16.gmra.mxu0 %v6649
        %v7582 = vpop.f32.mrf.mxu0
        %v7583 = vadd.f32 %v7494, %v7582
        %v7584 = vpop.f32.mrf.mxu0
        %v7585 = vadd.f32 %v7496, %v7584
        %7586 = vdwg.mxu0
        %7587 = vmatpush.bf16.msra.mxu0 %v7126
        %7588 = vmatpush.bf16.msra.mxu0 %v7125
        %7589 = vmatpush.bf16.msra.mxu0 %v7124
        %7590 = vmatpush.bf16.msra.mxu0 %v7123
        %7591 = vmatpush.bf16.msra.mxu0 %v7122
        %7592 = vmatpush.bf16.msra.mxu0 %v7121
        %7593 = vmatpush.bf16.msra.mxu0 %v7120
        %7594 = vmatpush.bf16.msra.mxu0 %v7119
        %7595 = vmatmul.bf16.gmra.mxu0 %v6515
        %v7596 = vpop.f32.mrf.mxu0
        %v7597 = vadd.f32 %v7508, %v7596
        %v7598 = vpop.f32.mrf.mxu0
        %v7599 = vadd.f32 %v7510, %v7598
        %7600 = vmatmul.bf16.gmra.mxu0 %v6524
        %v7601 = vpop.f32.mrf.mxu0
        %v7602 = vadd.f32 %v7513, %v7601
        %v7603 = vpop.f32.mrf.mxu0
        %v7604 = vadd.f32 %v7515, %v7603
        %7605 = vmatmul.bf16.gmra.mxu0 %v6533
        %v7606 = vpop.f32.mrf.mxu0
        %v7607 = vadd.f32 %v7518, %v7606
        %v7608 = vpop.f32.mrf.mxu0
        %v7609 = vadd.f32 %v7520, %v7608
        %7610 = vmatmul.bf16.gmra.mxu0 %v6542
        %v7611 = vpop.f32.mrf.mxu0
        %v7612 = vadd.f32 %v7523, %v7611
        %v7613 = vpop.f32.mrf.mxu0
        %v7614 = vadd.f32 %v7525, %v7613
        %7615 = vmatmul.bf16.gmra.mxu0 %v6551
        %v7616 = vpop.f32.mrf.mxu0
        %v7617 = vadd.f32 %v7528, %v7616
        %v7618 = vpop.f32.mrf.mxu0
        %v7619 = vadd.f32 %v7530, %v7618
        %7620 = vmatmul.bf16.gmra.mxu0 %v6560
        %v7621 = vpop.f32.mrf.mxu0
        %v7622 = vadd.f32 %v7533, %v7621
        %v7623 = vpop.f32.mrf.mxu0
        %v7624 = vadd.f32 %v7535, %v7623
        %7625 = vmatmul.bf16.gmra.mxu0 %v6569
        %v7626 = vpop.f32.mrf.mxu0
        %v7627 = vadd.f32 %v7538, %v7626
        %v7628 = vpop.f32.mrf.mxu0
        %v7629 = vadd.f32 %v7540, %v7628
        %7630 = vmatmul.bf16.gmra.mxu0 %v6578
        %v7631 = vpop.f32.mrf.mxu0
        %v7632 = vadd.f32 %v7543, %v7631
        %v7633 = vpop.f32.mrf.mxu0
        %v7634 = vadd.f32 %v7545, %v7633
        %7635 = vmatmul.bf16.gmra.mxu0 %v6587
        %v7636 = vpop.f32.mrf.mxu0
        %v7637 = vadd.f32 %v7548, %v7636
        %v7638 = vpop.f32.mrf.mxu0
        %v7639 = vadd.f32 %v7550, %v7638
        %7640 = vmatmul.bf16.gmra.mxu0 %v6596
        %v7641 = vpop.f32.mrf.mxu0
        %v7642 = vadd.f32 %v7553, %v7641
        %v7643 = vpop.f32.mrf.mxu0
        %v7644 = vadd.f32 %v7555, %v7643
        %7645 = vmatmul.bf16.gmra.mxu0 %v6605
        %v7646 = vpop.f32.mrf.mxu0
        %v7647 = vadd.f32 %v7558, %v7646
        %v7648 = vpop.f32.mrf.mxu0
        %v7649 = vadd.f32 %v7560, %v7648
        %7650 = vmatmul.bf16.gmra.mxu0 %v6614
        %v7651 = vpop.f32.mrf.mxu0
        %v7652 = vadd.f32 %v7563, %v7651
        %v7653 = vpop.f32.mrf.mxu0
        %v7654 = vadd.f32 %v7565, %v7653
        %7655 = vmatmul.bf16.gmra.mxu0 %v6623
        %v7656 = vpop.f32.mrf.mxu0
        %v7657 = vadd.f32 %v7568, %v7656
        %v7658 = vpop.f32.mrf.mxu0
        %v7659 = vadd.f32 %v7570, %v7658
        %7660 = vmatmul.bf16.gmra.mxu0 %v6632
        %v7661 = vpop.f32.mrf.mxu0
        %v7662 = vadd.f32 %v7573, %v7661
        %v7663 = vpop.f32.mrf.mxu0
        %v7664 = vadd.f32 %v7575, %v7663
        %7665 = vmatmul.bf16.gmra.mxu0 %v6641
        %v7666 = vpop.f32.mrf.mxu0
        %v7667 = vadd.f32 %v7578, %v7666
        %v7668 = vpop.f32.mrf.mxu0
        %v7669 = vadd.f32 %v7580, %v7668
        %7670 = vmatmul.bf16.gmra.mxu0 %v6650
        %v7671 = vpop.f32.mrf.mxu0
        %v7672 = vadd.f32 %v7583, %v7671
        %v7673 = vpop.f32.mrf.mxu0
        %v7674 = vadd.f32 %v7585, %v7673
        %7675 = vdwg.mxu0
        %7676 = vmatpush.bf16.msra.mxu0 %v7134
        %7677 = vmatpush.bf16.msra.mxu0 %v7133
        %7678 = vmatpush.bf16.msra.mxu0 %v7132
        %7679 = vmatpush.bf16.msra.mxu0 %v7131
        %7680 = vmatpush.bf16.msra.mxu0 %v7130
        %7681 = vmatpush.bf16.msra.mxu0 %v7129
        %7682 = vmatpush.bf16.msra.mxu0 %v7128
        %7683 = vmatpush.bf16.msra.mxu0 %v7127
        %7684 = vmatmul.bf16.gmra.mxu0 %v6516
        %v7685 = vpop.f32.mrf.mxu0
        %v7686 = vadd.f32 %v7597, %v7685
        %v7687 = vpop.f32.mrf.mxu0
        %v7688 = vadd.f32 %v7599, %v7687
        %7689 = vmatmul.bf16.gmra.mxu0 %v6525
        %v7690 = vpop.f32.mrf.mxu0
        %v7691 = vadd.f32 %v7602, %v7690
        %v7692 = vpop.f32.mrf.mxu0
        %v7693 = vadd.f32 %v7604, %v7692
        %7694 = vmatmul.bf16.gmra.mxu0 %v6534
        %v7695 = vpop.f32.mrf.mxu0
        %v7696 = vadd.f32 %v7607, %v7695
        %v7697 = vpop.f32.mrf.mxu0
        %v7698 = vadd.f32 %v7609, %v7697
        %7699 = vmatmul.bf16.gmra.mxu0 %v6543
        %v7700 = vpop.f32.mrf.mxu0
        %v7701 = vadd.f32 %v7612, %v7700
        %v7702 = vpop.f32.mrf.mxu0
        %v7703 = vadd.f32 %v7614, %v7702
        %7704 = vmatmul.bf16.gmra.mxu0 %v6552
        %v7705 = vpop.f32.mrf.mxu0
        %v7706 = vadd.f32 %v7617, %v7705
        %v7707 = vpop.f32.mrf.mxu0
        %v7708 = vadd.f32 %v7619, %v7707
        %7709 = vmatmul.bf16.gmra.mxu0 %v6561
        %v7710 = vpop.f32.mrf.mxu0
        %v7711 = vadd.f32 %v7622, %v7710
        %v7712 = vpop.f32.mrf.mxu0
        %v7713 = vadd.f32 %v7624, %v7712
        %7714 = vmatmul.bf16.gmra.mxu0 %v6570
        %v7715 = vpop.f32.mrf.mxu0
        %v7716 = vadd.f32 %v7627, %v7715
        %v7717 = vpop.f32.mrf.mxu0
        %v7718 = vadd.f32 %v7629, %v7717
        %7719 = vmatmul.bf16.gmra.mxu0 %v6579
        %v7720 = vpop.f32.mrf.mxu0
        %v7721 = vadd.f32 %v7632, %v7720
        %v7722 = vpop.f32.mrf.mxu0
        %v7723 = vadd.f32 %v7634, %v7722
        %7724 = vmatmul.bf16.gmra.mxu0 %v6588
        %v7725 = vpop.f32.mrf.mxu0
        %v7726 = vadd.f32 %v7637, %v7725
        %v7727 = vpop.f32.mrf.mxu0
        %v7728 = vadd.f32 %v7639, %v7727
        %7729 = vmatmul.bf16.gmra.mxu0 %v6597
        %v7730 = vpop.f32.mrf.mxu0
        %v7731 = vadd.f32 %v7642, %v7730
        %v7732 = vpop.f32.mrf.mxu0
        %v7733 = vadd.f32 %v7644, %v7732
        %7734 = vmatmul.bf16.gmra.mxu0 %v6606
        %v7735 = vpop.f32.mrf.mxu0
        %v7736 = vadd.f32 %v7647, %v7735
        %v7737 = vpop.f32.mrf.mxu0
        %v7738 = vadd.f32 %v7649, %v7737
        %7739 = vmatmul.bf16.gmra.mxu0 %v6615
        %v7740 = vpop.f32.mrf.mxu0
        %v7741 = vadd.f32 %v7652, %v7740
        %v7742 = vpop.f32.mrf.mxu0
        %v7743 = vadd.f32 %v7654, %v7742
        %7744 = vmatmul.bf16.gmra.mxu0 %v6624
        %v7745 = vpop.f32.mrf.mxu0
        %v7746 = vadd.f32 %v7657, %v7745
        %v7747 = vpop.f32.mrf.mxu0
        %v7748 = vadd.f32 %v7659, %v7747
        %7749 = vmatmul.bf16.gmra.mxu0 %v6633
        %v7750 = vpop.f32.mrf.mxu0
        %v7751 = vadd.f32 %v7662, %v7750
        %v7752 = vpop.f32.mrf.mxu0
        %v7753 = vadd.f32 %v7664, %v7752
        %7754 = vmatmul.bf16.gmra.mxu0 %v6642
        %v7755 = vpop.f32.mrf.mxu0
        %v7756 = vadd.f32 %v7667, %v7755
        %v7757 = vpop.f32.mrf.mxu0
        %v7758 = vadd.f32 %v7669, %v7757
        %7759 = vmatmul.bf16.gmra.mxu0 %v6651
        %v7760 = vpop.f32.mrf.mxu0
        %v7761 = vadd.f32 %v7672, %v7760
        %v7762 = vpop.f32.mrf.mxu0
        %v7763 = vadd.f32 %v7674, %v7762
        %7764 = vdwg.mxu0
        %7765 = vmatpush.bf16.msra.mxu0 %v7142
        %7766 = vmatpush.bf16.msra.mxu0 %v7141
        %7767 = vmatpush.bf16.msra.mxu0 %v7140
        %7768 = vmatpush.bf16.msra.mxu0 %v7139
        %7769 = vmatpush.bf16.msra.mxu0 %v7138
        %7770 = vmatpush.bf16.msra.mxu0 %v7137
        %7771 = vmatpush.bf16.msra.mxu0 %v7136
        %7772 = vmatpush.bf16.msra.mxu0 %v7135
        %7773 = vmatmul.bf16.gmra.mxu0 %v6517
        %v7774 = vpop.f32.mrf.mxu0
        %v7775 = vadd.f32 %v7686, %v7774
        %v7776 = vpop.f32.mrf.mxu0
        %v7777 = vadd.f32 %v7688, %v7776
        %7778 = vmatmul.bf16.gmra.mxu0 %v6526
        %v7779 = vpop.f32.mrf.mxu0
        %v7780 = vadd.f32 %v7691, %v7779
        %v7781 = vpop.f32.mrf.mxu0
        %v7782 = vadd.f32 %v7693, %v7781
        %7783 = vmatmul.bf16.gmra.mxu0 %v6535
        %v7784 = vpop.f32.mrf.mxu0
        %v7785 = vadd.f32 %v7696, %v7784
        %v7786 = vpop.f32.mrf.mxu0
        %v7787 = vadd.f32 %v7698, %v7786
        %7788 = vmatmul.bf16.gmra.mxu0 %v6544
        %v7789 = vpop.f32.mrf.mxu0
        %v7790 = vadd.f32 %v7701, %v7789
        %v7791 = vpop.f32.mrf.mxu0
        %v7792 = vadd.f32 %v7703, %v7791
        %7793 = vmatmul.bf16.gmra.mxu0 %v6553
        %v7794 = vpop.f32.mrf.mxu0
        %v7795 = vadd.f32 %v7706, %v7794
        %v7796 = vpop.f32.mrf.mxu0
        %v7797 = vadd.f32 %v7708, %v7796
        %7798 = vmatmul.bf16.gmra.mxu0 %v6562
        %v7799 = vpop.f32.mrf.mxu0
        %v7800 = vadd.f32 %v7711, %v7799
        %v7801 = vpop.f32.mrf.mxu0
        %v7802 = vadd.f32 %v7713, %v7801
        %7803 = vmatmul.bf16.gmra.mxu0 %v6571
        %v7804 = vpop.f32.mrf.mxu0
        %v7805 = vadd.f32 %v7716, %v7804
        %v7806 = vpop.f32.mrf.mxu0
        %v7807 = vadd.f32 %v7718, %v7806
        %7808 = vmatmul.bf16.gmra.mxu0 %v6580
        %v7809 = vpop.f32.mrf.mxu0
        %v7810 = vadd.f32 %v7721, %v7809
        %v7811 = vpop.f32.mrf.mxu0
        %v7812 = vadd.f32 %v7723, %v7811
        %7813 = vmatmul.bf16.gmra.mxu0 %v6589
        %v7814 = vpop.f32.mrf.mxu0
        %v7815 = vadd.f32 %v7726, %v7814
        %v7816 = vpop.f32.mrf.mxu0
        %v7817 = vadd.f32 %v7728, %v7816
        %7818 = vmatmul.bf16.gmra.mxu0 %v6598
        %v7819 = vpop.f32.mrf.mxu0
        %v7820 = vadd.f32 %v7731, %v7819
        %v7821 = vpop.f32.mrf.mxu0
        %v7822 = vadd.f32 %v7733, %v7821
        %7823 = vmatmul.bf16.gmra.mxu0 %v6607
        %v7824 = vpop.f32.mrf.mxu0
        %v7825 = vadd.f32 %v7736, %v7824
        %v7826 = vpop.f32.mrf.mxu0
        %v7827 = vadd.f32 %v7738, %v7826
        %7828 = vmatmul.bf16.gmra.mxu0 %v6616
        %v7829 = vpop.f32.mrf.mxu0
        %v7830 = vadd.f32 %v7741, %v7829
        %v7831 = vpop.f32.mrf.mxu0
        %v7832 = vadd.f32 %v7743, %v7831
        %7833 = vmatmul.bf16.gmra.mxu0 %v6625
        %v7834 = vpop.f32.mrf.mxu0
        %v7835 = vadd.f32 %v7746, %v7834
        %v7836 = vpop.f32.mrf.mxu0
        %v7837 = vadd.f32 %v7748, %v7836
        %7838 = vmatmul.bf16.gmra.mxu0 %v6634
        %v7839 = vpop.f32.mrf.mxu0
        %v7840 = vadd.f32 %v7751, %v7839
        %v7841 = vpop.f32.mrf.mxu0
        %v7842 = vadd.f32 %v7753, %v7841
        %7843 = vmatmul.bf16.gmra.mxu0 %v6643
        %v7844 = vpop.f32.mrf.mxu0
        %v7845 = vadd.f32 %v7756, %v7844
        %v7846 = vpop.f32.mrf.mxu0
        %v7847 = vadd.f32 %v7758, %v7846
        %7848 = vmatmul.bf16.gmra.mxu0 %v6652
        %v7849 = vpop.f32.mrf.mxu0
        %v7850 = vadd.f32 %v7761, %v7849
        %v7851 = vpop.f32.mrf.mxu0
        %v7852 = vadd.f32 %v7763, %v7851
        %7853 = vdwg.mxu0
        %7854 = vmatpush.bf16.msra.mxu0 %v7150
        %7855 = vmatpush.bf16.msra.mxu0 %v7149
        %7856 = vmatpush.bf16.msra.mxu0 %v7148
        %7857 = vmatpush.bf16.msra.mxu0 %v7147
        %7858 = vmatpush.bf16.msra.mxu0 %v7146
        %7859 = vmatpush.bf16.msra.mxu0 %v7145
        %7860 = vmatpush.bf16.msra.mxu0 %v7144
        %7861 = vmatpush.bf16.msra.mxu0 %v7143
        %7862 = vmatmul.bf16.gmra.mxu0 %v6518
        %v7863 = vpop.f32.mrf.mxu0
        %v7864 = vadd.f32 %v7775, %v7863
        %v7865 = vpop.f32.mrf.mxu0
        %v7866 = vadd.f32 %v7777, %v7865
        %7867 = vmatmul.bf16.gmra.mxu0 %v6527
        %v7868 = vpop.f32.mrf.mxu0
        %v7869 = vadd.f32 %v7780, %v7868
        %v7870 = vpop.f32.mrf.mxu0
        %v7871 = vadd.f32 %v7782, %v7870
        %7872 = vmatmul.bf16.gmra.mxu0 %v6536
        %v7873 = vpop.f32.mrf.mxu0
        %v7874 = vadd.f32 %v7785, %v7873
        %v7875 = vpop.f32.mrf.mxu0
        %v7876 = vadd.f32 %v7787, %v7875
        %7877 = vmatmul.bf16.gmra.mxu0 %v6545
        %v7878 = vpop.f32.mrf.mxu0
        %v7879 = vadd.f32 %v7790, %v7878
        %v7880 = vpop.f32.mrf.mxu0
        %v7881 = vadd.f32 %v7792, %v7880
        %7882 = vmatmul.bf16.gmra.mxu0 %v6554
        %v7883 = vpop.f32.mrf.mxu0
        %v7884 = vadd.f32 %v7795, %v7883
        %v7885 = vpop.f32.mrf.mxu0
        %v7886 = vadd.f32 %v7797, %v7885
        %7887 = vmatmul.bf16.gmra.mxu0 %v6563
        %v7888 = vpop.f32.mrf.mxu0
        %v7889 = vadd.f32 %v7800, %v7888
        %v7890 = vpop.f32.mrf.mxu0
        %v7891 = vadd.f32 %v7802, %v7890
        %7892 = vmatmul.bf16.gmra.mxu0 %v6572
        %v7893 = vpop.f32.mrf.mxu0
        %v7894 = vadd.f32 %v7805, %v7893
        %v7895 = vpop.f32.mrf.mxu0
        %v7896 = vadd.f32 %v7807, %v7895
        %7897 = vmatmul.bf16.gmra.mxu0 %v6581
        %v7898 = vpop.f32.mrf.mxu0
        %v7899 = vadd.f32 %v7810, %v7898
        %v7900 = vpop.f32.mrf.mxu0
        %v7901 = vadd.f32 %v7812, %v7900
        %7902 = vmatmul.bf16.gmra.mxu0 %v6590
        %v7903 = vpop.f32.mrf.mxu0
        %v7904 = vadd.f32 %v7815, %v7903
        %v7905 = vpop.f32.mrf.mxu0
        %v7906 = vadd.f32 %v7817, %v7905
        %7907 = vmatmul.bf16.gmra.mxu0 %v6599
        %v7908 = vpop.f32.mrf.mxu0
        %v7909 = vadd.f32 %v7820, %v7908
        %v7910 = vpop.f32.mrf.mxu0
        %v7911 = vadd.f32 %v7822, %v7910
        %7912 = vmatmul.bf16.gmra.mxu0 %v6608
        %v7913 = vpop.f32.mrf.mxu0
        %v7914 = vadd.f32 %v7825, %v7913
        %v7915 = vpop.f32.mrf.mxu0
        %v7916 = vadd.f32 %v7827, %v7915
        %7917 = vmatmul.bf16.gmra.mxu0 %v6617
        %v7918 = vpop.f32.mrf.mxu0
        %v7919 = vadd.f32 %v7830, %v7918
        %v7920 = vpop.f32.mrf.mxu0
        %v7921 = vadd.f32 %v7832, %v7920
        %7922 = vmatmul.bf16.gmra.mxu0 %v6626
        %v7923 = vpop.f32.mrf.mxu0
        %v7924 = vadd.f32 %v7835, %v7923
        %v7925 = vpop.f32.mrf.mxu0
        %v7926 = vadd.f32 %v7837, %v7925
        %7927 = vmatmul.bf16.gmra.mxu0 %v6635
        %v7928 = vpop.f32.mrf.mxu0
        %v7929 = vadd.f32 %v7840, %v7928
        %v7930 = vpop.f32.mrf.mxu0
        %v7931 = vadd.f32 %v7842, %v7930
        %7932 = vmatmul.bf16.gmra.mxu0 %v6644
        %v7933 = vpop.f32.mrf.mxu0
        %v7934 = vadd.f32 %v7845, %v7933
        %v7935 = vpop.f32.mrf.mxu0
        %v7936 = vadd.f32 %v7847, %v7935
        %7937 = vmatmul.bf16.gmra.mxu0 %v6653
        %v7938 = vpop.f32.mrf.mxu0
        %v7939 = vadd.f32 %v7850, %v7938
        %v7940 = vpop.f32.mrf.mxu0
        %v7941 = vadd.f32 %v7852, %v7940
        %7942 = vdwg.mxu0
        %7943 = vmatpush.bf16.msra.mxu0 %v7158
        %7944 = vmatpush.bf16.msra.mxu0 %v7157
        %7945 = vmatpush.bf16.msra.mxu0 %v7156
        %7946 = vmatpush.bf16.msra.mxu0 %v7155
        %7947 = vmatpush.bf16.msra.mxu0 %v7154
        %7948 = vmatpush.bf16.msra.mxu0 %v7153
        %7949 = vmatpush.bf16.msra.mxu0 %v7152
        %7950 = vmatpush.bf16.msra.mxu0 %v7151
        %7951 = vmatmul.bf16.gmra.mxu0 %v6519
        %v7952 = vpop.f32.mrf.mxu0
        %v7953 = vadd.f32 %v7864, %v7952
        %v7954 = vpop.f32.mrf.mxu0
        %v7955 = vadd.f32 %v7866, %v7954
        %7956 = vmatmul.bf16.gmra.mxu0 %v6528
        %v7957 = vpop.f32.mrf.mxu0
        %v7958 = vadd.f32 %v7869, %v7957
        %v7959 = vpop.f32.mrf.mxu0
        %v7960 = vadd.f32 %v7871, %v7959
        %7961 = vmatmul.bf16.gmra.mxu0 %v6537
        %v7962 = vpop.f32.mrf.mxu0
        %v7963 = vadd.f32 %v7874, %v7962
        %v7964 = vpop.f32.mrf.mxu0
        %v7965 = vadd.f32 %v7876, %v7964
        %7966 = vmatmul.bf16.gmra.mxu0 %v6546
        %v7967 = vpop.f32.mrf.mxu0
        %v7968 = vadd.f32 %v7879, %v7967
        %v7969 = vpop.f32.mrf.mxu0
        %v7970 = vadd.f32 %v7881, %v7969
        %7971 = vmatmul.bf16.gmra.mxu0 %v6555
        %v7972 = vpop.f32.mrf.mxu0
        %v7973 = vadd.f32 %v7884, %v7972
        %v7974 = vpop.f32.mrf.mxu0
        %v7975 = vadd.f32 %v7886, %v7974
        %7976 = vmatmul.bf16.gmra.mxu0 %v6564
        %v7977 = vpop.f32.mrf.mxu0
        %v7978 = vadd.f32 %v7889, %v7977
        %v7979 = vpop.f32.mrf.mxu0
        %v7980 = vadd.f32 %v7891, %v7979
        %7981 = vmatmul.bf16.gmra.mxu0 %v6573
        %v7982 = vpop.f32.mrf.mxu0
        %v7983 = vadd.f32 %v7894, %v7982
        %v7984 = vpop.f32.mrf.mxu0
        %v7985 = vadd.f32 %v7896, %v7984
        %7986 = vmatmul.bf16.gmra.mxu0 %v6582
        %v7987 = vpop.f32.mrf.mxu0
        %v7988 = vadd.f32 %v7899, %v7987
        %v7989 = vpop.f32.mrf.mxu0
        %v7990 = vadd.f32 %v7901, %v7989
        %7991 = vmatmul.bf16.gmra.mxu0 %v6591
        %v7992 = vpop.f32.mrf.mxu0
        %v7993 = vadd.f32 %v7904, %v7992
        %v7994 = vpop.f32.mrf.mxu0
        %v7995 = vadd.f32 %v7906, %v7994
        %7996 = vmatmul.bf16.gmra.mxu0 %v6600
        %v7997 = vpop.f32.mrf.mxu0
        %v7998 = vadd.f32 %v7909, %v7997
        %v7999 = vpop.f32.mrf.mxu0
        %v8000 = vadd.f32 %v7911, %v7999
        %8001 = vmatmul.bf16.gmra.mxu0 %v6609
        %v8002 = vpop.f32.mrf.mxu0
        %v8003 = vadd.f32 %v7914, %v8002
        %v8004 = vpop.f32.mrf.mxu0
        %v8005 = vadd.f32 %v7916, %v8004
        %8006 = vmatmul.bf16.gmra.mxu0 %v6618
        %v8007 = vpop.f32.mrf.mxu0
        %v8008 = vadd.f32 %v7919, %v8007
        %v8009 = vpop.f32.mrf.mxu0
        %v8010 = vadd.f32 %v7921, %v8009
        %8011 = vmatmul.bf16.gmra.mxu0 %v6627
        %v8012 = vpop.f32.mrf.mxu0
        %v8013 = vadd.f32 %v7924, %v8012
        %v8014 = vpop.f32.mrf.mxu0
        %v8015 = vadd.f32 %v7926, %v8014
        %8016 = vmatmul.bf16.gmra.mxu0 %v6636
        %v8017 = vpop.f32.mrf.mxu0
        %v8018 = vadd.f32 %v7929, %v8017
        %v8019 = vpop.f32.mrf.mxu0
        %v8020 = vadd.f32 %v7931, %v8019
        %8021 = vmatmul.bf16.gmra.mxu0 %v6645
        %v8022 = vpop.f32.mrf.mxu0
        %v8023 = vadd.f32 %v7934, %v8022
        %v8024 = vpop.f32.mrf.mxu0
        %v8025 = vadd.f32 %v7936, %v8024
        %8026 = vmatmul.bf16.gmra.mxu0 %v6654
        %v8027 = vpop.f32.mrf.mxu0
        %v8028 = vadd.f32 %v7939, %v8027
        %v8029 = vpop.f32.mrf.mxu0
        %v8030 = vadd.f32 %v7941, %v8029
        %8031 = vdwg.mxu0
        %v8032 = vadd.f32 %v7953, %v7955
        %v8033 = vadd.f32 %v8032, %v7958
        %v8034 = vadd.f32 %v8033, %v7960
        %v8035 = vadd.f32 %v8034, %v7963
        %v8036 = vadd.f32 %v8035, %v7965
        %v8037 = vadd.f32 %v8036, %v7968
        %v8038 = vadd.f32 %v8037, %v7970
        %v8039 = vadd.f32 %v8038, %v7973
        %v8040 = vadd.f32 %v8039, %v7975
        %v8041 = vadd.f32 %v8040, %v7978
        %v8042 = vadd.f32 %v8041, %v7980
        %v8043 = vadd.f32 %v8042, %v7983
        %v8044 = vadd.f32 %v8043, %v7985
        %v8045 = vadd.f32 %v8044, %v7988
        %v8046 = vadd.f32 %v8045, %v7990
        %v8047 = vadd.f32 %v8046, %v7993
        %v8048 = vadd.f32 %v8047, %v7995
        %v8049 = vadd.f32 %v8048, %v7998
        %v8050 = vadd.f32 %v8049, %v8000
        %v8051 = vadd.f32 %v8050, %v8003
        %v8052 = vadd.f32 %v8051, %v8005
        %v8053 = vadd.f32 %v8052, %v8008
        %v8054 = vadd.f32 %v8053, %v8010
        %v8055 = vadd.f32 %v8054, %v8013
        %v8056 = vadd.f32 %v8055, %v8015
        %v8057 = vadd.f32 %v8056, %v8018
        %v8058 = vadd.f32 %v8057, %v8020
        %v8059 = vadd.f32 %v8058, %v8023
        %v8060 = vadd.f32 %v8059, %v8025
        %v8061 = vadd.f32 %v8060, %v8028
        %v8062 = vadd.f32 %v8061, %v8030
        %v8063 = vrot.slane %v8062, 4
        %v8064 = vadd.f32 %v8062, %v8063
        %v8065 = vrot.slane %v8064, 2
        %v8066 = vadd.f32 %v8064, %v8065
        %v8067 = vrot.slane %v8066, 1
        %v8068 = vadd.f32 %v8066, %v8067
        %v8069 = vmul.f32 %v8068, 0.00390625
        %v8070 = vmul.f32 %v7953, %v7953
        %v8071 = vmul.f32 %v7955, %v7955
        %v8072 = vmul.f32 %v7958, %v7958
        %v8073 = vmul.f32 %v7960, %v7960
        %v8074 = vmul.f32 %v7963, %v7963
        %v8075 = vmul.f32 %v7965, %v7965
        %v8076 = vmul.f32 %v7968, %v7968
        %v8077 = vmul.f32 %v7970, %v7970
        %v8078 = vmul.f32 %v7973, %v7973
        %v8079 = vmul.f32 %v7975, %v7975
        %v8080 = vmul.f32 %v7978, %v7978
        %v8081 = vmul.f32 %v7980, %v7980
        %v8082 = vmul.f32 %v7983, %v7983
        %v8083 = vmul.f32 %v7985, %v7985
        %v8084 = vmul.f32 %v7988, %v7988
        %v8085 = vmul.f32 %v7990, %v7990
        %v8086 = vmul.f32 %v7993, %v7993
        %v8087 = vmul.f32 %v7995, %v7995
        %v8088 = vmul.f32 %v7998, %v7998
        %v8089 = vmul.f32 %v8000, %v8000
        %v8090 = vmul.f32 %v8003, %v8003
        %v8091 = vmul.f32 %v8005, %v8005
        %v8092 = vmul.f32 %v8008, %v8008
        %v8093 = vmul.f32 %v8010, %v8010
        %v8094 = vmul.f32 %v8013, %v8013
        %v8095 = vmul.f32 %v8015, %v8015
        %v8096 = vmul.f32 %v8018, %v8018
        %v8097 = vmul.f32 %v8020, %v8020
        %v8098 = vmul.f32 %v8023, %v8023
        %v8099 = vmul.f32 %v8025, %v8025
        %v8100 = vmul.f32 %v8028, %v8028
        %v8101 = vmul.f32 %v8030, %v8030
        %v8102 = vadd.f32 %v8070, %v8071
        %v8103 = vadd.f32 %v8102, %v8072
        %v8104 = vadd.f32 %v8103, %v8073
        %v8105 = vadd.f32 %v8104, %v8074
        %v8106 = vadd.f32 %v8105, %v8075
        %v8107 = vadd.f32 %v8106, %v8076
        %v8108 = vadd.f32 %v8107, %v8077
        %v8109 = vadd.f32 %v8108, %v8078
        %v8110 = vadd.f32 %v8109, %v8079
        %v8111 = vadd.f32 %v8110, %v8080
        %v8112 = vadd.f32 %v8111, %v8081
        %v8113 = vadd.f32 %v8112, %v8082
        %v8114 = vadd.f32 %v8113, %v8083
        %v8115 = vadd.f32 %v8114, %v8084
        %v8116 = vadd.f32 %v8115, %v8085
        %v8117 = vadd.f32 %v8116, %v8086
        %v8118 = vadd.f32 %v8117, %v8087
        %v8119 = vadd.f32 %v8118, %v8088
        %v8120 = vadd.f32 %v8119, %v8089
        %v8121 = vadd.f32 %v8120, %v8090
        %v8122 = vadd.f32 %v8121, %v8091
        %v8123 = vadd.f32 %v8122, %v8092
        %v8124 = vadd.f32 %v8123, %v8093
        %v8125 = vadd.f32 %v8124, %v8094
        %v8126 = vadd.f32 %v8125, %v8095
        %v8127 = vadd.f32 %v8126, %v8096
        %v8128 = vadd.f32 %v8127, %v8097
        %v8129 = vadd.f32 %v8128, %v8098
        %v8130 = vadd.f32 %v8129, %v8099
        %v8131 = vadd.f32 %v8130, %v8100
        %v8132 = vadd.f32 %v8131, %v8101
        %v8133 = vrot.slane %v8132, 4
        %v8134 = vadd.f32 %v8132, %v8133
        %v8135 = vrot.slane %v8134, 2
        %v8136 = vadd.f32 %v8134, %v8135
        %v8137 = vrot.slane %v8136, 1
        %v8138 = vadd.f32 %v8136, %v8137
        %v8139 = vmul.f32 %v8138, 0.00390625
        %v8140 = vmul.f32 %v8069, %v8069
        %v8141 = vsub.f32 %v8139, %v8140
        %v8142 = vmax.f32 %v8141, 0.0
        %v8143 = vsub.f32 %v7953, %v8069
        %v8144 = vsub.f32 %v7955, %v8069
        %v8145 = vsub.f32 %v7958, %v8069
        %v8146 = vsub.f32 %v7960, %v8069
        %v8147 = vsub.f32 %v7963, %v8069
        %v8148 = vsub.f32 %v7965, %v8069
        %v8149 = vsub.f32 %v7968, %v8069
        %v8150 = vsub.f32 %v7970, %v8069
        %v8151 = vsub.f32 %v7973, %v8069
        %v8152 = vsub.f32 %v7975, %v8069
        %v8153 = vsub.f32 %v7978, %v8069
        %v8154 = vsub.f32 %v7980, %v8069
        %v8155 = vsub.f32 %v7983, %v8069
        %v8156 = vsub.f32 %v7985, %v8069
        %v8157 = vsub.f32 %v7988, %v8069
        %v8158 = vsub.f32 %v7990, %v8069
        %v8159 = vsub.f32 %v7993, %v8069
        %v8160 = vsub.f32 %v7995, %v8069
        %v8161 = vsub.f32 %v7998, %v8069
        %v8162 = vsub.f32 %v8000, %v8069
        %v8163 = vsub.f32 %v8003, %v8069
        %v8164 = vsub.f32 %v8005, %v8069
        %v8165 = vsub.f32 %v8008, %v8069
        %v8166 = vsub.f32 %v8010, %v8069
        %v8167 = vsub.f32 %v8013, %v8069
        %v8168 = vsub.f32 %v8015, %v8069
        %v8169 = vsub.f32 %v8018, %v8069
        %v8170 = vsub.f32 %v8020, %v8069
        %v8171 = vsub.f32 %v8023, %v8069
        %v8172 = vsub.f32 %v8025, %v8069
        %v8173 = vsub.f32 %v8028, %v8069
        %v8174 = vsub.f32 %v8030, %v8069
        %v8175 = vadd.f32 %v8142, 1e-05
        %v8176 = vrsqrt.pop %v8175
        %v8177 = vmul.f32 %v8176, %v8175
        %v8178 = vmul.f32 %v8177, %v8176
        %v8179 = vmul.f32 0.5, %v8178
        %v8180 = vsub.f32 1.5, %v8179
        %v8181 = vmul.f32 %v8176, %v8180
        %vm8182 = vweird.f32 %v8175
        %vm8183 = vweird.f32 %v8176
        %vm8184 = vmor %vm8182, %vm8183
        %v8185 = vsel %vm8184, %v8176, %v8181
        %v8186 = vmul.f32 %v8143, %v8185
        %v8187 = vmul.f32 %v8144, %v8185
        %v8188 = vmul.f32 %v8145, %v8185
        %v8189 = vmul.f32 %v8146, %v8185
        %v8190 = vmul.f32 %v8147, %v8185
        %v8191 = vmul.f32 %v8148, %v8185
        %v8192 = vmul.f32 %v8149, %v8185
        %v8193 = vmul.f32 %v8150, %v8185
        %v8194 = vmul.f32 %v8151, %v8185
        %v8195 = vmul.f32 %v8152, %v8185
        %v8196 = vmul.f32 %v8153, %v8185
        %v8197 = vmul.f32 %v8154, %v8185
        %v8198 = vmul.f32 %v8155, %v8185
        %v8199 = vmul.f32 %v8156, %v8185
        %v8200 = vmul.f32 %v8157, %v8185
        %v8201 = vmul.f32 %v8158, %v8185
        %v8202 = vmul.f32 %v8159, %v8185
        %v8203 = vmul.f32 %v8160, %v8185
        %v8204 = vmul.f32 %v8161, %v8185
        %v8205 = vmul.f32 %v8162, %v8185
        %v8206 = vmul.f32 %v8163, %v8185
        %v8207 = vmul.f32 %v8164, %v8185
        %v8208 = vmul.f32 %v8165, %v8185
        %v8209 = vmul.f32 %v8166, %v8185
        %v8210 = vmul.f32 %v8167, %v8185
        %v8211 = vmul.f32 %v8168, %v8185
        %v8212 = vmul.f32 %v8169, %v8185
        %v8213 = vmul.f32 %v8170, %v8185
        %v8214 = vmul.f32 %v8171, %v8185
        %v8215 = vmul.f32 %v8172, %v8185
        %v8216 = vmul.f32 %v8173, %v8185
        %v8217 = vmul.f32 %v8174, %v8185
        %v8218 = vadd.f32 %v8186, %v8187
        %v8219 = vadd.f32 %v8218, %v8188
        %v8220 = vadd.f32 %v8219, %v8189
        %v8221 = vadd.f32 %v8220, %v8190
        %v8222 = vadd.f32 %v8221, %v8191
        %v8223 = vadd.f32 %v8222, %v8192
        %v8224 = vadd.f32 %v8223, %v8193
        %v8225 = vadd.f32 %v8224, %v8194
        %v8226 = vadd.f32 %v8225, %v8195
        %v8227 = vadd.f32 %v8226, %v8196
        %v8228 = vadd.f32 %v8227, %v8197
        %v8229 = vadd.f32 %v8228, %v8198
        %v8230 = vadd.f32 %v8229, %v8199
        %v8231 = vadd.f32 %v8230, %v8200
        %v8232 = vadd.f32 %v8231, %v8201
        %v8233 = vadd.f32 %v8232, %v8202
        %v8234 = vadd.f32 %v8233, %v8203
        %v8235 = vadd.f32 %v8234, %v8204
        %v8236 = vadd.f32 %v8235, %v8205
        %v8237 = vadd.f32 %v8236, %v8206
        %v8238 = vadd.f32 %v8237, %v8207
        %v8239 = vadd.f32 %v8238, %v8208
        %v8240 = vadd.f32 %v8239, %v8209
        %v8241 = vadd.f32 %v8240, %v8210
        %v8242 = vadd.f32 %v8241, %v8211
        %v8243 = vadd.f32 %v8242, %v8212
        %v8244 = vadd.f32 %v8243, %v8213
        %v8245 = vadd.f32 %v8244, %v8214
        %v8246 = vadd.f32 %v8245, %v8215
        %v8247 = vadd.f32 %v8246, %v8216
        %v8248 = vadd.f32 %v8247, %v8217
        %v8249 = vrot.slane %v8248, 4
        %v8250 = vadd.f32 %v8248, %v8249
        %v8251 = vrot.slane %v8250, 2
        %v8252 = vadd.f32 %v8250, %v8251
        %v8253 = vrot.slane %v8252, 1
        %v8254 = vadd.f32 %v8252, %v8253
        %v8255 = vmul.f32 %v8254, 0.00390625
        %v8256 = vpack.c.bf16 %v8255, %v8255
        %v8257 = vld [vmem:[%s3] sm:$0xf]
        %v8258 = vld [vmem:[%s3 + $0x4] sm:$0xf]
        %v8259 = vld [vmem:[%s3 + $0x8] sm:$0xf]
        %v8260 = vld [vmem:[%s3 + $0xc] sm:$0xf]
        %v8261 = vld [vmem:[%s3 + $0x10] sm:$0xf]
        %v8262 = vld [vmem:[%s3 + $0x14] sm:$0xf]
        %v8263 = vld [vmem:[%s3 + $0x18] sm:$0xf]
        %v8264 = vld [vmem:[%s3 + $0x1c] sm:$0xf]
        %v8265 = vld [vmem:[%s3 + $0x20] sm:$0xf]
        %v8266 = vld [vmem:[%s3 + $0x24] sm:$0xf]
        %v8267 = vld [vmem:[%s3 + $0x28] sm:$0xf]
        %v8268 = vld [vmem:[%s3 + $0x2c] sm:$0xf]
        %v8269 = vld [vmem:[%s3 + $0x30] sm:$0xf]
        %v8270 = vld [vmem:[%s3 + $0x34] sm:$0xf]
        %v8271 = vld [vmem:[%s3 + $0x38] sm:$0xf]
        %v8272 = vld [vmem:[%s3 + $0x3c] sm:$0xf]
        %v8289 = vunpack.c.l.b16 %v8257
        %v8290 = vunpack.c.l.b16 %v8258
        %v8291 = vunpack.c.l.b16 %v8259
        %v8292 = vunpack.c.l.b16 %v8260
        %v8293 = vunpack.c.l.b16 %v8261
        %v8294 = vunpack.c.l.b16 %v8262
        %v8295 = vunpack.c.l.b16 %v8263
        %v8296 = vunpack.c.l.b16 %v8264
        %v8297 = vunpack.c.l.b16 %v8265
        %v8298 = vunpack.c.l.b16 %v8266
        %v8299 = vunpack.c.l.b16 %v8267
        %v8300 = vunpack.c.l.b16 %v8268
        %v8301 = vunpack.c.l.b16 %v8269
        %v8302 = vunpack.c.l.b16 %v8270
        %v8303 = vunpack.c.l.b16 %v8271
        %v8304 = vunpack.c.l.b16 %v8272
        %v8305 = vpack.c.b16 %v8290, %v8289
        %v8306 = vpack.c.b16 %v8292, %v8291
        %v8307 = vpack.c.b16 %v8294, %v8293
        %v8308 = vpack.c.b16 %v8296, %v8295
        %v8309 = vpack.c.b16 %v8298, %v8297
        %v8310 = vpack.c.b16 %v8300, %v8299
        %v8311 = vpack.c.b16 %v8302, %v8301
        %v8312 = vpack.c.b16 %v8304, %v8303
        %8321 = vmatpush.bf16.msra.mxu0 %v8312
        %8322 = vmatpush.bf16.msra.mxu0 %v8311
        %8323 = vmatpush.bf16.msra.mxu0 %v8310
        %8324 = vmatpush.bf16.msra.mxu0 %v8309
        %8325 = vmatpush.bf16.msra.mxu0 %v8308
        %8326 = vmatpush.bf16.msra.mxu0 %v8307
        %8327 = vmatpush.bf16.msra.mxu0 %v8306
        %8328 = vmatpush.bf16.msra.mxu0 %v8305
        %8329 = vmatmul.bf16.gmra.mxu0 %v8256
        %v8330 = vpop.f32.mrf.mxu0
        %v8331 = vadd.f32 0.0, %v8330
        %v8332 = vpop.f32.mrf.mxu0
        %8333 = vdwg.mxu0
        %v8334 = vsub.f32 0.0, %v8331
        %v8335 = vmul.f32 %v8334, 1.442695
        %v8336 = vpow.pop %v8335
        %v8337 = vadd.f32 %v8336, 1.0
        %v8338 = vrcp.pop %v8337
        %v8339 = vmul.f32 %v8331, %v8338
        %v8340 = vpack.c.bf16 %v8339, %v8339
        %v8341 = vld [vmem:[%s4] sm:$0xf]
        %vm8342 = vcmask 64512
        %v8344 = vsel %vm8342, %v8340, 0
        %vm8346 = vcmask 1043456
        %v8348 = vsel %vm8346, %v8341, 0
        %8350 = vmatpush.bf16.msra.mxu0 0
        %8351 = vmatpush.bf16.msra.mxu0 0
        %8352 = vmatpush.bf16.msra.mxu0 0
        %8353 = vmatpush.bf16.msra.mxu0 0
        %8354 = vmatpush.bf16.msra.mxu0 0
        %8355 = vmatpush.bf16.msra.mxu0 0
        %8356 = vmatpush.bf16.msra.mxu0 0
        %8357 = vmatpush.bf16.msra.mxu0 %v8348
        %8358 = vmatmul.bf16.gmra.mxu0 %v8344
        %v8359 = vpop.f32.mrf.mxu0
        %v8360 = vadd.f32 0.0, %v8359
        %v8361 = vpop.f32.mrf.mxu0
        %8362 = vdwg.mxu0
        %v8363 = vsub.f32 0.0, %v8360
        %v8364 = vmul.f32 %v8363, 1.442695
        %v8365 = vpow.pop %v8364
        %v8366 = vadd.f32 %v8365, 1.0
        %v8367 = vrcp.pop %v8366
        %v8368 = vperm.slane %v8367, 0
        %v8369 = vmul.f32 %v8186, %v8368
        %v8370 = vmul.f32 %v8187, %v8368
        %v8371 = vmul.f32 %v8188, %v8368
        %v8372 = vmul.f32 %v8189, %v8368
        %v8373 = vmul.f32 %v8190, %v8368
        %v8374 = vmul.f32 %v8191, %v8368
        %v8375 = vmul.f32 %v8192, %v8368
        %v8376 = vmul.f32 %v8193, %v8368
        %v8377 = vmul.f32 %v8194, %v8368
        %v8378 = vmul.f32 %v8195, %v8368
        %v8379 = vmul.f32 %v8196, %v8368
        %v8380 = vmul.f32 %v8197, %v8368
        %v8381 = vmul.f32 %v8198, %v8368
        %v8382 = vmul.f32 %v8199, %v8368
        %v8383 = vmul.f32 %v8200, %v8368
        %v8384 = vmul.f32 %v8201, %v8368
        %v8385 = vmul.f32 %v8202, %v8368
        %v8386 = vmul.f32 %v8203, %v8368
        %v8387 = vmul.f32 %v8204, %v8368
        %v8388 = vmul.f32 %v8205, %v8368
        %v8389 = vmul.f32 %v8206, %v8368
        %v8390 = vmul.f32 %v8207, %v8368
        %v8391 = vmul.f32 %v8208, %v8368
        %v8392 = vmul.f32 %v8209, %v8368
        %v8393 = vmul.f32 %v8210, %v8368
        %v8394 = vmul.f32 %v8211, %v8368
        %v8395 = vmul.f32 %v8212, %v8368
        %v8396 = vmul.f32 %v8213, %v8368
        %v8397 = vmul.f32 %v8214, %v8368
        %v8398 = vmul.f32 %v8215, %v8368
        %v8399 = vmul.f32 %v8216, %v8368
        %v8400 = vmul.f32 %v8217, %v8368
        %v8401 = vld [vmem:[%s240] sm:$0xff]
        %v8402 = vld [vmem:[%s240 + $0x8] sm:$0xff]
        %v8403 = vld [vmem:[%s240 + $0x10] sm:$0xff]
        %v8404 = vld [vmem:[%s240 + $0x18] sm:$0xff]
        %v8405 = vld [vmem:[%s240 + $0x20] sm:$0xff]
        %v8406 = vld [vmem:[%s240 + $0x28] sm:$0xff]
        %v8407 = vld [vmem:[%s240 + $0x30] sm:$0xff]
        %v8408 = vld [vmem:[%s240 + $0x38] sm:$0xff]
        %v8409 = vld [vmem:[%s240 + $0x40] sm:$0xff]
        %v8410 = vld [vmem:[%s240 + $0x48] sm:$0xff]
        %v8411 = vld [vmem:[%s240 + $0x50] sm:$0xff]
        %v8412 = vld [vmem:[%s240 + $0x58] sm:$0xff]
        %v8413 = vld [vmem:[%s240 + $0x60] sm:$0xff]
        %v8414 = vld [vmem:[%s240 + $0x68] sm:$0xff]
        %v8415 = vld [vmem:[%s240 + $0x70] sm:$0xff]
        %v8416 = vld [vmem:[%s240 + $0x78] sm:$0xff]
        %v8417 = vld [vmem:[%s240 + $0x80] sm:$0xff]
        %v8418 = vld [vmem:[%s240 + $0x88] sm:$0xff]
        %v8419 = vld [vmem:[%s240 + $0x90] sm:$0xff]
        %v8420 = vld [vmem:[%s240 + $0x98] sm:$0xff]
        %v8421 = vld [vmem:[%s240 + $0xa0] sm:$0xff]
        %v8422 = vld [vmem:[%s240 + $0xa8] sm:$0xff]
        %v8423 = vld [vmem:[%s240 + $0xb0] sm:$0xff]
        %v8424 = vld [vmem:[%s240 + $0xb8] sm:$0xff]
        %v8425 = vld [vmem:[%s240 + $0xc0] sm:$0xff]
        %v8426 = vld [vmem:[%s240 + $0xc8] sm:$0xff]
        %v8427 = vld [vmem:[%s240 + $0xd0] sm:$0xff]
        %v8428 = vld [vmem:[%s240 + $0xd8] sm:$0xff]
        %v8429 = vld [vmem:[%s240 + $0xe0] sm:$0xff]
        %v8430 = vld [vmem:[%s240 + $0xe8] sm:$0xff]
        %v8431 = vld [vmem:[%s240 + $0xf0] sm:$0xff]
        %v8432 = vld [vmem:[%s240 + $0xf8] sm:$0xff]
        %v8433 = vadd.f32 %v8369, %v8401
        %v8434 = vadd.f32 %v8370, %v8402
        %v8435 = vadd.f32 %v8371, %v8403
        %v8436 = vadd.f32 %v8372, %v8404
        %v8437 = vadd.f32 %v8373, %v8405
        %v8438 = vadd.f32 %v8374, %v8406
        %v8439 = vadd.f32 %v8375, %v8407
        %v8440 = vadd.f32 %v8376, %v8408
        %v8441 = vadd.f32 %v8377, %v8409
        %v8442 = vadd.f32 %v8378, %v8410
        %v8443 = vadd.f32 %v8379, %v8411
        %v8444 = vadd.f32 %v8380, %v8412
        %v8445 = vadd.f32 %v8381, %v8413
        %v8446 = vadd.f32 %v8382, %v8414
        %v8447 = vadd.f32 %v8383, %v8415
        %v8448 = vadd.f32 %v8384, %v8416
        %v8449 = vadd.f32 %v8385, %v8417
        %v8450 = vadd.f32 %v8386, %v8418
        %v8451 = vadd.f32 %v8387, %v8419
        %v8452 = vadd.f32 %v8388, %v8420
        %v8453 = vadd.f32 %v8389, %v8421
        %v8454 = vadd.f32 %v8390, %v8422
        %v8455 = vadd.f32 %v8391, %v8423
        %v8456 = vadd.f32 %v8392, %v8424
        %v8457 = vadd.f32 %v8393, %v8425
        %v8458 = vadd.f32 %v8394, %v8426
        %v8459 = vadd.f32 %v8395, %v8427
        %v8460 = vadd.f32 %v8396, %v8428
        %v8461 = vadd.f32 %v8397, %v8429
        %v8462 = vadd.f32 %v8398, %v8430
        %v8463 = vadd.f32 %v8399, %v8431
        %v8464 = vadd.f32 %v8400, %v8432
        %v8465 = vsub.f32 0.0, %v8433
        %v8466 = vsub.f32 0.0, %v8434
        %v8467 = vsub.f32 0.0, %v8435
        %v8468 = vsub.f32 0.0, %v8436
        %v8469 = vsub.f32 0.0, %v8437
        %v8470 = vsub.f32 0.0, %v8438
        %v8471 = vsub.f32 0.0, %v8439
        %v8472 = vsub.f32 0.0, %v8440
        %v8473 = vsub.f32 0.0, %v8441
        %v8474 = vsub.f32 0.0, %v8442
        %v8475 = vsub.f32 0.0, %v8443
        %v8476 = vsub.f32 0.0, %v8444
        %v8477 = vsub.f32 0.0, %v8445
        %v8478 = vsub.f32 0.0, %v8446
        %v8479 = vsub.f32 0.0, %v8447
        %v8480 = vsub.f32 0.0, %v8448
        %v8481 = vsub.f32 0.0, %v8449
        %v8482 = vsub.f32 0.0, %v8450
        %v8483 = vsub.f32 0.0, %v8451
        %v8484 = vsub.f32 0.0, %v8452
        %v8485 = vsub.f32 0.0, %v8453
        %v8486 = vsub.f32 0.0, %v8454
        %v8487 = vsub.f32 0.0, %v8455
        %v8488 = vsub.f32 0.0, %v8456
        %v8489 = vsub.f32 0.0, %v8457
        %v8490 = vsub.f32 0.0, %v8458
        %v8491 = vsub.f32 0.0, %v8459
        %v8492 = vsub.f32 0.0, %v8460
        %v8493 = vsub.f32 0.0, %v8461
        %v8494 = vsub.f32 0.0, %v8462
        %v8495 = vsub.f32 0.0, %v8463
        %v8496 = vsub.f32 0.0, %v8464
        %v8497 = vmul.f32 %v8465, 1.442695
        %v8498 = vpow.pop %v8497
        %v8499 = vmul.f32 %v8466, 1.442695
        %v8500 = vpow.pop %v8499
        %v8501 = vmul.f32 %v8467, 1.442695
        %v8502 = vpow.pop %v8501
        %v8503 = vmul.f32 %v8468, 1.442695
        %v8504 = vpow.pop %v8503
        %v8505 = vmul.f32 %v8469, 1.442695
        %v8506 = vpow.pop %v8505
        %v8507 = vmul.f32 %v8470, 1.442695
        %v8508 = vpow.pop %v8507
        %v8509 = vmul.f32 %v8471, 1.442695
        %v8510 = vpow.pop %v8509
        %v8511 = vmul.f32 %v8472, 1.442695
        %v8512 = vpow.pop %v8511
        %v8513 = vmul.f32 %v8473, 1.442695
        %v8514 = vpow.pop %v8513
        %v8515 = vmul.f32 %v8474, 1.442695
        %v8516 = vpow.pop %v8515
        %v8517 = vmul.f32 %v8475, 1.442695
        %v8518 = vpow.pop %v8517
        %v8519 = vmul.f32 %v8476, 1.442695
        %v8520 = vpow.pop %v8519
        %v8521 = vmul.f32 %v8477, 1.442695
        %v8522 = vpow.pop %v8521
        %v8523 = vmul.f32 %v8478, 1.442695
        %v8524 = vpow.pop %v8523
        %v8525 = vmul.f32 %v8479, 1.442695
        %v8526 = vpow.pop %v8525
        %v8527 = vmul.f32 %v8480, 1.442695
        %v8528 = vpow.pop %v8527
        %v8529 = vmul.f32 %v8481, 1.442695
        %v8530 = vpow.pop %v8529
        %v8531 = vmul.f32 %v8482, 1.442695
        %v8532 = vpow.pop %v8531
        %v8533 = vmul.f32 %v8483, 1.442695
        %v8534 = vpow.pop %v8533
        %v8535 = vmul.f32 %v8484, 1.442695
        %v8536 = vpow.pop %v8535
        %v8537 = vmul.f32 %v8485, 1.442695
        %v8538 = vpow.pop %v8537
        %v8539 = vmul.f32 %v8486, 1.442695
        %v8540 = vpow.pop %v8539
        %v8541 = vmul.f32 %v8487, 1.442695
        %v8542 = vpow.pop %v8541
        %v8543 = vmul.f32 %v8488, 1.442695
        %v8544 = vpow.pop %v8543
        %v8545 = vmul.f32 %v8489, 1.442695
        %v8546 = vpow.pop %v8545
        %v8547 = vmul.f32 %v8490, 1.442695
        %v8548 = vpow.pop %v8547
        %v8549 = vmul.f32 %v8491, 1.442695
        %v8550 = vpow.pop %v8549
        %v8551 = vmul.f32 %v8492, 1.442695
        %v8552 = vpow.pop %v8551
        %v8553 = vmul.f32 %v8493, 1.442695
        %v8554 = vpow.pop %v8553
        %v8555 = vmul.f32 %v8494, 1.442695
        %v8556 = vpow.pop %v8555
        %v8557 = vmul.f32 %v8495, 1.442695
        %v8558 = vpow.pop %v8557
        %v8559 = vmul.f32 %v8496, 1.442695
        %v8560 = vpow.pop %v8559
        %v8561 = vadd.f32 %v8498, 1.0
        %v8562 = vadd.f32 %v8500, 1.0
        %v8563 = vadd.f32 %v8502, 1.0
        %v8564 = vadd.f32 %v8504, 1.0
        %v8565 = vadd.f32 %v8506, 1.0
        %v8566 = vadd.f32 %v8508, 1.0
        %v8567 = vadd.f32 %v8510, 1.0
        %v8568 = vadd.f32 %v8512, 1.0
        %v8569 = vadd.f32 %v8514, 1.0
        %v8570 = vadd.f32 %v8516, 1.0
        %v8571 = vadd.f32 %v8518, 1.0
        %v8572 = vadd.f32 %v8520, 1.0
        %v8573 = vadd.f32 %v8522, 1.0
        %v8574 = vadd.f32 %v8524, 1.0
        %v8575 = vadd.f32 %v8526, 1.0
        %v8576 = vadd.f32 %v8528, 1.0
        %v8577 = vadd.f32 %v8530, 1.0
        %v8578 = vadd.f32 %v8532, 1.0
        %v8579 = vadd.f32 %v8534, 1.0
        %v8580 = vadd.f32 %v8536, 1.0
        %v8581 = vadd.f32 %v8538, 1.0
        %v8582 = vadd.f32 %v8540, 1.0
        %v8583 = vadd.f32 %v8542, 1.0
        %v8584 = vadd.f32 %v8544, 1.0
        %v8585 = vadd.f32 %v8546, 1.0
        %v8586 = vadd.f32 %v8548, 1.0
        %v8587 = vadd.f32 %v8550, 1.0
        %v8588 = vadd.f32 %v8552, 1.0
        %v8589 = vadd.f32 %v8554, 1.0
        %v8590 = vadd.f32 %v8556, 1.0
        %v8591 = vadd.f32 %v8558, 1.0
        %v8592 = vadd.f32 %v8560, 1.0
        %v8593 = vrcp.pop %v8561
        %v8594 = vrcp.pop %v8562
        %v8595 = vrcp.pop %v8563
        %v8596 = vrcp.pop %v8564
        %v8597 = vrcp.pop %v8565
        %v8598 = vrcp.pop %v8566
        %v8599 = vrcp.pop %v8567
        %v8600 = vrcp.pop %v8568
        %v8601 = vrcp.pop %v8569
        %v8602 = vrcp.pop %v8570
        %v8603 = vrcp.pop %v8571
        %v8604 = vrcp.pop %v8572
        %v8605 = vrcp.pop %v8573
        %v8606 = vrcp.pop %v8574
        %v8607 = vrcp.pop %v8575
        %v8608 = vrcp.pop %v8576
        %v8609 = vrcp.pop %v8577
        %v8610 = vrcp.pop %v8578
        %v8611 = vrcp.pop %v8579
        %v8612 = vrcp.pop %v8580
        %v8613 = vrcp.pop %v8581
        %v8614 = vrcp.pop %v8582
        %v8615 = vrcp.pop %v8583
        %v8616 = vrcp.pop %v8584
        %v8617 = vrcp.pop %v8585
        %v8618 = vrcp.pop %v8586
        %v8619 = vrcp.pop %v8587
        %v8620 = vrcp.pop %v8588
        %v8621 = vrcp.pop %v8589
        %v8622 = vrcp.pop %v8590
        %v8623 = vrcp.pop %v8591
        %v8624 = vrcp.pop %v8592
        %v8625 = vmul.f32 %v8433, %v8593
        %v8626 = vmul.f32 %v8434, %v8594
        %v8627 = vmul.f32 %v8435, %v8595
        %v8628 = vmul.f32 %v8436, %v8596
        %v8629 = vmul.f32 %v8437, %v8597
        %v8630 = vmul.f32 %v8438, %v8598
        %v8631 = vmul.f32 %v8439, %v8599
        %v8632 = vmul.f32 %v8440, %v8600
        %v8633 = vmul.f32 %v8441, %v8601
        %v8634 = vmul.f32 %v8442, %v8602
        %v8635 = vmul.f32 %v8443, %v8603
        %v8636 = vmul.f32 %v8444, %v8604
        %v8637 = vmul.f32 %v8445, %v8605
        %v8638 = vmul.f32 %v8446, %v8606
        %v8639 = vmul.f32 %v8447, %v8607
        %v8640 = vmul.f32 %v8448, %v8608
        %v8641 = vmul.f32 %v8449, %v8609
        %v8642 = vmul.f32 %v8450, %v8610
        %v8643 = vmul.f32 %v8451, %v8611
        %v8644 = vmul.f32 %v8452, %v8612
        %v8645 = vmul.f32 %v8453, %v8613
        %v8646 = vmul.f32 %v8454, %v8614
        %v8647 = vmul.f32 %v8455, %v8615
        %v8648 = vmul.f32 %v8456, %v8616
        %v8649 = vmul.f32 %v8457, %v8617
        %v8650 = vmul.f32 %v8458, %v8618
        %v8651 = vmul.f32 %v8459, %v8619
        %v8652 = vmul.f32 %v8460, %v8620
        %v8653 = vmul.f32 %v8461, %v8621
        %v8654 = vmul.f32 %v8462, %v8622
        %v8655 = vmul.f32 %v8463, %v8623
        %v8656 = vmul.f32 %v8464, %v8624
        %8657 = vst [vmem:[%s277] sm:$0xff] %v8625
        %8658 = vst [vmem:[%s277 + $0x8] sm:$0xff] %v8626
        %8659 = vst [vmem:[%s277 + $0x10] sm:$0xff] %v8627
        %8660 = vst [vmem:[%s277 + $0x18] sm:$0xff] %v8628
        %8661 = vst [vmem:[%s277 + $0x20] sm:$0xff] %v8629
        %8662 = vst [vmem:[%s277 + $0x28] sm:$0xff] %v8630
        %8663 = vst [vmem:[%s277 + $0x30] sm:$0xff] %v8631
        %8664 = vst [vmem:[%s277 + $0x38] sm:$0xff] %v8632
        %8665 = vst [vmem:[%s277 + $0x40] sm:$0xff] %v8633
        %8666 = vst [vmem:[%s277 + $0x48] sm:$0xff] %v8634
        %8667 = vst [vmem:[%s277 + $0x50] sm:$0xff] %v8635
        %8668 = vst [vmem:[%s277 + $0x58] sm:$0xff] %v8636
        %8669 = vst [vmem:[%s277 + $0x60] sm:$0xff] %v8637
        %8670 = vst [vmem:[%s277 + $0x68] sm:$0xff] %v8638
        %8671 = vst [vmem:[%s277 + $0x70] sm:$0xff] %v8639
        %8672 = vst [vmem:[%s277 + $0x78] sm:$0xff] %v8640
        %8673 = vst [vmem:[%s277 + $0x80] sm:$0xff] %v8641
        %8674 = vst [vmem:[%s277 + $0x88] sm:$0xff] %v8642
        %8675 = vst [vmem:[%s277 + $0x90] sm:$0xff] %v8643
        %8676 = vst [vmem:[%s277 + $0x98] sm:$0xff] %v8644
        %8677 = vst [vmem:[%s277 + $0xa0] sm:$0xff] %v8645
        %8678 = vst [vmem:[%s277 + $0xa8] sm:$0xff] %v8646
        %8679 = vst [vmem:[%s277 + $0xb0] sm:$0xff] %v8647
        %8680 = vst [vmem:[%s277 + $0xb8] sm:$0xff] %v8648
        %8681 = vst [vmem:[%s277 + $0xc0] sm:$0xff] %v8649
        %8682 = vst [vmem:[%s277 + $0xc8] sm:$0xff] %v8650
        %8683 = vst [vmem:[%s277 + $0xd0] sm:$0xff] %v8651
        %8684 = vst [vmem:[%s277 + $0xd8] sm:$0xff] %v8652
        %8685 = vst [vmem:[%s277 + $0xe0] sm:$0xff] %v8653
        %8686 = vst [vmem:[%s277 + $0xe8] sm:$0xff] %v8654
        %8687 = vst [vmem:[%s277 + $0xf0] sm:$0xff] %v8655
        %8688 = vst [vmem:[%s277 + $0xf8] sm:$0xff] %v8656
        %s8689 = sand.u32 %s141, 1
        %s8690 = scalar_lea.sflag [#allocation6], %s8689
        %s8691 = sand.u32 %s141, 1
        %s8692 = smul.addr %s8691, 256
        %s8693 = scalar_lea.vmem [#allocation10], %s8692
        // Predicated region
        $region57: #{tpu_custom_call.1} parent=39 // pred_check
          %p8694 = pneg %p151
        $region58: #{tpu_custom_call.1} parent=39 // pred_check_branch
          %8696 = sbr.rel (%p8694) target = $region60
        $region59: #{tpu_custom_call.1} parent=39 // pred_region
          %8698 = vsyncadd %s8690, 0
          %s8699 = smul.addr %s23, 32
          %s8700 = smul.addr %s8699, 8
          %s8701 = scalar_lea.hbm %s5, %s8700
          %s8702 = sshll.u32 %s8693, 4
          %s8703 = int_to_ptr.vmem [resolvable:$true] %s8702
          %s8704 = sshll.u32 %s8701, 4
          %s8705 = int_to_ptr.hbm [resolvable:$true] %s8704
          %8710 = dma.vmem_to_hbm [thread:$0]  %s8703, 4096, %s8705, %s8690, 128, 128, 8
        $region60: #{tpu_custom_call.1} parent=39 // pred_fallthru
          _
      $region40: #{tpu_custom_call.1} parent=5 // pred_fallthru
        _
      %p8711 = scmp.le.s32.totalorder 2, %s18
      // Predicated region
      $region61: #{tpu_custom_call.1} parent=5 // pred_check
        %p8712 = pneg %p8711
      $region62: #{tpu_custom_call.1} parent=5 // pred_check_branch
        %8714 = sbr.rel (%p8712) target = $region64
      $region63: #{tpu_custom_call.1} parent=5 // pred_region
        %s8715 = ssub.s32 %s18, 2
        // Predicated region
        $region65: #{tpu_custom_call.1} parent=63 // pred_check
          %p8716 = pneg %p157
        $region66: #{tpu_custom_call.1} parent=63 // pred_check_branch
          %8718 = sbr.rel (%p8716) target = $region68
        $region67: #{tpu_custom_call.1} parent=63 // pred_region
          %s8719 = sand.u32 %s142, 1
          %s8720 = scalar_lea.sflag [#allocation6], %s8719
          %s8721 = sand.u32 %s142, 1
          %s8722 = smul.addr %s8721, 256
          %s8723 = scalar_lea.vmem [#allocation10], %s8722
          %8725 = dma.done %s8720, 4096
        $region68: #{tpu_custom_call.1} parent=63 // pred_fallthru
          _
      $region64: #{tpu_custom_call.1} parent=5 // pred_fallthru
        _
    $region6: #{tpu_custom_call.1} parent=1 // loop_footer
      %s22 = sadd.s32 1, %s18
    $region7: #{tpu_custom_call.1} parent=1 // loop_footer_branch
      %17 = sbr.rel target = $region3
    $region8: #{tpu_custom_call.1} parent=1 // loop_exit
      _
    %8726 = vsyncpa [#allocation5], 1
    %s8727 = scalar_lea.sflag [#allocation5], 1
    %8728 = vsyncpa %s8727, 1
    %8729 = vsyncpa [#allocation8], 1
    %8730 = vsyncpa [#allocation6], 1
    %s8731 = scalar_lea.sflag [#allocation6], 1
    %8732 = vsyncpa %s8731, 1

</llo_original>
